<compile_context>
chip_gen: v5e
topology: v5e:2x2
jax: 0.10.0
libtpu: 0.0.40
codegen_flags: <defaults>
</compile_context>

<pallas_src>
import math
from functools import partial

import numpy as np
import jax
import jax.numpy as jnp
from jax.experimental import pallas as pl
from jax.experimental.pallas import tpu as pltpu

_BF16 = jnp.bfloat16


# ----------------------------------------------------------------------------
# Tiling / compiler-params helpers
# ----------------------------------------------------------------------------
def _round_up(x, m):
    return ((x + m - 1) // m) * m


def _tile(dim, cap, align):
    """Return (padded_dim, tile).

    Prefers a tile that divides `dim` exactly (avoids pad-in / slice-out copies
    around the pallas_call); falls back to padding only when no aligned divisor
    exists.  `align` is 8 for sublane (row) dims and 128 for lane dims.
    """
    if dim <= cap:
        return dim, dim                      # single full-extent block (always legal)
    if dim % align == 0:
        t = cap
        while t >= align:
            if dim % t == 0:
                return dim, t
            t -= align
    return _round_up(dim, cap), cap


def _pad2(x, rows, cols):
    r, c = x.shape
    if r == rows and c == cols:
        return x
    return jnp.pad(x, ((0, rows - r), (0, cols - c)))


_VMEM_LIMIT_CACHE = [False, None]


def _vmem_limit():
    """Scoped-VMEM limit: physical minus 16 MiB headroom, capped at 96 MiB
    (-> ~96 MiB on v5e/v6e, ~48 MiB on v7x).  Falls back to compiler default."""
    if not _VMEM_LIMIT_CACHE[0]:
        _VMEM_LIMIT_CACHE[0] = True
        try:
            cap = int(pltpu.get_tpu_info().vmem_capacity_bytes)
            lim = min(cap - (16 << 20), 96 << 20)
            _VMEM_LIMIT_CACHE[1] = lim if lim > (16 << 20) else None
        except Exception:
            _VMEM_LIMIT_CACHE[1] = None
    return _VMEM_LIMIT_CACHE[1]


def _cp(dims):
    return pltpu.CompilerParams(dimension_semantics=dims,
                                vmem_limit_bytes=_vmem_limit())


def _apply_act(x, act):
    if act == "gelu":
        # TODO(synk): tanh-approx GELU (timm nn.GELU is erf-based; diff is tiny).
        return jax.nn.gelu(x, approximate=True)
    if act == "silu":
        return x * jax.nn.sigmoid(x)
    return x


# ----------------------------------------------------------------------------
# Pallas kernels
# ----------------------------------------------------------------------------
def _linear_kernel(*refs, act, has_gate, has_residual):
    """Tiled x@w + b with K-reduction accumulator; optional gated residual."""
    x_ref, w_ref, b_ref = refs[0], refs[1], refs[2]
    pos = 3
    gate_ref = res_ref = None
    if has_gate:
        gate_ref = refs[pos]; pos += 1
    if has_residual:
        res_ref = refs[pos]; pos += 1
    o_ref, acc_ref = refs[pos], refs[pos + 1]

    k = pl.program_id(2)

    @pl.when(k == 0)
    def _():
        acc_ref[...] = jnp.zeros_like(acc_ref)

    acc_ref[...] += jnp.dot(x_ref[...], w_ref[...],
                            preferred_element_type=jnp.float32)

    @pl.when(k == pl.num_programs(2) - 1)
    def _():
        acc = acc_ref[...] + b_ref[...].astype(jnp.float32)
        acc = _apply_act(acc, act)
        if has_gate:
            acc = gate_ref[...].astype(jnp.float32) * acc
        if has_residual:
            acc = res_ref[...].astype(jnp.float32) + acc
        o_ref[...] = acc.astype(o_ref.dtype)


def linear(x, w, b, act="none", residual=None, gate=None, out_dtype=jnp.float32):
    """[M,K] @ [K,N] + b  (bf16 MXU, f32 accumulate), optional act / gated residual."""
    M, K = x.shape
    N = w.shape[1]
    Mp, tm = _tile(M, 512, 8)
    Np, tn = _tile(N, 512, 128)
    Kp, tk = _tile(K, 512, 128)

    xp = _pad2(x.astype(_BF16), Mp, Kp)
    wp = _pad2(w.astype(_BF16), Kp, Np)
    bp = _pad2(b.reshape(1, N).astype(jnp.float32), 1, Np)

    in_specs = [
        pl.BlockSpec((tm, tk), lambda i, j, k: (i, k)),
        pl.BlockSpec((tk, tn), lambda i, j, k: (k, j)),
        pl.BlockSpec((1, tn), lambda i, j, k: (0, j)),
    ]
    operands = [xp, wp, bp]
    if gate is not None:
        in_specs.append(pl.BlockSpec((tm, tn), lambda i, j, k: (i, j)))
        operands.append(_pad2(gate, Mp, Np))       # native dtype, upcast in-kernel
    if residual is not None:
        in_specs.append(pl.BlockSpec((tm, tn), lambda i, j, k: (i, j)))
        operands.append(_pad2(residual, Mp, Np))

    out = pl.pallas_call(
        partial(_linear_kernel, act=act,
                has_gate=gate is not None, has_residual=residual is not None),
        out_shape=jax.ShapeDtypeStruct((Mp, Np), out_dtype),
        grid=(Mp // tm, Np // tn, Kp // tk),
        in_specs=in_specs,
        out_specs=pl.BlockSpec((tm, tn), lambda i, j, k: (i, j)),
        scratch_shapes=[pltpu.VMEM((tm, tn), jnp.float32)],
        compiler_params=_cp(("parallel", "parallel", "arbitrary")),
    )(*operands)
    if Mp != M or Np != N:
        out = out[:M, :N]
    return out


def _ln_linear_kernel(*refs, act, eps, modulate):
    """Fused LayerNorm (+ optional adaLN modulate from a mod slab) -> matmul
    -> bias -> activation.  Inputs may be bf16; LN stats are f32."""
    if modulate:
        x_ref, g_ref, b_ref, mod_ref, w_ref, bias_ref, o_ref = refs
    else:
        x_ref, g_ref, b_ref, w_ref, bias_ref, o_ref = refs
        mod_ref = None

    x = x_ref[...].astype(jnp.float32)
    K = x.shape[-1]
    mu = jnp.mean(x, axis=-1, keepdims=True)
    xc = x - mu
    var = jnp.mean(xc * xc, axis=-1, keepdims=True)
    h = xc * jax.lax.rsqrt(var + eps)
    h = h * g_ref[...].astype(jnp.float32) + b_ref[...].astype(jnp.float32)
    if modulate:
        shift = mod_ref[:, 0:K].astype(jnp.float32)
        scale = mod_ref[:, K:2 * K].astype(jnp.float32)
        h = h * (1.0 + scale) + shift

    acc = jnp.dot(h.astype(w_ref.dtype), w_ref[...],
                  preferred_element_type=jnp.float32)
    acc = acc + bias_ref[...].astype(jnp.float32)
    acc = _apply_act(acc, act)
    o_ref[...] = acc.astype(o_ref.dtype)


def ln_linear(x, g, bln, w, b, act="none", mod=None, out_dtype=jnp.float32, eps=1e-6):
    """layernorm(x)[*(1+scale)+shift] @ w + b with full-K blocks, tiled over M/N.

    `mod` (optional) is an [M, >=2K] slab laid out [shift | scale | ...]; shift
    and scale are sliced in-kernel (no XLA split copies)."""
    M, K = x.shape
    N = w.shape[1]
    Mp, tm = _tile(M, 256, 8)
    Np, tn = _tile(N, 512, 128)
    modulate = mod is not None

    xp = _pad2(x, Mp, K)                                 # native dtype (bf16 ok)
    gp = g.reshape(1, K).astype(jnp.float32)
    bp = bln.reshape(1, K).astype(jnp.float32)
    wp = _pad2(w.astype(_BF16), K, Np)
    biasp = _pad2(b.reshape(1, N).astype(jnp.float32), 1, Np)

    in_specs = [
        pl.BlockSpec((tm, K), lambda i, j: (i, 0)),
        pl.BlockSpec((1, K), lambda i, j: (0, 0)),
        pl.BlockSpec((1, K), lambda i, j: (0, 0)),
    ]
    operands = [xp, gp, bp]
    if modulate:
        Cm = mod.shape[1]
        in_specs.append(pl.BlockSpec((tm, Cm), lambda i, j: (i, 0)))
        operands.append(_pad2(mod, Mp, Cm))
    in_specs += [pl.BlockSpec((K, tn), lambda i, j: (0, j)),
                 pl.BlockSpec((1, tn), lambda i, j: (0, j))]
    operands += [wp, biasp]

    out = pl.pallas_call(
        partial(_ln_linear_kernel, act=act, eps=eps, modulate=modulate),
        out_shape=jax.ShapeDtypeStruct((Mp, Np), out_dtype),
        grid=(Mp // tm, Np // tn),
        in_specs=in_specs,
        out_specs=pl.BlockSpec((tm, tn), lambda i, j: (i, j)),
        compiler_params=_cp(("parallel", "parallel")),
    )(*operands)
    if Mp != M or Np != N:
        out = out[:M, :N]
    return out


def _add_pos_ln_kernel(x_ref, pos_ref, g_ref, b_ref, o_ref, *, eps):
    """(x + pos_embed) -> LayerNorm, one batch element per program."""
    x = x_ref[0].astype(jnp.float32) + pos_ref[0].astype(jnp.float32)
    mu = jnp.mean(x, axis=-1, keepdims=True)
    xc = x - mu
    var = jnp.mean(xc * xc, axis=-1, keepdims=True)
    h = xc * jax.lax.rsqrt(var + eps)
    h = h * g_ref[...].astype(jnp.float32) + b_ref[...].astype(jnp.float32)
    o_ref[0] = h.astype(o_ref.dtype)


def add_pos_layernorm(x, pos, g, b, out_dtype=_BF16, eps=1e-6):
    """Fused (+ positional embedding) + LayerNorm over [B, L, W]."""
    B, L, W = x.shape
    return pl.pallas_call(
        partial(_add_pos_ln_kernel, eps=eps),
        out_shape=jax.ShapeDtypeStruct((B, L, W), out_dtype),
        grid=(B,),
        in_specs=[pl.BlockSpec((1, L, W), lambda i: (i, 0, 0)),
                  pl.BlockSpec((1, L, W), lambda i: (0, 0, 0)),
                  pl.BlockSpec((1, W), lambda i: (0, 0)),
                  pl.BlockSpec((1, W), lambda i: (0, 0))],
        out_specs=pl.BlockSpec((1, L, W), lambda i: (i, 0, 0)),
        compiler_params=_cp(("parallel",)),
    )(x, pos, g.reshape(1, W).astype(jnp.float32), b.reshape(1, W).astype(jnp.float32))


def _ln_addpos_linear_kernel(x_ref, pos_ref, g_ref, b_ref, w_ref, bias_ref, o_ref, *, eps):
    """LayerNorm(x) + pos_embed -> matmul -> bias, one batch element / N tile."""
    x = x_ref[0].astype(jnp.float32)
    mu = jnp.mean(x, axis=-1, keepdims=True)
    xc = x - mu
    var = jnp.mean(xc * xc, axis=-1, keepdims=True)
    h = xc * jax.lax.rsqrt(var + eps)
    h = h * g_ref[...].astype(jnp.float32) + b_ref[...].astype(jnp.float32)
    h = h + pos_ref[0].astype(jnp.float32)
    acc = jnp.dot(h.astype(w_ref.dtype), w_ref[...],
                  preferred_element_type=jnp.float32)
    o_ref[0] = (acc + bias_ref[...].astype(jnp.float32)).astype(o_ref.dtype)


def ln_addpos_linear(x, pos, g, bln, w, b, out_dtype=jnp.float32, eps=1e-6):
    """(layernorm(x) + pos) @ w + b  over [B, S, K] -> [B, S, N]."""
    B, S, K = x.shape
    N = w.shape[1]
    Np, tn = _tile(N, 512, 128)
    wp = _pad2(w.astype(_BF16), K, Np)
    bp = _pad2(b.reshape(1, N).astype(jnp.float32), 1, Np)
    out = pl.pallas_call(
        partial(_ln_addpos_linear_kernel, eps=eps),
        out_shape=jax.ShapeDtypeStruct((B, S, Np), out_dtype),
        grid=(B, Np // tn),
        in_specs=[pl.BlockSpec((1, S, K), lambda bi, j: (bi, 0, 0)),
                  pl.BlockSpec((1, S, K), lambda bi, j: (0, 0, 0)),
                  pl.BlockSpec((1, K), lambda bi, j: (0, 0)),
                  pl.BlockSpec((1, K), lambda bi, j: (0, 0)),
                  pl.BlockSpec((K, tn), lambda bi, j: (0, j)),
                  pl.BlockSpec((1, tn), lambda bi, j: (0, j))],
        out_specs=pl.BlockSpec((1, S, tn), lambda bi, j: (bi, 0, j)),
        compiler_params=_cp(("parallel", "parallel")),
    )(x, pos, g.reshape(1, K).astype(jnp.float32),
      bln.reshape(1, K).astype(jnp.float32), wp, bp)
    if Np != N:
        out = out[:, :, :N]
    return out


def _attn_kernel(qkv_ref, o_ref, *, num_heads, scale):
    """Multi-head attention over one batch element from the fused bf16 qkv slab."""
    W3 = qkv_ref.shape[-1]
    W = W3 // 3
    Dh = W // num_heads
    for h in range(num_heads):
        # slice head windows directly from the VMEM ref (no full-slab load)
        q = qkv_ref[0, :, h * Dh:(h + 1) * Dh]
        k = qkv_ref[0, :, W + h * Dh:W + (h + 1) * Dh]
        v = qkv_ref[0, :, 2 * W + h * Dh:2 * W + (h + 1) * Dh]
        # fold softmax scale into q (LxDh) instead of scaling the LxL scores
        q = (q.astype(jnp.float32) * scale).astype(k.dtype)
        # q @ k^T via dot_general contracting on the last dims (no transpose op)
        s = jax.lax.dot_general(q, k, (((1,), (1,)), ((), ())),
                                preferred_element_type=jnp.float32)
        s = s - jnp.max(s, axis=-1, keepdims=True)
        p = jnp.exp(s)
        p = p * pl.reciprocal(jnp.sum(p, axis=-1, keepdims=True), approx=True)
        o = jnp.dot(p.astype(v.dtype), v, preferred_element_type=jnp.float32)
        # store each head straight into its output lane window (no concat)
        o_ref[0, :, h * Dh:(h + 1) * Dh] = o.astype(o_ref.dtype)


def attention(qkv, num_heads, out_dtype=_BF16):
    """qkv: [B, L, 3W] fused bf16 projections -> [B, L, W] attention output."""
    B, L, W3 = qkv.shape
    W = W3 // 3
    Dh = W // num_heads
    scale = 1.0 / math.sqrt(Dh)
    # TODO(synk): for v7x with small B, a head-major weight layout + (B, H) grid
    # would expose more parallel blocks / 128-aligned windows.
    return pl.pallas_call(
        partial(_attn_kernel, num_heads=num_heads, scale=scale),
        out_shape=jax.ShapeDtypeStruct((B, L, W), out_dtype),
        grid=(B,),
        in_specs=[pl.BlockSpec((1, L, W3), lambda i: (i, 0, 0))],
        out_specs=pl.BlockSpec((1, L, W), lambda i: (i, 0, 0)),
        compiler_params=_cp(("parallel",)),
    )(qkv)


def _masked_mse_kernel(p_ref, t_ref, m_ref, num_ref, den_ref, nacc, dacc):
    i = pl.program_id(1)

    @pl.when(i == 0)
    def _():
        nacc[...] = jnp.zeros_like(nacc)
        dacc[...] = jnp.zeros_like(dacc)

    d = p_ref[...].astype(jnp.float32) - t_ref[...].astype(jnp.float32)
    per = jnp.mean(d * d, axis=-1, keepdims=True)          # (tr, 1)
    m = m_ref[...].astype(jnp.float32)                     # (tr, 1)
    nacc[...] += jnp.sum(per * m, axis=0, keepdims=True)
    dacc[...] += jnp.sum(m, axis=0, keepdims=True)

    @pl.when(i == pl.num_programs(1) - 1)
    def _():
        num_ref[...] = jnp.broadcast_to(nacc[...], num_ref.shape)
        den_ref[...] = jnp.broadcast_to(dacc[...], den_ref.shape)


def masked_mse(pred, target, mask):
    """mean_flat((pred-target)^2) weighted by mask.

    Row reduction split over a leading 'parallel' grid axis (2 partials, one
    per TensorCore on v7x); the tiny final divide (with a clamp) is in XLA."""
    N, C = pred.shape
    ncore = 2
    total = _round_up(N, 8 * ncore)
    half = total // ncore                       # rows per partial, multiple of 8
    halfp, tr = _tile(half, 1024, 8)
    Np_ = halfp * ncore
    chunks = halfp // tr

    pred_p = _pad2(pred.astype(jnp.float32), Np_, C)
    tgt_p = _pad2(target.astype(jnp.float32), Np_, C)
    mask_p = _pad2(mask.reshape(N, 1).astype(jnp.float32), Np_, 1)  # pad rows -> mask 0

    num, den = pl.pallas_call(
        _masked_mse_kernel,
        out_shape=(jax.ShapeDtypeStruct((8 * ncore, 128), jnp.float32),
                   jax.ShapeDtypeStruct((8 * ncore, 128), jnp.float32)),
        grid=(ncore, chunks),
        in_specs=[pl.BlockSpec((tr, C), lambda c, i: (c * chunks + i, 0)),
                  pl.BlockSpec((tr, C), lambda c, i: (c * chunks + i, 0)),
                  pl.BlockSpec((tr, 1), lambda c, i: (c * chunks + i, 0))],
        out_specs=(pl.BlockSpec((8, 128), lambda c, i: (c, 0)),
                   pl.BlockSpec((8, 128), lambda c, i: (c, 0))),
        scratch_shapes=[pltpu.VMEM((1, 1), jnp.float32),
                        pltpu.VMEM((1, 1), jnp.float32)],
        compiler_params=_cp(("parallel", "arbitrary")),
    )(pred_p, tgt_p, mask_p)
    num_t = jnp.sum(num[::8, 0])
    den_t = jnp.sum(den[::8, 0])
    return num_t / jnp.maximum(den_t, 1e-8)


# ----------------------------------------------------------------------------
# Parameter initialization (deterministic, synthetic)
# ----------------------------------------------------------------------------
def xavier_linear(key, fan_in, fan_out):
    limit = math.sqrt(6.0 / (fan_in + fan_out))
    return {"w": jax.random.uniform(key, (fan_in, fan_out), jnp.float32, -limit, limit),
            "b": jnp.zeros((fan_out,), jnp.float32)}


def init_block_params(key, width):
    k = jax.random.split(key, 4)
    return {
        "ln1_g": jnp.ones((width,), jnp.float32), "ln1_b": jnp.zeros((width,), jnp.float32),
        "qkv": xavier_linear(k[0], width, 3 * width),
        "proj": xavier_linear(k[1], width, width),
        "ln2_g": jnp.ones((width,), jnp.float32), "ln2_b": jnp.zeros((width,), jnp.float32),
        "fc1": xavier_linear(k[2], width, 4 * width),
        "fc2": xavier_linear(k[3], 4 * width, width),
    }


def init_mar_params(key, cfg):
    W, ted = cfg["width"], cfg["token_embed_dim"]
    S, buf, dw = cfg["seq_len"], cfg["buffer_size"], cfg["diffloss_w"]
    ki = iter(jax.random.split(key, 32))

    enc_blocks = [init_block_params(next(ki), W) for _ in range(cfg["num_layers"])]
    dec_blocks = [init_block_params(next(ki), W) for _ in range(cfg["num_layers"])]

    res_blocks = []
    for _ in range(cfg["diffloss_d"]):
        k = jax.random.split(next(ki), 3)
        res_blocks.append({
            "ln_g": jnp.ones((dw,), jnp.float32), "ln_b": jnp.zeros((dw,), jnp.float32),
            "fc1": xavier_linear(k[0], dw, dw),
            "fc2": xavier_linear(k[1], dw, dw),
            "ada": xavier_linear(k[2], dw, 3 * dw),
        })
    kd = jax.random.split(next(ki), 6)
    diffloss = {
        "time1": xavier_linear(kd[0], dw, dw),
        "time2": xavier_linear(kd[1], dw, dw),
        "cond": xavier_linear(kd[2], W, dw),
        "input_proj": xavier_linear(kd[3], ted, dw),
        "res_blocks": res_blocks,
        "final_ada": xavier_linear(kd[4], dw, 2 * dw),
        "final_linear": xavier_linear(kd[5], dw, 2 * ted),
    }
    return {
        "class_emb": 0.02 * jax.random.normal(next(ki), (cfg["num_classes"], W), jnp.float32),
        "z_proj": xavier_linear(next(ki), ted, W),
        "z_proj_ln_g": jnp.ones((W,), jnp.float32), "z_proj_ln_b": jnp.zeros((W,), jnp.float32),
        "encoder_pos_embed": 0.02 * jax.random.normal(next(ki), (1, S + buf, W), jnp.float32),
        "encoder_blocks": enc_blocks,
        "encoder_norm_g": jnp.ones((W,), jnp.float32), "encoder_norm_b": jnp.zeros((W,), jnp.float32),
        "decoder_embed": xavier_linear(next(ki), W, W),
        "mask_token": 0.02 * jax.random.normal(next(ki), (1, 1, W), jnp.float32),
        "decoder_pos_embed": 0.02 * jax.random.normal(next(ki), (1, S + buf, W), jnp.float32),
        "decoder_blocks": dec_blocks,
        "decoder_norm_g": jnp.ones((W,), jnp.float32), "decoder_norm_b": jnp.zeros((W,), jnp.float32),
        "diffusion_pos_embed": 0.02 * jax.random.normal(next(ki), (1, S, W), jnp.float32),
        "diffloss": diffloss,
    }


# ----------------------------------------------------------------------------
# Model forward (glue in JAX, compute in fused Pallas kernels)
# ----------------------------------------------------------------------------
def patchify(imgs, patch_size):
    B, C, H, Wd = imgs.shape
    p = patch_size
    h_, w_ = H // p, Wd // p
    x = imgs.reshape(B, C, h_, p, w_, p)
    x = jnp.einsum("nchpwq->nhwcpq", x)
    return x.reshape(B, h_ * w_, C * p * p)


def transformer_block(x, p, num_heads):
    """Pre-LN ViT block; bf16 activation stream, f32 LN stats / accumulation."""
    B, L, W = x.shape
    x2 = x.reshape(B * L, W)
    # fused LN1 + QKV projection (bf16 slab for the MXU)
    qkv = ln_linear(x2, p["ln1_g"], p["ln1_b"], p["qkv"]["w"], p["qkv"]["b"],
                    out_dtype=_BF16)
    # fused multi-head attention on the bf16 qkv slab
    a = attention(qkv.reshape(B, L, 3 * W), num_heads)
    # fused proj + residual add
    x2 = linear(a.reshape(B * L, W), p["proj"]["w"], p["proj"]["b"],
                residual=x2, out_dtype=_BF16)
    # fused LN2 + fc1 + GELU
    h = ln_linear(x2, p["ln2_g"], p["ln2_b"], p["fc1"]["w"], p["fc1"]["b"],
                  act="gelu", out_dtype=_BF16)
    # fused fc2 + residual add
    x2 = linear(h, p["fc2"]["w"], p["fc2"]["b"], residual=x2, out_dtype=_BF16)
    return x2.reshape(B, L, W)


def forward_mae_encoder(x, mask, class_embedding, params, cfg):
    B, S, _ = x.shape
    W, buf = cfg["width"], cfg["buffer_size"]
    x = linear(x.reshape(B * S, -1), params["z_proj"]["w"], params["z_proj"]["b"],
               out_dtype=_BF16).reshape(B, S, W)
    # buffer positions hold the class embedding (eval mode: no label drop)
    # TODO(synk): training-mode label-drop / dropout / grad-checkpointing omitted.
    cls = jnp.broadcast_to(class_embedding.astype(_BF16)[:, None, :], (B, buf, W))
    x = jnp.concatenate([cls, x], axis=1)
    mask_with_buffer = jnp.concatenate(
        [jnp.zeros((B, buf), jnp.float32), mask], axis=1)
    # fused (+ encoder_pos_embed) + z_proj_ln  (one pass over the slab)
    x = add_pos_layernorm(x, params["encoder_pos_embed"],
                          params["z_proj_ln_g"], params["z_proj_ln_b"])

    keep = (S + buf) - cfg["num_masked"]
    # stable argsort of 0/1 mask == row-major nonzero order of unmasked tokens
    keep_idx = jnp.argsort(mask_with_buffer, axis=-1, stable=True)[:, :keep]
    gather_idx = jnp.broadcast_to(keep_idx[:, :, None], (B, keep, W))
    x = jnp.take_along_axis(x, gather_idx, axis=1)

    for bp in params["encoder_blocks"]:
        x = transformer_block(x, bp, cfg["num_heads"])
    # encoder_norm is fused into the decoder_embed matmul (see forward_mae_decoder)
    return x, keep_idx


def forward_mae_decoder(x, keep_idx, params, cfg):
    B, Lk, W = x.shape
    buf, S = cfg["buffer_size"], cfg["seq_len"]
    # fused encoder_norm + decoder_embed (bf16 activation stream)
    x = ln_linear(x.reshape(B * Lk, W),
                  params["encoder_norm_g"], params["encoder_norm_b"],
                  params["decoder_embed"]["w"], params["decoder_embed"]["b"],
                  out_dtype=_BF16).reshape(B, Lk, W)
    x_after_pad = jnp.tile(params["mask_token"].astype(_BF16), (B, S + buf, 1))
    batch_idx = jnp.arange(B)[:, None]
    x_after_pad = x_after_pad.at[batch_idx, keep_idx].set(x)
    x = x_after_pad + params["decoder_pos_embed"].astype(_BF16)
    for bp in params["decoder_blocks"]:
        x = transformer_block(x, bp, cfg["num_heads"])
    # decoder_norm + buffer slice + diffusion_pos_embed are fused into the cond
    # projection of the diffusion head (see forward_loss).
    return x


def timestep_embedding(t, dim, max_period=10000.0):
    half = dim // 2
    freqs = jnp.exp(-math.log(max_period) * jnp.arange(half, dtype=jnp.float32) / half)
    args = t[:, None].astype(jnp.float32) * freqs[None, :]
    return jnp.concatenate([jnp.cos(args), jnp.sin(args)], axis=-1)


def simple_mlp_adaln(x_t, t, cemb, p, cfg):
    dw = cfg["diffloss_w"]
    temb = timestep_embedding(t, dw)
    temb = linear(temb, p["time1"]["w"], p["time1"]["b"], act="silu", out_dtype=_BF16)
    temb = linear(temb, p["time2"]["w"], p["time2"]["b"])
    y = temb + cemb
    silu_y = (y * jax.nn.sigmoid(y)).astype(_BF16)     # adaLN input, cast to bf16 once
    h = linear(x_t, p["input_proj"]["w"], p["input_proj"]["b"], out_dtype=_BF16)
    for rb in p["res_blocks"]:
        mod = linear(silu_y, rb["ada"]["w"], rb["ada"]["b"], out_dtype=_BF16)  # [N, 3dw]
        # fused LN + adaLN modulate (shift/scale sliced in-kernel) + fc1 + SiLU
        hh = ln_linear(h, rb["ln_g"], rb["ln_b"], rb["fc1"]["w"], rb["fc1"]["b"],
                       act="silu", mod=mod, out_dtype=_BF16)
        # fused fc2 + gated residual:  h = h + gate * fc2(hh)
        h = linear(hh, rb["fc2"]["w"], rb["fc2"]["b"],
                   residual=h, gate=mod[:, 2 * dw:], out_dtype=_BF16)
    mod = linear(silu_y, p["final_ada"]["w"], p["final_ada"]["b"], out_dtype=_BF16)
    dw_ones = jnp.ones((dw,), jnp.float32)
    dw_zeros = jnp.zeros((dw,), jnp.float32)
    # fused final (non-affine) LN + modulate + final linear
    return ln_linear(h, dw_ones, dw_zeros,
                     p["final_linear"]["w"], p["final_linear"]["b"], mod=mod)


def forward_loss(x_dec, target, mask, params, cfg, key):
    B, S, ted = target.shape
    buf = cfg["buffer_size"]
    mul = cfg["diffusion_batch_mul"]
    diff = params["diffloss"]
    # fused decoder_norm + (+ diffusion_pos_embed) + cond projection, computed
    # once per token; linear commutes with the diffusion_batch_mul repeat.
    cemb = ln_addpos_linear(x_dec[:, buf:], params["diffusion_pos_embed"],
                            params["decoder_norm_g"], params["decoder_norm_b"],
                            diff["cond"]["w"], diff["cond"]["b"])
    cemb = jnp.tile(cemb.reshape(B * S, -1), (mul, 1))
    target = jnp.tile(target.reshape(B * S, ted), (mul, 1))
    mask = jnp.tile(mask.reshape(B * S), (mul,))
    N = target.shape[0]
    kt, kn = jax.random.split(key)
    T = cfg["num_timesteps"]
    t = jax.random.randint(kt, (N,), 0, T)
    noise = jax.random.normal(kn, target.shape, jnp.float32)
    ab = cfg["alphas_cumprod"]
    x_t = jnp.sqrt(ab)[t][:, None] * target + jnp.sqrt(1.0 - ab)[t][:, None] * noise
    model_out = simple_mlp_adaln(x_t, t, cemb, diff, cfg)
    eps_pred = model_out[:, :ted]
    # TODO(synk): learned-sigma VB term of the diffusion loss omitted; eps-MSE only.
    return masked_mse(eps_pred, noise, mask)


def mar_forward(params, cfg, imgs, labels, key):
    B = imgs.shape[0]
    class_embedding = params["class_emb"][labels]
    x = patchify(imgs, cfg["patch_size"])
    gt_latents = x
    k_order, k_diff = jax.random.split(key)
    order_keys = jax.random.split(k_order, B)
    orders = jnp.stack([jax.random.permutation(k, cfg["seq_len"]) for k in order_keys])
    # TODO(synk): PyTorch draws the mask ratio from a truncated normal; fixed rate here.
    mask_rate = 0.75
    num_masked = int(np.ceil(cfg["seq_len"] * mask_rate))
    cfg = dict(cfg, num_masked=num_masked)
    mask = jnp.zeros((B, cfg["seq_len"]), jnp.float32)
    mask = mask.at[jnp.arange(B)[:, None], orders[:, :num_masked]].set(1.0)
    x_enc, keep_idx = forward_mae_encoder(x, mask, class_embedding, params, cfg)
    x_dec = forward_mae_decoder(x_enc, keep_idx, params, cfg)
    return forward_loss(x_dec, gt_latents, mask, params, cfg, k_diff)


def cosine_alphas_cumprod(T):
    steps = np.arange(T + 1, dtype=np.float64) / T
    f = np.cos((steps + 0.008) / 1.008 * np.pi / 2.0) ** 2
    betas = np.clip(1.0 - f[1:] / f[:-1], 0.0, 0.999)
    return jnp.asarray(np.cumprod(1.0 - betas), dtype=jnp.float32)


# ----------------------------------------------------------------------------
if __name__ == "__main__":
    # Small synthetic MAR config (scaled-down 'base'):
    cfg = dict(
        img_size=16, patch_size=1, tokenizer_patch_size=4,
        token_channels=4, token_embed_dim=4,
        seq_h=4, seq_w=4, seq_len=16,
        width=64, num_layers=2, num_heads=4,
        buffer_size=4, num_classes=10,
        diffloss_d=2, diffloss_w=64,
        diffusion_batch_mul=2, num_timesteps=1000,
    )
    cfg["alphas_cumprod"] = cosine_alphas_cumprod(cfg["num_timesteps"])

    key = jax.random.PRNGKey(0)
    kp, ki, kl, kf = jax.random.split(key, 4)
    params = init_mar_params(kp, cfg)

    # "imgs" are pre-tokenized latents: [B, token_channels, seq_h, seq_w] (NCHW)
    imgs = jax.random.normal(ki, (2, cfg["token_channels"], cfg["seq_h"], cfg["seq_w"]),
                             jnp.float32)
    labels = jax.random.randint(kl, (2,), 0, cfg["num_classes"])

    fwd = jax.jit(lambda p, im, lb, k: mar_forward(p, cfg, im, lb, k))
    loss = fwd(params, imgs, labels, kf)
    loss = jax.block_until_ready(loss)
    assert np.isfinite(float(loss)), f"non-finite loss: {loss}"
    print("KERNEL_OK")
</pallas_src>

<mosaic_0001>
module attributes {stable_mosaic.version = 11 : i64} {
  func.func @_linear_kernel(%arg0: i32, %arg1: i32, %arg2: i32, %arg3: memref<32x4xbf16, #tpu.memory_space<vmem>>, %arg4: memref<4x64xbf16, #tpu.memory_space<vmem>>, %arg5: memref<1x64xf32, #tpu.memory_space<vmem>>, %arg6: memref<32x64xbf16, #tpu.memory_space<vmem>>, %arg7: memref<32x64xf32, #tpu.memory_space<vmem>>) attributes {dimension_semantics = [#tpu.dimension_semantics<parallel>, #tpu.dimension_semantics<parallel>, #tpu.dimension_semantics<arbitrary>], iteration_bounds = array<i64: 1, 1, 1>, scalar_prefetch = 0 : i64, scratch_operands = 1 : i64, tpu.core_type = #tpu.core_type<tc>, window_params = [{transform_indices = @transform_0, window_bounds = array<i64: 32, 4>}, {transform_indices = @transform_1, window_bounds = array<i64: 4, 64>}, {transform_indices = @transform_2, window_bounds = array<i64: 1, 64>}, {transform_indices = @transform_3, window_bounds = array<i64: 32, 64>}]} {
    %c0_i32 = arith.constant 0 : i32
    %0 = arith.cmpi eq, %arg2, %c0_i32 : i32
    %1 = arith.extui %0 : i1 to i32
    %c0_i32_0 = arith.constant 0 : i32
    %2 = arith.cmpi ne, %1, %c0_i32_0 : i32
    scf.if %2 {
      %cst_10 = arith.constant 0.000000e+00 : f32
      %12 = vector.broadcast %cst_10 : f32 to vector<32x64xf32>
      %c0_11 = arith.constant 0 : index
      %c0_12 = arith.constant 0 : index
      %13 = vector.load %arg7[%c0_11, %c0_12] : memref<32x64xf32, #tpu.memory_space<vmem>>, vector<32x64xf32>
      tpu.vector_store %arg7[%c0_11, %c0_12], %12 {strides = array<i32>} : memref<32x64xf32, #tpu.memory_space<vmem>>, vector<32x64xf32>,
    } else {
    }
    %c0 = arith.constant 0 : index
    %c0_1 = arith.constant 0 : index
    %3 = vector.load %arg7[%c0, %c0_1] : memref<32x64xf32, #tpu.memory_space<vmem>>, vector<32x64xf32>
    %c0_2 = arith.constant 0 : index
    %c0_3 = arith.constant 0 : index
    %4 = vector.load %arg3[%c0_2, %c0_3] : memref<32x4xbf16, #tpu.memory_space<vmem>>, vector<32x4xbf16>
    %c0_4 = arith.constant 0 : index
    %c0_5 = arith.constant 0 : index
    %5 = vector.load %arg4[%c0_4, %c0_5] : memref<4x64xbf16, #tpu.memory_space<vmem>>, vector<4x64xbf16>
    %cst = arith.constant dense<0.000000e+00> : vector<32x64xf32>
    %6 = tpu.matmul %4, %5, %cst {dimension_numbers = #tpu.dot_dimension_numbers<[1], [0], [0], [1], [0, 0, 1, 1], [], []>} : vector<32x4xbf16>, vector<4x64xbf16>, vector<32x64xf32> -> vector<32x64xf32>
    %7 = arith.addf %3, %6 : vector<32x64xf32>
    %c0_6 = arith.constant 0 : index
    %c0_7 = arith.constant 0 : index
    %8 = vector.load %arg7[%c0_6, %c0_7] : memref<32x64xf32, #tpu.memory_space<vmem>>, vector<32x64xf32>
    tpu.vector_store %arg7[%c0_6, %c0_7], %7 {strides = array<i32>} : memref<32x64xf32, #tpu.memory_space<vmem>>, vector<32x64xf32>,
    %c0_i32_8 = arith.constant 0 : i32
    %9 = arith.cmpi eq, %arg2, %c0_i32_8 : i32
    %10 = arith.extui %9 : i1 to i32
    %c0_i32_9 = arith.constant 0 : i32
    %11 = arith.cmpi ne, %10, %c0_i32_9 : i32
    scf.if %11 {
      %c0_10 = arith.constant 0 : index
      %c0_11 = arith.constant 0 : index
      %12 = vector.load %arg7[%c0_10, %c0_11] : memref<32x64xf32, #tpu.memory_space<vmem>>, vector<32x64xf32>
      %c0_12 = arith.constant 0 : index
      %c0_13 = arith.constant 0 : index
      %13 = vector.load %arg5[%c0_12, %c0_13] : memref<1x64xf32, #tpu.memory_space<vmem>>, vector<1x64xf32>
      %14 = vector.broadcast %13 : vector<1x64xf32> to vector<32x64xf32>
      %15 = arith.addf %12, %14 : vector<32x64xf32>
      %16 = arith.truncf %15 : vector<32x64xf32> to vector<32x64xbf16>
      %c0_14 = arith.constant 0 : index
      %c0_15 = arith.constant 0 : index
      %17 = vector.load %arg6[%c0_14, %c0_15] : memref<32x64xbf16, #tpu.memory_space<vmem>>, vector<32x64xbf16>
      tpu.vector_store %arg6[%c0_14, %c0_15], %16 {strides = array<i32>} : memref<32x64xbf16, #tpu.memory_space<vmem>>, vector<32x64xbf16>,
    } else {
    }
    return
  }
  func.func @transform_0(%arg0: i32, %arg1: i32, %arg2: i32) -> (i32, i32) {
    %c0_i32 = arith.constant 0 : i32
    return %arg0, %arg2 : i32, i32
  }
  func.func @transform_1(%arg0: i32, %arg1: i32, %arg2: i32) -> (i32, i32) {
    %c0_i32 = arith.constant 0 : i32
    return %arg2, %arg1 : i32, i32
  }
  func.func @transform_2(%arg0: i32, %arg1: i32, %arg2: i32) -> (i32, i32) {
    %c0_i32 = arith.constant 0 : i32
    %c0_i32_0 = arith.constant 0 : i32
    return %c0_i32, %arg1 : i32, i32
  }
  func.func @transform_3(%arg0: i32, %arg1: i32, %arg2: i32) -> (i32, i32) {
    %c0_i32 = arith.constant 0 : i32
    return %arg0, %arg1 : i32, i32
  }
}

module attributes {stable_mosaic.version = 11 : i64} {
  func.func @_add_pos_ln_kernel(%arg0: i32, %arg1: memref<1x20x64xbf16, #tpu.memory_space<vmem>>, %arg2: memref<1x20x64xf32, #tpu.memory_space<vmem>>, %arg3: memref<1x64xf32, #tpu.memory_space<vmem>>, %arg4: memref<1x64xf32, #tpu.memory_space<vmem>>, %arg5: memref<1x20x64xbf16, #tpu.memory_space<vmem>>) attributes {dimension_semantics = [#tpu.dimension_semantics<parallel>], iteration_bounds = array<i64: 2>, scalar_prefetch = 0 : i64, scratch_operands = 0 : i64, tpu.core_type = #tpu.core_type<tc>, window_params = [{transform_indices = @transform_0, window_bounds = array<i64: 1, 20, 64>}, {pipeline_mode = #tpu.pipeline_mode<synchronous>, transform_indices = @transform_1, window_bounds = array<i64: 1, 20, 64>}, {pipeline_mode = #tpu.pipeline_mode<synchronous>, transform_indices = @transform_2, window_bounds = array<i64: 1, 64>}, {pipeline_mode = #tpu.pipeline_mode<synchronous>, transform_indices = @transform_3, window_bounds = array<i64: 1, 64>}, {transform_indices = @transform_4, window_bounds = array<i64: 1, 20, 64>}]} {
    %c0 = arith.constant 0 : index
    %c0_0 = arith.constant 0 : index
    %c0_1 = arith.constant 0 : index
    %0 = vector.load %arg1[%c0, %c0_0, %c0_1] : memref<1x20x64xbf16, #tpu.memory_space<vmem>>, vector<1x20x64xbf16>
    %1 = vector.shape_cast %0 : vector<1x20x64xbf16> to vector<20x64xbf16>
    %2 = arith.extf %1 : vector<20x64xbf16> to vector<20x64xf32>
    %c0_2 = arith.constant 0 : index
    %c0_3 = arith.constant 0 : index
    %c0_4 = arith.constant 0 : index
    %3 = vector.load %arg2[%c0_2, %c0_3, %c0_4] : memref<1x20x64xf32, #tpu.memory_space<vmem>>, vector<1x20x64xf32>
    %4 = vector.shape_cast %3 : vector<1x20x64xf32> to vector<20x64xf32>
    %5 = arith.addf %2, %4 : vector<20x64xf32>
    %cst = arith.constant dense<0.000000e+00> : vector<20xf32>
    %6 = vector.multi_reduction <add>, %5, %cst [1] : vector<20x64xf32> to vector<20xf32>
    %7 = vector.shape_cast %6 : vector<20xf32> to vector<20x1xf32>
    %cst_5 = arith.constant 6.400000e+01 : f32
    %8 = vector.broadcast %cst_5 : f32 to vector<20x1xf32>
    %9 = arith.divf %7, %8 : vector<20x1xf32>
    %10 = vector.broadcast %9 : vector<20x1xf32> to vector<20x64xf32>
    %11 = arith.subf %5, %10 : vector<20x64xf32>
    %12 = arith.mulf %11, %11 : vector<20x64xf32>
    %cst_6 = arith.constant dense<0.000000e+00> : vector<20xf32>
    %13 = vector.multi_reduction <add>, %12, %cst_6 [1] : vector<20x64xf32> to vector<20xf32>
    %14 = vector.shape_cast %13 : vector<20xf32> to vector<20x1xf32>
    %cst_7 = arith.constant 6.400000e+01 : f32
    %15 = vector.broadcast %cst_7 : f32 to vector<20x1xf32>
    %16 = arith.divf %14, %15 : vector<20x1xf32>
    %cst_8 = arith.constant 9.99999997E-7 : f32
    %17 = vector.broadcast %cst_8 : f32 to vector<20x1xf32>
    %18 = arith.addf %16, %17 : vector<20x1xf32>
    %19 = math.rsqrt %18 : vector<20x1xf32>
    %20 = vector.broadcast %19 : vector<20x1xf32> to vector<20x64xf32>
    %21 = arith.mulf %11, %20 : vector<20x64xf32>
    %c0_9 = arith.constant 0 : index
    %c0_10 = arith.constant 0 : index
    %22 = vector.load %arg3[%c0_9, %c0_10] : memref<1x64xf32, #tpu.memory_space<vmem>>, vector<1x64xf32>
    %23 = vector.broadcast %22 : vector<1x64xf32> to vector<20x64xf32>
    %24 = arith.mulf %21, %23 : vector<20x64xf32>
    %c0_11 = arith.constant 0 : index
    %c0_12 = arith.constant 0 : index
    %25 = vector.load %arg4[%c0_11, %c0_12] : memref<1x64xf32, #tpu.memory_space<vmem>>, vector<1x64xf32>
    %26 = vector.broadcast %25 : vector<1x64xf32> to vector<20x64xf32>
    %27 = arith.addf %24, %26 : vector<20x64xf32>
    %28 = arith.truncf %27 : vector<20x64xf32> to vector<20x64xbf16>
    %c0_13 = arith.constant 0 : index
    %c0_14 = arith.constant 0 : index
    %c0_15 = arith.constant 0 : index
    %29 = vector.load %arg5[%c0_13, %c0_14, %c0_15] : memref<1x20x64xbf16, #tpu.memory_space<vmem>>, vector<1x20x64xbf16>
    %30 = vector.shape_cast %29 : vector<1x20x64xbf16> to vector<20x64xbf16>
    %31 = vector.shape_cast %28 : vector<20x64xbf16> to vector<1x20x64xbf16>
    tpu.vector_store %arg5[%c0_13, %c0_14, %c0_15], %31 {strides = array<i32>} : memref<1x20x64xbf16, #tpu.memory_space<vmem>>, vector<1x20x64xbf16>,
    return
  }
  func.func @transform_0(%arg0: i32) -> (i32, i32, i32) {
    %c0_i32 = arith.constant 0 : i32
    %c0_i32_0 = arith.constant 0 : i32
    %c0_i32_1 = arith.constant 0 : i32
    return %arg0, %c0_i32, %c0_i32_0 : i32, i32, i32
  }
  func.func @transform_1(%arg0: i32) -> (i32, i32, i32) {
    %c0_i32 = arith.constant 0 : i32
    %c0_i32_0 = arith.constant 0 : i32
    %c0_i32_1 = arith.constant 0 : i32
    %c0_i32_2 = arith.constant 0 : i32
    return %c0_i32, %c0_i32_0, %c0_i32_1 : i32, i32, i32
  }
  func.func @transform_2(%arg0: i32) -> (i32, i32) {
    %c0_i32 = arith.constant 0 : i32
    %c0_i32_0 = arith.constant 0 : i32
    %c0_i32_1 = arith.constant 0 : i32
    return %c0_i32, %c0_i32_0 : i32, i32
  }
  func.func @transform_3(%arg0: i32) -> (i32, i32) {
    %c0_i32 = arith.constant 0 : i32
    %c0_i32_0 = arith.constant 0 : i32
    %c0_i32_1 = arith.constant 0 : i32
    return %c0_i32, %c0_i32_0 : i32, i32
  }
  func.func @transform_4(%arg0: i32) -> (i32, i32, i32) {
    %c0_i32 = arith.constant 0 : i32
    %c0_i32_0 = arith.constant 0 : i32
    %c0_i32_1 = arith.constant 0 : i32
    return %arg0, %c0_i32, %c0_i32_0 : i32, i32, i32
  }
}

module attributes {stable_mosaic.version = 11 : i64} {
  func.func @_linear_kernel(%arg0: i32, %arg1: i32, %arg2: i32, %arg3: memref<16x64xbf16, #tpu.memory_space<vmem>>, %arg4: memref<64x64xbf16, #tpu.memory_space<vmem>>, %arg5: memref<1x64xf32, #tpu.memory_space<vmem>>, %arg6: memref<16x64xbf16, #tpu.memory_space<vmem>>, %arg7: memref<16x64xbf16, #tpu.memory_space<vmem>>, %arg8: memref<16x64xf32, #tpu.memory_space<vmem>>) attributes {dimension_semantics = [#tpu.dimension_semantics<parallel>, #tpu.dimension_semantics<parallel>, #tpu.dimension_semantics<arbitrary>], iteration_bounds = array<i64: 1, 1, 1>, scalar_prefetch = 0 : i64, scratch_operands = 1 : i64, tpu.core_type = #tpu.core_type<tc>, window_params = [{transform_indices = @transform_0, window_bounds = array<i64: 16, 64>}, {transform_indices = @transform_1, window_bounds = array<i64: 64, 64>}, {transform_indices = @transform_2, window_bounds = array<i64: 1, 64>}, {transform_indices = @transform_3, window_bounds = array<i64: 16, 64>}, {transform_indices = @transform_4, window_bounds = array<i64: 16, 64>}]} {
    %c0_i32 = arith.constant 0 : i32
    %0 = arith.cmpi eq, %arg2, %c0_i32 : i32
    %1 = arith.extui %0 : i1 to i32
    %c0_i32_0 = arith.constant 0 : i32
    %2 = arith.cmpi ne, %1, %c0_i32_0 : i32
    scf.if %2 {
      %cst_10 = arith.constant 0.000000e+00 : f32
      %12 = vector.broadcast %cst_10 : f32 to vector<16x64xf32>
      %c0_11 = arith.constant 0 : index
      %c0_12 = arith.constant 0 : index
      %13 = vector.load %arg8[%c0_11, %c0_12] : memref<16x64xf32, #tpu.memory_space<vmem>>, vector<16x64xf32>
      tpu.vector_store %arg8[%c0_11, %c0_12], %12 {strides = array<i32>} : memref<16x64xf32, #tpu.memory_space<vmem>>, vector<16x64xf32>,
    } else {
    }
    %c0 = arith.constant 0 : index
    %c0_1 = arith.constant 0 : index
    %3 = vector.load %arg8[%c0, %c0_1] : memref<16x64xf32, #tpu.memory_space<vmem>>, vector<16x64xf32>
    %c0_2 = arith.constant 0 : index
    %c0_3 = arith.constant 0 : index
    %4 = vector.load %arg3[%c0_2, %c0_3] : memref<16x64xbf16, #tpu.memory_space<vmem>>, vector<16x64xbf16>
    %c0_4 = arith.constant 0 : index
    %c0_5 = arith.constant 0 : index
    %5 = vector.load %arg4[%c0_4, %c0_5] : memref<64x64xbf16, #tpu.memory_space<vmem>>, vector<64x64xbf16>
    %cst = arith.constant dense<0.000000e+00> : vector<16x64xf32>
    %6 = tpu.matmul %4, %5, %cst {dimension_numbers = #tpu.dot_dimension_numbers<[1], [0], [0], [1], [0, 0, 1, 1], [], []>} : vector<16x64xbf16>, vector<64x64xbf16>, vector<16x64xf32> -> vector<16x64xf32>
    %7 = arith.addf %3, %6 : vector<16x64xf32>
    %c0_6 = arith.constant 0 : index
    %c0_7 = arith.constant 0 : index
    %8 = vector.load %arg8[%c0_6, %c0_7] : memref<16x64xf32, #tpu.memory_space<vmem>>, vector<16x64xf32>
    tpu.vector_store %arg8[%c0_6, %c0_7], %7 {strides = array<i32>} : memref<16x64xf32, #tpu.memory_space<vmem>>, vector<16x64xf32>,
    %c0_i32_8 = arith.constant 0 : i32
    %9 = arith.cmpi eq, %arg2, %c0_i32_8 : i32
    %10 = arith.extui %9 : i1 to i32
    %c0_i32_9 = arith.constant 0 : i32
    %11 = arith.cmpi ne, %10, %c0_i32_9 : i32
    scf.if %11 {
      %c0_10 = arith.constant 0 : index
      %c0_11 = arith.constant 0 : index
      %12 = vector.load %arg8[%c0_10, %c0_11] : memref<16x64xf32, #tpu.memory_space<vmem>>, vector<16x64xf32>
      %c0_12 = arith.constant 0 : index
      %c0_13 = arith.constant 0 : index
      %13 = vector.load %arg5[%c0_12, %c0_13] : memref<1x64xf32, #tpu.memory_space<vmem>>, vector<1x64xf32>
      %14 = vector.broadcast %13 : vector<1x64xf32> to vector<16x64xf32>
      %15 = arith.addf %12, %14 : vector<16x64xf32>
      %c0_14 = arith.constant 0 : index
      %c0_15 = arith.constant 0 : index
      %16 = vector.load %arg6[%c0_14, %c0_15] : memref<16x64xbf16, #tpu.memory_space<vmem>>, vector<16x64xbf16>
      %17 = arith.extf %16 : vector<16x64xbf16> to vector<16x64xf32>
      %18 = arith.addf %17, %15 : vector<16x64xf32>
      %19 = arith.truncf %18 : vector<16x64xf32> to vector<16x64xbf16>
      %c0_16 = arith.constant 0 : index
      %c0_17 = arith.constant 0 : index
      %20 = vector.load %arg7[%c0_16, %c0_17] : memref<16x64xbf16, #tpu.memory_space<vmem>>, vector<16x64xbf16>
      tpu.vector_store %arg7[%c0_16, %c0_17], %19 {strides = array<i32>} : memref<16x64xbf16, #tpu.memory_space<vmem>>, vector<16x64xbf16>,
    } else {
    }
    return
  }
  func.func @transform_0(%arg0: i32, %arg1: i32, %arg2: i32) -> (i32, i32) {
    %c0_i32 = arith.constant 0 : i32
    return %arg0, %arg2 : i32, i32
  }
  func.func @transform_1(%arg0: i32, %arg1: i32, %arg2: i32) -> (i32, i32) {
    %c0_i32 = arith.constant 0 : i32
    return %arg2, %arg1 : i32, i32
  }
  func.func @transform_2(%arg0: i32, %arg1: i32, %arg2: i32) -> (i32, i32) {
    %c0_i32 = arith.constant 0 : i32
    %c0_i32_0 = arith.constant 0 : i32
    return %c0_i32, %arg1 : i32, i32
  }
  func.func @transform_3(%arg0: i32, %arg1: i32, %arg2: i32) -> (i32, i32) {
    %c0_i32 = arith.constant 0 : i32
    return %arg0, %arg1 : i32, i32
  }
  func.func @transform_4(%arg0: i32, %arg1: i32, %arg2: i32) -> (i32, i32) {
    %c0_i32 = arith.constant 0 : i32
    return %arg0, %arg1 : i32, i32
  }
}

module attributes {stable_mosaic.version = 11 : i64} {
  func.func @_ln_linear_kernel(%arg0: i32, %arg1: i32, %arg2: memref<16x64xbf16, #tpu.memory_space<vmem>>, %arg3: memref<1x64xf32, #tpu.memory_space<vmem>>, %arg4: memref<1x64xf32, #tpu.memory_space<vmem>>, %arg5: memref<64x192xbf16, #tpu.memory_space<vmem>>, %arg6: memref<1x192xf32, #tpu.memory_space<vmem>>, %arg7: memref<16x192xbf16, #tpu.memory_space<vmem>>) attributes {dimension_semantics = [#tpu.dimension_semantics<parallel>, #tpu.dimension_semantics<parallel>], iteration_bounds = array<i64: 1, 1>, scalar_prefetch = 0 : i64, scratch_operands = 0 : i64, tpu.core_type = #tpu.core_type<tc>, window_params = [{transform_indices = @transform_0, window_bounds = array<i64: 16, 64>}, {pipeline_mode = #tpu.pipeline_mode<synchronous>, transform_indices = @transform_1, window_bounds = array<i64: 1, 64>}, {pipeline_mode = #tpu.pipeline_mode<synchronous>, transform_indices = @transform_2, window_bounds = array<i64: 1, 64>}, {transform_indices = @transform_3, window_bounds = array<i64: 64, 192>}, {transform_indices = @transform_4, window_bounds = array<i64: 1, 192>}, {transform_indices = @transform_5, window_bounds = array<i64: 16, 192>}]} {
    %c0 = arith.constant 0 : index
    %c0_0 = arith.constant 0 : index
    %0 = vector.load %arg2[%c0, %c0_0] : memref<16x64xbf16, #tpu.memory_space<vmem>>, vector<16x64xbf16>
    %1 = arith.extf %0 : vector<16x64xbf16> to vector<16x64xf32>
    %cst = arith.constant dense<0.000000e+00> : vector<16xf32>
    %2 = vector.multi_reduction <add>, %1, %cst [1] : vector<16x64xf32> to vector<16xf32>
    %3 = vector.shape_cast %2 : vector<16xf32> to vector<16x1xf32>
    %cst_1 = arith.constant 6.400000e+01 : f32
    %4 = vector.broadcast %cst_1 : f32 to vector<16x1xf32>
    %5 = arith.divf %3, %4 : vector<16x1xf32>
    %6 = vector.broadcast %5 : vector<16x1xf32> to vector<16x64xf32>
    %7 = arith.subf %1, %6 : vector<16x64xf32>
    %8 = arith.mulf %7, %7 : vector<16x64xf32>
    %cst_2 = arith.constant dense<0.000000e+00> : vector<16xf32>
    %9 = vector.multi_reduction <add>, %8, %cst_2 [1] : vector<16x64xf32> to vector<16xf32>
    %10 = vector.shape_cast %9 : vector<16xf32> to vector<16x1xf32>
    %cst_3 = arith.constant 6.400000e+01 : f32
    %11 = vector.broadcast %cst_3 : f32 to vector<16x1xf32>
    %12 = arith.divf %10, %11 : vector<16x1xf32>
    %cst_4 = arith.constant 9.99999997E-7 : f32
    %13 = vector.broadcast %cst_4 : f32 to vector<16x1xf32>
    %14 = arith.addf %12, %13 : vector<16x1xf32>
    %15 = math.rsqrt %14 : vector<16x1xf32>
    %16 = vector.broadcast %15 : vector<16x1xf32> to vector<16x64xf32>
    %17 = arith.mulf %7, %16 : vector<16x64xf32>
    %c0_5 = arith.constant 0 : index
    %c0_6 = arith.constant 0 : index
    %18 = vector.load %arg3[%c0_5, %c0_6] : memref<1x64xf32, #tpu.memory_space<vmem>>, vector<1x64xf32>
    %19 = vector.broadcast %18 : vector<1x64xf32> to vector<16x64xf32>
    %20 = arith.mulf %17, %19 : vector<16x64xf32>
    %c0_7 = arith.constant 0 : index
    %c0_8 = arith.constant 0 : index
    %21 = vector.load %arg4[%c0_7, %c0_8] : memref<1x64xf32, #tpu.memory_space<vmem>>, vector<1x64xf32>
    %22 = vector.broadcast %21 : vector<1x64xf32> to vector<16x64xf32>
    %23 = arith.addf %20, %22 : vector<16x64xf32>
    %24 = arith.truncf %23 : vector<16x64xf32> to vector<16x64xbf16>
    %c0_9 = arith.constant 0 : index
    %c0_10 = arith.constant 0 : index
    %25 = vector.load %arg5[%c0_9, %c0_10] : memref<64x192xbf16, #tpu.memory_space<vmem>>, vector<64x192xbf16>
    %cst_11 = arith.constant dense<0.000000e+00> : vector<16x192xf32>
    %26 = tpu.matmul %24, %25, %cst_11 {dimension_numbers = #tpu.dot_dimension_numbers<[1], [0], [0], [1], [0, 0, 1, 1], [], []>} : vector<16x64xbf16>, vector<64x192xbf16>, vector<16x192xf32> -> vector<16x192xf32>
    %c0_12 = arith.constant 0 : index
    %c0_13 = arith.constant 0 : index
    %27 = vector.load %arg6[%c0_12, %c0_13] : memref<1x192xf32, #tpu.memory_space<vmem>>, vector<1x192xf32>
    %28 = vector.broadcast %27 : vector<1x192xf32> to vector<16x192xf32>
    %29 = arith.addf %26, %28 : vector<16x192xf32>
    %30 = arith.truncf %29 : vector<16x192xf32> to vector<16x192xbf16>
    %c0_14 = arith.constant 0 : index
    %c0_15 = arith.constant 0 : index
    %31 = vector.load %arg7[%c0_14, %c0_15] : memref<16x192xbf16, #tpu.memory_space<vmem>>, vector<16x192xbf16>
    tpu.vector_store %arg7[%c0_14, %c0_15], %30 {strides = array<i32>} : memref<16x192xbf16, #tpu.memory_space<vmem>>, vector<16x192xbf16>,
    return
  }
  func.func @transform_0(%arg0: i32, %arg1: i32) -> (i32, i32) {
    %c0_i32 = arith.constant 0 : i32
    %c0_i32_0 = arith.constant 0 : i32
    return %arg0, %c0_i32 : i32, i32
  }
  func.func @transform_1(%arg0: i32, %arg1: i32) -> (i32, i32) {
    %c0_i32 = arith.constant 0 : i32
    %c0_i32_0 = arith.constant 0 : i32
    %c0_i32_1 = arith.constant 0 : i32
    return %c0_i32, %c0_i32_0 : i32, i32
  }
  func.func @transform_2(%arg0: i32, %arg1: i32) -> (i32, i32) {
    %c0_i32 = arith.constant 0 : i32
    %c0_i32_0 = arith.constant 0 : i32
    %c0_i32_1 = arith.constant 0 : i32
    return %c0_i32, %c0_i32_0 : i32, i32
  }
  func.func @transform_3(%arg0: i32, %arg1: i32) -> (i32, i32) {
    %c0_i32 = arith.constant 0 : i32
    %c0_i32_0 = arith.constant 0 : i32
    return %c0_i32, %arg1 : i32, i32
  }
  func.func @transform_4(%arg0: i32, %arg1: i32) -> (i32, i32) {
    %c0_i32 = arith.constant 0 : i32
    %c0_i32_0 = arith.constant 0 : i32
    return %c0_i32, %arg1 : i32, i32
  }
  func.func @transform_5(%arg0: i32, %arg1: i32) -> (i32, i32) {
    %c0_i32 = arith.constant 0 : i32
    return %arg0, %arg1 : i32, i32
  }
}

module attributes {stable_mosaic.version = 11 : i64} {
  func.func @_attn_kernel(%arg0: i32, %arg1: memref<1x8x192xbf16, #tpu.memory_space<vmem>>, %arg2: memref<1x8x64xbf16, #tpu.memory_space<vmem>>) attributes {dimension_semantics = [#tpu.dimension_semantics<parallel>], iteration_bounds = array<i64: 2>, scalar_prefetch = 0 : i64, scratch_operands = 0 : i64, tpu.core_type = #tpu.core_type<tc>, window_params = [{transform_indices = @transform_0, window_bounds = array<i64: 1, 8, 192>}, {transform_indices = @transform_1, window_bounds = array<i64: 1, 8, 64>}]} {
    %c0 = arith.constant 0 : index
    %c0_0 = arith.constant 0 : index
    %c0_1 = arith.constant 0 : index
    %0 = vector.load %arg1[%c0, %c0_0, %c0_1] : memref<1x8x192xbf16, #tpu.memory_space<vmem>>, vector<1x8x16xbf16>
    %1 = vector.shape_cast %0 : vector<1x8x16xbf16> to vector<8x16xbf16>
    %c0_2 = arith.constant 0 : index
    %c0_3 = arith.constant 0 : index
    %c64 = arith.constant 64 : index
    %2 = vector.load %arg1[%c0_2, %c0_3, %c64] : memref<1x8x192xbf16, #tpu.memory_space<vmem>>, vector<1x8x16xbf16>
    %3 = vector.shape_cast %2 : vector<1x8x16xbf16> to vector<8x16xbf16>
    %c0_4 = arith.constant 0 : index
    %c0_5 = arith.constant 0 : index
    %c128 = arith.constant 128 : index
    %4 = vector.load %arg1[%c0_4, %c0_5, %c128] : memref<1x8x192xbf16, #tpu.memory_space<vmem>>, vector<1x8x16xbf16>
    %5 = vector.shape_cast %4 : vector<1x8x16xbf16> to vector<8x16xbf16>
    %6 = arith.extf %1 : vector<8x16xbf16> to vector<8x16xf32>
    %cst = arith.constant 2.500000e-01 : f32
    %7 = vector.broadcast %cst : f32 to vector<8x16xf32>
    %8 = arith.mulf %6, %7 : vector<8x16xf32>
    %9 = arith.truncf %8 : vector<8x16xf32> to vector<8x16xbf16>
    %cst_6 = arith.constant dense<0.000000e+00> : vector<8x8xf32>
    %10 = tpu.matmul %9, %3, %cst_6 {dimension_numbers = #tpu.dot_dimension_numbers<[1], [1], [0], [0], [0, 0, 1, 0], [], []>} : vector<8x16xbf16>, vector<8x16xbf16>, vector<8x8xf32> -> vector<8x8xf32>
    %cst_7 = arith.constant dense<0xFF800000> : vector<8xf32>
    %11 = vector.multi_reduction <maximumf>, %10, %cst_7 [1] : vector<8x8xf32> to vector<8xf32>
    %12 = vector.shape_cast %11 : vector<8xf32> to vector<8x1xf32>
    %13 = vector.broadcast %12 : vector<8x1xf32> to vector<8x8xf32>
    %14 = arith.subf %10, %13 : vector<8x8xf32>
    %15 = math.exp %14 : vector<8x8xf32>
    %cst_8 = arith.constant dense<0.000000e+00> : vector<8xf32>
    %16 = vector.multi_reduction <add>, %15, %cst_8 [1] : vector<8x8xf32> to vector<8xf32>
    %17 = vector.shape_cast %16 : vector<8xf32> to vector<8x1xf32>
    %18 = tpu.reciprocal %17 {approx = true} : vector<8x1xf32> -> vector<8x1xf32>
    %19 = vector.broadcast %18 : vector<8x1xf32> to vector<8x8xf32>
    %20 = arith.mulf %15, %19 : vector<8x8xf32>
    %21 = arith.truncf %20 : vector<8x8xf32> to vector<8x8xbf16>
    %cst_9 = arith.constant dense<0.000000e+00> : vector<8x16xf32>
    %22 = tpu.matmul %21, %5, %cst_9 {dimension_numbers = #tpu.dot_dimension_numbers<[1], [0], [0], [1], [0, 0, 1, 1], [], []>} : vector<8x8xbf16>, vector<8x16xbf16>, vector<8x16xf32> -> vector<8x16xf32>
    %23 = arith.truncf %22 : vector<8x16xf32> to vector<8x16xbf16>
    %c0_10 = arith.constant 0 : index
    %c0_11 = arith.constant 0 : index
    %c0_12 = arith.constant 0 : index
    %24 = vector.load %arg2[%c0_10, %c0_11, %c0_12] : memref<1x8x64xbf16, #tpu.memory_space<vmem>>, vector<1x8x16xbf16>
    %25 = vector.shape_cast %24 : vector<1x8x16xbf16> to vector<8x16xbf16>
    %26 = vector.shape_cast %23 : vector<8x16xbf16> to vector<1x8x16xbf16>
    tpu.vector_store %arg2[%c0_10, %c0_11, %c0_12], %26 {strides = array<i32>} : memref<1x8x64xbf16, #tpu.memory_space<vmem>>, vector<1x8x16xbf16>,
    %c0_13 = arith.constant 0 : index
    %c0_14 = arith.constant 0 : index
    %c16 = arith.constant 16 : index
    %27 = vector.load %arg1[%c0_13, %c0_14, %c16] : memref<1x8x192xbf16, #tpu.memory_space<vmem>>, vector<1x8x16xbf16>
    %28 = vector.shape_cast %27 : vector<1x8x16xbf16> to vector<8x16xbf16>
    %c0_15 = arith.constant 0 : index
    %c0_16 = arith.constant 0 : index
    %c80 = arith.constant 80 : index
    %29 = vector.load %arg1[%c0_15, %c0_16, %c80] : memref<1x8x192xbf16, #tpu.memory_space<vmem>>, vector<1x8x16xbf16>
    %30 = vector.shape_cast %29 : vector<1x8x16xbf16> to vector<8x16xbf16>
    %c0_17 = arith.constant 0 : index
    %c0_18 = arith.constant 0 : index
    %c144 = arith.constant 144 : index
    %31 = vector.load %arg1[%c0_17, %c0_18, %c144] : memref<1x8x192xbf16, #tpu.memory_space<vmem>>, vector<1x8x16xbf16>
    %32 = vector.shape_cast %31 : vector<1x8x16xbf16> to vector<8x16xbf16>
    %33 = arith.extf %28 : vector<8x16xbf16> to vector<8x16xf32>
    %cst_19 = arith.constant 2.500000e-01 : f32
    %34 = vector.broadcast %cst_19 : f32 to vector<8x16xf32>
    %35 = arith.mulf %33, %34 : vector<8x16xf32>
    %36 = arith.truncf %35 : vector<8x16xf32> to vector<8x16xbf16>
    %cst_20 = arith.constant dense<0.000000e+00> : vector<8x8xf32>
    %37 = tpu.matmul %36, %30, %cst_20 {dimension_numbers = #tpu.dot_dimension_numbers<[1], [1], [0], [0], [0, 0, 1, 0], [], []>} : vector<8x16xbf16>, vector<8x16xbf16>, vector<8x8xf32> -> vector<8x8xf32>
    %cst_21 = arith.constant dense<0xFF800000> : vector<8xf32>
    %38 = vector.multi_reduction <maximumf>, %37, %cst_21 [1] : vector<8x8xf32> to vector<8xf32>
    %39 = vector.shape_cast %38 : vector<8xf32> to vector<8x1xf32>
    %40 = vector.broadcast %39 : vector<8x1xf32> to vector<8x8xf32>
    %41 = arith.subf %37, %40 : vector<8x8xf32>
    %42 = math.exp %41 : vector<8x8xf32>
    %cst_22 = arith.constant dense<0.000000e+00> : vector<8xf32>
    %43 = vector.multi_reduction <add>, %42, %cst_22 [1] : vector<8x8xf32> to vector<8xf32>
    %44 = vector.shape_cast %43 : vector<8xf32> to vector<8x1xf32>
    %45 = tpu.reciprocal %44 {approx = true} : vector<8x1xf32> -> vector<8x1xf32>
    %46 = vector.broadcast %45 : vector<8x1xf32> to vector<8x8xf32>
    %47 = arith.mulf %42, %46 : vector<8x8xf32>
    %48 = arith.truncf %47 : vector<8x8xf32> to vector<8x8xbf16>
    %cst_23 = arith.constant dense<0.000000e+00> : vector<8x16xf32>
    %49 = tpu.matmul %48, %32, %cst_23 {dimension_numbers = #tpu.dot_dimension_numbers<[1], [0], [0], [1], [0, 0, 1, 1], [], []>} : vector<8x8xbf16>, vector<8x16xbf16>, vector<8x16xf32> -> vector<8x16xf32>
    %50 = arith.truncf %49 : vector<8x16xf32> to vector<8x16xbf16>
    %c0_24 = arith.constant 0 : index
    %c0_25 = arith.constant 0 : index
    %c16_26 = arith.constant 16 : index
    %51 = vector.load %arg2[%c0_24, %c0_25, %c16_26] : memref<1x8x64xbf16, #tpu.memory_space<vmem>>, vector<1x8x16xbf16>
    %52 = vector.shape_cast %51 : vector<1x8x16xbf16> to vector<8x16xbf16>
    %53 = vector.shape_cast %50 : vector<8x16xbf16> to vector<1x8x16xbf16>
    tpu.vector_store %arg2[%c0_24, %c0_25, %c16_26], %53 {strides = array<i32>} : memref<1x8x64xbf16, #tpu.memory_space<vmem>>, vector<1x8x16xbf16>,
    %c0_27 = arith.constant 0 : index
    %c0_28 = arith.constant 0 : index
    %c32 = arith.constant 32 : index
    %54 = vector.load %arg1[%c0_27, %c0_28, %c32] : memref<1x8x192xbf16, #tpu.memory_space<vmem>>, vector<1x8x16xbf16>
    %55 = vector.shape_cast %54 : vector<1x8x16xbf16> to vector<8x16xbf16>
    %c0_29 = arith.constant 0 : index
    %c0_30 = arith.constant 0 : index
    %c96 = arith.constant 96 : index
    %56 = vector.load %arg1[%c0_29, %c0_30, %c96] : memref<1x8x192xbf16, #tpu.memory_space<vmem>>, vector<1x8x16xbf16>
    %57 = vector.shape_cast %56 : vector<1x8x16xbf16> to vector<8x16xbf16>
    %c0_31 = arith.constant 0 : index
    %c0_32 = arith.constant 0 : index
    %c160 = arith.constant 160 : index
    %58 = vector.load %arg1[%c0_31, %c0_32, %c160] : memref<1x8x192xbf16, #tpu.memory_space<vmem>>, vector<1x8x16xbf16>
    %59 = vector.shape_cast %58 : vector<1x8x16xbf16> to vector<8x16xbf16>
    %60 = arith.extf %55 : vector<8x16xbf16> to vector<8x16xf32>
    %cst_33 = arith.constant 2.500000e-01 : f32
    %61 = vector.broadcast %cst_33 : f32 to vector<8x16xf32>
    %62 = arith.mulf %60, %61 : vector<8x16xf32>
    %63 = arith.truncf %62 : vector<8x16xf32> to vector<8x16xbf16>
    %cst_34 = arith.constant dense<0.000000e+00> : vector<8x8xf32>
    %64 = tpu.matmul %63, %57, %cst_34 {dimension_numbers = #tpu.dot_dimension_numbers<[1], [1], [0], [0], [0, 0, 1, 0], [], []>} : vector<8x16xbf16>, vector<8x16xbf16>, vector<8x8xf32> -> vector<8x8xf32>
    %cst_35 = arith.constant dense<0xFF800000> : vector<8xf32>
    %65 = vector.multi_reduction <maximumf>, %64, %cst_35 [1] : vector<8x8xf32> to vector<8xf32>
    %66 = vector.shape_cast %65 : vector<8xf32> to vector<8x1xf32>
    %67 = vector.broadcast %66 : vector<8x1xf32> to vector<8x8xf32>
    %68 = arith.subf %64, %67 : vector<8x8xf32>
    %69 = math.exp %68 : vector<8x8xf32>
    %cst_36 = arith.constant dense<0.000000e+00> : vector<8xf32>
    %70 = vector.multi_reduction <add>, %69, %cst_36 [1] : vector<8x8xf32> to vector<8xf32>
    %71 = vector.shape_cast %70 : vector<8xf32> to vector<8x1xf32>
    %72 = tpu.reciprocal %71 {approx = true} : vector<8x1xf32> -> vector<8x1xf32>
    %73 = vector.broadcast %72 : vector<8x1xf32> to vector<8x8xf32>
    %74 = arith.mulf %69, %73 : vector<8x8xf32>
    %75 = arith.truncf %74 : vector<8x8xf32> to vector<8x8xbf16>
    %cst_37 = arith.constant dense<0.000000e+00> : vector<8x16xf32>
    %76 = tpu.matmul %75, %59, %cst_37 {dimension_numbers = #tpu.dot_dimension_numbers<[1], [0], [0], [1], [0, 0, 1, 1], [], []>} : vector<8x8xbf16>, vector<8x16xbf16>, vector<8x16xf32> -> vector<8x16xf32>
    %77 = arith.truncf %76 : vector<8x16xf32> to vector<8x16xbf16>
    %c0_38 = arith.constant 0 : index
    %c0_39 = arith.constant 0 : index
    %c32_40 = arith.constant 32 : index
    %78 = vector.load %arg2[%c0_38, %c0_39, %c32_40] : memref<1x8x64xbf16, #tpu.memory_space<vmem>>, vector<1x8x16xbf16>
    %79 = vector.shape_cast %78 : vector<1x8x16xbf16> to vector<8x16xbf16>
    %80 = vector.shape_cast %77 : vector<8x16xbf16> to vector<1x8x16xbf16>
    tpu.vector_store %arg2[%c0_38, %c0_39, %c32_40], %80 {strides = array<i32>} : memref<1x8x64xbf16, #tpu.memory_space<vmem>>, vector<1x8x16xbf16>,
    %c0_41 = arith.constant 0 : index
    %c0_42 = arith.constant 0 : index
    %c48 = arith.constant 48 : index
    %81 = vector.load %arg1[%c0_41, %c0_42, %c48] : memref<1x8x192xbf16, #tpu.memory_space<vmem>>, vector<1x8x16xbf16>
    %82 = vector.shape_cast %81 : vector<1x8x16xbf16> to vector<8x16xbf16>
    %c0_43 = arith.constant 0 : index
    %c0_44 = arith.constant 0 : index
    %c112 = arith.constant 112 : index
    %83 = vector.load %arg1[%c0_43, %c0_44, %c112] : memref<1x8x192xbf16, #tpu.memory_space<vmem>>, vector<1x8x16xbf16>
    %84 = vector.shape_cast %83 : vector<1x8x16xbf16> to vector<8x16xbf16>
    %c0_45 = arith.constant 0 : index
    %c0_46 = arith.constant 0 : index
    %c176 = arith.constant 176 : index
    %85 = vector.load %arg1[%c0_45, %c0_46, %c176] : memref<1x8x192xbf16, #tpu.memory_space<vmem>>, vector<1x8x16xbf16>
    %86 = vector.shape_cast %85 : vector<1x8x16xbf16> to vector<8x16xbf16>
    %87 = arith.extf %82 : vector<8x16xbf16> to vector<8x16xf32>
    %cst_47 = arith.constant 2.500000e-01 : f32
    %88 = vector.broadcast %cst_47 : f32 to vector<8x16xf32>
    %89 = arith.mulf %87, %88 : vector<8x16xf32>
    %90 = arith.truncf %89 : vector<8x16xf32> to vector<8x16xbf16>
    %cst_48 = arith.constant dense<0.000000e+00> : vector<8x8xf32>
    %91 = tpu.matmul %90, %84, %cst_48 {dimension_numbers = #tpu.dot_dimension_numbers<[1], [1], [0], [0], [0, 0, 1, 0], [], []>} : vector<8x16xbf16>, vector<8x16xbf16>, vector<8x8xf32> -> vector<8x8xf32>
    %cst_49 = arith.constant dense<0xFF800000> : vector<8xf32>
    %92 = vector.multi_reduction <maximumf>, %91, %cst_49 [1] : vector<8x8xf32> to vector<8xf32>
    %93 = vector.shape_cast %92 : vector<8xf32> to vector<8x1xf32>
    %94 = vector.broadcast %93 : vector<8x1xf32> to vector<8x8xf32>
    %95 = arith.subf %91, %94 : vector<8x8xf32>
    %96 = math.exp %95 : vector<8x8xf32>
    %cst_50 = arith.constant dense<0.000000e+00> : vector<8xf32>
    %97 = vector.multi_reduction <add>, %96, %cst_50 [1] : vector<8x8xf32> to vector<8xf32>
    %98 = vector.shape_cast %97 : vector<8xf32> to vector<8x1xf32>
    %99 = tpu.reciprocal %98 {approx = true} : vector<8x1xf32> -> vector<8x1xf32>
    %100 = vector.broadcast %99 : vector<8x1xf32> to vector<8x8xf32>
    %101 = arith.mulf %96, %100 : vector<8x8xf32>
    %102 = arith.truncf %101 : vector<8x8xf32> to vector<8x8xbf16>
    %cst_51 = arith.constant dense<0.000000e+00> : vector<8x16xf32>
    %103 = tpu.matmul %102, %86, %cst_51 {dimension_numbers = #tpu.dot_dimension_numbers<[1], [0], [0], [1], [0, 0, 1, 1], [], []>} : vector<8x8xbf16>, vector<8x16xbf16>, vector<8x16xf32> -> vector<8x16xf32>
    %104 = arith.truncf %103 : vector<8x16xf32> to vector<8x16xbf16>
    %c0_52 = arith.constant 0 : index
    %c0_53 = arith.constant 0 : index
    %c48_54 = arith.constant 48 : index
    %105 = vector.load %arg2[%c0_52, %c0_53, %c48_54] : memref<1x8x64xbf16, #tpu.memory_space<vmem>>, vector<1x8x16xbf16>
    %106 = vector.shape_cast %105 : vector<1x8x16xbf16> to vector<8x16xbf16>
    %107 = vector.shape_cast %104 : vector<8x16xbf16> to vector<1x8x16xbf16>
    tpu.vector_store %arg2[%c0_52, %c0_53, %c48_54], %107 {strides = array<i32>} : memref<1x8x64xbf16, #tpu.memory_space<vmem>>, vector<1x8x16xbf16>,
    return
  }
  func.func @transform_0(%arg0: i32) -> (i32, i32, i32) {
    %c0_i32 = arith.constant 0 : i32
    %c0_i32_0 = arith.constant 0 : i32
    %c0_i32_1 = arith.constant 0 : i32
    return %arg0, %c0_i32, %c0_i32_0 : i32, i32, i32
  }
  func.func @transform_1(%arg0: i32) -> (i32, i32, i32) {
    %c0_i32 = arith.constant 0 : i32
    %c0_i32_0 = arith.constant 0 : i32
    %c0_i32_1 = arith.constant 0 : i32
    return %arg0, %c0_i32, %c0_i32_0 : i32, i32, i32
  }
}

module attributes {stable_mosaic.version = 11 : i64} {
  func.func @_ln_linear_kernel(%arg0: i32, %arg1: i32, %arg2: memref<16x64xbf16, #tpu.memory_space<vmem>>, %arg3: memref<1x64xf32, #tpu.memory_space<vmem>>, %arg4: memref<1x64xf32, #tpu.memory_space<vmem>>, %arg5: memref<64x256xbf16, #tpu.memory_space<vmem>>, %arg6: memref<1x256xf32, #tpu.memory_space<vmem>>, %arg7: memref<16x256xbf16, #tpu.memory_space<vmem>>) attributes {dimension_semantics = [#tpu.dimension_semantics<parallel>, #tpu.dimension_semantics<parallel>], iteration_bounds = array<i64: 1, 1>, scalar_prefetch = 0 : i64, scratch_operands = 0 : i64, tpu.core_type = #tpu.core_type<tc>, window_params = [{transform_indices = @transform_0, window_bounds = array<i64: 16, 64>}, {pipeline_mode = #tpu.pipeline_mode<synchronous>, transform_indices = @transform_1, window_bounds = array<i64: 1, 64>}, {pipeline_mode = #tpu.pipeline_mode<synchronous>, transform_indices = @transform_2, window_bounds = array<i64: 1, 64>}, {transform_indices = @transform_3, window_bounds = array<i64: 64, 256>}, {transform_indices = @transform_4, window_bounds = array<i64: 1, 256>}, {transform_indices = @transform_5, window_bounds = array<i64: 16, 256>}]} {
    %c0 = arith.constant 0 : index
    %c0_0 = arith.constant 0 : index
    %0 = vector.load %arg2[%c0, %c0_0] : memref<16x64xbf16, #tpu.memory_space<vmem>>, vector<16x64xbf16>
    %1 = arith.extf %0 : vector<16x64xbf16> to vector<16x64xf32>
    %cst = arith.constant dense<0.000000e+00> : vector<16xf32>
    %2 = vector.multi_reduction <add>, %1, %cst [1] : vector<16x64xf32> to vector<16xf32>
    %3 = vector.shape_cast %2 : vector<16xf32> to vector<16x1xf32>
    %cst_1 = arith.constant 6.400000e+01 : f32
    %4 = vector.broadcast %cst_1 : f32 to vector<16x1xf32>
    %5 = arith.divf %3, %4 : vector<16x1xf32>
    %6 = vector.broadcast %5 : vector<16x1xf32> to vector<16x64xf32>
    %7 = arith.subf %1, %6 : vector<16x64xf32>
    %8 = arith.mulf %7, %7 : vector<16x64xf32>
    %cst_2 = arith.constant dense<0.000000e+00> : vector<16xf32>
    %9 = vector.multi_reduction <add>, %8, %cst_2 [1] : vector<16x64xf32> to vector<16xf32>
    %10 = vector.shape_cast %9 : vector<16xf32> to vector<16x1xf32>
    %cst_3 = arith.constant 6.400000e+01 : f32
    %11 = vector.broadcast %cst_3 : f32 to vector<16x1xf32>
    %12 = arith.divf %10, %11 : vector<16x1xf32>
    %cst_4 = arith.constant 9.99999997E-7 : f32
    %13 = vector.broadcast %cst_4 : f32 to vector<16x1xf32>
    %14 = arith.addf %12, %13 : vector<16x1xf32>
    %15 = math.rsqrt %14 : vector<16x1xf32>
    %16 = vector.broadcast %15 : vector<16x1xf32> to vector<16x64xf32>
    %17 = arith.mulf %7, %16 : vector<16x64xf32>
    %c0_5 = arith.constant 0 : index
    %c0_6 = arith.constant 0 : index
    %18 = vector.load %arg3[%c0_5, %c0_6] : memref<1x64xf32, #tpu.memory_space<vmem>>, vector<1x64xf32>
    %19 = vector.broadcast %18 : vector<1x64xf32> to vector<16x64xf32>
    %20 = arith.mulf %17, %19 : vector<16x64xf32>
    %c0_7 = arith.constant 0 : index
    %c0_8 = arith.constant 0 : index
    %21 = vector.load %arg4[%c0_7, %c0_8] : memref<1x64xf32, #tpu.memory_space<vmem>>, vector<1x64xf32>
    %22 = vector.broadcast %21 : vector<1x64xf32> to vector<16x64xf32>
    %23 = arith.addf %20, %22 : vector<16x64xf32>
    %24 = arith.truncf %23 : vector<16x64xf32> to vector<16x64xbf16>
    %c0_9 = arith.constant 0 : index
    %c0_10 = arith.constant 0 : index
    %25 = vector.load %arg5[%c0_9, %c0_10] : memref<64x256xbf16, #tpu.memory_space<vmem>>, vector<64x256xbf16>
    %cst_11 = arith.constant dense<0.000000e+00> : vector<16x256xf32>
    %26 = tpu.matmul %24, %25, %cst_11 {dimension_numbers = #tpu.dot_dimension_numbers<[1], [0], [0], [1], [0, 0, 1, 1], [], []>} : vector<16x64xbf16>, vector<64x256xbf16>, vector<16x256xf32> -> vector<16x256xf32>
    %c0_12 = arith.constant 0 : index
    %c0_13 = arith.constant 0 : index
    %27 = vector.load %arg6[%c0_12, %c0_13] : memref<1x256xf32, #tpu.memory_space<vmem>>, vector<1x256xf32>
    %28 = vector.broadcast %27 : vector<1x256xf32> to vector<16x256xf32>
    %29 = arith.addf %26, %28 : vector<16x256xf32>
    %30 = arith.mulf %29, %29 : vector<16x256xf32>
    %31 = arith.mulf %29, %30 : vector<16x256xf32>
    %cst_14 = arith.constant 4.471500e-02 : f32
    %32 = vector.broadcast %cst_14 : f32 to vector<16x256xf32>
    %33 = arith.mulf %32, %31 : vector<16x256xf32>
    %34 = arith.addf %29, %33 : vector<16x256xf32>
    %cst_15 = arith.constant 0.797884583 : f32
    %35 = vector.broadcast %cst_15 : f32 to vector<16x256xf32>
    %36 = arith.mulf %35, %34 : vector<16x256xf32>
    %37 = math.tanh %36 : vector<16x256xf32>
    %cst_16 = arith.constant 1.000000e+00 : f32
    %38 = vector.broadcast %cst_16 : f32 to vector<16x256xf32>
    %39 = arith.addf %38, %37 : vector<16x256xf32>
    %cst_17 = arith.constant 5.000000e-01 : f32
    %40 = vector.broadcast %cst_17 : f32 to vector<16x256xf32>
    %41 = arith.mulf %40, %39 : vector<16x256xf32>
    %42 = arith.mulf %29, %41 : vector<16x256xf32>
    %43 = arith.truncf %42 : vector<16x256xf32> to vector<16x256xbf16>
    %c0_18 = arith.constant 0 : index
    %c0_19 = arith.constant 0 : index
    %44 = vector.load %arg7[%c0_18, %c0_19] : memref<16x256xbf16, #tpu.memory_space<vmem>>, vector<16x256xbf16>
    tpu.vector_store %arg7[%c0_18, %c0_19], %43 {strides = array<i32>} : memref<16x256xbf16, #tpu.memory_space<vmem>>, vector<16x256xbf16>,
    return
  }
  func.func @transform_0(%arg0: i32, %arg1: i32) -> (i32, i32) {
    %c0_i32 = arith.constant 0 : i32
    %c0_i32_0 = arith.constant 0 : i32
    return %arg0, %c0_i32 : i32, i32
  }
  func.func @transform_1(%arg0: i32, %arg1: i32) -> (i32, i32) {
    %c0_i32 = arith.constant 0 : i32
    %c0_i32_0 = arith.constant 0 : i32
    %c0_i32_1 = arith.constant 0 : i32
    return %c0_i32, %c0_i32_0 : i32, i32
  }
  func.func @transform_2(%arg0: i32, %arg1: i32) -> (i32, i32) {
    %c0_i32 = arith.constant 0 : i32
    %c0_i32_0 = arith.constant 0 : i32
    %c0_i32_1 = arith.constant 0 : i32
    return %c0_i32, %c0_i32_0 : i32, i32
  }
  func.func @transform_3(%arg0: i32, %arg1: i32) -> (i32, i32) {
    %c0_i32 = arith.constant 0 : i32
    %c0_i32_0 = arith.constant 0 : i32
    return %c0_i32, %arg1 : i32, i32
  }
  func.func @transform_4(%arg0: i32, %arg1: i32) -> (i32, i32) {
    %c0_i32 = arith.constant 0 : i32
    %c0_i32_0 = arith.constant 0 : i32
    return %c0_i32, %arg1 : i32, i32
  }
  func.func @transform_5(%arg0: i32, %arg1: i32) -> (i32, i32) {
    %c0_i32 = arith.constant 0 : i32
    return %arg0, %arg1 : i32, i32
  }
}

module attributes {stable_mosaic.version = 11 : i64} {
  func.func @_linear_kernel(%arg0: i32, %arg1: i32, %arg2: i32, %arg3: memref<16x256xbf16, #tpu.memory_space<vmem>>, %arg4: memref<256x64xbf16, #tpu.memory_space<vmem>>, %arg5: memref<1x64xf32, #tpu.memory_space<vmem>>, %arg6: memref<16x64xbf16, #tpu.memory_space<vmem>>, %arg7: memref<16x64xbf16, #tpu.memory_space<vmem>>, %arg8: memref<16x64xf32, #tpu.memory_space<vmem>>) attributes {dimension_semantics = [#tpu.dimension_semantics<parallel>, #tpu.dimension_semantics<parallel>, #tpu.dimension_semantics<arbitrary>], iteration_bounds = array<i64: 1, 1, 1>, scalar_prefetch = 0 : i64, scratch_operands = 1 : i64, tpu.core_type = #tpu.core_type<tc>, window_params = [{transform_indices = @transform_0, window_bounds = array<i64: 16, 256>}, {transform_indices = @transform_1, window_bounds = array<i64: 256, 64>}, {transform_indices = @transform_2, window_bounds = array<i64: 1, 64>}, {transform_indices = @transform_3, window_bounds = array<i64: 16, 64>}, {transform_indices = @transform_4, window_bounds = array<i64: 16, 64>}]} {
    %c0_i32 = arith.constant 0 : i32
    %0 = arith.cmpi eq, %arg2, %c0_i32 : i32
    %1 = arith.extui %0 : i1 to i32
    %c0_i32_0 = arith.constant 0 : i32
    %2 = arith.cmpi ne, %1, %c0_i32_0 : i32
    scf.if %2 {
      %cst_10 = arith.constant 0.000000e+00 : f32
      %12 = vector.broadcast %cst_10 : f32 to vector<16x64xf32>
      %c0_11 = arith.constant 0 : index
      %c0_12 = arith.constant 0 : index
      %13 = vector.load %arg8[%c0_11, %c0_12] : memref<16x64xf32, #tpu.memory_space<vmem>>, vector<16x64xf32>
      tpu.vector_store %arg8[%c0_11, %c0_12], %12 {strides = array<i32>} : memref<16x64xf32, #tpu.memory_space<vmem>>, vector<16x64xf32>,
    } else {
    }
    %c0 = arith.constant 0 : index
    %c0_1 = arith.constant 0 : index
    %3 = vector.load %arg8[%c0, %c0_1] : memref<16x64xf32, #tpu.memory_space<vmem>>, vector<16x64xf32>
    %c0_2 = arith.constant 0 : index
    %c0_3 = arith.constant 0 : index
    %4 = vector.load %arg3[%c0_2, %c0_3] : memref<16x256xbf16, #tpu.memory_space<vmem>>, vector<16x256xbf16>
    %c0_4 = arith.constant 0 : index
    %c0_5 = arith.constant 0 : index
    %5 = vector.load %arg4[%c0_4, %c0_5] : memref<256x64xbf16, #tpu.memory_space<vmem>>, vector<256x64xbf16>
    %cst = arith.constant dense<0.000000e+00> : vector<16x64xf32>
    %6 = tpu.matmul %4, %5, %cst {dimension_numbers = #tpu.dot_dimension_numbers<[1], [0], [0], [1], [0, 0, 1, 1], [], []>} : vector<16x256xbf16>, vector<256x64xbf16>, vector<16x64xf32> -> vector<16x64xf32>
    %7 = arith.addf %3, %6 : vector<16x64xf32>
    %c0_6 = arith.constant 0 : index
    %c0_7 = arith.constant 0 : index
    %8 = vector.load %arg8[%c0_6, %c0_7] : memref<16x64xf32, #tpu.memory_space<vmem>>, vector<16x64xf32>
    tpu.vector_store %arg8[%c0_6, %c0_7], %7 {strides = array<i32>} : memref<16x64xf32, #tpu.memory_space<vmem>>, vector<16x64xf32>,
    %c0_i32_8 = arith.constant 0 : i32
    %9 = arith.cmpi eq, %arg2, %c0_i32_8 : i32
    %10 = arith.extui %9 : i1 to i32
    %c0_i32_9 = arith.constant 0 : i32
    %11 = arith.cmpi ne, %10, %c0_i32_9 : i32
    scf.if %11 {
      %c0_10 = arith.constant 0 : index
      %c0_11 = arith.constant 0 : index
      %12 = vector.load %arg8[%c0_10, %c0_11] : memref<16x64xf32, #tpu.memory_space<vmem>>, vector<16x64xf32>
      %c0_12 = arith.constant 0 : index
      %c0_13 = arith.constant 0 : index
      %13 = vector.load %arg5[%c0_12, %c0_13] : memref<1x64xf32, #tpu.memory_space<vmem>>, vector<1x64xf32>
      %14 = vector.broadcast %13 : vector<1x64xf32> to vector<16x64xf32>
      %15 = arith.addf %12, %14 : vector<16x64xf32>
      %c0_14 = arith.constant 0 : index
      %c0_15 = arith.constant 0 : index
      %16 = vector.load %arg6[%c0_14, %c0_15] : memref<16x64xbf16, #tpu.memory_space<vmem>>, vector<16x64xbf16>
      %17 = arith.extf %16 : vector<16x64xbf16> to vector<16x64xf32>
      %18 = arith.addf %17, %15 : vector<16x64xf32>
      %19 = arith.truncf %18 : vector<16x64xf32> to vector<16x64xbf16>
      %c0_16 = arith.constant 0 : index
      %c0_17 = arith.constant 0 : index
      %20 = vector.load %arg7[%c0_16, %c0_17] : memref<16x64xbf16, #tpu.memory_space<vmem>>, vector<16x64xbf16>
      tpu.vector_store %arg7[%c0_16, %c0_17], %19 {strides = array<i32>} : memref<16x64xbf16, #tpu.memory_space<vmem>>, vector<16x64xbf16>,
    } else {
    }
    return
  }
  func.func @transform_0(%arg0: i32, %arg1: i32, %arg2: i32) -> (i32, i32) {
    %c0_i32 = arith.constant 0 : i32
    return %arg0, %arg2 : i32, i32
  }
  func.func @transform_1(%arg0: i32, %arg1: i32, %arg2: i32) -> (i32, i32) {
    %c0_i32 = arith.constant 0 : i32
    return %arg2, %arg1 : i32, i32
  }
  func.func @transform_2(%arg0: i32, %arg1: i32, %arg2: i32) -> (i32, i32) {
    %c0_i32 = arith.constant 0 : i32
    %c0_i32_0 = arith.constant 0 : i32
    return %c0_i32, %arg1 : i32, i32
  }
  func.func @transform_3(%arg0: i32, %arg1: i32, %arg2: i32) -> (i32, i32) {
    %c0_i32 = arith.constant 0 : i32
    return %arg0, %arg1 : i32, i32
  }
  func.func @transform_4(%arg0: i32, %arg1: i32, %arg2: i32) -> (i32, i32) {
    %c0_i32 = arith.constant 0 : i32
    return %arg0, %arg1 : i32, i32
  }
}

module attributes {stable_mosaic.version = 11 : i64} {
  func.func @_ln_linear_kernel(%arg0: i32, %arg1: i32, %arg2: memref<16x64xbf16, #tpu.memory_space<vmem>>, %arg3: memref<1x64xf32, #tpu.memory_space<vmem>>, %arg4: memref<1x64xf32, #tpu.memory_space<vmem>>, %arg5: memref<64x64xbf16, #tpu.memory_space<vmem>>, %arg6: memref<1x64xf32, #tpu.memory_space<vmem>>, %arg7: memref<16x64xbf16, #tpu.memory_space<vmem>>) attributes {dimension_semantics = [#tpu.dimension_semantics<parallel>, #tpu.dimension_semantics<parallel>], iteration_bounds = array<i64: 1, 1>, scalar_prefetch = 0 : i64, scratch_operands = 0 : i64, tpu.core_type = #tpu.core_type<tc>, window_params = [{transform_indices = @transform_0, window_bounds = array<i64: 16, 64>}, {pipeline_mode = #tpu.pipeline_mode<synchronous>, transform_indices = @transform_1, window_bounds = array<i64: 1, 64>}, {pipeline_mode = #tpu.pipeline_mode<synchronous>, transform_indices = @transform_2, window_bounds = array<i64: 1, 64>}, {transform_indices = @transform_3, window_bounds = array<i64: 64, 64>}, {transform_indices = @transform_4, window_bounds = array<i64: 1, 64>}, {transform_indices = @transform_5, window_bounds = array<i64: 16, 64>}]} {
    %c0 = arith.constant 0 : index
    %c0_0 = arith.constant 0 : index
    %0 = vector.load %arg2[%c0, %c0_0] : memref<16x64xbf16, #tpu.memory_space<vmem>>, vector<16x64xbf16>
    %1 = arith.extf %0 : vector<16x64xbf16> to vector<16x64xf32>
    %cst = arith.constant dense<0.000000e+00> : vector<16xf32>
    %2 = vector.multi_reduction <add>, %1, %cst [1] : vector<16x64xf32> to vector<16xf32>
    %3 = vector.shape_cast %2 : vector<16xf32> to vector<16x1xf32>
    %cst_1 = arith.constant 6.400000e+01 : f32
    %4 = vector.broadcast %cst_1 : f32 to vector<16x1xf32>
    %5 = arith.divf %3, %4 : vector<16x1xf32>
    %6 = vector.broadcast %5 : vector<16x1xf32> to vector<16x64xf32>
    %7 = arith.subf %1, %6 : vector<16x64xf32>
    %8 = arith.mulf %7, %7 : vector<16x64xf32>
    %cst_2 = arith.constant dense<0.000000e+00> : vector<16xf32>
    %9 = vector.multi_reduction <add>, %8, %cst_2 [1] : vector<16x64xf32> to vector<16xf32>
    %10 = vector.shape_cast %9 : vector<16xf32> to vector<16x1xf32>
    %cst_3 = arith.constant 6.400000e+01 : f32
    %11 = vector.broadcast %cst_3 : f32 to vector<16x1xf32>
    %12 = arith.divf %10, %11 : vector<16x1xf32>
    %cst_4 = arith.constant 9.99999997E-7 : f32
    %13 = vector.broadcast %cst_4 : f32 to vector<16x1xf32>
    %14 = arith.addf %12, %13 : vector<16x1xf32>
    %15 = math.rsqrt %14 : vector<16x1xf32>
    %16 = vector.broadcast %15 : vector<16x1xf32> to vector<16x64xf32>
    %17 = arith.mulf %7, %16 : vector<16x64xf32>
    %c0_5 = arith.constant 0 : index
    %c0_6 = arith.constant 0 : index
    %18 = vector.load %arg3[%c0_5, %c0_6] : memref<1x64xf32, #tpu.memory_space<vmem>>, vector<1x64xf32>
    %19 = vector.broadcast %18 : vector<1x64xf32> to vector<16x64xf32>
    %20 = arith.mulf %17, %19 : vector<16x64xf32>
    %c0_7 = arith.constant 0 : index
    %c0_8 = arith.constant 0 : index
    %21 = vector.load %arg4[%c0_7, %c0_8] : memref<1x64xf32, #tpu.memory_space<vmem>>, vector<1x64xf32>
    %22 = vector.broadcast %21 : vector<1x64xf32> to vector<16x64xf32>
    %23 = arith.addf %20, %22 : vector<16x64xf32>
    %24 = arith.truncf %23 : vector<16x64xf32> to vector<16x64xbf16>
    %c0_9 = arith.constant 0 : index
    %c0_10 = arith.constant 0 : index
    %25 = vector.load %arg5[%c0_9, %c0_10] : memref<64x64xbf16, #tpu.memory_space<vmem>>, vector<64x64xbf16>
    %cst_11 = arith.constant dense<0.000000e+00> : vector<16x64xf32>
    %26 = tpu.matmul %24, %25, %cst_11 {dimension_numbers = #tpu.dot_dimension_numbers<[1], [0], [0], [1], [0, 0, 1, 1], [], []>} : vector<16x64xbf16>, vector<64x64xbf16>, vector<16x64xf32> -> vector<16x64xf32>
    %c0_12 = arith.constant 0 : index
    %c0_13 = arith.constant 0 : index
    %27 = vector.load %arg6[%c0_12, %c0_13] : memref<1x64xf32, #tpu.memory_space<vmem>>, vector<1x64xf32>
    %28 = vector.broadcast %27 : vector<1x64xf32> to vector<16x64xf32>
    %29 = arith.addf %26, %28 : vector<16x64xf32>
    %30 = arith.truncf %29 : vector<16x64xf32> to vector<16x64xbf16>
    %c0_14 = arith.constant 0 : index
    %c0_15 = arith.constant 0 : index
    %31 = vector.load %arg7[%c0_14, %c0_15] : memref<16x64xbf16, #tpu.memory_space<vmem>>, vector<16x64xbf16>
    tpu.vector_store %arg7[%c0_14, %c0_15], %30 {strides = array<i32>} : memref<16x64xbf16, #tpu.memory_space<vmem>>, vector<16x64xbf16>,
    return
  }
  func.func @transform_0(%arg0: i32, %arg1: i32) -> (i32, i32) {
    %c0_i32 = arith.constant 0 : i32
    %c0_i32_0 = arith.constant 0 : i32
    return %arg0, %c0_i32 : i32, i32
  }
  func.func @transform_1(%arg0: i32, %arg1: i32) -> (i32, i32) {
    %c0_i32 = arith.constant 0 : i32
    %c0_i32_0 = arith.constant 0 : i32
    %c0_i32_1 = arith.constant 0 : i32
    return %c0_i32, %c0_i32_0 : i32, i32
  }
  func.func @transform_2(%arg0: i32, %arg1: i32) -> (i32, i32) {
    %c0_i32 = arith.constant 0 : i32
    %c0_i32_0 = arith.constant 0 : i32
    %c0_i32_1 = arith.constant 0 : i32
    return %c0_i32, %c0_i32_0 : i32, i32
  }
  func.func @transform_3(%arg0: i32, %arg1: i32) -> (i32, i32) {
    %c0_i32 = arith.constant 0 : i32
    %c0_i32_0 = arith.constant 0 : i32
    return %c0_i32, %arg1 : i32, i32
  }
  func.func @transform_4(%arg0: i32, %arg1: i32) -> (i32, i32) {
    %c0_i32 = arith.constant 0 : i32
    %c0_i32_0 = arith.constant 0 : i32
    return %c0_i32, %arg1 : i32, i32
  }
  func.func @transform_5(%arg0: i32, %arg1: i32) -> (i32, i32) {
    %c0_i32 = arith.constant 0 : i32
    return %arg0, %arg1 : i32, i32
  }
}

module attributes {stable_mosaic.version = 11 : i64} {
  func.func @_ln_linear_kernel(%arg0: i32, %arg1: i32, %arg2: memref<40x64xbf16, #tpu.memory_space<vmem>>, %arg3: memref<1x64xf32, #tpu.memory_space<vmem>>, %arg4: memref<1x64xf32, #tpu.memory_space<vmem>>, %arg5: memref<64x192xbf16, #tpu.memory_space<vmem>>, %arg6: memref<1x192xf32, #tpu.memory_space<vmem>>, %arg7: memref<40x192xbf16, #tpu.memory_space<vmem>>) attributes {dimension_semantics = [#tpu.dimension_semantics<parallel>, #tpu.dimension_semantics<parallel>], iteration_bounds = array<i64: 1, 1>, scalar_prefetch = 0 : i64, scratch_operands = 0 : i64, tpu.core_type = #tpu.core_type<tc>, window_params = [{transform_indices = @transform_0, window_bounds = array<i64: 40, 64>}, {pipeline_mode = #tpu.pipeline_mode<synchronous>, transform_indices = @transform_1, window_bounds = array<i64: 1, 64>}, {pipeline_mode = #tpu.pipeline_mode<synchronous>, transform_indices = @transform_2, window_bounds = array<i64: 1, 64>}, {transform_indices = @transform_3, window_bounds = array<i64: 64, 192>}, {transform_indices = @transform_4, window_bounds = array<i64: 1, 192>}, {transform_indices = @transform_5, window_bounds = array<i64: 40, 192>}]} {
    %c0 = arith.constant 0 : index
    %c0_0 = arith.constant 0 : index
    %0 = vector.load %arg2[%c0, %c0_0] : memref<40x64xbf16, #tpu.memory_space<vmem>>, vector<40x64xbf16>
    %1 = arith.extf %0 : vector<40x64xbf16> to vector<40x64xf32>
    %cst = arith.constant dense<0.000000e+00> : vector<40xf32>
    %2 = vector.multi_reduction <add>, %1, %cst [1] : vector<40x64xf32> to vector<40xf32>
    %3 = vector.shape_cast %2 : vector<40xf32> to vector<40x1xf32>
    %cst_1 = arith.constant 6.400000e+01 : f32
    %4 = vector.broadcast %cst_1 : f32 to vector<40x1xf32>
    %5 = arith.divf %3, %4 : vector<40x1xf32>
    %6 = vector.broadcast %5 : vector<40x1xf32> to vector<40x64xf32>
    %7 = arith.subf %1, %6 : vector<40x64xf32>
    %8 = arith.mulf %7, %7 : vector<40x64xf32>
    %cst_2 = arith.constant dense<0.000000e+00> : vector<40xf32>
    %9 = vector.multi_reduction <add>, %8, %cst_2 [1] : vector<40x64xf32> to vector<40xf32>
    %10 = vector.shape_cast %9 : vector<40xf32> to vector<40x1xf32>
    %cst_3 = arith.constant 6.400000e+01 : f32
    %11 = vector.broadcast %cst_3 : f32 to vector<40x1xf32>
    %12 = arith.divf %10, %11 : vector<40x1xf32>
    %cst_4 = arith.constant 9.99999997E-7 : f32
    %13 = vector.broadcast %cst_4 : f32 to vector<40x1xf32>
    %14 = arith.addf %12, %13 : vector<40x1xf32>
    %15 = math.rsqrt %14 : vector<40x1xf32>
    %16 = vector.broadcast %15 : vector<40x1xf32> to vector<40x64xf32>
    %17 = arith.mulf %7, %16 : vector<40x64xf32>
    %c0_5 = arith.constant 0 : index
    %c0_6 = arith.constant 0 : index
    %18 = vector.load %arg3[%c0_5, %c0_6] : memref<1x64xf32, #tpu.memory_space<vmem>>, vector<1x64xf32>
    %19 = vector.broadcast %18 : vector<1x64xf32> to vector<40x64xf32>
    %20 = arith.mulf %17, %19 : vector<40x64xf32>
    %c0_7 = arith.constant 0 : index
    %c0_8 = arith.constant 0 : index
    %21 = vector.load %arg4[%c0_7, %c0_8] : memref<1x64xf32, #tpu.memory_space<vmem>>, vector<1x64xf32>
    %22 = vector.broadcast %21 : vector<1x64xf32> to vector<40x64xf32>
    %23 = arith.addf %20, %22 : vector<40x64xf32>
    %24 = arith.truncf %23 : vector<40x64xf32> to vector<40x64xbf16>
    %c0_9 = arith.constant 0 : index
    %c0_10 = arith.constant 0 : index
    %25 = vector.load %arg5[%c0_9, %c0_10] : memref<64x192xbf16, #tpu.memory_space<vmem>>, vector<64x192xbf16>
    %cst_11 = arith.constant dense<0.000000e+00> : vector<40x192xf32>
    %26 = tpu.matmul %24, %25, %cst_11 {dimension_numbers = #tpu.dot_dimension_numbers<[1], [0], [0], [1], [0, 0, 1, 1], [], []>} : vector<40x64xbf16>, vector<64x192xbf16>, vector<40x192xf32> -> vector<40x192xf32>
    %c0_12 = arith.constant 0 : index
    %c0_13 = arith.constant 0 : index
    %27 = vector.load %arg6[%c0_12, %c0_13] : memref<1x192xf32, #tpu.memory_space<vmem>>, vector<1x192xf32>
    %28 = vector.broadcast %27 : vector<1x192xf32> to vector<40x192xf32>
    %29 = arith.addf %26, %28 : vector<40x192xf32>
    %30 = arith.truncf %29 : vector<40x192xf32> to vector<40x192xbf16>
    %c0_14 = arith.constant 0 : index
    %c0_15 = arith.constant 0 : index
    %31 = vector.load %arg7[%c0_14, %c0_15] : memref<40x192xbf16, #tpu.memory_space<vmem>>, vector<40x192xbf16>
    tpu.vector_store %arg7[%c0_14, %c0_15], %30 {strides = array<i32>} : memref<40x192xbf16, #tpu.memory_space<vmem>>, vector<40x192xbf16>,
    return
  }
  func.func @transform_0(%arg0: i32, %arg1: i32) -> (i32, i32) {
    %c0_i32 = arith.constant 0 : i32
    %c0_i32_0 = arith.constant 0 : i32
    return %arg0, %c0_i32 : i32, i32
  }
  func.func @transform_1(%arg0: i32, %arg1: i32) -> (i32, i32) {
    %c0_i32 = arith.constant 0 : i32
    %c0_i32_0 = arith.constant 0 : i32
    %c0_i32_1 = arith.constant 0 : i32
    return %c0_i32, %c0_i32_0 : i32, i32
  }
  func.func @transform_2(%arg0: i32, %arg1: i32) -> (i32, i32) {
    %c0_i32 = arith.constant 0 : i32
    %c0_i32_0 = arith.constant 0 : i32
    %c0_i32_1 = arith.constant 0 : i32
    return %c0_i32, %c0_i32_0 : i32, i32
  }
  func.func @transform_3(%arg0: i32, %arg1: i32) -> (i32, i32) {
    %c0_i32 = arith.constant 0 : i32
    %c0_i32_0 = arith.constant 0 : i32
    return %c0_i32, %arg1 : i32, i32
  }
  func.func @transform_4(%arg0: i32, %arg1: i32) -> (i32, i32) {
    %c0_i32 = arith.constant 0 : i32
    %c0_i32_0 = arith.constant 0 : i32
    return %c0_i32, %arg1 : i32, i32
  }
  func.func @transform_5(%arg0: i32, %arg1: i32) -> (i32, i32) {
    %c0_i32 = arith.constant 0 : i32
    return %arg0, %arg1 : i32, i32
  }
}

module attributes {stable_mosaic.version = 11 : i64} {
  func.func @_attn_kernel(%arg0: i32, %arg1: memref<1x20x192xbf16, #tpu.memory_space<vmem>>, %arg2: memref<1x20x64xbf16, #tpu.memory_space<vmem>>) attributes {dimension_semantics = [#tpu.dimension_semantics<parallel>], iteration_bounds = array<i64: 2>, scalar_prefetch = 0 : i64, scratch_operands = 0 : i64, tpu.core_type = #tpu.core_type<tc>, window_params = [{transform_indices = @transform_0, window_bounds = array<i64: 1, 20, 192>}, {transform_indices = @transform_1, window_bounds = array<i64: 1, 20, 64>}]} {
    %c0 = arith.constant 0 : index
    %c0_0 = arith.constant 0 : index
    %c0_1 = arith.constant 0 : index
    %0 = vector.load %arg1[%c0, %c0_0, %c0_1] : memref<1x20x192xbf16, #tpu.memory_space<vmem>>, vector<1x20x16xbf16>
    %1 = vector.shape_cast %0 : vector<1x20x16xbf16> to vector<20x16xbf16>
    %c0_2 = arith.constant 0 : index
    %c0_3 = arith.constant 0 : index
    %c64 = arith.constant 64 : index
    %2 = vector.load %arg1[%c0_2, %c0_3, %c64] : memref<1x20x192xbf16, #tpu.memory_space<vmem>>, vector<1x20x16xbf16>
    %3 = vector.shape_cast %2 : vector<1x20x16xbf16> to vector<20x16xbf16>
    %c0_4 = arith.constant 0 : index
    %c0_5 = arith.constant 0 : index
    %c128 = arith.constant 128 : index
    %4 = vector.load %arg1[%c0_4, %c0_5, %c128] : memref<1x20x192xbf16, #tpu.memory_space<vmem>>, vector<1x20x16xbf16>
    %5 = vector.shape_cast %4 : vector<1x20x16xbf16> to vector<20x16xbf16>
    %6 = arith.extf %1 : vector<20x16xbf16> to vector<20x16xf32>
    %cst = arith.constant 2.500000e-01 : f32
    %7 = vector.broadcast %cst : f32 to vector<20x16xf32>
    %8 = arith.mulf %6, %7 : vector<20x16xf32>
    %9 = arith.truncf %8 : vector<20x16xf32> to vector<20x16xbf16>
    %cst_6 = arith.constant dense<0.000000e+00> : vector<20x20xf32>
    %10 = tpu.matmul %9, %3, %cst_6 {dimension_numbers = #tpu.dot_dimension_numbers<[1], [1], [0], [0], [0, 0, 1, 0], [], []>} : vector<20x16xbf16>, vector<20x16xbf16>, vector<20x20xf32> -> vector<20x20xf32>
    %cst_7 = arith.constant dense<0xFF800000> : vector<20xf32>
    %11 = vector.multi_reduction <maximumf>, %10, %cst_7 [1] : vector<20x20xf32> to vector<20xf32>
    %12 = vector.shape_cast %11 : vector<20xf32> to vector<20x1xf32>
    %13 = vector.broadcast %12 : vector<20x1xf32> to vector<20x20xf32>
    %14 = arith.subf %10, %13 : vector<20x20xf32>
    %15 = math.exp %14 : vector<20x20xf32>
    %cst_8 = arith.constant dense<0.000000e+00> : vector<20xf32>
    %16 = vector.multi_reduction <add>, %15, %cst_8 [1] : vector<20x20xf32> to vector<20xf32>
    %17 = vector.shape_cast %16 : vector<20xf32> to vector<20x1xf32>
    %18 = tpu.reciprocal %17 {approx = true} : vector<20x1xf32> -> vector<20x1xf32>
    %19 = vector.broadcast %18 : vector<20x1xf32> to vector<20x20xf32>
    %20 = arith.mulf %15, %19 : vector<20x20xf32>
    %21 = arith.truncf %20 : vector<20x20xf32> to vector<20x20xbf16>
    %cst_9 = arith.constant dense<0.000000e+00> : vector<20x16xf32>
    %22 = tpu.matmul %21, %5, %cst_9 {dimension_numbers = #tpu.dot_dimension_numbers<[1], [0], [0], [1], [0, 0, 1, 1], [], []>} : vector<20x20xbf16>, vector<20x16xbf16>, vector<20x16xf32> -> vector<20x16xf32>
    %23 = arith.truncf %22 : vector<20x16xf32> to vector<20x16xbf16>
    %c0_10 = arith.constant 0 : index
    %c0_11 = arith.constant 0 : index
    %c0_12 = arith.constant 0 : index
    %24 = vector.load %arg2[%c0_10, %c0_11, %c0_12] : memref<1x20x64xbf16, #tpu.memory_space<vmem>>, vector<1x20x16xbf16>
    %25 = vector.shape_cast %24 : vector<1x20x16xbf16> to vector<20x16xbf16>
    %26 = vector.shape_cast %23 : vector<20x16xbf16> to vector<1x20x16xbf16>
    tpu.vector_store %arg2[%c0_10, %c0_11, %c0_12], %26 {strides = array<i32>} : memref<1x20x64xbf16, #tpu.memory_space<vmem>>, vector<1x20x16xbf16>,
    %c0_13 = arith.constant 0 : index
    %c0_14 = arith.constant 0 : index
    %c16 = arith.constant 16 : index
    %27 = vector.load %arg1[%c0_13, %c0_14, %c16] : memref<1x20x192xbf16, #tpu.memory_space<vmem>>, vector<1x20x16xbf16>
    %28 = vector.shape_cast %27 : vector<1x20x16xbf16> to vector<20x16xbf16>
    %c0_15 = arith.constant 0 : index
    %c0_16 = arith.constant 0 : index
    %c80 = arith.constant 80 : index
    %29 = vector.load %arg1[%c0_15, %c0_16, %c80] : memref<1x20x192xbf16, #tpu.memory_space<vmem>>, vector<1x20x16xbf16>
    %30 = vector.shape_cast %29 : vector<1x20x16xbf16> to vector<20x16xbf16>
    %c0_17 = arith.constant 0 : index
    %c0_18 = arith.constant 0 : index
    %c144 = arith.constant 144 : index
    %31 = vector.load %arg1[%c0_17, %c0_18, %c144] : memref<1x20x192xbf16, #tpu.memory_space<vmem>>, vector<1x20x16xbf16>
    %32 = vector.shape_cast %31 : vector<1x20x16xbf16> to vector<20x16xbf16>
    %33 = arith.extf %28 : vector<20x16xbf16> to vector<20x16xf32>
    %cst_19 = arith.constant 2.500000e-01 : f32
    %34 = vector.broadcast %cst_19 : f32 to vector<20x16xf32>
    %35 = arith.mulf %33, %34 : vector<20x16xf32>
    %36 = arith.truncf %35 : vector<20x16xf32> to vector<20x16xbf16>
    %cst_20 = arith.constant dense<0.000000e+00> : vector<20x20xf32>
    %37 = tpu.matmul %36, %30, %cst_20 {dimension_numbers = #tpu.dot_dimension_numbers<[1], [1], [0], [0], [0, 0, 1, 0], [], []>} : vector<20x16xbf16>, vector<20x16xbf16>, vector<20x20xf32> -> vector<20x20xf32>
    %cst_21 = arith.constant dense<0xFF800000> : vector<20xf32>
    %38 = vector.multi_reduction <maximumf>, %37, %cst_21 [1] : vector<20x20xf32> to vector<20xf32>
    %39 = vector.shape_cast %38 : vector<20xf32> to vector<20x1xf32>
    %40 = vector.broadcast %39 : vector<20x1xf32> to vector<20x20xf32>
    %41 = arith.subf %37, %40 : vector<20x20xf32>
    %42 = math.exp %41 : vector<20x20xf32>
    %cst_22 = arith.constant dense<0.000000e+00> : vector<20xf32>
    %43 = vector.multi_reduction <add>, %42, %cst_22 [1] : vector<20x20xf32> to vector<20xf32>
    %44 = vector.shape_cast %43 : vector<20xf32> to vector<20x1xf32>
    %45 = tpu.reciprocal %44 {approx = true} : vector<20x1xf32> -> vector<20x1xf32>
    %46 = vector.broadcast %45 : vector<20x1xf32> to vector<20x20xf32>
    %47 = arith.mulf %42, %46 : vector<20x20xf32>
    %48 = arith.truncf %47 : vector<20x20xf32> to vector<20x20xbf16>
    %cst_23 = arith.constant dense<0.000000e+00> : vector<20x16xf32>
    %49 = tpu.matmul %48, %32, %cst_23 {dimension_numbers = #tpu.dot_dimension_numbers<[1], [0], [0], [1], [0, 0, 1, 1], [], []>} : vector<20x20xbf16>, vector<20x16xbf16>, vector<20x16xf32> -> vector<20x16xf32>
    %50 = arith.truncf %49 : vector<20x16xf32> to vector<20x16xbf16>
    %c0_24 = arith.constant 0 : index
    %c0_25 = arith.constant 0 : index
    %c16_26 = arith.constant 16 : index
    %51 = vector.load %arg2[%c0_24, %c0_25, %c16_26] : memref<1x20x64xbf16, #tpu.memory_space<vmem>>, vector<1x20x16xbf16>
    %52 = vector.shape_cast %51 : vector<1x20x16xbf16> to vector<20x16xbf16>
    %53 = vector.shape_cast %50 : vector<20x16xbf16> to vector<1x20x16xbf16>
    tpu.vector_store %arg2[%c0_24, %c0_25, %c16_26], %53 {strides = array<i32>} : memref<1x20x64xbf16, #tpu.memory_space<vmem>>, vector<1x20x16xbf16>,
    %c0_27 = arith.constant 0 : index
    %c0_28 = arith.constant 0 : index
    %c32 = arith.constant 32 : index
    %54 = vector.load %arg1[%c0_27, %c0_28, %c32] : memref<1x20x192xbf16, #tpu.memory_space<vmem>>, vector<1x20x16xbf16>
    %55 = vector.shape_cast %54 : vector<1x20x16xbf16> to vector<20x16xbf16>
    %c0_29 = arith.constant 0 : index
    %c0_30 = arith.constant 0 : index
    %c96 = arith.constant 96 : index
    %56 = vector.load %arg1[%c0_29, %c0_30, %c96] : memref<1x20x192xbf16, #tpu.memory_space<vmem>>, vector<1x20x16xbf16>
    %57 = vector.shape_cast %56 : vector<1x20x16xbf16> to vector<20x16xbf16>
    %c0_31 = arith.constant 0 : index
    %c0_32 = arith.constant 0 : index
    %c160 = arith.constant 160 : index
    %58 = vector.load %arg1[%c0_31, %c0_32, %c160] : memref<1x20x192xbf16, #tpu.memory_space<vmem>>, vector<1x20x16xbf16>
    %59 = vector.shape_cast %58 : vector<1x20x16xbf16> to vector<20x16xbf16>
    %60 = arith.extf %55 : vector<20x16xbf16> to vector<20x16xf32>
    %cst_33 = arith.constant 2.500000e-01 : f32
    %61 = vector.broadcast %cst_33 : f32 to vector<20x16xf32>
    %62 = arith.mulf %60, %61 : vector<20x16xf32>
    %63 = arith.truncf %62 : vector<20x16xf32> to vector<20x16xbf16>
    %cst_34 = arith.constant dense<0.000000e+00> : vector<20x20xf32>
    %64 = tpu.matmul %63, %57, %cst_34 {dimension_numbers = #tpu.dot_dimension_numbers<[1], [1], [0], [0], [0, 0, 1, 0], [], []>} : vector<20x16xbf16>, vector<20x16xbf16>, vector<20x20xf32> -> vector<20x20xf32>
    %cst_35 = arith.constant dense<0xFF800000> : vector<20xf32>
    %65 = vector.multi_reduction <maximumf>, %64, %cst_35 [1] : vector<20x20xf32> to vector<20xf32>
    %66 = vector.shape_cast %65 : vector<20xf32> to vector<20x1xf32>
    %67 = vector.broadcast %66 : vector<20x1xf32> to vector<20x20xf32>
    %68 = arith.subf %64, %67 : vector<20x20xf32>
    %69 = math.exp %68 : vector<20x20xf32>
    %cst_36 = arith.constant dense<0.000000e+00> : vector<20xf32>
    %70 = vector.multi_reduction <add>, %69, %cst_36 [1] : vector<20x20xf32> to vector<20xf32>
    %71 = vector.shape_cast %70 : vector<20xf32> to vector<20x1xf32>
    %72 = tpu.reciprocal %71 {approx = true} : vector<20x1xf32> -> vector<20x1xf32>
    %73 = vector.broadcast %72 : vector<20x1xf32> to vector<20x20xf32>
    %74 = arith.mulf %69, %73 : vector<20x20xf32>
    %75 = arith.truncf %74 : vector<20x20xf32> to vector<20x20xbf16>
    %cst_37 = arith.constant dense<0.000000e+00> : vector<20x16xf32>
    %76 = tpu.matmul %75, %59, %cst_37 {dimension_numbers = #tpu.dot_dimension_numbers<[1], [0], [0], [1], [0, 0, 1, 1], [], []>} : vector<20x20xbf16>, vector<20x16xbf16>, vector<20x16xf32> -> vector<20x16xf32>
    %77 = arith.truncf %76 : vector<20x16xf32> to vector<20x16xbf16>
    %c0_38 = arith.constant 0 : index
    %c0_39 = arith.constant 0 : index
    %c32_40 = arith.constant 32 : index
    %78 = vector.load %arg2[%c0_38, %c0_39, %c32_40] : memref<1x20x64xbf16, #tpu.memory_space<vmem>>, vector<1x20x16xbf16>
    %79 = vector.shape_cast %78 : vector<1x20x16xbf16> to vector<20x16xbf16>
    %80 = vector.shape_cast %77 : vector<20x16xbf16> to vector<1x20x16xbf16>
    tpu.vector_store %arg2[%c0_38, %c0_39, %c32_40], %80 {strides = array<i32>} : memref<1x20x64xbf16, #tpu.memory_space<vmem>>, vector<1x20x16xbf16>,
    %c0_41 = arith.constant 0 : index
    %c0_42 = arith.constant 0 : index
    %c48 = arith.constant 48 : index
    %81 = vector.load %arg1[%c0_41, %c0_42, %c48] : memref<1x20x192xbf16, #tpu.memory_space<vmem>>, vector<1x20x16xbf16>
    %82 = vector.shape_cast %81 : vector<1x20x16xbf16> to vector<20x16xbf16>
    %c0_43 = arith.constant 0 : index
    %c0_44 = arith.constant 0 : index
    %c112 = arith.constant 112 : index
    %83 = vector.load %arg1[%c0_43, %c0_44, %c112] : memref<1x20x192xbf16, #tpu.memory_space<vmem>>, vector<1x20x16xbf16>
    %84 = vector.shape_cast %83 : vector<1x20x16xbf16> to vector<20x16xbf16>
    %c0_45 = arith.constant 0 : index
    %c0_46 = arith.constant 0 : index
    %c176 = arith.constant 176 : index
    %85 = vector.load %arg1[%c0_45, %c0_46, %c176] : memref<1x20x192xbf16, #tpu.memory_space<vmem>>, vector<1x20x16xbf16>
    %86 = vector.shape_cast %85 : vector<1x20x16xbf16> to vector<20x16xbf16>
    %87 = arith.extf %82 : vector<20x16xbf16> to vector<20x16xf32>
    %cst_47 = arith.constant 2.500000e-01 : f32
    %88 = vector.broadcast %cst_47 : f32 to vector<20x16xf32>
    %89 = arith.mulf %87, %88 : vector<20x16xf32>
    %90 = arith.truncf %89 : vector<20x16xf32> to vector<20x16xbf16>
    %cst_48 = arith.constant dense<0.000000e+00> : vector<20x20xf32>
    %91 = tpu.matmul %90, %84, %cst_48 {dimension_numbers = #tpu.dot_dimension_numbers<[1], [1], [0], [0], [0, 0, 1, 0], [], []>} : vector<20x16xbf16>, vector<20x16xbf16>, vector<20x20xf32> -> vector<20x20xf32>
    %cst_49 = arith.constant dense<0xFF800000> : vector<20xf32>
    %92 = vector.multi_reduction <maximumf>, %91, %cst_49 [1] : vector<20x20xf32> to vector<20xf32>
    %93 = vector.shape_cast %92 : vector<20xf32> to vector<20x1xf32>
    %94 = vector.broadcast %93 : vector<20x1xf32> to vector<20x20xf32>
    %95 = arith.subf %91, %94 : vector<20x20xf32>
    %96 = math.exp %95 : vector<20x20xf32>
    %cst_50 = arith.constant dense<0.000000e+00> : vector<20xf32>
    %97 = vector.multi_reduction <add>, %96, %cst_50 [1] : vector<20x20xf32> to vector<20xf32>
    %98 = vector.shape_cast %97 : vector<20xf32> to vector<20x1xf32>
    %99 = tpu.reciprocal %98 {approx = true} : vector<20x1xf32> -> vector<20x1xf32>
    %100 = vector.broadcast %99 : vector<20x1xf32> to vector<20x20xf32>
    %101 = arith.mulf %96, %100 : vector<20x20xf32>
    %102 = arith.truncf %101 : vector<20x20xf32> to vector<20x20xbf16>
    %cst_51 = arith.constant dense<0.000000e+00> : vector<20x16xf32>
    %103 = tpu.matmul %102, %86, %cst_51 {dimension_numbers = #tpu.dot_dimension_numbers<[1], [0], [0], [1], [0, 0, 1, 1], [], []>} : vector<20x20xbf16>, vector<20x16xbf16>, vector<20x16xf32> -> vector<20x16xf32>
    %104 = arith.truncf %103 : vector<20x16xf32> to vector<20x16xbf16>
    %c0_52 = arith.constant 0 : index
    %c0_53 = arith.constant 0 : index
    %c48_54 = arith.constant 48 : index
    %105 = vector.load %arg2[%c0_52, %c0_53, %c48_54] : memref<1x20x64xbf16, #tpu.memory_space<vmem>>, vector<1x20x16xbf16>
    %106 = vector.shape_cast %105 : vector<1x20x16xbf16> to vector<20x16xbf16>
    %107 = vector.shape_cast %104 : vector<20x16xbf16> to vector<1x20x16xbf16>
    tpu.vector_store %arg2[%c0_52, %c0_53, %c48_54], %107 {strides = array<i32>} : memref<1x20x64xbf16, #tpu.memory_space<vmem>>, vector<1x20x16xbf16>,
    return
  }
  func.func @transform_0(%arg0: i32) -> (i32, i32, i32) {
    %c0_i32 = arith.constant 0 : i32
    %c0_i32_0 = arith.constant 0 : i32
    %c0_i32_1 = arith.constant 0 : i32
    return %arg0, %c0_i32, %c0_i32_0 : i32, i32, i32
  }
  func.func @transform_1(%arg0: i32) -> (i32, i32, i32) {
    %c0_i32 = arith.constant 0 : i32
    %c0_i32_0 = arith.constant 0 : i32
    %c0_i32_1 = arith.constant 0 : i32
    return %arg0, %c0_i32, %c0_i32_0 : i32, i32, i32
  }
}

module attributes {stable_mosaic.version = 11 : i64} {
  func.func @_linear_kernel(%arg0: i32, %arg1: i32, %arg2: i32, %arg3: memref<40x64xbf16, #tpu.memory_space<vmem>>, %arg4: memref<64x64xbf16, #tpu.memory_space<vmem>>, %arg5: memref<1x64xf32, #tpu.memory_space<vmem>>, %arg6: memref<40x64xbf16, #tpu.memory_space<vmem>>, %arg7: memref<40x64xbf16, #tpu.memory_space<vmem>>, %arg8: memref<40x64xf32, #tpu.memory_space<vmem>>) attributes {dimension_semantics = [#tpu.dimension_semantics<parallel>, #tpu.dimension_semantics<parallel>, #tpu.dimension_semantics<arbitrary>], iteration_bounds = array<i64: 1, 1, 1>, scalar_prefetch = 0 : i64, scratch_operands = 1 : i64, tpu.core_type = #tpu.core_type<tc>, window_params = [{transform_indices = @transform_0, window_bounds = array<i64: 40, 64>}, {transform_indices = @transform_1, window_bounds = array<i64: 64, 64>}, {transform_indices = @transform_2, window_bounds = array<i64: 1, 64>}, {transform_indices = @transform_3, window_bounds = array<i64: 40, 64>}, {transform_indices = @transform_4, window_bounds = array<i64: 40, 64>}]} {
    %c0_i32 = arith.constant 0 : i32
    %0 = arith.cmpi eq, %arg2, %c0_i32 : i32
    %1 = arith.extui %0 : i1 to i32
    %c0_i32_0 = arith.constant 0 : i32
    %2 = arith.cmpi ne, %1, %c0_i32_0 : i32
    scf.if %2 {
      %cst_10 = arith.constant 0.000000e+00 : f32
      %12 = vector.broadcast %cst_10 : f32 to vector<40x64xf32>
      %c0_11 = arith.constant 0 : index
      %c0_12 = arith.constant 0 : index
      %13 = vector.load %arg8[%c0_11, %c0_12] : memref<40x64xf32, #tpu.memory_space<vmem>>, vector<40x64xf32>
      tpu.vector_store %arg8[%c0_11, %c0_12], %12 {strides = array<i32>} : memref<40x64xf32, #tpu.memory_space<vmem>>, vector<40x64xf32>,
    } else {
    }
    %c0 = arith.constant 0 : index
    %c0_1 = arith.constant 0 : index
    %3 = vector.load %arg8[%c0, %c0_1] : memref<40x64xf32, #tpu.memory_space<vmem>>, vector<40x64xf32>
    %c0_2 = arith.constant 0 : index
    %c0_3 = arith.constant 0 : index
    %4 = vector.load %arg3[%c0_2, %c0_3] : memref<40x64xbf16, #tpu.memory_space<vmem>>, vector<40x64xbf16>
    %c0_4 = arith.constant 0 : index
    %c0_5 = arith.constant 0 : index
    %5 = vector.load %arg4[%c0_4, %c0_5] : memref<64x64xbf16, #tpu.memory_space<vmem>>, vector<64x64xbf16>
    %cst = arith.constant dense<0.000000e+00> : vector<40x64xf32>
    %6 = tpu.matmul %4, %5, %cst {dimension_numbers = #tpu.dot_dimension_numbers<[1], [0], [0], [1], [0, 0, 1, 1], [], []>} : vector<40x64xbf16>, vector<64x64xbf16>, vector<40x64xf32> -> vector<40x64xf32>
    %7 = arith.addf %3, %6 : vector<40x64xf32>
    %c0_6 = arith.constant 0 : index
    %c0_7 = arith.constant 0 : index
    %8 = vector.load %arg8[%c0_6, %c0_7] : memref<40x64xf32, #tpu.memory_space<vmem>>, vector<40x64xf32>
    tpu.vector_store %arg8[%c0_6, %c0_7], %7 {strides = array<i32>} : memref<40x64xf32, #tpu.memory_space<vmem>>, vector<40x64xf32>,
    %c0_i32_8 = arith.constant 0 : i32
    %9 = arith.cmpi eq, %arg2, %c0_i32_8 : i32
    %10 = arith.extui %9 : i1 to i32
    %c0_i32_9 = arith.constant 0 : i32
    %11 = arith.cmpi ne, %10, %c0_i32_9 : i32
    scf.if %11 {
      %c0_10 = arith.constant 0 : index
      %c0_11 = arith.constant 0 : index
      %12 = vector.load %arg8[%c0_10, %c0_11] : memref<40x64xf32, #tpu.memory_space<vmem>>, vector<40x64xf32>
      %c0_12 = arith.constant 0 : index
      %c0_13 = arith.constant 0 : index
      %13 = vector.load %arg5[%c0_12, %c0_13] : memref<1x64xf32, #tpu.memory_space<vmem>>, vector<1x64xf32>
      %14 = vector.broadcast %13 : vector<1x64xf32> to vector<40x64xf32>
      %15 = arith.addf %12, %14 : vector<40x64xf32>
      %c0_14 = arith.constant 0 : index
      %c0_15 = arith.constant 0 : index
      %16 = vector.load %arg6[%c0_14, %c0_15] : memref<40x64xbf16, #tpu.memory_space<vmem>>, vector<40x64xbf16>
      %17 = arith.extf %16 : vector<40x64xbf16> to vector<40x64xf32>
      %18 = arith.addf %17, %15 : vector<40x64xf32>
      %19 = arith.truncf %18 : vector<40x64xf32> to vector<40x64xbf16>
      %c0_16 = arith.constant 0 : index
      %c0_17 = arith.constant 0 : index
      %20 = vector.load %arg7[%c0_16, %c0_17] : memref<40x64xbf16, #tpu.memory_space<vmem>>, vector<40x64xbf16>
      tpu.vector_store %arg7[%c0_16, %c0_17], %19 {strides = array<i32>} : memref<40x64xbf16, #tpu.memory_space<vmem>>, vector<40x64xbf16>,
    } else {
    }
    return
  }
  func.func @transform_0(%arg0: i32, %arg1: i32, %arg2: i32) -> (i32, i32) {
    %c0_i32 = arith.constant 0 : i32
    return %arg0, %arg2 : i32, i32
  }
  func.func @transform_1(%arg0: i32, %arg1: i32, %arg2: i32) -> (i32, i32) {
    %c0_i32 = arith.constant 0 : i32
    return %arg2, %arg1 : i32, i32
  }
  func.func @transform_2(%arg0: i32, %arg1: i32, %arg2: i32) -> (i32, i32) {
    %c0_i32 = arith.constant 0 : i32
    %c0_i32_0 = arith.constant 0 : i32
    return %c0_i32, %arg1 : i32, i32
  }
  func.func @transform_3(%arg0: i32, %arg1: i32, %arg2: i32) -> (i32, i32) {
    %c0_i32 = arith.constant 0 : i32
    return %arg0, %arg1 : i32, i32
  }
  func.func @transform_4(%arg0: i32, %arg1: i32, %arg2: i32) -> (i32, i32) {
    %c0_i32 = arith.constant 0 : i32
    return %arg0, %arg1 : i32, i32
  }
}

module attributes {stable_mosaic.version = 11 : i64} {
  func.func @_ln_linear_kernel(%arg0: i32, %arg1: i32, %arg2: memref<40x64xbf16, #tpu.memory_space<vmem>>, %arg3: memref<1x64xf32, #tpu.memory_space<vmem>>, %arg4: memref<1x64xf32, #tpu.memory_space<vmem>>, %arg5: memref<64x256xbf16, #tpu.memory_space<vmem>>, %arg6: memref<1x256xf32, #tpu.memory_space<vmem>>, %arg7: memref<40x256xbf16, #tpu.memory_space<vmem>>) attributes {dimension_semantics = [#tpu.dimension_semantics<parallel>, #tpu.dimension_semantics<parallel>], iteration_bounds = array<i64: 1, 1>, scalar_prefetch = 0 : i64, scratch_operands = 0 : i64, tpu.core_type = #tpu.core_type<tc>, window_params = [{transform_indices = @transform_0, window_bounds = array<i64: 40, 64>}, {pipeline_mode = #tpu.pipeline_mode<synchronous>, transform_indices = @transform_1, window_bounds = array<i64: 1, 64>}, {pipeline_mode = #tpu.pipeline_mode<synchronous>, transform_indices = @transform_2, window_bounds = array<i64: 1, 64>}, {transform_indices = @transform_3, window_bounds = array<i64: 64, 256>}, {transform_indices = @transform_4, window_bounds = array<i64: 1, 256>}, {transform_indices = @transform_5, window_bounds = array<i64: 40, 256>}]} {
    %c0 = arith.constant 0 : index
    %c0_0 = arith.constant 0 : index
    %0 = vector.load %arg2[%c0, %c0_0] : memref<40x64xbf16, #tpu.memory_space<vmem>>, vector<40x64xbf16>
    %1 = arith.extf %0 : vector<40x64xbf16> to vector<40x64xf32>
    %cst = arith.constant dense<0.000000e+00> : vector<40xf32>
    %2 = vector.multi_reduction <add>, %1, %cst [1] : vector<40x64xf32> to vector<40xf32>
    %3 = vector.shape_cast %2 : vector<40xf32> to vector<40x1xf32>
    %cst_1 = arith.constant 6.400000e+01 : f32
    %4 = vector.broadcast %cst_1 : f32 to vector<40x1xf32>
    %5 = arith.divf %3, %4 : vector<40x1xf32>
    %6 = vector.broadcast %5 : vector<40x1xf32> to vector<40x64xf32>
    %7 = arith.subf %1, %6 : vector<40x64xf32>
    %8 = arith.mulf %7, %7 : vector<40x64xf32>
    %cst_2 = arith.constant dense<0.000000e+00> : vector<40xf32>
    %9 = vector.multi_reduction <add>, %8, %cst_2 [1] : vector<40x64xf32> to vector<40xf32>
    %10 = vector.shape_cast %9 : vector<40xf32> to vector<40x1xf32>
    %cst_3 = arith.constant 6.400000e+01 : f32
    %11 = vector.broadcast %cst_3 : f32 to vector<40x1xf32>
    %12 = arith.divf %10, %11 : vector<40x1xf32>
    %cst_4 = arith.constant 9.99999997E-7 : f32
    %13 = vector.broadcast %cst_4 : f32 to vector<40x1xf32>
    %14 = arith.addf %12, %13 : vector<40x1xf32>
    %15 = math.rsqrt %14 : vector<40x1xf32>
    %16 = vector.broadcast %15 : vector<40x1xf32> to vector<40x64xf32>
    %17 = arith.mulf %7, %16 : vector<40x64xf32>
    %c0_5 = arith.constant 0 : index
    %c0_6 = arith.constant 0 : index
    %18 = vector.load %arg3[%c0_5, %c0_6] : memref<1x64xf32, #tpu.memory_space<vmem>>, vector<1x64xf32>
    %19 = vector.broadcast %18 : vector<1x64xf32> to vector<40x64xf32>
    %20 = arith.mulf %17, %19 : vector<40x64xf32>
    %c0_7 = arith.constant 0 : index
    %c0_8 = arith.constant 0 : index
    %21 = vector.load %arg4[%c0_7, %c0_8] : memref<1x64xf32, #tpu.memory_space<vmem>>, vector<1x64xf32>
    %22 = vector.broadcast %21 : vector<1x64xf32> to vector<40x64xf32>
    %23 = arith.addf %20, %22 : vector<40x64xf32>
    %24 = arith.truncf %23 : vector<40x64xf32> to vector<40x64xbf16>
    %c0_9 = arith.constant 0 : index
    %c0_10 = arith.constant 0 : index
    %25 = vector.load %arg5[%c0_9, %c0_10] : memref<64x256xbf16, #tpu.memory_space<vmem>>, vector<64x256xbf16>
    %cst_11 = arith.constant dense<0.000000e+00> : vector<40x256xf32>
    %26 = tpu.matmul %24, %25, %cst_11 {dimension_numbers = #tpu.dot_dimension_numbers<[1], [0], [0], [1], [0, 0, 1, 1], [], []>} : vector<40x64xbf16>, vector<64x256xbf16>, vector<40x256xf32> -> vector<40x256xf32>
    %c0_12 = arith.constant 0 : index
    %c0_13 = arith.constant 0 : index
    %27 = vector.load %arg6[%c0_12, %c0_13] : memref<1x256xf32, #tpu.memory_space<vmem>>, vector<1x256xf32>
    %28 = vector.broadcast %27 : vector<1x256xf32> to vector<40x256xf32>
    %29 = arith.addf %26, %28 : vector<40x256xf32>
    %30 = arith.mulf %29, %29 : vector<40x256xf32>
    %31 = arith.mulf %29, %30 : vector<40x256xf32>
    %cst_14 = arith.constant 4.471500e-02 : f32
    %32 = vector.broadcast %cst_14 : f32 to vector<40x256xf32>
    %33 = arith.mulf %32, %31 : vector<40x256xf32>
    %34 = arith.addf %29, %33 : vector<40x256xf32>
    %cst_15 = arith.constant 0.797884583 : f32
    %35 = vector.broadcast %cst_15 : f32 to vector<40x256xf32>
    %36 = arith.mulf %35, %34 : vector<40x256xf32>
    %37 = math.tanh %36 : vector<40x256xf32>
    %cst_16 = arith.constant 1.000000e+00 : f32
    %38 = vector.broadcast %cst_16 : f32 to vector<40x256xf32>
    %39 = arith.addf %38, %37 : vector<40x256xf32>
    %cst_17 = arith.constant 5.000000e-01 : f32
    %40 = vector.broadcast %cst_17 : f32 to vector<40x256xf32>
    %41 = arith.mulf %40, %39 : vector<40x256xf32>
    %42 = arith.mulf %29, %41 : vector<40x256xf32>
    %43 = arith.truncf %42 : vector<40x256xf32> to vector<40x256xbf16>
    %c0_18 = arith.constant 0 : index
    %c0_19 = arith.constant 0 : index
    %44 = vector.load %arg7[%c0_18, %c0_19] : memref<40x256xbf16, #tpu.memory_space<vmem>>, vector<40x256xbf16>
    tpu.vector_store %arg7[%c0_18, %c0_19], %43 {strides = array<i32>} : memref<40x256xbf16, #tpu.memory_space<vmem>>, vector<40x256xbf16>,
    return
  }
  func.func @transform_0(%arg0: i32, %arg1: i32) -> (i32, i32) {
    %c0_i32 = arith.constant 0 : i32
    %c0_i32_0 = arith.constant 0 : i32
    return %arg0, %c0_i32 : i32, i32
  }
  func.func @transform_1(%arg0: i32, %arg1: i32) -> (i32, i32) {
    %c0_i32 = arith.constant 0 : i32
    %c0_i32_0 = arith.constant 0 : i32
    %c0_i32_1 = arith.constant 0 : i32
    return %c0_i32, %c0_i32_0 : i32, i32
  }
  func.func @transform_2(%arg0: i32, %arg1: i32) -> (i32, i32) {
    %c0_i32 = arith.constant 0 : i32
    %c0_i32_0 = arith.constant 0 : i32
    %c0_i32_1 = arith.constant 0 : i32
    return %c0_i32, %c0_i32_0 : i32, i32
  }
  func.func @transform_3(%arg0: i32, %arg1: i32) -> (i32, i32) {
    %c0_i32 = arith.constant 0 : i32
    %c0_i32_0 = arith.constant 0 : i32
    return %c0_i32, %arg1 : i32, i32
  }
  func.func @transform_4(%arg0: i32, %arg1: i32) -> (i32, i32) {
    %c0_i32 = arith.constant 0 : i32
    %c0_i32_0 = arith.constant 0 : i32
    return %c0_i32, %arg1 : i32, i32
  }
  func.func @transform_5(%arg0: i32, %arg1: i32) -> (i32, i32) {
    %c0_i32 = arith.constant 0 : i32
    return %arg0, %arg1 : i32, i32
  }
}

module attributes {stable_mosaic.version = 11 : i64} {
  func.func @_linear_kernel(%arg0: i32, %arg1: i32, %arg2: i32, %arg3: memref<40x256xbf16, #tpu.memory_space<vmem>>, %arg4: memref<256x64xbf16, #tpu.memory_space<vmem>>, %arg5: memref<1x64xf32, #tpu.memory_space<vmem>>, %arg6: memref<40x64xbf16, #tpu.memory_space<vmem>>, %arg7: memref<40x64xbf16, #tpu.memory_space<vmem>>, %arg8: memref<40x64xf32, #tpu.memory_space<vmem>>) attributes {dimension_semantics = [#tpu.dimension_semantics<parallel>, #tpu.dimension_semantics<parallel>, #tpu.dimension_semantics<arbitrary>], iteration_bounds = array<i64: 1, 1, 1>, scalar_prefetch = 0 : i64, scratch_operands = 1 : i64, tpu.core_type = #tpu.core_type<tc>, window_params = [{transform_indices = @transform_0, window_bounds = array<i64: 40, 256>}, {transform_indices = @transform_1, window_bounds = array<i64: 256, 64>}, {transform_indices = @transform_2, window_bounds = array<i64: 1, 64>}, {transform_indices = @transform_3, window_bounds = array<i64: 40, 64>}, {transform_indices = @transform_4, window_bounds = array<i64: 40, 64>}]} {
    %c0_i32 = arith.constant 0 : i32
    %0 = arith.cmpi eq, %arg2, %c0_i32 : i32
    %1 = arith.extui %0 : i1 to i32
    %c0_i32_0 = arith.constant 0 : i32
    %2 = arith.cmpi ne, %1, %c0_i32_0 : i32
    scf.if %2 {
      %cst_10 = arith.constant 0.000000e+00 : f32
      %12 = vector.broadcast %cst_10 : f32 to vector<40x64xf32>
      %c0_11 = arith.constant 0 : index
      %c0_12 = arith.constant 0 : index
      %13 = vector.load %arg8[%c0_11, %c0_12] : memref<40x64xf32, #tpu.memory_space<vmem>>, vector<40x64xf32>
      tpu.vector_store %arg8[%c0_11, %c0_12], %12 {strides = array<i32>} : memref<40x64xf32, #tpu.memory_space<vmem>>, vector<40x64xf32>,
    } else {
    }
    %c0 = arith.constant 0 : index
    %c0_1 = arith.constant 0 : index
    %3 = vector.load %arg8[%c0, %c0_1] : memref<40x64xf32, #tpu.memory_space<vmem>>, vector<40x64xf32>
    %c0_2 = arith.constant 0 : index
    %c0_3 = arith.constant 0 : index
    %4 = vector.load %arg3[%c0_2, %c0_3] : memref<40x256xbf16, #tpu.memory_space<vmem>>, vector<40x256xbf16>
    %c0_4 = arith.constant 0 : index
    %c0_5 = arith.constant 0 : index
    %5 = vector.load %arg4[%c0_4, %c0_5] : memref<256x64xbf16, #tpu.memory_space<vmem>>, vector<256x64xbf16>
    %cst = arith.constant dense<0.000000e+00> : vector<40x64xf32>
    %6 = tpu.matmul %4, %5, %cst {dimension_numbers = #tpu.dot_dimension_numbers<[1], [0], [0], [1], [0, 0, 1, 1], [], []>} : vector<40x256xbf16>, vector<256x64xbf16>, vector<40x64xf32> -> vector<40x64xf32>
    %7 = arith.addf %3, %6 : vector<40x64xf32>
    %c0_6 = arith.constant 0 : index
    %c0_7 = arith.constant 0 : index
    %8 = vector.load %arg8[%c0_6, %c0_7] : memref<40x64xf32, #tpu.memory_space<vmem>>, vector<40x64xf32>
    tpu.vector_store %arg8[%c0_6, %c0_7], %7 {strides = array<i32>} : memref<40x64xf32, #tpu.memory_space<vmem>>, vector<40x64xf32>,
    %c0_i32_8 = arith.constant 0 : i32
    %9 = arith.cmpi eq, %arg2, %c0_i32_8 : i32
    %10 = arith.extui %9 : i1 to i32
    %c0_i32_9 = arith.constant 0 : i32
    %11 = arith.cmpi ne, %10, %c0_i32_9 : i32
    scf.if %11 {
      %c0_10 = arith.constant 0 : index
      %c0_11 = arith.constant 0 : index
      %12 = vector.load %arg8[%c0_10, %c0_11] : memref<40x64xf32, #tpu.memory_space<vmem>>, vector<40x64xf32>
      %c0_12 = arith.constant 0 : index
      %c0_13 = arith.constant 0 : index
      %13 = vector.load %arg5[%c0_12, %c0_13] : memref<1x64xf32, #tpu.memory_space<vmem>>, vector<1x64xf32>
      %14 = vector.broadcast %13 : vector<1x64xf32> to vector<40x64xf32>
      %15 = arith.addf %12, %14 : vector<40x64xf32>
      %c0_14 = arith.constant 0 : index
      %c0_15 = arith.constant 0 : index
      %16 = vector.load %arg6[%c0_14, %c0_15] : memref<40x64xbf16, #tpu.memory_space<vmem>>, vector<40x64xbf16>
      %17 = arith.extf %16 : vector<40x64xbf16> to vector<40x64xf32>
      %18 = arith.addf %17, %15 : vector<40x64xf32>
      %19 = arith.truncf %18 : vector<40x64xf32> to vector<40x64xbf16>
      %c0_16 = arith.constant 0 : index
      %c0_17 = arith.constant 0 : index
      %20 = vector.load %arg7[%c0_16, %c0_17] : memref<40x64xbf16, #tpu.memory_space<vmem>>, vector<40x64xbf16>
      tpu.vector_store %arg7[%c0_16, %c0_17], %19 {strides = array<i32>} : memref<40x64xbf16, #tpu.memory_space<vmem>>, vector<40x64xbf16>,
    } else {
    }
    return
  }
  func.func @transform_0(%arg0: i32, %arg1: i32, %arg2: i32) -> (i32, i32) {
    %c0_i32 = arith.constant 0 : i32
    return %arg0, %arg2 : i32, i32
  }
  func.func @transform_1(%arg0: i32, %arg1: i32, %arg2: i32) -> (i32, i32) {
    %c0_i32 = arith.constant 0 : i32
    return %arg2, %arg1 : i32, i32
  }
  func.func @transform_2(%arg0: i32, %arg1: i32, %arg2: i32) -> (i32, i32) {
    %c0_i32 = arith.constant 0 : i32
    %c0_i32_0 = arith.constant 0 : i32
    return %c0_i32, %arg1 : i32, i32
  }
  func.func @transform_3(%arg0: i32, %arg1: i32, %arg2: i32) -> (i32, i32) {
    %c0_i32 = arith.constant 0 : i32
    return %arg0, %arg1 : i32, i32
  }
  func.func @transform_4(%arg0: i32, %arg1: i32, %arg2: i32) -> (i32, i32) {
    %c0_i32 = arith.constant 0 : i32
    return %arg0, %arg1 : i32, i32
  }
}

module attributes {stable_mosaic.version = 11 : i64} {
  func.func @_ln_addpos_linear_kernel(%arg0: i32, %arg1: i32, %arg2: memref<1x16x64xbf16, #tpu.memory_space<vmem>>, %arg3: memref<1x16x64xf32, #tpu.memory_space<vmem>>, %arg4: memref<1x64xf32, #tpu.memory_space<vmem>>, %arg5: memref<1x64xf32, #tpu.memory_space<vmem>>, %arg6: memref<64x64xbf16, #tpu.memory_space<vmem>>, %arg7: memref<1x64xf32, #tpu.memory_space<vmem>>, %arg8: memref<1x16x64xf32, #tpu.memory_space<vmem>>) attributes {dimension_semantics = [#tpu.dimension_semantics<parallel>, #tpu.dimension_semantics<parallel>], iteration_bounds = array<i64: 2, 1>, scalar_prefetch = 0 : i64, scratch_operands = 0 : i64, tpu.core_type = #tpu.core_type<tc>, window_params = [{transform_indices = @transform_0, window_bounds = array<i64: 1, 16, 64>}, {pipeline_mode = #tpu.pipeline_mode<synchronous>, transform_indices = @transform_1, window_bounds = array<i64: 1, 16, 64>}, {pipeline_mode = #tpu.pipeline_mode<synchronous>, transform_indices = @transform_2, window_bounds = array<i64: 1, 64>}, {pipeline_mode = #tpu.pipeline_mode<synchronous>, transform_indices = @transform_3, window_bounds = array<i64: 1, 64>}, {transform_indices = @transform_4, window_bounds = array<i64: 64, 64>}, {transform_indices = @transform_5, window_bounds = array<i64: 1, 64>}, {transform_indices = @transform_6, window_bounds = array<i64: 1, 16, 64>}]} {
    %c0 = arith.constant 0 : index
    %c0_0 = arith.constant 0 : index
    %c0_1 = arith.constant 0 : index
    %0 = vector.load %arg2[%c0, %c0_0, %c0_1] : memref<1x16x64xbf16, #tpu.memory_space<vmem>>, vector<1x16x64xbf16>
    %1 = vector.shape_cast %0 : vector<1x16x64xbf16> to vector<16x64xbf16>
    %2 = arith.extf %1 : vector<16x64xbf16> to vector<16x64xf32>
    %cst = arith.constant dense<0.000000e+00> : vector<16xf32>
    %3 = vector.multi_reduction <add>, %2, %cst [1] : vector<16x64xf32> to vector<16xf32>
    %4 = vector.shape_cast %3 : vector<16xf32> to vector<16x1xf32>
    %cst_2 = arith.constant 6.400000e+01 : f32
    %5 = vector.broadcast %cst_2 : f32 to vector<16x1xf32>
    %6 = arith.divf %4, %5 : vector<16x1xf32>
    %7 = vector.broadcast %6 : vector<16x1xf32> to vector<16x64xf32>
    %8 = arith.subf %2, %7 : vector<16x64xf32>
    %9 = arith.mulf %8, %8 : vector<16x64xf32>
    %cst_3 = arith.constant dense<0.000000e+00> : vector<16xf32>
    %10 = vector.multi_reduction <add>, %9, %cst_3 [1] : vector<16x64xf32> to vector<16xf32>
    %11 = vector.shape_cast %10 : vector<16xf32> to vector<16x1xf32>
    %cst_4 = arith.constant 6.400000e+01 : f32
    %12 = vector.broadcast %cst_4 : f32 to vector<16x1xf32>
    %13 = arith.divf %11, %12 : vector<16x1xf32>
    %cst_5 = arith.constant 9.99999997E-7 : f32
    %14 = vector.broadcast %cst_5 : f32 to vector<16x1xf32>
    %15 = arith.addf %13, %14 : vector<16x1xf32>
    %16 = math.rsqrt %15 : vector<16x1xf32>
    %17 = vector.broadcast %16 : vector<16x1xf32> to vector<16x64xf32>
    %18 = arith.mulf %8, %17 : vector<16x64xf32>
    %c0_6 = arith.constant 0 : index
    %c0_7 = arith.constant 0 : index
    %19 = vector.load %arg4[%c0_6, %c0_7] : memref<1x64xf32, #tpu.memory_space<vmem>>, vector<1x64xf32>
    %20 = vector.broadcast %19 : vector<1x64xf32> to vector<16x64xf32>
    %21 = arith.mulf %18, %20 : vector<16x64xf32>
    %c0_8 = arith.constant 0 : index
    %c0_9 = arith.constant 0 : index
    %22 = vector.load %arg5[%c0_8, %c0_9] : memref<1x64xf32, #tpu.memory_space<vmem>>, vector<1x64xf32>
    %23 = vector.broadcast %22 : vector<1x64xf32> to vector<16x64xf32>
    %24 = arith.addf %21, %23 : vector<16x64xf32>
    %c0_10 = arith.constant 0 : index
    %c0_11 = arith.constant 0 : index
    %c0_12 = arith.constant 0 : index
    %25 = vector.load %arg3[%c0_10, %c0_11, %c0_12] : memref<1x16x64xf32, #tpu.memory_space<vmem>>, vector<1x16x64xf32>
    %26 = vector.shape_cast %25 : vector<1x16x64xf32> to vector<16x64xf32>
    %27 = arith.addf %24, %26 : vector<16x64xf32>
    %28 = arith.truncf %27 : vector<16x64xf32> to vector<16x64xbf16>
    %c0_13 = arith.constant 0 : index
    %c0_14 = arith.constant 0 : index
    %29 = vector.load %arg6[%c0_13, %c0_14] : memref<64x64xbf16, #tpu.memory_space<vmem>>, vector<64x64xbf16>
    %cst_15 = arith.constant dense<0.000000e+00> : vector<16x64xf32>
    %30 = tpu.matmul %28, %29, %cst_15 {dimension_numbers = #tpu.dot_dimension_numbers<[1], [0], [0], [1], [0, 0, 1, 1], [], []>} : vector<16x64xbf16>, vector<64x64xbf16>, vector<16x64xf32> -> vector<16x64xf32>
    %c0_16 = arith.constant 0 : index
    %c0_17 = arith.constant 0 : index
    %31 = vector.load %arg7[%c0_16, %c0_17] : memref<1x64xf32, #tpu.memory_space<vmem>>, vector<1x64xf32>
    %32 = vector.broadcast %31 : vector<1x64xf32> to vector<16x64xf32>
    %33 = arith.addf %30, %32 : vector<16x64xf32>
    %c0_18 = arith.constant 0 : index
    %c0_19 = arith.constant 0 : index
    %c0_20 = arith.constant 0 : index
    %34 = vector.load %arg8[%c0_18, %c0_19, %c0_20] : memref<1x16x64xf32, #tpu.memory_space<vmem>>, vector<1x16x64xf32>
    %35 = vector.shape_cast %34 : vector<1x16x64xf32> to vector<16x64xf32>
    %36 = vector.shape_cast %33 : vector<16x64xf32> to vector<1x16x64xf32>
    tpu.vector_store %arg8[%c0_18, %c0_19, %c0_20], %36 {strides = array<i32>} : memref<1x16x64xf32, #tpu.memory_space<vmem>>, vector<1x16x64xf32>,
    return
  }
  func.func @transform_0(%arg0: i32, %arg1: i32) -> (i32, i32, i32) {
    %c0_i32 = arith.constant 0 : i32
    %c0_i32_0 = arith.constant 0 : i32
    %c0_i32_1 = arith.constant 0 : i32
    return %arg0, %c0_i32, %c0_i32_0 : i32, i32, i32
  }
  func.func @transform_1(%arg0: i32, %arg1: i32) -> (i32, i32, i32) {
    %c0_i32 = arith.constant 0 : i32
    %c0_i32_0 = arith.constant 0 : i32
    %c0_i32_1 = arith.constant 0 : i32
    %c0_i32_2 = arith.constant 0 : i32
    return %c0_i32, %c0_i32_0, %c0_i32_1 : i32, i32, i32
  }
  func.func @transform_2(%arg0: i32, %arg1: i32) -> (i32, i32) {
    %c0_i32 = arith.constant 0 : i32
    %c0_i32_0 = arith.constant 0 : i32
    %c0_i32_1 = arith.constant 0 : i32
    return %c0_i32, %c0_i32_0 : i32, i32
  }
  func.func @transform_3(%arg0: i32, %arg1: i32) -> (i32, i32) {
    %c0_i32 = arith.constant 0 : i32
    %c0_i32_0 = arith.constant 0 : i32
    %c0_i32_1 = arith.constant 0 : i32
    return %c0_i32, %c0_i32_0 : i32, i32
  }
  func.func @transform_4(%arg0: i32, %arg1: i32) -> (i32, i32) {
    %c0_i32 = arith.constant 0 : i32
    %c0_i32_0 = arith.constant 0 : i32
    return %c0_i32, %arg1 : i32, i32
  }
  func.func @transform_5(%arg0: i32, %arg1: i32) -> (i32, i32) {
    %c0_i32 = arith.constant 0 : i32
    %c0_i32_0 = arith.constant 0 : i32
    return %c0_i32, %arg1 : i32, i32
  }
  func.func @transform_6(%arg0: i32, %arg1: i32) -> (i32, i32, i32) {
    %c0_i32 = arith.constant 0 : i32
    %c0_i32_0 = arith.constant 0 : i32
    return %arg0, %c0_i32, %arg1 : i32, i32, i32
  }
}

module attributes {stable_mosaic.version = 11 : i64} {
  func.func @_linear_kernel(%arg0: i32, %arg1: i32, %arg2: i32, %arg3: memref<64x64xbf16, #tpu.memory_space<vmem>>, %arg4: memref<64x64xbf16, #tpu.memory_space<vmem>>, %arg5: memref<1x64xf32, #tpu.memory_space<vmem>>, %arg6: memref<64x64xf32, #tpu.memory_space<vmem>>, %arg7: memref<64x64xf32, #tpu.memory_space<vmem>>) attributes {dimension_semantics = [#tpu.dimension_semantics<parallel>, #tpu.dimension_semantics<parallel>, #tpu.dimension_semantics<arbitrary>], iteration_bounds = array<i64: 1, 1, 1>, scalar_prefetch = 0 : i64, scratch_operands = 1 : i64, tpu.core_type = #tpu.core_type<tc>, window_params = [{transform_indices = @transform_0, window_bounds = array<i64: 64, 64>}, {transform_indices = @transform_1, window_bounds = array<i64: 64, 64>}, {transform_indices = @transform_2, window_bounds = array<i64: 1, 64>}, {transform_indices = @transform_3, window_bounds = array<i64: 64, 64>}]} {
    %c0_i32 = arith.constant 0 : i32
    %0 = arith.cmpi eq, %arg2, %c0_i32 : i32
    %1 = arith.extui %0 : i1 to i32
    %c0_i32_0 = arith.constant 0 : i32
    %2 = arith.cmpi ne, %1, %c0_i32_0 : i32
    scf.if %2 {
      %cst_10 = arith.constant 0.000000e+00 : f32
      %12 = vector.broadcast %cst_10 : f32 to vector<64x64xf32>
      %c0_11 = arith.constant 0 : index
      %c0_12 = arith.constant 0 : index
      %13 = vector.load %arg7[%c0_11, %c0_12] : memref<64x64xf32, #tpu.memory_space<vmem>>, vector<64x64xf32>
      tpu.vector_store %arg7[%c0_11, %c0_12], %12 {strides = array<i32>} : memref<64x64xf32, #tpu.memory_space<vmem>>, vector<64x64xf32>,
    } else {
    }
    %c0 = arith.constant 0 : index
    %c0_1 = arith.constant 0 : index
    %3 = vector.load %arg7[%c0, %c0_1] : memref<64x64xf32, #tpu.memory_space<vmem>>, vector<64x64xf32>
    %c0_2 = arith.constant 0 : index
    %c0_3 = arith.constant 0 : index
    %4 = vector.load %arg3[%c0_2, %c0_3] : memref<64x64xbf16, #tpu.memory_space<vmem>>, vector<64x64xbf16>
    %c0_4 = arith.constant 0 : index
    %c0_5 = arith.constant 0 : index
    %5 = vector.load %arg4[%c0_4, %c0_5] : memref<64x64xbf16, #tpu.memory_space<vmem>>, vector<64x64xbf16>
    %cst = arith.constant dense<0.000000e+00> : vector<64x64xf32>
    %6 = tpu.matmul %4, %5, %cst {dimension_numbers = #tpu.dot_dimension_numbers<[1], [0], [0], [1], [0, 0, 1, 1], [], []>} : vector<64x64xbf16>, vector<64x64xbf16>, vector<64x64xf32> -> vector<64x64xf32>
    %7 = arith.addf %3, %6 : vector<64x64xf32>
    %c0_6 = arith.constant 0 : index
    %c0_7 = arith.constant 0 : index
    %8 = vector.load %arg7[%c0_6, %c0_7] : memref<64x64xf32, #tpu.memory_space<vmem>>, vector<64x64xf32>
    tpu.vector_store %arg7[%c0_6, %c0_7], %7 {strides = array<i32>} : memref<64x64xf32, #tpu.memory_space<vmem>>, vector<64x64xf32>,
    %c0_i32_8 = arith.constant 0 : i32
    %9 = arith.cmpi eq, %arg2, %c0_i32_8 : i32
    %10 = arith.extui %9 : i1 to i32
    %c0_i32_9 = arith.constant 0 : i32
    %11 = arith.cmpi ne, %10, %c0_i32_9 : i32
    scf.if %11 {
      %c0_10 = arith.constant 0 : index
      %c0_11 = arith.constant 0 : index
      %12 = vector.load %arg7[%c0_10, %c0_11] : memref<64x64xf32, #tpu.memory_space<vmem>>, vector<64x64xf32>
      %c0_12 = arith.constant 0 : index
      %c0_13 = arith.constant 0 : index
      %13 = vector.load %arg5[%c0_12, %c0_13] : memref<1x64xf32, #tpu.memory_space<vmem>>, vector<1x64xf32>
      %14 = vector.broadcast %13 : vector<1x64xf32> to vector<64x64xf32>
      %15 = arith.addf %12, %14 : vector<64x64xf32>
      %c0_14 = arith.constant 0 : index
      %c0_15 = arith.constant 0 : index
      %16 = vector.load %arg6[%c0_14, %c0_15] : memref<64x64xf32, #tpu.memory_space<vmem>>, vector<64x64xf32>
      tpu.vector_store %arg6[%c0_14, %c0_15], %15 {strides = array<i32>} : memref<64x64xf32, #tpu.memory_space<vmem>>, vector<64x64xf32>,
    } else {
    }
    return
  }
  func.func @transform_0(%arg0: i32, %arg1: i32, %arg2: i32) -> (i32, i32) {
    %c0_i32 = arith.constant 0 : i32
    return %arg0, %arg2 : i32, i32
  }
  func.func @transform_1(%arg0: i32, %arg1: i32, %arg2: i32) -> (i32, i32) {
    %c0_i32 = arith.constant 0 : i32
    return %arg2, %arg1 : i32, i32
  }
  func.func @transform_2(%arg0: i32, %arg1: i32, %arg2: i32) -> (i32, i32) {
    %c0_i32 = arith.constant 0 : i32
    %c0_i32_0 = arith.constant 0 : i32
    return %c0_i32, %arg1 : i32, i32
  }
  func.func @transform_3(%arg0: i32, %arg1: i32, %arg2: i32) -> (i32, i32) {
    %c0_i32 = arith.constant 0 : i32
    return %arg0, %arg1 : i32, i32
  }
}

module attributes {stable_mosaic.version = 11 : i64} {
  func.func @_linear_kernel(%arg0: i32, %arg1: i32, %arg2: i32, %arg3: memref<64x64xbf16, #tpu.memory_space<vmem>>, %arg4: memref<64x64xbf16, #tpu.memory_space<vmem>>, %arg5: memref<1x64xf32, #tpu.memory_space<vmem>>, %arg6: memref<64x64xbf16, #tpu.memory_space<vmem>>, %arg7: memref<64x64xf32, #tpu.memory_space<vmem>>) attributes {dimension_semantics = [#tpu.dimension_semantics<parallel>, #tpu.dimension_semantics<parallel>, #tpu.dimension_semantics<arbitrary>], iteration_bounds = array<i64: 1, 1, 1>, scalar_prefetch = 0 : i64, scratch_operands = 1 : i64, tpu.core_type = #tpu.core_type<tc>, window_params = [{transform_indices = @transform_0, window_bounds = array<i64: 64, 64>}, {transform_indices = @transform_1, window_bounds = array<i64: 64, 64>}, {transform_indices = @transform_2, window_bounds = array<i64: 1, 64>}, {transform_indices = @transform_3, window_bounds = array<i64: 64, 64>}]} {
    %c0_i32 = arith.constant 0 : i32
    %0 = arith.cmpi eq, %arg2, %c0_i32 : i32
    %1 = arith.extui %0 : i1 to i32
    %c0_i32_0 = arith.constant 0 : i32
    %2 = arith.cmpi ne, %1, %c0_i32_0 : i32
    scf.if %2 {
      %cst_10 = arith.constant 0.000000e+00 : f32
      %12 = vector.broadcast %cst_10 : f32 to vector<64x64xf32>
      %c0_11 = arith.constant 0 : index
      %c0_12 = arith.constant 0 : index
      %13 = vector.load %arg7[%c0_11, %c0_12] : memref<64x64xf32, #tpu.memory_space<vmem>>, vector<64x64xf32>
      tpu.vector_store %arg7[%c0_11, %c0_12], %12 {strides = array<i32>} : memref<64x64xf32, #tpu.memory_space<vmem>>, vector<64x64xf32>,
    } else {
    }
    %c0 = arith.constant 0 : index
    %c0_1 = arith.constant 0 : index
    %3 = vector.load %arg7[%c0, %c0_1] : memref<64x64xf32, #tpu.memory_space<vmem>>, vector<64x64xf32>
    %c0_2 = arith.constant 0 : index
    %c0_3 = arith.constant 0 : index
    %4 = vector.load %arg3[%c0_2, %c0_3] : memref<64x64xbf16, #tpu.memory_space<vmem>>, vector<64x64xbf16>
    %c0_4 = arith.constant 0 : index
    %c0_5 = arith.constant 0 : index
    %5 = vector.load %arg4[%c0_4, %c0_5] : memref<64x64xbf16, #tpu.memory_space<vmem>>, vector<64x64xbf16>
    %cst = arith.constant dense<0.000000e+00> : vector<64x64xf32>
    %6 = tpu.matmul %4, %5, %cst {dimension_numbers = #tpu.dot_dimension_numbers<[1], [0], [0], [1], [0, 0, 1, 1], [], []>} : vector<64x64xbf16>, vector<64x64xbf16>, vector<64x64xf32> -> vector<64x64xf32>
    %7 = arith.addf %3, %6 : vector<64x64xf32>
    %c0_6 = arith.constant 0 : index
    %c0_7 = arith.constant 0 : index
    %8 = vector.load %arg7[%c0_6, %c0_7] : memref<64x64xf32, #tpu.memory_space<vmem>>, vector<64x64xf32>
    tpu.vector_store %arg7[%c0_6, %c0_7], %7 {strides = array<i32>} : memref<64x64xf32, #tpu.memory_space<vmem>>, vector<64x64xf32>,
    %c0_i32_8 = arith.constant 0 : i32
    %9 = arith.cmpi eq, %arg2, %c0_i32_8 : i32
    %10 = arith.extui %9 : i1 to i32
    %c0_i32_9 = arith.constant 0 : i32
    %11 = arith.cmpi ne, %10, %c0_i32_9 : i32
    scf.if %11 {
      %c0_10 = arith.constant 0 : index
      %c0_11 = arith.constant 0 : index
      %12 = vector.load %arg7[%c0_10, %c0_11] : memref<64x64xf32, #tpu.memory_space<vmem>>, vector<64x64xf32>
      %c0_12 = arith.constant 0 : index
      %c0_13 = arith.constant 0 : index
      %13 = vector.load %arg5[%c0_12, %c0_13] : memref<1x64xf32, #tpu.memory_space<vmem>>, vector<1x64xf32>
      %14 = vector.broadcast %13 : vector<1x64xf32> to vector<64x64xf32>
      %15 = arith.addf %12, %14 : vector<64x64xf32>
      %16 = arith.negf %15 : vector<64x64xf32>
      %17 = math.exp %16 : vector<64x64xf32>
      %cst_14 = arith.constant 1.000000e+00 : f32
      %18 = vector.broadcast %cst_14 : f32 to vector<64x64xf32>
      %19 = arith.addf %18, %17 : vector<64x64xf32>
      %20 = arith.divf %18, %19 : vector<64x64xf32>
      %21 = arith.mulf %15, %20 : vector<64x64xf32>
      %22 = arith.truncf %21 : vector<64x64xf32> to vector<64x64xbf16>
      %c0_15 = arith.constant 0 : index
      %c0_16 = arith.constant 0 : index
      %23 = vector.load %arg6[%c0_15, %c0_16] : memref<64x64xbf16, #tpu.memory_space<vmem>>, vector<64x64xbf16>
      tpu.vector_store %arg6[%c0_15, %c0_16], %22 {strides = array<i32>} : memref<64x64xbf16, #tpu.memory_space<vmem>>, vector<64x64xbf16>,
    } else {
    }
    return
  }
  func.func @transform_0(%arg0: i32, %arg1: i32, %arg2: i32) -> (i32, i32) {
    %c0_i32 = arith.constant 0 : i32
    return %arg0, %arg2 : i32, i32
  }
  func.func @transform_1(%arg0: i32, %arg1: i32, %arg2: i32) -> (i32, i32) {
    %c0_i32 = arith.constant 0 : i32
    return %arg2, %arg1 : i32, i32
  }
  func.func @transform_2(%arg0: i32, %arg1: i32, %arg2: i32) -> (i32, i32) {
    %c0_i32 = arith.constant 0 : i32
    %c0_i32_0 = arith.constant 0 : i32
    return %c0_i32, %arg1 : i32, i32
  }
  func.func @transform_3(%arg0: i32, %arg1: i32, %arg2: i32) -> (i32, i32) {
    %c0_i32 = arith.constant 0 : i32
    return %arg0, %arg1 : i32, i32
  }
}

module attributes {stable_mosaic.version = 11 : i64} {
  func.func @_linear_kernel(%arg0: i32, %arg1: i32, %arg2: i32, %arg3: memref<64x64xbf16, #tpu.memory_space<vmem>>, %arg4: memref<64x192xbf16, #tpu.memory_space<vmem>>, %arg5: memref<1x192xf32, #tpu.memory_space<vmem>>, %arg6: memref<64x192xbf16, #tpu.memory_space<vmem>>, %arg7: memref<64x192xf32, #tpu.memory_space<vmem>>) attributes {dimension_semantics = [#tpu.dimension_semantics<parallel>, #tpu.dimension_semantics<parallel>, #tpu.dimension_semantics<arbitrary>], iteration_bounds = array<i64: 1, 1, 1>, scalar_prefetch = 0 : i64, scratch_operands = 1 : i64, tpu.core_type = #tpu.core_type<tc>, window_params = [{transform_indices = @transform_0, window_bounds = array<i64: 64, 64>}, {transform_indices = @transform_1, window_bounds = array<i64: 64, 192>}, {transform_indices = @transform_2, window_bounds = array<i64: 1, 192>}, {transform_indices = @transform_3, window_bounds = array<i64: 64, 192>}]} {
    %c0_i32 = arith.constant 0 : i32
    %0 = arith.cmpi eq, %arg2, %c0_i32 : i32
    %1 = arith.extui %0 : i1 to i32
    %c0_i32_0 = arith.constant 0 : i32
    %2 = arith.cmpi ne, %1, %c0_i32_0 : i32
    scf.if %2 {
      %cst_10 = arith.constant 0.000000e+00 : f32
      %12 = vector.broadcast %cst_10 : f32 to vector<64x192xf32>
      %c0_11 = arith.constant 0 : index
      %c0_12 = arith.constant 0 : index
      %13 = vector.load %arg7[%c0_11, %c0_12] : memref<64x192xf32, #tpu.memory_space<vmem>>, vector<64x192xf32>
      tpu.vector_store %arg7[%c0_11, %c0_12], %12 {strides = array<i32>} : memref<64x192xf32, #tpu.memory_space<vmem>>, vector<64x192xf32>,
    } else {
    }
    %c0 = arith.constant 0 : index
    %c0_1 = arith.constant 0 : index
    %3 = vector.load %arg7[%c0, %c0_1] : memref<64x192xf32, #tpu.memory_space<vmem>>, vector<64x192xf32>
    %c0_2 = arith.constant 0 : index
    %c0_3 = arith.constant 0 : index
    %4 = vector.load %arg3[%c0_2, %c0_3] : memref<64x64xbf16, #tpu.memory_space<vmem>>, vector<64x64xbf16>
    %c0_4 = arith.constant 0 : index
    %c0_5 = arith.constant 0 : index
    %5 = vector.load %arg4[%c0_4, %c0_5] : memref<64x192xbf16, #tpu.memory_space<vmem>>, vector<64x192xbf16>
    %cst = arith.constant dense<0.000000e+00> : vector<64x192xf32>
    %6 = tpu.matmul %4, %5, %cst {dimension_numbers = #tpu.dot_dimension_numbers<[1], [0], [0], [1], [0, 0, 1, 1], [], []>} : vector<64x64xbf16>, vector<64x192xbf16>, vector<64x192xf32> -> vector<64x192xf32>
    %7 = arith.addf %3, %6 : vector<64x192xf32>
    %c0_6 = arith.constant 0 : index
    %c0_7 = arith.constant 0 : index
    %8 = vector.load %arg7[%c0_6, %c0_7] : memref<64x192xf32, #tpu.memory_space<vmem>>, vector<64x192xf32>
    tpu.vector_store %arg7[%c0_6, %c0_7], %7 {strides = array<i32>} : memref<64x192xf32, #tpu.memory_space<vmem>>, vector<64x192xf32>,
    %c0_i32_8 = arith.constant 0 : i32
    %9 = arith.cmpi eq, %arg2, %c0_i32_8 : i32
    %10 = arith.extui %9 : i1 to i32
    %c0_i32_9 = arith.constant 0 : i32
    %11 = arith.cmpi ne, %10, %c0_i32_9 : i32
    scf.if %11 {
      %c0_10 = arith.constant 0 : index
      %c0_11 = arith.constant 0 : index
      %12 = vector.load %arg7[%c0_10, %c0_11] : memref<64x192xf32, #tpu.memory_space<vmem>>, vector<64x192xf32>
      %c0_12 = arith.constant 0 : index
      %c0_13 = arith.constant 0 : index
      %13 = vector.load %arg5[%c0_12, %c0_13] : memref<1x192xf32, #tpu.memory_space<vmem>>, vector<1x192xf32>
      %14 = vector.broadcast %13 : vector<1x192xf32> to vector<64x192xf32>
      %15 = arith.addf %12, %14 : vector<64x192xf32>
      %16 = arith.truncf %15 : vector<64x192xf32> to vector<64x192xbf16>
      %c0_14 = arith.constant 0 : index
      %c0_15 = arith.constant 0 : index
      %17 = vector.load %arg6[%c0_14, %c0_15] : memref<64x192xbf16, #tpu.memory_space<vmem>>, vector<64x192xbf16>
      tpu.vector_store %arg6[%c0_14, %c0_15], %16 {strides = array<i32>} : memref<64x192xbf16, #tpu.memory_space<vmem>>, vector<64x192xbf16>,
    } else {
    }
    return
  }
  func.func @transform_0(%arg0: i32, %arg1: i32, %arg2: i32) -> (i32, i32) {
    %c0_i32 = arith.constant 0 : i32
    return %arg0, %arg2 : i32, i32
  }
  func.func @transform_1(%arg0: i32, %arg1: i32, %arg2: i32) -> (i32, i32) {
    %c0_i32 = arith.constant 0 : i32
    return %arg2, %arg1 : i32, i32
  }
  func.func @transform_2(%arg0: i32, %arg1: i32, %arg2: i32) -> (i32, i32) {
    %c0_i32 = arith.constant 0 : i32
    %c0_i32_0 = arith.constant 0 : i32
    return %c0_i32, %arg1 : i32, i32
  }
  func.func @transform_3(%arg0: i32, %arg1: i32, %arg2: i32) -> (i32, i32) {
    %c0_i32 = arith.constant 0 : i32
    return %arg0, %arg1 : i32, i32
  }
}

module attributes {stable_mosaic.version = 11 : i64} {
  func.func @_linear_kernel(%arg0: i32, %arg1: i32, %arg2: i32, %arg3: memref<64x4xbf16, #tpu.memory_space<vmem>>, %arg4: memref<4x64xbf16, #tpu.memory_space<vmem>>, %arg5: memref<1x64xf32, #tpu.memory_space<vmem>>, %arg6: memref<64x64xbf16, #tpu.memory_space<vmem>>, %arg7: memref<64x64xf32, #tpu.memory_space<vmem>>) attributes {dimension_semantics = [#tpu.dimension_semantics<parallel>, #tpu.dimension_semantics<parallel>, #tpu.dimension_semantics<arbitrary>], iteration_bounds = array<i64: 1, 1, 1>, scalar_prefetch = 0 : i64, scratch_operands = 1 : i64, tpu.core_type = #tpu.core_type<tc>, window_params = [{transform_indices = @transform_0, window_bounds = array<i64: 64, 4>}, {transform_indices = @transform_1, window_bounds = array<i64: 4, 64>}, {transform_indices = @transform_2, window_bounds = array<i64: 1, 64>}, {transform_indices = @transform_3, window_bounds = array<i64: 64, 64>}]} {
    %c0_i32 = arith.constant 0 : i32
    %0 = arith.cmpi eq, %arg2, %c0_i32 : i32
    %1 = arith.extui %0 : i1 to i32
    %c0_i32_0 = arith.constant 0 : i32
    %2 = arith.cmpi ne, %1, %c0_i32_0 : i32
    scf.if %2 {
      %cst_10 = arith.constant 0.000000e+00 : f32
      %12 = vector.broadcast %cst_10 : f32 to vector<64x64xf32>
      %c0_11 = arith.constant 0 : index
      %c0_12 = arith.constant 0 : index
      %13 = vector.load %arg7[%c0_11, %c0_12] : memref<64x64xf32, #tpu.memory_space<vmem>>, vector<64x64xf32>
      tpu.vector_store %arg7[%c0_11, %c0_12], %12 {strides = array<i32>} : memref<64x64xf32, #tpu.memory_space<vmem>>, vector<64x64xf32>,
    } else {
    }
    %c0 = arith.constant 0 : index
    %c0_1 = arith.constant 0 : index
    %3 = vector.load %arg7[%c0, %c0_1] : memref<64x64xf32, #tpu.memory_space<vmem>>, vector<64x64xf32>
    %c0_2 = arith.constant 0 : index
    %c0_3 = arith.constant 0 : index
    %4 = vector.load %arg3[%c0_2, %c0_3] : memref<64x4xbf16, #tpu.memory_space<vmem>>, vector<64x4xbf16>
    %c0_4 = arith.constant 0 : index
    %c0_5 = arith.constant 0 : index
    %5 = vector.load %arg4[%c0_4, %c0_5] : memref<4x64xbf16, #tpu.memory_space<vmem>>, vector<4x64xbf16>
    %cst = arith.constant dense<0.000000e+00> : vector<64x64xf32>
    %6 = tpu.matmul %4, %5, %cst {dimension_numbers = #tpu.dot_dimension_numbers<[1], [0], [0], [1], [0, 0, 1, 1], [], []>} : vector<64x4xbf16>, vector<4x64xbf16>, vector<64x64xf32> -> vector<64x64xf32>
    %7 = arith.addf %3, %6 : vector<64x64xf32>
    %c0_6 = arith.constant 0 : index
    %c0_7 = arith.constant 0 : index
    %8 = vector.load %arg7[%c0_6, %c0_7] : memref<64x64xf32, #tpu.memory_space<vmem>>, vector<64x64xf32>
    tpu.vector_store %arg7[%c0_6, %c0_7], %7 {strides = array<i32>} : memref<64x64xf32, #tpu.memory_space<vmem>>, vector<64x64xf32>,
    %c0_i32_8 = arith.constant 0 : i32
    %9 = arith.cmpi eq, %arg2, %c0_i32_8 : i32
    %10 = arith.extui %9 : i1 to i32
    %c0_i32_9 = arith.constant 0 : i32
    %11 = arith.cmpi ne, %10, %c0_i32_9 : i32
    scf.if %11 {
      %c0_10 = arith.constant 0 : index
      %c0_11 = arith.constant 0 : index
      %12 = vector.load %arg7[%c0_10, %c0_11] : memref<64x64xf32, #tpu.memory_space<vmem>>, vector<64x64xf32>
      %c0_12 = arith.constant 0 : index
      %c0_13 = arith.constant 0 : index
      %13 = vector.load %arg5[%c0_12, %c0_13] : memref<1x64xf32, #tpu.memory_space<vmem>>, vector<1x64xf32>
      %14 = vector.broadcast %13 : vector<1x64xf32> to vector<64x64xf32>
      %15 = arith.addf %12, %14 : vector<64x64xf32>
      %16 = arith.truncf %15 : vector<64x64xf32> to vector<64x64xbf16>
      %c0_14 = arith.constant 0 : index
      %c0_15 = arith.constant 0 : index
      %17 = vector.load %arg6[%c0_14, %c0_15] : memref<64x64xbf16, #tpu.memory_space<vmem>>, vector<64x64xbf16>
      tpu.vector_store %arg6[%c0_14, %c0_15], %16 {strides = array<i32>} : memref<64x64xbf16, #tpu.memory_space<vmem>>, vector<64x64xbf16>,
    } else {
    }
    return
  }
  func.func @transform_0(%arg0: i32, %arg1: i32, %arg2: i32) -> (i32, i32) {
    %c0_i32 = arith.constant 0 : i32
    return %arg0, %arg2 : i32, i32
  }
  func.func @transform_1(%arg0: i32, %arg1: i32, %arg2: i32) -> (i32, i32) {
    %c0_i32 = arith.constant 0 : i32
    return %arg2, %arg1 : i32, i32
  }
  func.func @transform_2(%arg0: i32, %arg1: i32, %arg2: i32) -> (i32, i32) {
    %c0_i32 = arith.constant 0 : i32
    %c0_i32_0 = arith.constant 0 : i32
    return %c0_i32, %arg1 : i32, i32
  }
  func.func @transform_3(%arg0: i32, %arg1: i32, %arg2: i32) -> (i32, i32) {
    %c0_i32 = arith.constant 0 : i32
    return %arg0, %arg1 : i32, i32
  }
}

module attributes {stable_mosaic.version = 11 : i64} {
  func.func @_ln_linear_kernel(%arg0: i32, %arg1: i32, %arg2: memref<64x64xbf16, #tpu.memory_space<vmem>>, %arg3: memref<1x64xf32, #tpu.memory_space<vmem>>, %arg4: memref<1x64xf32, #tpu.memory_space<vmem>>, %arg5: memref<64x192xbf16, #tpu.memory_space<vmem>>, %arg6: memref<64x64xbf16, #tpu.memory_space<vmem>>, %arg7: memref<1x64xf32, #tpu.memory_space<vmem>>, %arg8: memref<64x64xbf16, #tpu.memory_space<vmem>>) attributes {dimension_semantics = [#tpu.dimension_semantics<parallel>, #tpu.dimension_semantics<parallel>], iteration_bounds = array<i64: 1, 1>, scalar_prefetch = 0 : i64, scratch_operands = 0 : i64, tpu.core_type = #tpu.core_type<tc>, window_params = [{transform_indices = @transform_0, window_bounds = array<i64: 64, 64>}, {pipeline_mode = #tpu.pipeline_mode<synchronous>, transform_indices = @transform_1, window_bounds = array<i64: 1, 64>}, {pipeline_mode = #tpu.pipeline_mode<synchronous>, transform_indices = @transform_2, window_bounds = array<i64: 1, 64>}, {transform_indices = @transform_3, window_bounds = array<i64: 64, 192>}, {transform_indices = @transform_4, window_bounds = array<i64: 64, 64>}, {transform_indices = @transform_5, window_bounds = array<i64: 1, 64>}, {transform_indices = @transform_6, window_bounds = array<i64: 64, 64>}]} {
    %c0 = arith.constant 0 : index
    %c0_0 = arith.constant 0 : index
    %0 = vector.load %arg2[%c0, %c0_0] : memref<64x64xbf16, #tpu.memory_space<vmem>>, vector<64x64xbf16>
    %1 = arith.extf %0 : vector<64x64xbf16> to vector<64x64xf32>
    %cst = arith.constant dense<0.000000e+00> : vector<64xf32>
    %2 = vector.multi_reduction <add>, %1, %cst [1] : vector<64x64xf32> to vector<64xf32>
    %3 = vector.shape_cast %2 : vector<64xf32> to vector<64x1xf32>
    %cst_1 = arith.constant 6.400000e+01 : f32
    %4 = vector.broadcast %cst_1 : f32 to vector<64x1xf32>
    %5 = arith.divf %3, %4 : vector<64x1xf32>
    %6 = vector.broadcast %5 : vector<64x1xf32> to vector<64x64xf32>
    %7 = arith.subf %1, %6 : vector<64x64xf32>
    %8 = arith.mulf %7, %7 : vector<64x64xf32>
    %cst_2 = arith.constant dense<0.000000e+00> : vector<64xf32>
    %9 = vector.multi_reduction <add>, %8, %cst_2 [1] : vector<64x64xf32> to vector<64xf32>
    %10 = vector.shape_cast %9 : vector<64xf32> to vector<64x1xf32>
    %cst_3 = arith.constant 6.400000e+01 : f32
    %11 = vector.broadcast %cst_3 : f32 to vector<64x1xf32>
    %12 = arith.divf %10, %11 : vector<64x1xf32>
    %cst_4 = arith.constant 9.99999997E-7 : f32
    %13 = vector.broadcast %cst_4 : f32 to vector<64x1xf32>
    %14 = arith.addf %12, %13 : vector<64x1xf32>
    %15 = math.rsqrt %14 : vector<64x1xf32>
    %16 = vector.broadcast %15 : vector<64x1xf32> to vector<64x64xf32>
    %17 = arith.mulf %7, %16 : vector<64x64xf32>
    %c0_5 = arith.constant 0 : index
    %c0_6 = arith.constant 0 : index
    %18 = vector.load %arg3[%c0_5, %c0_6] : memref<1x64xf32, #tpu.memory_space<vmem>>, vector<1x64xf32>
    %19 = vector.broadcast %18 : vector<1x64xf32> to vector<64x64xf32>
    %20 = arith.mulf %17, %19 : vector<64x64xf32>
    %c0_7 = arith.constant 0 : index
    %c0_8 = arith.constant 0 : index
    %21 = vector.load %arg4[%c0_7, %c0_8] : memref<1x64xf32, #tpu.memory_space<vmem>>, vector<1x64xf32>
    %22 = vector.broadcast %21 : vector<1x64xf32> to vector<64x64xf32>
    %23 = arith.addf %20, %22 : vector<64x64xf32>
    %c0_9 = arith.constant 0 : index
    %c0_10 = arith.constant 0 : index
    %24 = vector.load %arg5[%c0_9, %c0_10] : memref<64x192xbf16, #tpu.memory_space<vmem>>, vector<64x64xbf16>
    %25 = arith.extf %24 : vector<64x64xbf16> to vector<64x64xf32>
    %c0_11 = arith.constant 0 : index
    %c64 = arith.constant 64 : index
    %26 = vector.load %arg5[%c0_11, %c64] : memref<64x192xbf16, #tpu.memory_space<vmem>>, vector<64x64xbf16>
    %27 = arith.extf %26 : vector<64x64xbf16> to vector<64x64xf32>
    %cst_12 = arith.constant 1.000000e+00 : f32
    %28 = vector.broadcast %cst_12 : f32 to vector<64x64xf32>
    %29 = arith.addf %28, %27 : vector<64x64xf32>
    %30 = arith.mulf %23, %29 : vector<64x64xf32>
    %31 = arith.addf %30, %25 : vector<64x64xf32>
    %32 = arith.truncf %31 : vector<64x64xf32> to vector<64x64xbf16>
    %c0_13 = arith.constant 0 : index
    %c0_14 = arith.constant 0 : index
    %33 = vector.load %arg6[%c0_13, %c0_14] : memref<64x64xbf16, #tpu.memory_space<vmem>>, vector<64x64xbf16>
    %cst_15 = arith.constant dense<0.000000e+00> : vector<64x64xf32>
    %34 = tpu.matmul %32, %33, %cst_15 {dimension_numbers = #tpu.dot_dimension_numbers<[1], [0], [0], [1], [0, 0, 1, 1], [], []>} : vector<64x64xbf16>, vector<64x64xbf16>, vector<64x64xf32> -> vector<64x64xf32>
    %c0_16 = arith.constant 0 : index
    %c0_17 = arith.constant 0 : index
    %35 = vector.load %arg7[%c0_16, %c0_17] : memref<1x64xf32, #tpu.memory_space<vmem>>, vector<1x64xf32>
    %36 = vector.broadcast %35 : vector<1x64xf32> to vector<64x64xf32>
    %37 = arith.addf %34, %36 : vector<64x64xf32>
    %38 = arith.negf %37 : vector<64x64xf32>
    %39 = math.exp %38 : vector<64x64xf32>
    %cst_18 = arith.constant 1.000000e+00 : f32
    %40 = vector.broadcast %cst_18 : f32 to vector<64x64xf32>
    %41 = arith.addf %40, %39 : vector<64x64xf32>
    %42 = arith.divf %40, %41 : vector<64x64xf32>
    %43 = arith.mulf %37, %42 : vector<64x64xf32>
    %44 = arith.truncf %43 : vector<64x64xf32> to vector<64x64xbf16>
    %c0_19 = arith.constant 0 : index
    %c0_20 = arith.constant 0 : index
    %45 = vector.load %arg8[%c0_19, %c0_20] : memref<64x64xbf16, #tpu.memory_space<vmem>>, vector<64x64xbf16>
    tpu.vector_store %arg8[%c0_19, %c0_20], %44 {strides = array<i32>} : memref<64x64xbf16, #tpu.memory_space<vmem>>, vector<64x64xbf16>,
    return
  }
  func.func @transform_0(%arg0: i32, %arg1: i32) -> (i32, i32) {
    %c0_i32 = arith.constant 0 : i32
    %c0_i32_0 = arith.constant 0 : i32
    return %arg0, %c0_i32 : i32, i32
  }
  func.func @transform_1(%arg0: i32, %arg1: i32) -> (i32, i32) {
    %c0_i32 = arith.constant 0 : i32
    %c0_i32_0 = arith.constant 0 : i32
    %c0_i32_1 = arith.constant 0 : i32
    return %c0_i32, %c0_i32_0 : i32, i32
  }
  func.func @transform_2(%arg0: i32, %arg1: i32) -> (i32, i32) {
    %c0_i32 = arith.constant 0 : i32
    %c0_i32_0 = arith.constant 0 : i32
    %c0_i32_1 = arith.constant 0 : i32
    return %c0_i32, %c0_i32_0 : i32, i32
  }
  func.func @transform_3(%arg0: i32, %arg1: i32) -> (i32, i32) {
    %c0_i32 = arith.constant 0 : i32
    %c0_i32_0 = arith.constant 0 : i32
    return %arg0, %c0_i32 : i32, i32
  }
  func.func @transform_4(%arg0: i32, %arg1: i32) -> (i32, i32) {
    %c0_i32 = arith.constant 0 : i32
    %c0_i32_0 = arith.constant 0 : i32
    return %c0_i32, %arg1 : i32, i32
  }
  func.func @transform_5(%arg0: i32, %arg1: i32) -> (i32, i32) {
    %c0_i32 = arith.constant 0 : i32
    %c0_i32_0 = arith.constant 0 : i32
    return %c0_i32, %arg1 : i32, i32
  }
  func.func @transform_6(%arg0: i32, %arg1: i32) -> (i32, i32) {
    %c0_i32 = arith.constant 0 : i32
    return %arg0, %arg1 : i32, i32
  }
}

module attributes {stable_mosaic.version = 11 : i64} {
  func.func @_linear_kernel(%arg0: i32, %arg1: i32, %arg2: i32, %arg3: memref<64x64xbf16, #tpu.memory_space<vmem>>, %arg4: memref<64x64xbf16, #tpu.memory_space<vmem>>, %arg5: memref<1x64xf32, #tpu.memory_space<vmem>>, %arg6: memref<64x64xbf16, #tpu.memory_space<vmem>>, %arg7: memref<64x64xbf16, #tpu.memory_space<vmem>>, %arg8: memref<64x64xbf16, #tpu.memory_space<vmem>>, %arg9: memref<64x64xf32, #tpu.memory_space<vmem>>) attributes {dimension_semantics = [#tpu.dimension_semantics<parallel>, #tpu.dimension_semantics<parallel>, #tpu.dimension_semantics<arbitrary>], iteration_bounds = array<i64: 1, 1, 1>, scalar_prefetch = 0 : i64, scratch_operands = 1 : i64, tpu.core_type = #tpu.core_type<tc>, window_params = [{transform_indices = @transform_0, window_bounds = array<i64: 64, 64>}, {transform_indices = @transform_1, window_bounds = array<i64: 64, 64>}, {transform_indices = @transform_2, window_bounds = array<i64: 1, 64>}, {transform_indices = @transform_3, window_bounds = array<i64: 64, 64>}, {transform_indices = @transform_4, window_bounds = array<i64: 64, 64>}, {transform_indices = @transform_5, window_bounds = array<i64: 64, 64>}]} {
    %c0_i32 = arith.constant 0 : i32
    %0 = arith.cmpi eq, %arg2, %c0_i32 : i32
    %1 = arith.extui %0 : i1 to i32
    %c0_i32_0 = arith.constant 0 : i32
    %2 = arith.cmpi ne, %1, %c0_i32_0 : i32
    scf.if %2 {
      %cst_10 = arith.constant 0.000000e+00 : f32
      %12 = vector.broadcast %cst_10 : f32 to vector<64x64xf32>
      %c0_11 = arith.constant 0 : index
      %c0_12 = arith.constant 0 : index
      %13 = vector.load %arg9[%c0_11, %c0_12] : memref<64x64xf32, #tpu.memory_space<vmem>>, vector<64x64xf32>
      tpu.vector_store %arg9[%c0_11, %c0_12], %12 {strides = array<i32>} : memref<64x64xf32, #tpu.memory_space<vmem>>, vector<64x64xf32>,
    } else {
    }
    %c0 = arith.constant 0 : index
    %c0_1 = arith.constant 0 : index
    %3 = vector.load %arg9[%c0, %c0_1] : memref<64x64xf32, #tpu.memory_space<vmem>>, vector<64x64xf32>
    %c0_2 = arith.constant 0 : index
    %c0_3 = arith.constant 0 : index
    %4 = vector.load %arg3[%c0_2, %c0_3] : memref<64x64xbf16, #tpu.memory_space<vmem>>, vector<64x64xbf16>
    %c0_4 = arith.constant 0 : index
    %c0_5 = arith.constant 0 : index
    %5 = vector.load %arg4[%c0_4, %c0_5] : memref<64x64xbf16, #tpu.memory_space<vmem>>, vector<64x64xbf16>
    %cst = arith.constant dense<0.000000e+00> : vector<64x64xf32>
    %6 = tpu.matmul %4, %5, %cst {dimension_numbers = #tpu.dot_dimension_numbers<[1], [0], [0], [1], [0, 0, 1, 1], [], []>} : vector<64x64xbf16>, vector<64x64xbf16>, vector<64x64xf32> -> vector<64x64xf32>
    %7 = arith.addf %3, %6 : vector<64x64xf32>
    %c0_6 = arith.constant 0 : index
    %c0_7 = arith.constant 0 : index
    %8 = vector.load %arg9[%c0_6, %c0_7] : memref<64x64xf32, #tpu.memory_space<vmem>>, vector<64x64xf32>
    tpu.vector_store %arg9[%c0_6, %c0_7], %7 {strides = array<i32>} : memref<64x64xf32, #tpu.memory_space<vmem>>, vector<64x64xf32>,
    %c0_i32_8 = arith.constant 0 : i32
    %9 = arith.cmpi eq, %arg2, %c0_i32_8 : i32
    %10 = arith.extui %9 : i1 to i32
    %c0_i32_9 = arith.constant 0 : i32
    %11 = arith.cmpi ne, %10, %c0_i32_9 : i32
    scf.if %11 {
      %c0_10 = arith.constant 0 : index
      %c0_11 = arith.constant 0 : index
      %12 = vector.load %arg9[%c0_10, %c0_11] : memref<64x64xf32, #tpu.memory_space<vmem>>, vector<64x64xf32>
      %c0_12 = arith.constant 0 : index
      %c0_13 = arith.constant 0 : index
      %13 = vector.load %arg5[%c0_12, %c0_13] : memref<1x64xf32, #tpu.memory_space<vmem>>, vector<1x64xf32>
      %14 = vector.broadcast %13 : vector<1x64xf32> to vector<64x64xf32>
      %15 = arith.addf %12, %14 : vector<64x64xf32>
      %c0_14 = arith.constant 0 : index
      %c0_15 = arith.constant 0 : index
      %16 = vector.load %arg6[%c0_14, %c0_15] : memref<64x64xbf16, #tpu.memory_space<vmem>>, vector<64x64xbf16>
      %17 = arith.extf %16 : vector<64x64xbf16> to vector<64x64xf32>
      %18 = arith.mulf %17, %15 : vector<64x64xf32>
      %c0_16 = arith.constant 0 : index
      %c0_17 = arith.constant 0 : index
      %19 = vector.load %arg7[%c0_16, %c0_17] : memref<64x64xbf16, #tpu.memory_space<vmem>>, vector<64x64xbf16>
      %20 = arith.extf %19 : vector<64x64xbf16> to vector<64x64xf32>
      %21 = arith.addf %20, %18 : vector<64x64xf32>
      %22 = arith.truncf %21 : vector<64x64xf32> to vector<64x64xbf16>
      %c0_18 = arith.constant 0 : index
      %c0_19 = arith.constant 0 : index
      %23 = vector.load %arg8[%c0_18, %c0_19] : memref<64x64xbf16, #tpu.memory_space<vmem>>, vector<64x64xbf16>
      tpu.vector_store %arg8[%c0_18, %c0_19], %22 {strides = array<i32>} : memref<64x64xbf16, #tpu.memory_space<vmem>>, vector<64x64xbf16>,
    } else {
    }
    return
  }
  func.func @transform_0(%arg0: i32, %arg1: i32, %arg2: i32) -> (i32, i32) {
    %c0_i32 = arith.constant 0 : i32
    return %arg0, %arg2 : i32, i32
  }
  func.func @transform_1(%arg0: i32, %arg1: i32, %arg2: i32) -> (i32, i32) {
    %c0_i32 = arith.constant 0 : i32
    return %arg2, %arg1 : i32, i32
  }
  func.func @transform_2(%arg0: i32, %arg1: i32, %arg2: i32) -> (i32, i32) {
    %c0_i32 = arith.constant 0 : i32
    %c0_i32_0 = arith.constant 0 : i32
    return %c0_i32, %arg1 : i32, i32
  }
  func.func @transform_3(%arg0: i32, %arg1: i32, %arg2: i32) -> (i32, i32) {
    %c0_i32 = arith.constant 0 : i32
    return %arg0, %arg1 : i32, i32
  }
  func.func @transform_4(%arg0: i32, %arg1: i32, %arg2: i32) -> (i32, i32) {
    %c0_i32 = arith.constant 0 : i32
    return %arg0, %arg1 : i32, i32
  }
  func.func @transform_5(%arg0: i32, %arg1: i32, %arg2: i32) -> (i32, i32) {
    %c0_i32 = arith.constant 0 : i32
    return %arg0, %arg1 : i32, i32
  }
}

module attributes {stable_mosaic.version = 11 : i64} {
  func.func @_linear_kernel(%arg0: i32, %arg1: i32, %arg2: i32, %arg3: memref<64x64xbf16, #tpu.memory_space<vmem>>, %arg4: memref<64x128xbf16, #tpu.memory_space<vmem>>, %arg5: memref<1x128xf32, #tpu.memory_space<vmem>>, %arg6: memref<64x128xbf16, #tpu.memory_space<vmem>>, %arg7: memref<64x128xf32, #tpu.memory_space<vmem>>) attributes {dimension_semantics = [#tpu.dimension_semantics<parallel>, #tpu.dimension_semantics<parallel>, #tpu.dimension_semantics<arbitrary>], iteration_bounds = array<i64: 1, 1, 1>, scalar_prefetch = 0 : i64, scratch_operands = 1 : i64, tpu.core_type = #tpu.core_type<tc>, window_params = [{transform_indices = @transform_0, window_bounds = array<i64: 64, 64>}, {transform_indices = @transform_1, window_bounds = array<i64: 64, 128>}, {transform_indices = @transform_2, window_bounds = array<i64: 1, 128>}, {transform_indices = @transform_3, window_bounds = array<i64: 64, 128>}]} {
    %c0_i32 = arith.constant 0 : i32
    %0 = arith.cmpi eq, %arg2, %c0_i32 : i32
    %1 = arith.extui %0 : i1 to i32
    %c0_i32_0 = arith.constant 0 : i32
    %2 = arith.cmpi ne, %1, %c0_i32_0 : i32
    scf.if %2 {
      %cst_10 = arith.constant 0.000000e+00 : f32
      %12 = vector.broadcast %cst_10 : f32 to vector<64x128xf32>
      %c0_11 = arith.constant 0 : index
      %c0_12 = arith.constant 0 : index
      %13 = vector.load %arg7[%c0_11, %c0_12] : memref<64x128xf32, #tpu.memory_space<vmem>>, vector<64x128xf32>
      tpu.vector_store %arg7[%c0_11, %c0_12], %12 {strides = array<i32>} : memref<64x128xf32, #tpu.memory_space<vmem>>, vector<64x128xf32>,
    } else {
    }
    %c0 = arith.constant 0 : index
    %c0_1 = arith.constant 0 : index
    %3 = vector.load %arg7[%c0, %c0_1] : memref<64x128xf32, #tpu.memory_space<vmem>>, vector<64x128xf32>
    %c0_2 = arith.constant 0 : index
    %c0_3 = arith.constant 0 : index
    %4 = vector.load %arg3[%c0_2, %c0_3] : memref<64x64xbf16, #tpu.memory_space<vmem>>, vector<64x64xbf16>
    %c0_4 = arith.constant 0 : index
    %c0_5 = arith.constant 0 : index
    %5 = vector.load %arg4[%c0_4, %c0_5] : memref<64x128xbf16, #tpu.memory_space<vmem>>, vector<64x128xbf16>
    %cst = arith.constant dense<0.000000e+00> : vector<64x128xf32>
    %6 = tpu.matmul %4, %5, %cst {dimension_numbers = #tpu.dot_dimension_numbers<[1], [0], [0], [1], [0, 0, 1, 1], [], []>} : vector<64x64xbf16>, vector<64x128xbf16>, vector<64x128xf32> -> vector<64x128xf32>
    %7 = arith.addf %3, %6 : vector<64x128xf32>
    %c0_6 = arith.constant 0 : index
    %c0_7 = arith.constant 0 : index
    %8 = vector.load %arg7[%c0_6, %c0_7] : memref<64x128xf32, #tpu.memory_space<vmem>>, vector<64x128xf32>
    tpu.vector_store %arg7[%c0_6, %c0_7], %7 {strides = array<i32>} : memref<64x128xf32, #tpu.memory_space<vmem>>, vector<64x128xf32>,
    %c0_i32_8 = arith.constant 0 : i32
    %9 = arith.cmpi eq, %arg2, %c0_i32_8 : i32
    %10 = arith.extui %9 : i1 to i32
    %c0_i32_9 = arith.constant 0 : i32
    %11 = arith.cmpi ne, %10, %c0_i32_9 : i32
    scf.if %11 {
      %c0_10 = arith.constant 0 : index
      %c0_11 = arith.constant 0 : index
      %12 = vector.load %arg7[%c0_10, %c0_11] : memref<64x128xf32, #tpu.memory_space<vmem>>, vector<64x128xf32>
      %c0_12 = arith.constant 0 : index
      %c0_13 = arith.constant 0 : index
      %13 = vector.load %arg5[%c0_12, %c0_13] : memref<1x128xf32, #tpu.memory_space<vmem>>, vector<1x128xf32>
      %14 = vector.broadcast %13 : vector<1x128xf32> to vector<64x128xf32>
      %15 = arith.addf %12, %14 : vector<64x128xf32>
      %16 = arith.truncf %15 : vector<64x128xf32> to vector<64x128xbf16>
      %c0_14 = arith.constant 0 : index
      %c0_15 = arith.constant 0 : index
      %17 = vector.load %arg6[%c0_14, %c0_15] : memref<64x128xbf16, #tpu.memory_space<vmem>>, vector<64x128xbf16>
      tpu.vector_store %arg6[%c0_14, %c0_15], %16 {strides = array<i32>} : memref<64x128xbf16, #tpu.memory_space<vmem>>, vector<64x128xbf16>,
    } else {
    }
    return
  }
  func.func @transform_0(%arg0: i32, %arg1: i32, %arg2: i32) -> (i32, i32) {
    %c0_i32 = arith.constant 0 : i32
    return %arg0, %arg2 : i32, i32
  }
  func.func @transform_1(%arg0: i32, %arg1: i32, %arg2: i32) -> (i32, i32) {
    %c0_i32 = arith.constant 0 : i32
    return %arg2, %arg1 : i32, i32
  }
  func.func @transform_2(%arg0: i32, %arg1: i32, %arg2: i32) -> (i32, i32) {
    %c0_i32 = arith.constant 0 : i32
    %c0_i32_0 = arith.constant 0 : i32
    return %c0_i32, %arg1 : i32, i32
  }
  func.func @transform_3(%arg0: i32, %arg1: i32, %arg2: i32) -> (i32, i32) {
    %c0_i32 = arith.constant 0 : i32
    return %arg0, %arg1 : i32, i32
  }
}

module attributes {stable_mosaic.version = 11 : i64} {
  func.func @_ln_linear_kernel(%arg0: i32, %arg1: i32, %arg2: memref<64x64xbf16, #tpu.memory_space<vmem>>, %arg3: memref<1x64xf32, #tpu.memory_space<vmem>>, %arg4: memref<1x64xf32, #tpu.memory_space<vmem>>, %arg5: memref<64x128xbf16, #tpu.memory_space<vmem>>, %arg6: memref<64x8xbf16, #tpu.memory_space<vmem>>, %arg7: memref<1x8xf32, #tpu.memory_space<vmem>>, %arg8: memref<64x8xf32, #tpu.memory_space<vmem>>) attributes {dimension_semantics = [#tpu.dimension_semantics<parallel>, #tpu.dimension_semantics<parallel>], iteration_bounds = array<i64: 1, 1>, scalar_prefetch = 0 : i64, scratch_operands = 0 : i64, tpu.core_type = #tpu.core_type<tc>, window_params = [{transform_indices = @transform_0, window_bounds = array<i64: 64, 64>}, {pipeline_mode = #tpu.pipeline_mode<synchronous>, transform_indices = @transform_1, window_bounds = array<i64: 1, 64>}, {pipeline_mode = #tpu.pipeline_mode<synchronous>, transform_indices = @transform_2, window_bounds = array<i64: 1, 64>}, {transform_indices = @transform_3, window_bounds = array<i64: 64, 128>}, {transform_indices = @transform_4, window_bounds = array<i64: 64, 8>}, {transform_indices = @transform_5, window_bounds = array<i64: 1, 8>}, {transform_indices = @transform_6, window_bounds = array<i64: 64, 8>}]} {
    %c0 = arith.constant 0 : index
    %c0_0 = arith.constant 0 : index
    %0 = vector.load %arg2[%c0, %c0_0] : memref<64x64xbf16, #tpu.memory_space<vmem>>, vector<64x64xbf16>
    %1 = arith.extf %0 : vector<64x64xbf16> to vector<64x64xf32>
    %cst = arith.constant dense<0.000000e+00> : vector<64xf32>
    %2 = vector.multi_reduction <add>, %1, %cst [1] : vector<64x64xf32> to vector<64xf32>
    %3 = vector.shape_cast %2 : vector<64xf32> to vector<64x1xf32>
    %cst_1 = arith.constant 6.400000e+01 : f32
    %4 = vector.broadcast %cst_1 : f32 to vector<64x1xf32>
    %5 = arith.divf %3, %4 : vector<64x1xf32>
    %6 = vector.broadcast %5 : vector<64x1xf32> to vector<64x64xf32>
    %7 = arith.subf %1, %6 : vector<64x64xf32>
    %8 = arith.mulf %7, %7 : vector<64x64xf32>
    %cst_2 = arith.constant dense<0.000000e+00> : vector<64xf32>
    %9 = vector.multi_reduction <add>, %8, %cst_2 [1] : vector<64x64xf32> to vector<64xf32>
    %10 = vector.shape_cast %9 : vector<64xf32> to vector<64x1xf32>
    %cst_3 = arith.constant 6.400000e+01 : f32
    %11 = vector.broadcast %cst_3 : f32 to vector<64x1xf32>
    %12 = arith.divf %10, %11 : vector<64x1xf32>
    %cst_4 = arith.constant 9.99999997E-7 : f32
    %13 = vector.broadcast %cst_4 : f32 to vector<64x1xf32>
    %14 = arith.addf %12, %13 : vector<64x1xf32>
    %15 = math.rsqrt %14 : vector<64x1xf32>
    %16 = vector.broadcast %15 : vector<64x1xf32> to vector<64x64xf32>
    %17 = arith.mulf %7, %16 : vector<64x64xf32>
    %c0_5 = arith.constant 0 : index
    %c0_6 = arith.constant 0 : index
    %18 = vector.load %arg3[%c0_5, %c0_6] : memref<1x64xf32, #tpu.memory_space<vmem>>, vector<1x64xf32>
    %19 = vector.broadcast %18 : vector<1x64xf32> to vector<64x64xf32>
    %20 = arith.mulf %17, %19 : vector<64x64xf32>
    %c0_7 = arith.constant 0 : index
    %c0_8 = arith.constant 0 : index
    %21 = vector.load %arg4[%c0_7, %c0_8] : memref<1x64xf32, #tpu.memory_space<vmem>>, vector<1x64xf32>
    %22 = vector.broadcast %21 : vector<1x64xf32> to vector<64x64xf32>
    %23 = arith.addf %20, %22 : vector<64x64xf32>
    %c0_9 = arith.constant 0 : index
    %c0_10 = arith.constant 0 : index
    %24 = vector.load %arg5[%c0_9, %c0_10] : memref<64x128xbf16, #tpu.memory_space<vmem>>, vector<64x64xbf16>
    %25 = arith.extf %24 : vector<64x64xbf16> to vector<64x64xf32>
    %c0_11 = arith.constant 0 : index
    %c64 = arith.constant 64 : index
    %26 = vector.load %arg5[%c0_11, %c64] : memref<64x128xbf16, #tpu.memory_space<vmem>>, vector<64x64xbf16>
    %27 = arith.extf %26 : vector<64x64xbf16> to vector<64x64xf32>
    %cst_12 = arith.constant 1.000000e+00 : f32
    %28 = vector.broadcast %cst_12 : f32 to vector<64x64xf32>
    %29 = arith.addf %28, %27 : vector<64x64xf32>
    %30 = arith.mulf %23, %29 : vector<64x64xf32>
    %31 = arith.addf %30, %25 : vector<64x64xf32>
    %32 = arith.truncf %31 : vector<64x64xf32> to vector<64x64xbf16>
    %c0_13 = arith.constant 0 : index
    %c0_14 = arith.constant 0 : index
    %33 = vector.load %arg6[%c0_13, %c0_14] : memref<64x8xbf16, #tpu.memory_space<vmem>>, vector<64x8xbf16>
    %cst_15 = arith.constant dense<0.000000e+00> : vector<64x8xf32>
    %34 = tpu.matmul %32, %33, %cst_15 {dimension_numbers = #tpu.dot_dimension_numbers<[1], [0], [0], [1], [0, 0, 1, 1], [], []>} : vector<64x64xbf16>, vector<64x8xbf16>, vector<64x8xf32> -> vector<64x8xf32>
    %c0_16 = arith.constant 0 : index
    %c0_17 = arith.constant 0 : index
    %35 = vector.load %arg7[%c0_16, %c0_17] : memref<1x8xf32, #tpu.memory_space<vmem>>, vector<1x8xf32>
    %36 = vector.broadcast %35 : vector<1x8xf32> to vector<64x8xf32>
    %37 = arith.addf %34, %36 : vector<64x8xf32>
    %c0_18 = arith.constant 0 : index
    %c0_19 = arith.constant 0 : index
    %38 = vector.load %arg8[%c0_18, %c0_19] : memref<64x8xf32, #tpu.memory_space<vmem>>, vector<64x8xf32>
    tpu.vector_store %arg8[%c0_18, %c0_19], %37 {strides = array<i32>} : memref<64x8xf32, #tpu.memory_space<vmem>>, vector<64x8xf32>,
    return
  }
  func.func @transform_0(%arg0: i32, %arg1: i32) -> (i32, i32) {
    %c0_i32 = arith.constant 0 : i32
    %c0_i32_0 = arith.constant 0 : i32
    return %arg0, %c0_i32 : i32, i32
  }
  func.func @transform_1(%arg0: i32, %arg1: i32) -> (i32, i32) {
    %c0_i32 = arith.constant 0 : i32
    %c0_i32_0 = arith.constant 0 : i32
    %c0_i32_1 = arith.constant 0 : i32
    return %c0_i32, %c0_i32_0 : i32, i32
  }
  func.func @transform_2(%arg0: i32, %arg1: i32) -> (i32, i32) {
    %c0_i32 = arith.constant 0 : i32
    %c0_i32_0 = arith.constant 0 : i32
    %c0_i32_1 = arith.constant 0 : i32
    return %c0_i32, %c0_i32_0 : i32, i32
  }
  func.func @transform_3(%arg0: i32, %arg1: i32) -> (i32, i32) {
    %c0_i32 = arith.constant 0 : i32
    %c0_i32_0 = arith.constant 0 : i32
    return %arg0, %c0_i32 : i32, i32
  }
  func.func @transform_4(%arg0: i32, %arg1: i32) -> (i32, i32) {
    %c0_i32 = arith.constant 0 : i32
    %c0_i32_0 = arith.constant 0 : i32
    return %c0_i32, %arg1 : i32, i32
  }
  func.func @transform_5(%arg0: i32, %arg1: i32) -> (i32, i32) {
    %c0_i32 = arith.constant 0 : i32
    %c0_i32_0 = arith.constant 0 : i32
    return %c0_i32, %arg1 : i32, i32
  }
  func.func @transform_6(%arg0: i32, %arg1: i32) -> (i32, i32) {
    %c0_i32 = arith.constant 0 : i32
    return %arg0, %arg1 : i32, i32
  }
}

module attributes {stable_mosaic.version = 11 : i64} {
  func.func @_masked_mse_kernel(%arg0: i32, %arg1: i32, %arg2: memref<32x4xf32, #tpu.memory_space<vmem>>, %arg3: memref<32x4xf32, #tpu.memory_space<vmem>>, %arg4: memref<32x1xf32, #tpu.memory_space<vmem>>, %arg5: memref<8x128xf32, #tpu.memory_space<vmem>>, %arg6: memref<8x128xf32, #tpu.memory_space<vmem>>, %arg7: memref<1x1xf32, #tpu.memory_space<vmem>>, %arg8: memref<1x1xf32, #tpu.memory_space<vmem>>) attributes {dimension_semantics = [#tpu.dimension_semantics<parallel>, #tpu.dimension_semantics<arbitrary>], iteration_bounds = array<i64: 2, 1>, scalar_prefetch = 0 : i64, scratch_operands = 2 : i64, tpu.core_type = #tpu.core_type<tc>, window_params = [{transform_indices = @transform_0, window_bounds = array<i64: 32, 4>}, {transform_indices = @transform_1, window_bounds = array<i64: 32, 4>}, {transform_indices = @transform_2, window_bounds = array<i64: 32, 1>}, {transform_indices = @transform_3, window_bounds = array<i64: 8, 128>}, {transform_indices = @transform_4, window_bounds = array<i64: 8, 128>}]} {
    %c0_i32 = arith.constant 0 : i32
    %0 = arith.cmpi eq, %arg1, %c0_i32 : i32
    %1 = arith.extui %0 : i1 to i32
    %c0_i32_0 = arith.constant 0 : i32
    %2 = arith.cmpi ne, %1, %c0_i32_0 : i32
    scf.if %2 {
      %cst_19 = arith.constant 0.000000e+00 : f32
      %26 = vector.broadcast %cst_19 : f32 to vector<1x1xf32>
      %c0_20 = arith.constant 0 : index
      %c0_21 = arith.constant 0 : index
      %27 = vector.load %arg7[%c0_20, %c0_21] : memref<1x1xf32, #tpu.memory_space<vmem>>, vector<1x1xf32>
      tpu.vector_store %arg7[%c0_20, %c0_21], %26 {strides = array<i32>} : memref<1x1xf32, #tpu.memory_space<vmem>>, vector<1x1xf32>,
      %cst_22 = arith.constant 0.000000e+00 : f32
      %28 = vector.broadcast %cst_22 : f32 to vector<1x1xf32>
      %c0_23 = arith.constant 0 : index
      %c0_24 = arith.constant 0 : index
      %29 = vector.load %arg8[%c0_23, %c0_24] : memref<1x1xf32, #tpu.memory_space<vmem>>, vector<1x1xf32>
      tpu.vector_store %arg8[%c0_23, %c0_24], %28 {strides = array<i32>} : memref<1x1xf32, #tpu.memory_space<vmem>>, vector<1x1xf32>,
    } else {
    }
    %c0 = arith.constant 0 : index
    %c0_1 = arith.constant 0 : index
    %3 = vector.load %arg2[%c0, %c0_1] : memref<32x4xf32, #tpu.memory_space<vmem>>, vector<32x4xf32>
    %c0_2 = arith.constant 0 : index
    %c0_3 = arith.constant 0 : index
    %4 = vector.load %arg3[%c0_2, %c0_3] : memref<32x4xf32, #tpu.memory_space<vmem>>, vector<32x4xf32>
    %5 = arith.subf %3, %4 : vector<32x4xf32>
    %6 = arith.mulf %5, %5 : vector<32x4xf32>
    %cst = arith.constant dense<0.000000e+00> : vector<32xf32>
    %7 = vector.multi_reduction <add>, %6, %cst [1] : vector<32x4xf32> to vector<32xf32>
    %8 = vector.shape_cast %7 : vector<32xf32> to vector<32x1xf32>
    %cst_4 = arith.constant 4.000000e+00 : f32
    %9 = vector.broadcast %cst_4 : f32 to vector<32x1xf32>
    %10 = arith.divf %8, %9 : vector<32x1xf32>
    %c0_5 = arith.constant 0 : index
    %c0_6 = arith.constant 0 : index
    %11 = vector.load %arg4[%c0_5, %c0_6] : memref<32x1xf32, #tpu.memory_space<vmem>>, vector<32x1xf32>
    %c0_7 = arith.constant 0 : index
    %c0_8 = arith.constant 0 : index
    %12 = vector.load %arg7[%c0_7, %c0_8] : memref<1x1xf32, #tpu.memory_space<vmem>>, vector<1x1xf32>
    %13 = arith.mulf %10, %11 : vector<32x1xf32>
    %cst_9 = arith.constant dense<0.000000e+00> : vector<1xf32>
    %14 = vector.multi_reduction <add>, %13, %cst_9 [0] : vector<32x1xf32> to vector<1xf32>
    %15 = vector.shape_cast %14 : vector<1xf32> to vector<1x1xf32>
    %16 = arith.addf %12, %15 : vector<1x1xf32>
    %c0_10 = arith.constant 0 : index
    %c0_11 = arith.constant 0 : index
    %17 = vector.load %arg7[%c0_10, %c0_11] : memref<1x1xf32, #tpu.memory_space<vmem>>, vector<1x1xf32>
    tpu.vector_store %arg7[%c0_10, %c0_11], %16 {strides = array<i32>} : memref<1x1xf32, #tpu.memory_space<vmem>>, vector<1x1xf32>,
    %c0_12 = arith.constant 0 : index
    %c0_13 = arith.constant 0 : index
    %18 = vector.load %arg8[%c0_12, %c0_13] : memref<1x1xf32, #tpu.memory_space<vmem>>, vector<1x1xf32>
    %cst_14 = arith.constant dense<0.000000e+00> : vector<1xf32>
    %19 = vector.multi_reduction <add>, %11, %cst_14 [0] : vector<32x1xf32> to vector<1xf32>
    %20 = vector.shape_cast %19 : vector<1xf32> to vector<1x1xf32>
    %21 = arith.addf %18, %20 : vector<1x1xf32>
    %c0_15 = arith.constant 0 : index
    %c0_16 = arith.constant 0 : index
    %22 = vector.load %arg8[%c0_15, %c0_16] : memref<1x1xf32, #tpu.memory_space<vmem>>, vector<1x1xf32>
    tpu.vector_store %arg8[%c0_15, %c0_16], %21 {strides = array<i32>} : memref<1x1xf32, #tpu.memory_space<vmem>>, vector<1x1xf32>,
    %c0_i32_17 = arith.constant 0 : i32
    %23 = arith.cmpi eq, %arg1, %c0_i32_17 : i32
    %24 = arith.extui %23 : i1 to i32
    %c0_i32_18 = arith.constant 0 : i32
    %25 = arith.cmpi ne, %24, %c0_i32_18 : i32
    scf.if %25 {
      %c0_19 = arith.constant 0 : index
      %c0_20 = arith.constant 0 : index
      %26 = vector.load %arg7[%c0_19, %c0_20] : memref<1x1xf32, #tpu.memory_space<vmem>>, vector<1x1xf32>
      %27 = vector.shape_cast %26 : vector<1x1xf32> to vector<1x1xf32>
      %28 = vector.broadcast %27 : vector<1x1xf32> to vector<8x128xf32>
      %c0_21 = arith.constant 0 : index
      %c0_22 = arith.constant 0 : index
      %29 = vector.load %arg5[%c0_21, %c0_22] : memref<8x128xf32, #tpu.memory_space<vmem>>, vector<8x128xf32>
      tpu.vector_store %arg5[%c0_21, %c0_22], %28 {strides = array<i32>} : memref<8x128xf32, #tpu.memory_space<vmem>>, vector<8x128xf32>,
      %c0_23 = arith.constant 0 : index
      %c0_24 = arith.constant 0 : index
      %30 = vector.load %arg8[%c0_23, %c0_24] : memref<1x1xf32, #tpu.memory_space<vmem>>, vector<1x1xf32>
      %31 = vector.shape_cast %30 : vector<1x1xf32> to vector<1x1xf32>
      %32 = vector.broadcast %31 : vector<1x1xf32> to vector<8x128xf32>
      %c0_25 = arith.constant 0 : index
      %c0_26 = arith.constant 0 : index
      %33 = vector.load %arg6[%c0_25, %c0_26] : memref<8x128xf32, #tpu.memory_space<vmem>>, vector<8x128xf32>
      tpu.vector_store %arg6[%c0_25, %c0_26], %32 {strides = array<i32>} : memref<8x128xf32, #tpu.memory_space<vmem>>, vector<8x128xf32>,
    } else {
    }
    return
  }
  func.func @transform_0(%arg0: i32, %arg1: i32) -> (i32, i32) {
    %c1_i32 = arith.constant 1 : i32
    %0 = arith.muli %arg0, %c1_i32 : i32
    %1 = arith.addi %0, %arg1 : i32
    %c0_i32 = arith.constant 0 : i32
    %c0_i32_0 = arith.constant 0 : i32
    return %1, %c0_i32 : i32, i32
  }
  func.func @transform_1(%arg0: i32, %arg1: i32) -> (i32, i32) {
    %c1_i32 = arith.constant 1 : i32
    %0 = arith.muli %arg0, %c1_i32 : i32
    %1 = arith.addi %0, %arg1 : i32
    %c0_i32 = arith.constant 0 : i32
    %c0_i32_0 = arith.constant 0 : i32
    return %1, %c0_i32 : i32, i32
  }
  func.func @transform_2(%arg0: i32, %arg1: i32) -> (i32, i32) {
    %c1_i32 = arith.constant 1 : i32
    %0 = arith.muli %arg0, %c1_i32 : i32
    %1 = arith.addi %0, %arg1 : i32
    %c0_i32 = arith.constant 0 : i32
    %c0_i32_0 = arith.constant 0 : i32
    return %1, %c0_i32 : i32, i32
  }
  func.func @transform_3(%arg0: i32, %arg1: i32) -> (i32, i32) {
    %c0_i32 = arith.constant 0 : i32
    %c0_i32_0 = arith.constant 0 : i32
    return %arg0, %c0_i32 : i32, i32
  }
  func.func @transform_4(%arg0: i32, %arg1: i32) -> (i32, i32) {
    %c0_i32 = arith.constant 0 : i32
    %c0_i32_0 = arith.constant 0 : i32
    return %arg0, %c0_i32 : i32, i32
  }
}

</mosaic_0001>

<llo_original>
// kernel: _lambda_.39
$region0: #{_lambda_.39}
  #allocation0 [shape = 'u32[]', space=smem, size = 0x4, offset = 0x4, fixed_abs, tag = 'smem constant byte address 0x4 - core index']
  #allocation1 [shape = 'u32[72,128]{1,0:T(1,128)}', space=vmem, size = 0x9000, scoped, tag = 'internal scratch']
  #allocation2 [shape = 'f32[32,64]{1,0:T(8,128)}', space=vmem, size = 0x4000, scoped, tag = 'scratch operand']
  %s0 = inlined_call_operand.vmem [shape: bf16[32,4], index: 0, kind: input, shape index: {}]
  %s1 = inlined_call_operand.vmem [shape: bf16[4,64], index: 1, kind: input, shape index: {}]
  %s2 = inlined_call_operand.vmem [shape: f32[1,64], index: 2, kind: input, shape index: {}]
  %s3 = inlined_call_operand.vmem [shape: bf16[32,64], index: 3, kind: output, shape index: {}]
  %s4 = sld [smem:[#allocation0]]
  $region30: #{_lambda_.39} parent=0
    _
  %s6 = ssub.s32 1, %s4
  %s7 = scalar_select 0, %s6, %s4
  // Predicated region
  $region2: #{_lambda_.39} parent=0 // pred_check
    _
  $region3: #{_lambda_.39} parent=0 // pred_check_branch
    %9 = sbr.rel (0) target = $region5
  $region4: #{_lambda_.39} parent=0 // pred_region
    _
  $region5: #{_lambda_.39} parent=0 // pred_fallthru
    _
  // Predicated region
  $region6: #{_lambda_.39} parent=0 // pred_check
    _
  $region7: #{_lambda_.39} parent=0 // pred_check_branch
    %11 = sbr.rel (0) target = $region9
  $region8: #{_lambda_.39} parent=0 // pred_region
    _
  $region9: #{_lambda_.39} parent=0 // pred_fallthru
    _
  // Predicated region
  $region10: #{_lambda_.39} parent=0 // pred_check
    _
  $region11: #{_lambda_.39} parent=0 // pred_check_branch
    %13 = sbr.rel (0) target = $region13
  $region12: #{_lambda_.39} parent=0 // pred_region
    _
  $region13: #{_lambda_.39} parent=0 // pred_fallthru
    _
  %p15 = scmp.eq.s32.totalorder 0, 0
  // Predicated region
  $region14: #{_lambda_.39} parent=0 // pred_check
    %p16 = pneg %p15
  $region15: #{_lambda_.39} parent=0 // pred_check_branch
    %18 = sbr.rel (%p16) target = $region17
  $region16: #{_lambda_.39} parent=0 // pred_region
    %vm19 = vcmask 523264
    %20 = vst.msk [vmem:[#allocation2] sm:$0xff] %vm19, 0.0
    %21 = vst.msk [vmem:[#allocation2 + $0x8] sm:$0xff] %vm19, 0.0
    %22 = vst.msk [vmem:[#allocation2 + $0x10] sm:$0xff] %vm19, 0.0
    %23 = vst.msk [vmem:[#allocation2 + $0x18] sm:$0xff] %vm19, 0.0
  $region17: #{_lambda_.39} parent=0 // pred_fallthru
    _
  %v24 = vld [vmem:[#allocation2] sm:$0xff]
  %v25 = vld [vmem:[#allocation2 + $0x8] sm:$0xff]
  %v26 = vld [vmem:[#allocation2 + $0x10] sm:$0xff]
  %v27 = vld [vmem:[#allocation2 + $0x18] sm:$0xff]
  %v28 = vld [vmem:[%s0] sm:$0xf]
  %v29 = vld [vmem:[%s0 + $0x4] sm:$0xf]
  %v30 = vld [vmem:[%s0 + $0x8] sm:$0xf]
  %v31 = vld [vmem:[%s0 + $0xc] sm:$0xf]
  %v32 = vld [vmem:[%s1] sm:$0x3]
  %v37 = vunpack.c.l.b16 %v28
  %v38 = vunpack.c.l.b16 %v29
  %v39 = vunpack.c.l.b16 %v30
  %v40 = vunpack.c.l.b16 %v31
  %v41 = vpack.c.b16 %v38, %v37
  %v42 = vpack.c.b16 %v40, %v39
  %vm43 = vcmask 31744
  %v45 = vsel %vm43, %v41, 0
  %v48 = vsel %vm43, %v42, 0
  %vm50 = vcmask 1041408
  %v52 = vsel %vm50, %v32, 0
  %54 = vmatpush.bf16.msra.mxu0 0
  %55 = vmatpush.bf16.msra.mxu0 0
  %56 = vmatpush.bf16.msra.mxu0 0
  %57 = vmatpush.bf16.msra.mxu0 0
  %58 = vmatpush.bf16.msra.mxu0 0
  %59 = vmatpush.bf16.msra.mxu0 0
  %60 = vmatpush.bf16.msra.mxu0 0
  %61 = vmatpush.bf16.msra.mxu0 %v52
  %62 = vmatmul.bf16.gmra.mxu0 %v45
  %v63 = vpop.f32.mrf.mxu0
  %v64 = vadd.f32 0.0, %v63
  %v65 = vpop.f32.mrf.mxu0
  %v66 = vadd.f32 0.0, %v65
  %67 = vmatmul.bf16.gmra.mxu0 %v48
  %v68 = vpop.f32.mrf.mxu0
  %v69 = vadd.f32 0.0, %v68
  %v70 = vpop.f32.mrf.mxu0
  %v71 = vadd.f32 0.0, %v70
  %72 = vdwg.mxu0
  %v73 = vadd.f32 %v24, %v64
  %v74 = vadd.f32 %v25, %v66
  %v75 = vadd.f32 %v26, %v69
  %v76 = vadd.f32 %v27, %v71
  %vm77 = vcmask 523264
  %78 = vst.msk [vmem:[#allocation2] sm:$0xff] %vm77, %v73
  %79 = vst.msk [vmem:[#allocation2 + $0x8] sm:$0xff] %vm77, %v74
  %80 = vst.msk [vmem:[#allocation2 + $0x10] sm:$0xff] %vm77, %v75
  %81 = vst.msk [vmem:[#allocation2 + $0x18] sm:$0xff] %vm77, %v76
  // Predicated region
  $region18: #{_lambda_.39} parent=0 // pred_check
    %p82 = pneg %p15
  $region19: #{_lambda_.39} parent=0 // pred_check_branch
    %84 = sbr.rel (%p82) target = $region21
  $region20: #{_lambda_.39} parent=0 // pred_region
    %v85 = vld [vmem:[#allocation2] sm:$0xff]
    %v86 = vld [vmem:[#allocation2 + $0x8] sm:$0xff]
    %v87 = vld [vmem:[#allocation2 + $0x10] sm:$0xff]
    %v88 = vld [vmem:[#allocation2 + $0x18] sm:$0xff]
    %v89 = vld [vmem:[%s2] sm:$0x1]
    %v91 = vperm.slane %v89, 0
    %v93 = vadd.f32 %v85, %v91
    %v94 = vadd.f32 %v86, %v91
    %v95 = vadd.f32 %v87, %v91
    %v96 = vadd.f32 %v88, %v91
    %v97 = vpack.c.bf16 %v93, %v93
    %v98 = vpack.c.bf16 %v94, %v94
    %v99 = vpack.c.bf16 %v95, %v95
    %v100 = vpack.c.bf16 %v96, %v96
    %vm101 = vcmask 519168
    %102 = vst.msk [vmem:[%s3] sm:$0xf] %vm101, %v97
    %103 = vst.msk [vmem:[%s3 + $0x4] sm:$0xf] %vm101, %v98
    %104 = vst.msk [vmem:[%s3 + $0x8] sm:$0xf] %vm101, %v99
    %105 = vst.msk [vmem:[%s3 + $0xc] sm:$0xf] %vm101, %v100
  $region21: #{_lambda_.39} parent=0 // pred_fallthru
    _
  // Predicated region
  $region22: #{_lambda_.39} parent=0 // pred_check
    _
  $region23: #{_lambda_.39} parent=0 // pred_check_branch
    %107 = sbr.rel (0) target = $region25
  $region24: #{_lambda_.39} parent=0 // pred_region
    _
  $region25: #{_lambda_.39} parent=0 // pred_fallthru
    _
  // Predicated region
  $region26: #{_lambda_.39} parent=0 // pred_check
    _
  $region27: #{_lambda_.39} parent=0 // pred_check_branch
    %109 = sbr.rel (0) target = $region29
  $region28: #{_lambda_.39} parent=0 // pred_region
    _
  $region29: #{_lambda_.39} parent=0 // pred_fallthru
    _

// kernel: _lambda_.40
$region0: #{_lambda_.40}
  #allocation0 [shape = 'u32[]', space=smem, size = 0x4, offset = 0x4, fixed_abs, tag = 'smem constant byte address 0x4 - core index']
  #allocation1 [shape = 'u32[72,128]{1,0:T(1,128)}', space=vmem, size = 0x9000, scoped, tag = 'internal scratch']
  %s0 = inlined_call_operand.vmem [shape: bf16[2,20,64], index: 0, kind: input, shape index: {}]
  %s1 = inlined_call_operand.vmem [shape: f32[1,20,64], index: 1, kind: input, shape index: {}]
  %s2 = inlined_call_operand.vmem [shape: f32[1,64], index: 2, kind: input, shape index: {}]
  %s3 = inlined_call_operand.vmem [shape: f32[1,64], index: 3, kind: input, shape index: {}]
  %s4 = inlined_call_operand.vmem [shape: bf16[2,20,64], index: 4, kind: output, shape index: {}]
  %s5 = sld [smem:[#allocation0]]
  $region49: #{_lambda_.40} parent=0
    _
  %s7 = ssub.s32 1, %s5
  %s8 = scalar_select 0, %s7, %s5
  loop: start=0, step=1, limit=4
  $region2: #{_lambda_.40} parent=0 // loop_pre_header
    _
  $region3: #{_lambda_.40} parent=0 // loop_header
    %s10 = sphi 0, %s14
    %p11 = scmp.ge.s32.totalorder %s10, 4
    %s20 = sphi 0, %s22
    %s23 = sphi 0, %s20
    %s24 = sphi 0, %s23
    %s40 = sphi 0, %s24
    %s44 = sphi 0, %s44
    %s46 = sphi 0, %s44
    %s47 = sphi 0, %s46
    %s61 = sphi 0, %s47
    %s65 = sphi 0, %s65
    %s67 = sphi 0, %s65
    %s68 = sphi 0, %s67
    %s82 = sphi 0, %s68
    %s86 = sphi 0, %s86
    %s88 = sphi 0, %s86
    %s89 = sphi 0, %s88
    %s103 = sphi 0, %s89
    %s109 = sphi 0, %s111
    %s112 = sphi 0, %s109
    %s113 = sphi 0, %s112
    %s129 = sphi 0, %s113
  $region4: #{_lambda_.40} parent=0 // loop_header_branch
    %13 = sbr.rel (%p11) target = $region8
  $region5: #{_lambda_.40} parent=0 // loop_body
    %s15 = ssub.s32 %s10, 1
    %s16 = ssub.s32 %s10, 2
    %s17 = sadd.s32 %s10, 1
    %s18 = ssub.s32 %s10, %s17
    %p19 = scmp.eq.s32.totalorder %s18, 0
    %s21 = sadd.s32 %s20, 1
    %s22 = scalar_select %p19, %s20, %s21
    %p25 = pneg %p19
    %p26 = scmp.eq.s32.totalorder %s10, 1
    %p27 = por %p25, %p26
    %p28 = scmp.ne.s32.totalorder %s20, %s23
    %p29 = scmp.eq.s32.totalorder %s10, 0
    %p30 = por %p28, %p29
    %p31 = scmp.ne.s32.totalorder %s20, %s23
    %p32 = scmp.eq.s32.totalorder %s15, 1
    %p33 = por %p31, %p32
    %p34 = scmp.ne.s32.totalorder %s23, %s24
    %p35 = scmp.eq.s32.totalorder %s15, 0
    %p36 = por %p34, %p35
    %p37 = scmp.ne.s32.totalorder %s23, %s24
    %p38 = scmp.eq.s32.totalorder %s16, 1
    %p39 = por %p37, %p38
    %p41 = scmp.ne.s32.totalorder %s24, %s40
    %p42 = scmp.eq.s32.totalorder %s16, 0
    %p43 = por %p41, %p42
    %s45 = sadd.s32 %s44, 1
    %p48 = scmp.eq.s32.totalorder %s10, 1
    %p49 = scmp.ne.s32.totalorder %s44, %s46
    %p50 = scmp.eq.s32.totalorder %s10, 0
    %p51 = por %p49, %p50
    %p52 = scmp.ne.s32.totalorder %s44, %s46
    %p53 = scmp.eq.s32.totalorder %s15, 1
    %p54 = por %p52, %p53
    %p55 = scmp.ne.s32.totalorder %s46, %s47
    %p56 = scmp.eq.s32.totalorder %s15, 0
    %p57 = por %p55, %p56
    %p58 = scmp.ne.s32.totalorder %s46, %s47
    %p59 = scmp.eq.s32.totalorder %s16, 1
    %p60 = por %p58, %p59
    %p62 = scmp.ne.s32.totalorder %s47, %s61
    %p63 = scmp.eq.s32.totalorder %s16, 0
    %p64 = por %p62, %p63
    %s66 = sadd.s32 %s65, 1
    %p69 = scmp.eq.s32.totalorder %s10, 1
    %p70 = scmp.ne.s32.totalorder %s65, %s67
    %p71 = scmp.eq.s32.totalorder %s10, 0
    %p72 = por %p70, %p71
    %p73 = scmp.ne.s32.totalorder %s65, %s67
    %p74 = scmp.eq.s32.totalorder %s15, 1
    %p75 = por %p73, %p74
    %p76 = scmp.ne.s32.totalorder %s67, %s68
    %p77 = scmp.eq.s32.totalorder %s15, 0
    %p78 = por %p76, %p77
    %p79 = scmp.ne.s32.totalorder %s67, %s68
    %p80 = scmp.eq.s32.totalorder %s16, 1
    %p81 = por %p79, %p80
    %p83 = scmp.ne.s32.totalorder %s68, %s82
    %p84 = scmp.eq.s32.totalorder %s16, 0
    %p85 = por %p83, %p84
    %s87 = sadd.s32 %s86, 1
    %p90 = scmp.eq.s32.totalorder %s10, 1
    %p91 = scmp.ne.s32.totalorder %s86, %s88
    %p92 = scmp.eq.s32.totalorder %s10, 0
    %p93 = por %p91, %p92
    %p94 = scmp.ne.s32.totalorder %s86, %s88
    %p95 = scmp.eq.s32.totalorder %s15, 1
    %p96 = por %p94, %p95
    %p97 = scmp.ne.s32.totalorder %s88, %s89
    %p98 = scmp.eq.s32.totalorder %s15, 0
    %p99 = por %p97, %p98
    %p100 = scmp.ne.s32.totalorder %s88, %s89
    %p101 = scmp.eq.s32.totalorder %s16, 1
    %p102 = por %p100, %p101
    %p104 = scmp.ne.s32.totalorder %s89, %s103
    %p105 = scmp.eq.s32.totalorder %s16, 0
    %p106 = por %p104, %p105
    %s107 = ssub.s32 %s10, %s17
    %p108 = scmp.eq.s32.totalorder %s107, 0
    %s110 = sadd.s32 %s109, 1
    %s111 = scalar_select %p108, %s109, %s110
    %p114 = pneg %p108
    %p115 = scmp.eq.s32.totalorder %s10, 1
    %p116 = por %p114, %p115
    %p117 = scmp.ne.s32.totalorder %s109, %s112
    %p118 = scmp.eq.s32.totalorder %s10, 0
    %p119 = por %p117, %p118
    %p120 = scmp.ne.s32.totalorder %s109, %s112
    %p121 = scmp.eq.s32.totalorder %s15, 1
    %p122 = por %p120, %p121
    %p123 = scmp.ne.s32.totalorder %s112, %s113
    %p124 = scmp.eq.s32.totalorder %s15, 0
    %p125 = por %p123, %p124
    %p126 = scmp.ne.s32.totalorder %s112, %s113
    %p127 = scmp.eq.s32.totalorder %s16, 1
    %p128 = por %p126, %p127
    %p130 = scmp.ne.s32.totalorder %s113, %s129
    %p131 = scmp.eq.s32.totalorder %s16, 0
    %p132 = por %p130, %p131
    %p133 = scmp.le.s32.totalorder 1, %s10
    %p134 = scmp.lt.s32.totalorder %s10, 3
    %p135 = pnand %p133, %p134
    %p136 = pneg %p135
    // Predicated region
    $region9: #{_lambda_.40} parent=5 // pred_check
      _
    $region10: #{_lambda_.40} parent=5 // pred_check_branch
      %138 = sbr.rel (%p135) target = $region12
    $region11: #{_lambda_.40} parent=5 // pred_region
      %s139 = ssub.s32 %s10, 1
      // Predicated region
      $region13: #{_lambda_.40} parent=11 // pred_check
        %p140 = pneg %p57
      $region14: #{_lambda_.40} parent=11 // pred_check_branch
        %142 = sbr.rel (%p140) target = $region16
      $region15: #{_lambda_.40} parent=11 // pred_region
        _
      $region16: #{_lambda_.40} parent=11 // pred_fallthru
        _
      // Predicated region
      $region17: #{_lambda_.40} parent=11 // pred_check
        %p143 = pneg %p78
      $region18: #{_lambda_.40} parent=11 // pred_check_branch
        %145 = sbr.rel (%p143) target = $region20
      $region19: #{_lambda_.40} parent=11 // pred_region
        _
      $region20: #{_lambda_.40} parent=11 // pred_fallthru
        _
      // Predicated region
      $region21: #{_lambda_.40} parent=11 // pred_check
        %p146 = pneg %p99
      $region22: #{_lambda_.40} parent=11 // pred_check_branch
        %148 = sbr.rel (%p146) target = $region24
      $region23: #{_lambda_.40} parent=11 // pred_region
        _
      $region24: #{_lambda_.40} parent=11 // pred_fallthru
        _
    $region12: #{_lambda_.40} parent=5 // pred_fallthru
      _
    %p149 = scmp.lt.s32.totalorder %s10, 2
    // Predicated region
    $region25: #{_lambda_.40} parent=5 // pred_check
      %p150 = pneg %p149
    $region26: #{_lambda_.40} parent=5 // pred_check_branch
      %152 = sbr.rel (%p150) target = $region28
    $region27: #{_lambda_.40} parent=5 // pred_region
      // Predicated region
      $region29: #{_lambda_.40} parent=27 // pred_check
        %p153 = pneg %p30
      $region30: #{_lambda_.40} parent=27 // pred_check_branch
        %155 = sbr.rel (%p153) target = $region32
      $region31: #{_lambda_.40} parent=27 // pred_region
        %p156 = scmp.lt.s32.totalorder %s10, 1
        %s157 = scalar_select %p156, %s10, 1
        %s158 = smul.addr %s157, 3
        %s159 = smul.addr %s158, 4
        %s160 = scalar_lea.vmem %s0, %s159
      $region32: #{_lambda_.40} parent=27 // pred_fallthru
        _
    $region28: #{_lambda_.40} parent=5 // pred_fallthru
      _
    %p161 = scmp.le.s32.totalorder 1, %s10
    %p162 = scmp.lt.s32.totalorder %s10, 3
    %p163 = pnand %p161, %p162
    %p164 = pneg %p163
    // Predicated region
    $region33: #{_lambda_.40} parent=5 // pred_check
      _
    $region34: #{_lambda_.40} parent=5 // pred_check_branch
      %166 = sbr.rel (%p163) target = $region36
    $region35: #{_lambda_.40} parent=5 // pred_region
      %s167 = ssub.s32 %s10, 1
      %p168 = scmp.lt.s32.totalorder %s15, 1
      %s169 = scalar_select %p168, %s15, 1
      %s170 = smul.addr %s169, 3
      %s171 = smul.addr %s170, 4
      %s172 = scalar_lea.vmem %s0, %s171
      %p173 = pneg %p36
      %p174 = pneg %p33
      %p175 = pneg %p57
      %p176 = pneg %p54
      %p177 = pneg %p78
      %p178 = pneg %p75
      %p179 = pneg %p99
      %p180 = pneg %p96
      %p181 = pneg %p125
      %p182 = pneg %p122
      %p183 = scmp.lt.s32.totalorder %s15, 1
      %s184 = scalar_select %p183, %s15, 1
      %s185 = smul.addr %s184, 3
      %s186 = smul.addr %s185, 4
      %s187 = scalar_lea.vmem %s4, %s186
      %p188 = scmp.lt.s32.totalorder %s15, 1
      %s189 = scalar_select %p188, %s15, 1
      %s190 = smul.addr %s189, 3
      %s191 = smul.addr %s190, 4
      %s192 = scalar_lea.vmem %s0, %s191
      %p193 = scmp.lt.s32.totalorder %s15, 1
      %s194 = scalar_select %p193, %s15, 1
      %s195 = smul.addr %s194, 3
      %s196 = smul.addr %s195, 4
      %s197 = scalar_lea.vmem %s4, %s196
      %v198 = vld [vmem:[%s192] sm:$0xf]
      %v199 = vld [vmem:[%s192 + $0x4] sm:$0xf]
      %v200 = vld [vmem:[%s192 + $0x8] sm:$0x3]
      %v201 = vunpack.c.l.bf16 %v198
      %v202 = vunpack.c.l.bf16 %v199
      %v203 = vunpack.c.l.bf16 %v200
      %v204 = vld [vmem:[%s1] sm:$0xff]
      %v205 = vld [vmem:[%s1 + $0x8] sm:$0xff]
      %v206 = vld [vmem:[%s1 + $0x10] sm:$0xf]
      %v207 = vadd.f32 %v201, %v204
      %v208 = vadd.f32 %v202, %v205
      %v209 = vadd.f32 %v203, %v206
      %vm210 = vcmask 523264
      %v211 = vsel %vm210, %v207, 0.0
      %212 = vadd.xlane.f32.xlu0 %v211
      %v213 = vpop.xlane.xlu0 %212
      %v214 = vsel %vm210, %v208, 0.0
      %215 = vadd.xlane.f32.xlu0 %v214
      %v216 = vpop.xlane.xlu0 %215
      %vm217 = vcmask 519168
      %v218 = vsel %vm217, %v209, 0.0
      %219 = vadd.xlane.f32.xlu0 %v218
      %v220 = vpop.xlane.xlu0 %219
      %v221 = vrcp.pop 64.0
      %v222 = vmul.f32 64.0, %v221
      %v223 = vsub.f32 1.0, %v222
      %v224 = vmul.f32 %v221, %v223
      %v225 = vadd.f32 %v221, %v224
      %vm226 = vweird.f32 %v221
      %v227 = vsel %vm226, %v221, %v225
      %v228 = vmul.f32 %v213, %v227
      %v229 = vmul.f32 %v216, %v227
      %v230 = vmul.f32 %v220, %v227
      %v231 = vsub.f32 %v207, %v228
      %v232 = vsub.f32 %v208, %v229
      %v233 = vsub.f32 %v209, %v230
      %v234 = vmul.f32 %v231, %v231
      %v235 = vmul.f32 %v232, %v232
      %v236 = vmul.f32 %v233, %v233
      %v237 = vsel %vm210, %v234, 0.0
      %238 = vadd.xlane.f32.xlu0 %v237
      %v239 = vpop.xlane.xlu0 %238
      %v240 = vsel %vm210, %v235, 0.0
      %241 = vadd.xlane.f32.xlu0 %v240
      %v242 = vpop.xlane.xlu0 %241
      %v243 = vsel %vm217, %v236, 0.0
      %244 = vadd.xlane.f32.xlu0 %v243
      %v245 = vpop.xlane.xlu0 %244
      %v246 = vmul.f32 %v239, %v227
      %v247 = vmul.f32 %v242, %v227
      %v248 = vmul.f32 %v245, %v227
      %v249 = vadd.f32 %v246, 1e-06
      %v250 = vadd.f32 %v247, 1e-06
      %v251 = vadd.f32 %v248, 1e-06
      %v252 = vrsqrt.pop %v249
      %v253 = vmul.f32 %v252, %v249
      %v254 = vmul.f32 %v253, %v252
      %v255 = vmul.f32 0.5, %v254
      %v256 = vsub.f32 1.5, %v255
      %v257 = vmul.f32 %v252, %v256
      %vm258 = vweird.f32 %v249
      %vm259 = vweird.f32 %v252
      %vm260 = vmor %vm258, %vm259
      %v261 = vsel %vm260, %v252, %v257
      %v262 = vrsqrt.pop %v250
      %v263 = vmul.f32 %v262, %v250
      %v264 = vmul.f32 %v263, %v262
      %v265 = vmul.f32 0.5, %v264
      %v266 = vsub.f32 1.5, %v265
      %v267 = vmul.f32 %v262, %v266
      %vm268 = vweird.f32 %v250
      %vm269 = vweird.f32 %v262
      %vm270 = vmor %vm268, %vm269
      %v271 = vsel %vm270, %v262, %v267
      %v272 = vrsqrt.pop %v251
      %v273 = vmul.f32 %v272, %v251
      %v274 = vmul.f32 %v273, %v272
      %v275 = vmul.f32 0.5, %v274
      %v276 = vsub.f32 1.5, %v275
      %v277 = vmul.f32 %v272, %v276
      %vm278 = vweird.f32 %v251
      %vm279 = vweird.f32 %v272
      %vm280 = vmor %vm278, %vm279
      %v281 = vsel %vm280, %v272, %v277
      %v282 = vmul.f32 %v231, %v261
      %v283 = vmul.f32 %v232, %v271
      %v284 = vmul.f32 %v233, %v281
      %v285 = vld [vmem:[%s2] sm:$0x1]
      %v287 = vperm.slane %v285, 0
      %v289 = vmul.f32 %v282, %v287
      %v290 = vmul.f32 %v283, %v287
      %v291 = vmul.f32 %v284, %v287
      %v292 = vld [vmem:[%s3] sm:$0x1]
      %v294 = vperm.slane %v292, 0
      %v296 = vadd.f32 %v289, %v294
      %v297 = vadd.f32 %v290, %v294
      %v298 = vadd.f32 %v291, %v294
      %v299 = vpack.c.bf16 %v296, %v296
      %v300 = vpack.c.bf16 %v297, %v297
      %v301 = vpack.c.bf16 %v298, %v298
      %302 = vst.msk [vmem:[%s197] sm:$0xf] %vm217, %v299
      %303 = vst.msk [vmem:[%s197 + $0x4] sm:$0xf] %vm217, %v300
      %vm304 = vcmask 517120
      %305 = vst.msk [vmem:[%s197 + $0x8] sm:$0x3] %vm304, %v301
      %p306 = scmp.lt.s32.totalorder %s15, 1
      %s307 = scalar_select %p306, %s15, 1
      %s308 = smul.addr %s307, 3
      %s309 = smul.addr %s308, 4
      %s310 = scalar_lea.vmem %s4, %s309
      // Predicated region
      $region37: #{_lambda_.40} parent=35 // pred_check
        %p311 = pneg %p122
      $region38: #{_lambda_.40} parent=35 // pred_check_branch
        %313 = sbr.rel (%p311) target = $region40
      $region39: #{_lambda_.40} parent=35 // pred_region
        _
      $region40: #{_lambda_.40} parent=35 // pred_fallthru
        _
    $region36: #{_lambda_.40} parent=5 // pred_fallthru
      _
    %p314 = scmp.le.s32.totalorder 2, %s10
    // Predicated region
    $region41: #{_lambda_.40} parent=5 // pred_check
      %p315 = pneg %p314
    $region42: #{_lambda_.40} parent=5 // pred_check_branch
      %317 = sbr.rel (%p315) target = $region44
    $region43: #{_lambda_.40} parent=5 // pred_region
      %s318 = ssub.s32 %s10, 2
      // Predicated region
      $region45: #{_lambda_.40} parent=43 // pred_check
        %p319 = pneg %p128
      $region46: #{_lambda_.40} parent=43 // pred_check_branch
        %321 = sbr.rel (%p319) target = $region48
      $region47: #{_lambda_.40} parent=43 // pred_region
        %p322 = scmp.lt.s32.totalorder %s16, 1
        %s323 = scalar_select %p322, %s16, 1
        %s324 = smul.addr %s323, 3
        %s325 = smul.addr %s324, 4
        %s326 = scalar_lea.vmem %s4, %s325
      $region48: #{_lambda_.40} parent=43 // pred_fallthru
        _
    $region44: #{_lambda_.40} parent=5 // pred_fallthru
      _
  $region6: #{_lambda_.40} parent=0 // loop_footer
    %s14 = sadd.s32 1, %s10
  $region7: #{_lambda_.40} parent=0 // loop_footer_branch
    %9 = sbr.rel target = $region3
  $region8: #{_lambda_.40} parent=0 // loop_exit
    _

// kernel: _lambda_.43
$region0: #{_lambda_.43}
  #allocation0 [shape = 'u32[]', space=smem, size = 0x4, offset = 0x4, fixed_abs, tag = 'smem constant byte address 0x4 - core index']
  #allocation1 [shape = 'u32[72,128]{1,0:T(1,128)}', space=vmem, size = 0x9000, scoped, tag = 'internal scratch']
  #allocation2 [shape = 'f32[16,64]{1,0:T(8,128)}', space=vmem, size = 0x2000, scoped, tag = 'scratch operand']
  %s0 = inlined_call_operand.vmem [shape: bf16[16,64], index: 0, kind: input, shape index: {}]
  %s1 = inlined_call_operand.vmem [shape: bf16[64,64], index: 1, kind: input, shape index: {}]
  %s2 = inlined_call_operand.vmem [shape: f32[1,64], index: 2, kind: input, shape index: {}]
  %s3 = inlined_call_operand.vmem [shape: bf16[16,64], index: 3, kind: input, shape index: {}]
  %s4 = inlined_call_operand.vmem [shape: bf16[16,64], index: 4, kind: output, shape index: {}]
  %s5 = sld [smem:[#allocation0]]
  $region34: #{_lambda_.43} parent=0
    _
  %s7 = ssub.s32 1, %s5
  %s8 = scalar_select 0, %s7, %s5
  // Predicated region
  $region2: #{_lambda_.43} parent=0 // pred_check
    _
  $region3: #{_lambda_.43} parent=0 // pred_check_branch
    %10 = sbr.rel (0) target = $region5
  $region4: #{_lambda_.43} parent=0 // pred_region
    _
  $region5: #{_lambda_.43} parent=0 // pred_fallthru
    _
  // Predicated region
  $region6: #{_lambda_.43} parent=0 // pred_check
    _
  $region7: #{_lambda_.43} parent=0 // pred_check_branch
    %12 = sbr.rel (0) target = $region9
  $region8: #{_lambda_.43} parent=0 // pred_region
    _
  $region9: #{_lambda_.43} parent=0 // pred_fallthru
    _
  // Predicated region
  $region10: #{_lambda_.43} parent=0 // pred_check
    _
  $region11: #{_lambda_.43} parent=0 // pred_check_branch
    %14 = sbr.rel (0) target = $region13
  $region12: #{_lambda_.43} parent=0 // pred_region
    _
  $region13: #{_lambda_.43} parent=0 // pred_fallthru
    _
  // Predicated region
  $region14: #{_lambda_.43} parent=0 // pred_check
    _
  $region15: #{_lambda_.43} parent=0 // pred_check_branch
    %16 = sbr.rel (0) target = $region17
  $region16: #{_lambda_.43} parent=0 // pred_region
    _
  $region17: #{_lambda_.43} parent=0 // pred_fallthru
    _
  %p18 = scmp.eq.s32.totalorder 0, 0
  // Predicated region
  $region18: #{_lambda_.43} parent=0 // pred_check
    %p19 = pneg %p18
  $region19: #{_lambda_.43} parent=0 // pred_check_branch
    %21 = sbr.rel (%p19) target = $region21
  $region20: #{_lambda_.43} parent=0 // pred_region
    %vm22 = vcmask 523264
    %23 = vst.msk [vmem:[#allocation2] sm:$0xff] %vm22, 0.0
    %24 = vst.msk [vmem:[#allocation2 + $0x8] sm:$0xff] %vm22, 0.0
  $region21: #{_lambda_.43} parent=0 // pred_fallthru
    _
  %v25 = vld [vmem:[#allocation2] sm:$0xff]
  %v26 = vld [vmem:[#allocation2 + $0x8] sm:$0xff]
  %v27 = vld [vmem:[%s0] sm:$0xf]
  %v28 = vld [vmem:[%s0 + $0x4] sm:$0xf]
  %v29 = vld [vmem:[%s1] sm:$0xf]
  %v30 = vld [vmem:[%s1 + $0x4] sm:$0xf]
  %v31 = vld [vmem:[%s1 + $0x8] sm:$0xf]
  %v32 = vld [vmem:[%s1 + $0xc] sm:$0xf]
  %v33 = vld [vmem:[%s1 + $0x10] sm:$0xf]
  %v34 = vld [vmem:[%s1 + $0x14] sm:$0xf]
  %v35 = vld [vmem:[%s1 + $0x18] sm:$0xf]
  %v36 = vld [vmem:[%s1 + $0x1c] sm:$0xf]
  %v39 = vunpack.c.l.b16 %v27
  %v40 = vunpack.c.l.b16 %v28
  %v41 = vpack.c.b16 %v40, %v39
  %v50 = vunpack.c.l.b16 %v29
  %v51 = vunpack.c.l.b16 %v30
  %v52 = vunpack.c.l.b16 %v31
  %v53 = vunpack.c.l.b16 %v32
  %v54 = vunpack.c.l.b16 %v33
  %v55 = vunpack.c.l.b16 %v34
  %v56 = vunpack.c.l.b16 %v35
  %v57 = vunpack.c.l.b16 %v36
  %v58 = vpack.c.b16 %v51, %v50
  %v59 = vpack.c.b16 %v53, %v52
  %v60 = vpack.c.b16 %v55, %v54
  %v61 = vpack.c.b16 %v57, %v56
  %vm66 = vcmask 523264
  %v68 = vsel %vm66, %v41, 0
  %70 = vmatpush.bf16.msra.mxu0 0
  %71 = vmatpush.bf16.msra.mxu0 0
  %72 = vmatpush.bf16.msra.mxu0 0
  %73 = vmatpush.bf16.msra.mxu0 0
  %74 = vmatpush.bf16.msra.mxu0 %v61
  %75 = vmatpush.bf16.msra.mxu0 %v60
  %76 = vmatpush.bf16.msra.mxu0 %v59
  %77 = vmatpush.bf16.msra.mxu0 %v58
  %78 = vmatmul.bf16.gmra.mxu0 %v68
  %v79 = vpop.f32.mrf.mxu0
  %v80 = vadd.f32 0.0, %v79
  %v81 = vpop.f32.mrf.mxu0
  %v82 = vadd.f32 0.0, %v81
  %83 = vdwg.mxu0
  %v84 = vadd.f32 %v25, %v80
  %v85 = vadd.f32 %v26, %v82
  %86 = vst.msk [vmem:[#allocation2] sm:$0xff] %vm66, %v84
  %87 = vst.msk [vmem:[#allocation2 + $0x8] sm:$0xff] %vm66, %v85
  // Predicated region
  $region22: #{_lambda_.43} parent=0 // pred_check
    %p88 = pneg %p18
  $region23: #{_lambda_.43} parent=0 // pred_check_branch
    %90 = sbr.rel (%p88) target = $region25
  $region24: #{_lambda_.43} parent=0 // pred_region
    %v91 = vld [vmem:[#allocation2] sm:$0xff]
    %v92 = vld [vmem:[#allocation2 + $0x8] sm:$0xff]
    %v93 = vld [vmem:[%s2] sm:$0x1]
    %v95 = vperm.slane %v93, 0
    %v97 = vadd.f32 %v91, %v95
    %v98 = vadd.f32 %v92, %v95
    %v99 = vld [vmem:[%s3] sm:$0xf]
    %v100 = vld [vmem:[%s3 + $0x4] sm:$0xf]
    %v101 = vunpack.c.l.bf16 %v99
    %v102 = vunpack.c.l.bf16 %v100
    %v103 = vadd.f32 %v101, %v97
    %v104 = vadd.f32 %v102, %v98
    %v105 = vpack.c.bf16 %v103, %v103
    %v106 = vpack.c.bf16 %v104, %v104
    %vm107 = vcmask 519168
    %108 = vst.msk [vmem:[%s4] sm:$0xf] %vm107, %v105
    %109 = vst.msk [vmem:[%s4 + $0x4] sm:$0xf] %vm107, %v106
  $region25: #{_lambda_.43} parent=0 // pred_fallthru
    _
  // Predicated region
  $region26: #{_lambda_.43} parent=0 // pred_check
    _
  $region27: #{_lambda_.43} parent=0 // pred_check_branch
    %111 = sbr.rel (0) target = $region29
  $region28: #{_lambda_.43} parent=0 // pred_region
    _
  $region29: #{_lambda_.43} parent=0 // pred_fallthru
    _
  // Predicated region
  $region30: #{_lambda_.43} parent=0 // pred_check
    _
  $region31: #{_lambda_.43} parent=0 // pred_check_branch
    %113 = sbr.rel (0) target = $region33
  $region32: #{_lambda_.43} parent=0 // pred_region
    _
  $region33: #{_lambda_.43} parent=0 // pred_fallthru
    _

// kernel: _lambda_.41
$region0: #{_lambda_.41}
  #allocation0 [shape = 'u32[]', space=smem, size = 0x4, offset = 0x4, fixed_abs, tag = 'smem constant byte address 0x4 - core index']
  #allocation1 [shape = 'u32[72,128]{1,0:T(1,128)}', space=vmem, size = 0x9000, scoped, tag = 'internal scratch']
  %s0 = inlined_call_operand.vmem [shape: bf16[16,64], index: 0, kind: input, shape index: {}]
  %s1 = inlined_call_operand.vmem [shape: f32[1,64], index: 1, kind: input, shape index: {}]
  %s2 = inlined_call_operand.vmem [shape: f32[1,64], index: 2, kind: input, shape index: {}]
  %s3 = inlined_call_operand.vmem [shape: bf16[64,192], index: 3, kind: input, shape index: {}]
  %s4 = inlined_call_operand.vmem [shape: f32[1,192], index: 4, kind: input, shape index: {}]
  %s5 = inlined_call_operand.vmem [shape: bf16[16,192], index: 5, kind: output, shape index: {}]
  %s6 = sld [smem:[#allocation0]]
  $region30: #{_lambda_.41} parent=0
    _
  %s8 = ssub.s32 1, %s6
  %s9 = scalar_select 0, %s8, %s6
  // Predicated region
  $region2: #{_lambda_.41} parent=0 // pred_check
    _
  $region3: #{_lambda_.41} parent=0 // pred_check_branch
    %11 = sbr.rel (0) target = $region5
  $region4: #{_lambda_.41} parent=0 // pred_region
    _
  $region5: #{_lambda_.41} parent=0 // pred_fallthru
    _
  // Predicated region
  $region6: #{_lambda_.41} parent=0 // pred_check
    _
  $region7: #{_lambda_.41} parent=0 // pred_check_branch
    %13 = sbr.rel (0) target = $region9
  $region8: #{_lambda_.41} parent=0 // pred_region
    _
  $region9: #{_lambda_.41} parent=0 // pred_fallthru
    _
  // Predicated region
  $region10: #{_lambda_.41} parent=0 // pred_check
    _
  $region11: #{_lambda_.41} parent=0 // pred_check_branch
    %15 = sbr.rel (0) target = $region13
  $region12: #{_lambda_.41} parent=0 // pred_region
    _
  $region13: #{_lambda_.41} parent=0 // pred_fallthru
    _
  // Predicated region
  $region14: #{_lambda_.41} parent=0 // pred_check
    _
  $region15: #{_lambda_.41} parent=0 // pred_check_branch
    %17 = sbr.rel (0) target = $region17
  $region16: #{_lambda_.41} parent=0 // pred_region
    _
  $region17: #{_lambda_.41} parent=0 // pred_fallthru
    _
  // Predicated region
  $region18: #{_lambda_.41} parent=0 // pred_check
    _
  $region19: #{_lambda_.41} parent=0 // pred_check_branch
    %19 = sbr.rel (0) target = $region21
  $region20: #{_lambda_.41} parent=0 // pred_region
    _
  $region21: #{_lambda_.41} parent=0 // pred_fallthru
    _
  %v21 = vld [vmem:[%s0] sm:$0xf]
  %v22 = vld [vmem:[%s0 + $0x4] sm:$0xf]
  %v23 = vunpack.c.l.bf16 %v21
  %v24 = vunpack.c.l.bf16 %v22
  %vm25 = vcmask 523264
  %v26 = vsel %vm25, %v23, 0.0
  %27 = vadd.xlane.f32.xlu0 %v26
  %v28 = vpop.xlane.xlu0 %27
  %v29 = vsel %vm25, %v24, 0.0
  %30 = vadd.xlane.f32.xlu0 %v29
  %v31 = vpop.xlane.xlu0 %30
  %v32 = vrcp.pop 64.0
  %v33 = vmul.f32 64.0, %v32
  %v34 = vsub.f32 1.0, %v33
  %v35 = vmul.f32 %v32, %v34
  %v36 = vadd.f32 %v32, %v35
  %vm37 = vweird.f32 %v32
  %v38 = vsel %vm37, %v32, %v36
  %v39 = vmul.f32 %v28, %v38
  %v40 = vmul.f32 %v31, %v38
  %v41 = vsub.f32 %v23, %v39
  %v42 = vsub.f32 %v24, %v40
  %v43 = vmul.f32 %v41, %v41
  %v44 = vmul.f32 %v42, %v42
  %v45 = vsel %vm25, %v43, 0.0
  %46 = vadd.xlane.f32.xlu0 %v45
  %v47 = vpop.xlane.xlu0 %46
  %v48 = vsel %vm25, %v44, 0.0
  %49 = vadd.xlane.f32.xlu0 %v48
  %v50 = vpop.xlane.xlu0 %49
  %v51 = vmul.f32 %v47, %v38
  %v52 = vmul.f32 %v50, %v38
  %v53 = vadd.f32 %v51, 1e-06
  %v54 = vadd.f32 %v52, 1e-06
  %v55 = vrsqrt.pop %v53
  %v56 = vmul.f32 %v55, %v53
  %v57 = vmul.f32 %v56, %v55
  %v58 = vmul.f32 0.5, %v57
  %v59 = vsub.f32 1.5, %v58
  %v60 = vmul.f32 %v55, %v59
  %vm61 = vweird.f32 %v53
  %vm62 = vweird.f32 %v55
  %vm63 = vmor %vm61, %vm62
  %v64 = vsel %vm63, %v55, %v60
  %v65 = vrsqrt.pop %v54
  %v66 = vmul.f32 %v65, %v54
  %v67 = vmul.f32 %v66, %v65
  %v68 = vmul.f32 0.5, %v67
  %v69 = vsub.f32 1.5, %v68
  %v70 = vmul.f32 %v65, %v69
  %vm71 = vweird.f32 %v54
  %vm72 = vweird.f32 %v65
  %vm73 = vmor %vm71, %vm72
  %v74 = vsel %vm73, %v65, %v70
  %v75 = vmul.f32 %v41, %v64
  %v76 = vmul.f32 %v42, %v74
  %v77 = vld [vmem:[%s1] sm:$0x1]
  %v79 = vperm.slane %v77, 0
  %v81 = vmul.f32 %v75, %v79
  %v82 = vmul.f32 %v76, %v79
  %v83 = vld [vmem:[%s2] sm:$0x1]
  %v85 = vperm.slane %v83, 0
  %v87 = vadd.f32 %v81, %v85
  %v88 = vadd.f32 %v82, %v85
  %v89 = vpack.c.bf16 %v88, %v87
  %v90 = vld [vmem:[%s3] sm:$0xff]
  %v91 = vld [vmem:[%s3 + $0x8] sm:$0xff]
  %v92 = vld [vmem:[%s3 + $0x10] sm:$0xff]
  %v93 = vld [vmem:[%s3 + $0x18] sm:$0xff]
  %v94 = vld [vmem:[%s3 + $0x20] sm:$0xff]
  %v95 = vld [vmem:[%s3 + $0x28] sm:$0xff]
  %v96 = vld [vmem:[%s3 + $0x30] sm:$0xff]
  %v97 = vld [vmem:[%s3 + $0x38] sm:$0xff]
  %v98 = vld [vmem:[%s4] sm:$0x3]
  %v100 = vperm.slane %v98, 0
  %v101 = vperm.slane %v98, 1
  %v112 = vunpack.c.l.b16 %v90
  %v113 = vunpack.c.h.b16 %v90
  %v114 = vunpack.c.l.b16 %v91
  %v115 = vunpack.c.h.b16 %v91
  %v116 = vunpack.c.l.b16 %v92
  %v117 = vunpack.c.h.b16 %v92
  %v118 = vunpack.c.l.b16 %v93
  %v119 = vunpack.c.h.b16 %v93
  %v120 = vunpack.c.l.b16 %v94
  %v121 = vunpack.c.h.b16 %v94
  %v122 = vunpack.c.l.b16 %v95
  %v123 = vunpack.c.h.b16 %v95
  %v124 = vunpack.c.l.b16 %v96
  %v125 = vunpack.c.h.b16 %v96
  %v126 = vunpack.c.l.b16 %v97
  %v127 = vunpack.c.h.b16 %v97
  %v128 = vpack.c.b16 %v114, %v112
  %v129 = vpack.c.b16 %v115, %v113
  %v130 = vpack.c.b16 %v118, %v116
  %v131 = vpack.c.b16 %v119, %v117
  %v132 = vpack.c.b16 %v122, %v120
  %v133 = vpack.c.b16 %v123, %v121
  %v134 = vpack.c.b16 %v126, %v124
  %v135 = vpack.c.b16 %v127, %v125
  %v145 = vsel %vm25, %v89, 0
  %147 = vmatpush.bf16.msra.mxu0 0
  %148 = vmatpush.bf16.msra.mxu0 0
  %149 = vmatpush.bf16.msra.mxu0 0
  %150 = vmatpush.bf16.msra.mxu0 0
  %151 = vmatpush.bf16.msra.mxu0 %v134
  %152 = vmatpush.bf16.msra.mxu0 %v132
  %153 = vmatpush.bf16.msra.mxu0 %v130
  %154 = vmatpush.bf16.msra.mxu0 %v128
  %155 = vmatmul.bf16.gmra.mxu0 %v145
  %v156 = vpop.f32.mrf.mxu0
  %v157 = vadd.f32 %v100, %v156
  %v158 = vpop.f32.mrf.mxu0
  %v159 = vadd.f32 %v100, %v158
  %160 = vdwg.mxu0
  %161 = vmatpush.bf16.msra.mxu0 0
  %162 = vmatpush.bf16.msra.mxu0 0
  %163 = vmatpush.bf16.msra.mxu0 0
  %164 = vmatpush.bf16.msra.mxu0 0
  %165 = vmatpush.bf16.msra.mxu0 %v135
  %166 = vmatpush.bf16.msra.mxu0 %v133
  %167 = vmatpush.bf16.msra.mxu0 %v131
  %168 = vmatpush.bf16.msra.mxu0 %v129
  %169 = vmatmul.bf16.gmra.mxu0 %v145
  %v170 = vpop.f32.mrf.mxu0
  %v171 = vadd.f32 %v101, %v170
  %v172 = vpop.f32.mrf.mxu0
  %v173 = vadd.f32 %v101, %v172
  %174 = vdwg.mxu0
  %v175 = vpack.c.bf16 %v171, %v157
  %v176 = vpack.c.bf16 %v173, %v159
  %vm177 = vcmask 1043456
  %vm178 = vcmask 523268
  %vm179 = vmor %vm178, %vm177
  %180 = vst.msk [vmem:[%s5] sm:$0xff] %vm179, %v175
  %181 = vst.msk [vmem:[%s5 + $0x8] sm:$0xff] %vm179, %v176
  // Predicated region
  $region22: #{_lambda_.41} parent=0 // pred_check
    _
  $region23: #{_lambda_.41} parent=0 // pred_check_branch
    %183 = sbr.rel (0) target = $region25
  $region24: #{_lambda_.41} parent=0 // pred_region
    _
  $region25: #{_lambda_.41} parent=0 // pred_fallthru
    _
  // Predicated region
  $region26: #{_lambda_.41} parent=0 // pred_check
    _
  $region27: #{_lambda_.41} parent=0 // pred_check_branch
    %185 = sbr.rel (0) target = $region29
  $region28: #{_lambda_.41} parent=0 // pred_region
    _
  $region29: #{_lambda_.41} parent=0 // pred_fallthru
    _

// kernel: _lambda_.42
$region0: #{_lambda_.42}
  #allocation0 [shape = 'u32[]', space=smem, size = 0x4, offset = 0x4, fixed_abs, tag = 'smem constant byte address 0x4 - core index']
  #allocation1 [shape = 'u32[72,128]{1,0:T(1,128)}', space=vmem, size = 0x9000, scoped, tag = 'internal scratch']
  %s0 = inlined_call_operand.vmem [shape: bf16[2,8,192], index: 0, kind: input, shape index: {}]
  %s1 = inlined_call_operand.vmem [shape: bf16[2,8,64], index: 1, kind: output, shape index: {}]
  %s2 = sld [smem:[#allocation0]]
  $region37: #{_lambda_.42} parent=0
    _
  %s4 = ssub.s32 1, %s2
  %s5 = scalar_select 0, %s4, %s2
  loop: start=0, step=1, limit=4
  $region2: #{_lambda_.42} parent=0 // loop_pre_header
    _
  $region3: #{_lambda_.42} parent=0 // loop_header
    %s7 = sphi 0, %s11
    %p8 = scmp.ge.s32.totalorder %s7, 4
    %s17 = sphi 0, %s19
    %s20 = sphi 0, %s17
    %s21 = sphi 0, %s20
    %s37 = sphi 0, %s21
    %s43 = sphi 0, %s45
    %s46 = sphi 0, %s43
    %s47 = sphi 0, %s46
    %s63 = sphi 0, %s47
  $region4: #{_lambda_.42} parent=0 // loop_header_branch
    %10 = sbr.rel (%p8) target = $region8
  $region5: #{_lambda_.42} parent=0 // loop_body
    %s12 = ssub.s32 %s7, 1
    %s13 = ssub.s32 %s7, 2
    %s14 = sadd.s32 %s7, 1
    %s15 = ssub.s32 %s7, %s14
    %p16 = scmp.eq.s32.totalorder %s15, 0
    %s18 = sadd.s32 %s17, 1
    %s19 = scalar_select %p16, %s17, %s18
    %p22 = pneg %p16
    %p23 = scmp.eq.s32.totalorder %s7, 1
    %p24 = por %p22, %p23
    %p25 = scmp.ne.s32.totalorder %s17, %s20
    %p26 = scmp.eq.s32.totalorder %s7, 0
    %p27 = por %p25, %p26
    %p28 = scmp.ne.s32.totalorder %s17, %s20
    %p29 = scmp.eq.s32.totalorder %s12, 1
    %p30 = por %p28, %p29
    %p31 = scmp.ne.s32.totalorder %s20, %s21
    %p32 = scmp.eq.s32.totalorder %s12, 0
    %p33 = por %p31, %p32
    %p34 = scmp.ne.s32.totalorder %s20, %s21
    %p35 = scmp.eq.s32.totalorder %s13, 1
    %p36 = por %p34, %p35
    %p38 = scmp.ne.s32.totalorder %s21, %s37
    %p39 = scmp.eq.s32.totalorder %s13, 0
    %p40 = por %p38, %p39
    %s41 = ssub.s32 %s7, %s14
    %p42 = scmp.eq.s32.totalorder %s41, 0
    %s44 = sadd.s32 %s43, 1
    %s45 = scalar_select %p42, %s43, %s44
    %p48 = pneg %p42
    %p49 = scmp.eq.s32.totalorder %s7, 1
    %p50 = por %p48, %p49
    %p51 = scmp.ne.s32.totalorder %s43, %s46
    %p52 = scmp.eq.s32.totalorder %s7, 0
    %p53 = por %p51, %p52
    %p54 = scmp.ne.s32.totalorder %s43, %s46
    %p55 = scmp.eq.s32.totalorder %s12, 1
    %p56 = por %p54, %p55
    %p57 = scmp.ne.s32.totalorder %s46, %s47
    %p58 = scmp.eq.s32.totalorder %s12, 0
    %p59 = por %p57, %p58
    %p60 = scmp.ne.s32.totalorder %s46, %s47
    %p61 = scmp.eq.s32.totalorder %s13, 1
    %p62 = por %p60, %p61
    %p64 = scmp.ne.s32.totalorder %s47, %s63
    %p65 = scmp.eq.s32.totalorder %s13, 0
    %p66 = por %p64, %p65
    %p67 = scmp.le.s32.totalorder 1, %s7
    %p68 = scmp.lt.s32.totalorder %s7, 3
    %p69 = pnand %p67, %p68
    %p70 = pneg %p69
    // Predicated region
    $region9: #{_lambda_.42} parent=5 // pred_check
      _
    $region10: #{_lambda_.42} parent=5 // pred_check_branch
      %72 = sbr.rel (%p69) target = $region12
    $region11: #{_lambda_.42} parent=5 // pred_region
      %s73 = ssub.s32 %s7, 1
    $region12: #{_lambda_.42} parent=5 // pred_fallthru
      _
    %p74 = scmp.lt.s32.totalorder %s7, 2
    // Predicated region
    $region13: #{_lambda_.42} parent=5 // pred_check
      %p75 = pneg %p74
    $region14: #{_lambda_.42} parent=5 // pred_check_branch
      %77 = sbr.rel (%p75) target = $region16
    $region15: #{_lambda_.42} parent=5 // pred_region
      // Predicated region
      $region17: #{_lambda_.42} parent=15 // pred_check
        %p78 = pneg %p27
      $region18: #{_lambda_.42} parent=15 // pred_check_branch
        %80 = sbr.rel (%p78) target = $region20
      $region19: #{_lambda_.42} parent=15 // pred_region
        %p81 = scmp.lt.s32.totalorder %s7, 1
        %s82 = scalar_select %p81, %s7, 1
        %s83 = smul.addr %s82, 2
        %s84 = smul.addr %s83, 4
        %s85 = scalar_lea.vmem %s0, %s84
      $region20: #{_lambda_.42} parent=15 // pred_fallthru
        _
    $region16: #{_lambda_.42} parent=5 // pred_fallthru
      _
    %p86 = scmp.le.s32.totalorder 1, %s7
    %p87 = scmp.lt.s32.totalorder %s7, 3
    %p88 = pnand %p86, %p87
    %p89 = pneg %p88
    // Predicated region
    $region21: #{_lambda_.42} parent=5 // pred_check
      _
    $region22: #{_lambda_.42} parent=5 // pred_check_branch
      %91 = sbr.rel (%p88) target = $region24
    $region23: #{_lambda_.42} parent=5 // pred_region
      %s92 = ssub.s32 %s7, 1
      %p93 = scmp.lt.s32.totalorder %s12, 1
      %s94 = scalar_select %p93, %s12, 1
      %s95 = smul.addr %s94, 2
      %s96 = smul.addr %s95, 4
      %s97 = scalar_lea.vmem %s0, %s96
      %p98 = pneg %p33
      %p99 = pneg %p30
      %p100 = pneg %p59
      %p101 = pneg %p56
      %p102 = scmp.lt.s32.totalorder %s12, 1
      %s103 = scalar_select %p102, %s12, 1
      %s104 = smul.addr %s103, 4
      %s105 = scalar_lea.vmem %s1, %s104
      %p106 = scmp.lt.s32.totalorder %s12, 1
      %s107 = scalar_select %p106, %s12, 1
      %s108 = smul.addr %s107, 2
      %s109 = smul.addr %s108, 4
      %s110 = scalar_lea.vmem %s0, %s109
      %p111 = scmp.lt.s32.totalorder %s12, 1
      %s112 = scalar_select %p111, %s12, 1
      %s113 = smul.addr %s112, 4
      %s114 = scalar_lea.vmem %s1, %s113
      %v116 = vld [vmem:[%s110] sm:$0xf]
      %v117 = vld [vmem:[%s110 + $0x4] sm:$0xf]
      %v118 = vunpack.c.l.bf16 %v116
      %v119 = vmul.f32 %v118, 0.25
      %v120 = vpack.c.bf16 %v119, %v119
      %v122 = vunpack.c.l.b16 %v116
      %v123 = vpack.c.b16 %v122, %v122
      %124 = vrot.lane.b32.xlu0 %v123, 64
      %v125 = vpop.permute.xlu0 %124
      %vm126 = vcmask 130048
      %v128 = vsel %vm126, %v120, 0
      %v131 = vsel %vm126, %v125, 0
      %133 = vmatpush.bf16.xpose.msra.mxu0 0
      %134 = vmatpush.bf16.xpose.msra.mxu0 0
      %135 = vmatpush.bf16.xpose.msra.mxu0 0
      %136 = vmatpush.bf16.xpose.msra.mxu0 0
      %137 = vmatpush.bf16.xpose.msra.mxu0 0
      %138 = vmatpush.bf16.xpose.msra.mxu0 0
      %139 = vmatpush.bf16.xpose.msra.mxu0 0
      %140 = vmatpush.bf16.xpose.msra.mxu0 %v131
      %141 = vmatmul.bf16.gmra.mxu0 %v128
      %v142 = vpop.f32.mrf.mxu0
      %v143 = vadd.f32 0.0, %v142
      %v144 = vpop.f32.mrf.mxu0
      %145 = vdwg.mxu0
      %vm146 = vcmask 64512
      %v147 = vsel %vm146, %v143, -inf
      %148 = vmax.xlane.f32.xlu0 %v147
      %v149 = vpop.xlane.xlu0 %148
      %v150 = vsub.f32 %v143, %v149
      %v151 = vmul.f32 %v150, 1.442695
      %v152 = vpow.pop %v151
      %v153 = vsel %vm146, %v152, 0.0
      %154 = vadd.xlane.f32.xlu0 %v153
      %v155 = vpop.xlane.xlu0 %154
      %v156 = vrcp.pop %v155
      %v157 = vmul.f32 %v152, %v156
      %v158 = vpack.c.bf16 %v157, %v157
      %v160 = vsel %vm146, %v158, 0
      %vm162 = vcmask 1043456
      %v164 = vsel %vm162, %v117, 0
      %166 = vmatpush.bf16.msra.mxu0 0
      %167 = vmatpush.bf16.msra.mxu0 0
      %168 = vmatpush.bf16.msra.mxu0 0
      %169 = vmatpush.bf16.msra.mxu0 0
      %170 = vmatpush.bf16.msra.mxu0 0
      %171 = vmatpush.bf16.msra.mxu0 0
      %172 = vmatpush.bf16.msra.mxu0 0
      %173 = vmatpush.bf16.msra.mxu0 %v164
      %174 = vmatmul.bf16.gmra.mxu0 %v160
      %v175 = vpop.f32.mrf.mxu0
      %v176 = vadd.f32 0.0, %v175
      %v177 = vpop.f32.mrf.mxu0
      %178 = vdwg.mxu0
      %v179 = vpack.c.bf16 %v176, %v176
      %vm180 = vcmask 125952
      %181 = vst.msk [vmem:[%s114] sm:$0xf] %vm180, %v179
      %v182 = vld [vmem:[%s110] sm:$0xf]
      %v183 = vld [vmem:[%s110 + $0x4] sm:$0xf]
      %v184 = vunpack.c.l.bf16 %v182
      %v185 = vmul.f32 %v184, 0.25
      %v186 = vpack.c.bf16 %v185, %v185
      %188 = vrot.lane.b32.xlu0 %v186, 112
      %v189 = vpop.permute.xlu0 %188
      %v191 = vunpack.c.l.b16 %v182
      %v192 = vpack.c.b16 %v191, %v191
      %193 = vrot.lane.b32.xlu0 %v192, 48
      %v194 = vpop.permute.xlu0 %193
      %v196 = vsel %vm126, %v189, 0
      %v199 = vsel %vm126, %v194, 0
      %201 = vmatpush.bf16.xpose.msra.mxu0 0
      %202 = vmatpush.bf16.xpose.msra.mxu0 0
      %203 = vmatpush.bf16.xpose.msra.mxu0 0
      %204 = vmatpush.bf16.xpose.msra.mxu0 0
      %205 = vmatpush.bf16.xpose.msra.mxu0 0
      %206 = vmatpush.bf16.xpose.msra.mxu0 0
      %207 = vmatpush.bf16.xpose.msra.mxu0 0
      %208 = vmatpush.bf16.xpose.msra.mxu0 %v199
      %209 = vmatmul.bf16.gmra.mxu0 %v196
      %v210 = vpop.f32.mrf.mxu0
      %v211 = vadd.f32 0.0, %v210
      %v212 = vpop.f32.mrf.mxu0
      %213 = vdwg.mxu0
      %v214 = vsel %vm146, %v211, -inf
      %215 = vmax.xlane.f32.xlu0 %v214
      %v216 = vpop.xlane.xlu0 %215
      %v217 = vsub.f32 %v211, %v216
      %v218 = vmul.f32 %v217, 1.442695
      %v219 = vpow.pop %v218
      %v220 = vsel %vm146, %v219, 0.0
      %221 = vadd.xlane.f32.xlu0 %v220
      %v222 = vpop.xlane.xlu0 %221
      %v223 = vrcp.pop %v222
      %v224 = vmul.f32 %v219, %v223
      %v225 = vpack.c.bf16 %v224, %v224
      %v227 = vunpack.c.l.b16 %v183
      %v228 = vpack.c.b16 %v227, %v227
      %229 = vrot.lane.b32.xlu0 %v228, 112
      %v230 = vpop.permute.xlu0 %229
      %v232 = vsel %vm146, %v225, 0
      %v235 = vsel %vm162, %v230, 0
      %237 = vmatpush.bf16.msra.mxu0 0
      %238 = vmatpush.bf16.msra.mxu0 0
      %239 = vmatpush.bf16.msra.mxu0 0
      %240 = vmatpush.bf16.msra.mxu0 0
      %241 = vmatpush.bf16.msra.mxu0 0
      %242 = vmatpush.bf16.msra.mxu0 0
      %243 = vmatpush.bf16.msra.mxu0 0
      %244 = vmatpush.bf16.msra.mxu0 %v235
      %245 = vmatmul.bf16.gmra.mxu0 %v232
      %v246 = vpop.f32.mrf.mxu0
      %v247 = vadd.f32 0.0, %v246
      %v248 = vpop.f32.mrf.mxu0
      %249 = vdwg.mxu0
      %v250 = vpack.c.bf16 %v247, %v247
      %252 = vrot.lane.b32.xlu0 %v250, 16
      %v253 = vpop.permute.xlu0 %252
      %vm255 = vcmask 257152
      %256 = vst.msk [vmem:[%s114] sm:$0xf] %vm255, %v253
      %v257 = vld [vmem:[%s110] sm:$0xf]
      %v258 = vld [vmem:[%s110 + $0x4] sm:$0xf]
      %v259 = vunpack.c.l.bf16 %v257
      %v260 = vmul.f32 %v259, 0.25
      %v261 = vpack.c.bf16 %v260, %v260
      %263 = vrot.lane.b32.xlu0 %v261, 96
      %v264 = vpop.permute.xlu0 %263
      %v266 = vunpack.c.l.b16 %v257
      %v267 = vpack.c.b16 %v266, %v266
      %268 = vrot.lane.b32.xlu0 %v267, 32
      %v269 = vpop.permute.xlu0 %268
      %v271 = vsel %vm126, %v264, 0
      %v274 = vsel %vm126, %v269, 0
      %276 = vmatpush.bf16.xpose.msra.mxu0 0
      %277 = vmatpush.bf16.xpose.msra.mxu0 0
      %278 = vmatpush.bf16.xpose.msra.mxu0 0
      %279 = vmatpush.bf16.xpose.msra.mxu0 0
      %280 = vmatpush.bf16.xpose.msra.mxu0 0
      %281 = vmatpush.bf16.xpose.msra.mxu0 0
      %282 = vmatpush.bf16.xpose.msra.mxu0 0
      %283 = vmatpush.bf16.xpose.msra.mxu0 %v274
      %284 = vmatmul.bf16.gmra.mxu0 %v271
      %v285 = vpop.f32.mrf.mxu0
      %v286 = vadd.f32 0.0, %v285
      %v287 = vpop.f32.mrf.mxu0
      %288 = vdwg.mxu0
      %v289 = vsel %vm146, %v286, -inf
      %290 = vmax.xlane.f32.xlu0 %v289
      %v291 = vpop.xlane.xlu0 %290
      %v292 = vsub.f32 %v286, %v291
      %v293 = vmul.f32 %v292, 1.442695
      %v294 = vpow.pop %v293
      %v295 = vsel %vm146, %v294, 0.0
      %296 = vadd.xlane.f32.xlu0 %v295
      %v297 = vpop.xlane.xlu0 %296
      %v298 = vrcp.pop %v297
      %v299 = vmul.f32 %v294, %v298
      %v300 = vpack.c.bf16 %v299, %v299
      %v302 = vunpack.c.l.b16 %v258
      %v303 = vpack.c.b16 %v302, %v302
      %304 = vrot.lane.b32.xlu0 %v303, 96
      %v305 = vpop.permute.xlu0 %304
      %v307 = vsel %vm146, %v300, 0
      %v310 = vsel %vm162, %v305, 0
      %312 = vmatpush.bf16.msra.mxu0 0
      %313 = vmatpush.bf16.msra.mxu0 0
      %314 = vmatpush.bf16.msra.mxu0 0
      %315 = vmatpush.bf16.msra.mxu0 0
      %316 = vmatpush.bf16.msra.mxu0 0
      %317 = vmatpush.bf16.msra.mxu0 0
      %318 = vmatpush.bf16.msra.mxu0 0
      %319 = vmatpush.bf16.msra.mxu0 %v310
      %320 = vmatmul.bf16.gmra.mxu0 %v307
      %v321 = vpop.f32.mrf.mxu0
      %v322 = vadd.f32 0.0, %v321
      %v323 = vpop.f32.mrf.mxu0
      %324 = vdwg.mxu0
      %v325 = vpack.c.bf16 %v322, %v322
      %327 = vrot.lane.b32.xlu0 %v325, 32
      %v328 = vpop.permute.xlu0 %327
      %vm330 = vcmask 388352
      %331 = vst.msk [vmem:[%s114] sm:$0xf] %vm330, %v328
      %v332 = vld [vmem:[%s110] sm:$0xf]
      %v333 = vld [vmem:[%s110 + $0x4] sm:$0xf]
      %v334 = vunpack.c.l.bf16 %v332
      %v335 = vmul.f32 %v334, 0.25
      %v336 = vpack.c.bf16 %v335, %v335
      %338 = vrot.lane.b32.xlu0 %v336, 80
      %v339 = vpop.permute.xlu0 %338
      %v341 = vunpack.c.l.b16 %v332
      %v342 = vpack.c.b16 %v341, %v341
      %343 = vrot.lane.b32.xlu0 %v342, 16
      %v344 = vpop.permute.xlu0 %343
      %v346 = vsel %vm126, %v339, 0
      %v349 = vsel %vm126, %v344, 0
      %351 = vmatpush.bf16.xpose.msra.mxu0 0
      %352 = vmatpush.bf16.xpose.msra.mxu0 0
      %353 = vmatpush.bf16.xpose.msra.mxu0 0
      %354 = vmatpush.bf16.xpose.msra.mxu0 0
      %355 = vmatpush.bf16.xpose.msra.mxu0 0
      %356 = vmatpush.bf16.xpose.msra.mxu0 0
      %357 = vmatpush.bf16.xpose.msra.mxu0 0
      %358 = vmatpush.bf16.xpose.msra.mxu0 %v349
      %359 = vmatmul.bf16.gmra.mxu0 %v346
      %v360 = vpop.f32.mrf.mxu0
      %v361 = vadd.f32 0.0, %v360
      %v362 = vpop.f32.mrf.mxu0
      %363 = vdwg.mxu0
      %v364 = vsel %vm146, %v361, -inf
      %365 = vmax.xlane.f32.xlu0 %v364
      %v366 = vpop.xlane.xlu0 %365
      %v367 = vsub.f32 %v361, %v366
      %v368 = vmul.f32 %v367, 1.442695
      %v369 = vpow.pop %v368
      %v370 = vsel %vm146, %v369, 0.0
      %371 = vadd.xlane.f32.xlu0 %v370
      %v372 = vpop.xlane.xlu0 %371
      %v373 = vrcp.pop %v372
      %v374 = vmul.f32 %v369, %v373
      %v375 = vpack.c.bf16 %v374, %v374
      %v377 = vunpack.c.l.b16 %v333
      %v378 = vpack.c.b16 %v377, %v377
      %379 = vrot.lane.b32.xlu0 %v378, 80
      %v380 = vpop.permute.xlu0 %379
      %v382 = vsel %vm146, %v375, 0
      %v385 = vsel %vm162, %v380, 0
      %387 = vmatpush.bf16.msra.mxu0 0
      %388 = vmatpush.bf16.msra.mxu0 0
      %389 = vmatpush.bf16.msra.mxu0 0
      %390 = vmatpush.bf16.msra.mxu0 0
      %391 = vmatpush.bf16.msra.mxu0 0
      %392 = vmatpush.bf16.msra.mxu0 0
      %393 = vmatpush.bf16.msra.mxu0 0
      %394 = vmatpush.bf16.msra.mxu0 %v385
      %395 = vmatmul.bf16.gmra.mxu0 %v382
      %v396 = vpop.f32.mrf.mxu0
      %v397 = vadd.f32 0.0, %v396
      %v398 = vpop.f32.mrf.mxu0
      %399 = vdwg.mxu0
      %v400 = vpack.c.bf16 %v397, %v397
      %402 = vrot.lane.b32.xlu0 %v400, 48
      %v403 = vpop.permute.xlu0 %402
      %vm405 = vcmask 519552
      %406 = vst.msk [vmem:[%s114] sm:$0xf] %vm405, %v403
      %p407 = scmp.lt.s32.totalorder %s12, 1
      %s408 = scalar_select %p407, %s12, 1
      %s409 = smul.addr %s408, 4
      %s410 = scalar_lea.vmem %s1, %s409
      // Predicated region
      $region25: #{_lambda_.42} parent=23 // pred_check
        %p411 = pneg %p56
      $region26: #{_lambda_.42} parent=23 // pred_check_branch
        %413 = sbr.rel (%p411) target = $region28
      $region27: #{_lambda_.42} parent=23 // pred_region
        _
      $region28: #{_lambda_.42} parent=23 // pred_fallthru
        _
    $region24: #{_lambda_.42} parent=5 // pred_fallthru
      _
    %p414 = scmp.le.s32.totalorder 2, %s7
    // Predicated region
    $region29: #{_lambda_.42} parent=5 // pred_check
      %p415 = pneg %p414
    $region30: #{_lambda_.42} parent=5 // pred_check_branch
      %417 = sbr.rel (%p415) target = $region32
    $region31: #{_lambda_.42} parent=5 // pred_region
      %s418 = ssub.s32 %s7, 2
      // Predicated region
      $region33: #{_lambda_.42} parent=31 // pred_check
        %p419 = pneg %p62
      $region34: #{_lambda_.42} parent=31 // pred_check_branch
        %421 = sbr.rel (%p419) target = $region36
      $region35: #{_lambda_.42} parent=31 // pred_region
        %p422 = scmp.lt.s32.totalorder %s13, 1
        %s423 = scalar_select %p422, %s13, 1
        %s424 = smul.addr %s423, 4
        %s425 = scalar_lea.vmem %s1, %s424
      $region36: #{_lambda_.42} parent=31 // pred_fallthru
        _
    $region32: #{_lambda_.42} parent=5 // pred_fallthru
      _
  $region6: #{_lambda_.42} parent=0 // loop_footer
    %s11 = sadd.s32 1, %s7
  $region7: #{_lambda_.42} parent=0 // loop_footer_branch
    %6 = sbr.rel target = $region3
  $region8: #{_lambda_.42} parent=0 // loop_exit
    _

// kernel: _lambda_.44
$region0: #{_lambda_.44}
  #allocation0 [shape = 'u32[]', space=smem, size = 0x4, offset = 0x4, fixed_abs, tag = 'smem constant byte address 0x4 - core index']
  #allocation1 [shape = 'u32[72,128]{1,0:T(1,128)}', space=vmem, size = 0x9000, scoped, tag = 'internal scratch']
  %s0 = inlined_call_operand.vmem [shape: bf16[16,64], index: 0, kind: input, shape index: {}]
  %s1 = inlined_call_operand.vmem [shape: f32[1,64], index: 1, kind: input, shape index: {}]
  %s2 = inlined_call_operand.vmem [shape: f32[1,64], index: 2, kind: input, shape index: {}]
  %s3 = inlined_call_operand.vmem [shape: bf16[64,256], index: 3, kind: input, shape index: {}]
  %s4 = inlined_call_operand.vmem [shape: f32[1,256], index: 4, kind: input, shape index: {}]
  %s5 = inlined_call_operand.vmem [shape: bf16[16,256], index: 5, kind: output, shape index: {}]
  %s6 = sld [smem:[#allocation0]]
  $region30: #{_lambda_.44} parent=0
    _
  %s8 = ssub.s32 1, %s6
  %s9 = scalar_select 0, %s8, %s6
  // Predicated region
  $region2: #{_lambda_.44} parent=0 // pred_check
    _
  $region3: #{_lambda_.44} parent=0 // pred_check_branch
    %11 = sbr.rel (0) target = $region5
  $region4: #{_lambda_.44} parent=0 // pred_region
    _
  $region5: #{_lambda_.44} parent=0 // pred_fallthru
    _
  // Predicated region
  $region6: #{_lambda_.44} parent=0 // pred_check
    _
  $region7: #{_lambda_.44} parent=0 // pred_check_branch
    %13 = sbr.rel (0) target = $region9
  $region8: #{_lambda_.44} parent=0 // pred_region
    _
  $region9: #{_lambda_.44} parent=0 // pred_fallthru
    _
  // Predicated region
  $region10: #{_lambda_.44} parent=0 // pred_check
    _
  $region11: #{_lambda_.44} parent=0 // pred_check_branch
    %15 = sbr.rel (0) target = $region13
  $region12: #{_lambda_.44} parent=0 // pred_region
    _
  $region13: #{_lambda_.44} parent=0 // pred_fallthru
    _
  // Predicated region
  $region14: #{_lambda_.44} parent=0 // pred_check
    _
  $region15: #{_lambda_.44} parent=0 // pred_check_branch
    %17 = sbr.rel (0) target = $region17
  $region16: #{_lambda_.44} parent=0 // pred_region
    _
  $region17: #{_lambda_.44} parent=0 // pred_fallthru
    _
  // Predicated region
  $region18: #{_lambda_.44} parent=0 // pred_check
    _
  $region19: #{_lambda_.44} parent=0 // pred_check_branch
    %19 = sbr.rel (0) target = $region21
  $region20: #{_lambda_.44} parent=0 // pred_region
    _
  $region21: #{_lambda_.44} parent=0 // pred_fallthru
    _
  %v21 = vld [vmem:[%s0] sm:$0xf]
  %v22 = vld [vmem:[%s0 + $0x4] sm:$0xf]
  %v23 = vunpack.c.l.bf16 %v21
  %v24 = vunpack.c.l.bf16 %v22
  %vm25 = vcmask 523264
  %v26 = vsel %vm25, %v23, 0.0
  %27 = vadd.xlane.f32.xlu0 %v26
  %v28 = vpop.xlane.xlu0 %27
  %v29 = vsel %vm25, %v24, 0.0
  %30 = vadd.xlane.f32.xlu0 %v29
  %v31 = vpop.xlane.xlu0 %30
  %v32 = vrcp.pop 64.0
  %v33 = vmul.f32 64.0, %v32
  %v34 = vsub.f32 1.0, %v33
  %v35 = vmul.f32 %v32, %v34
  %v36 = vadd.f32 %v32, %v35
  %vm37 = vweird.f32 %v32
  %v38 = vsel %vm37, %v32, %v36
  %v39 = vmul.f32 %v28, %v38
  %v40 = vmul.f32 %v31, %v38
  %v41 = vsub.f32 %v23, %v39
  %v42 = vsub.f32 %v24, %v40
  %v43 = vmul.f32 %v41, %v41
  %v44 = vmul.f32 %v42, %v42
  %v45 = vsel %vm25, %v43, 0.0
  %46 = vadd.xlane.f32.xlu0 %v45
  %v47 = vpop.xlane.xlu0 %46
  %v48 = vsel %vm25, %v44, 0.0
  %49 = vadd.xlane.f32.xlu0 %v48
  %v50 = vpop.xlane.xlu0 %49
  %v51 = vmul.f32 %v47, %v38
  %v52 = vmul.f32 %v50, %v38
  %v53 = vadd.f32 %v51, 1e-06
  %v54 = vadd.f32 %v52, 1e-06
  %v55 = vrsqrt.pop %v53
  %v56 = vmul.f32 %v55, %v53
  %v57 = vmul.f32 %v56, %v55
  %v58 = vmul.f32 0.5, %v57
  %v59 = vsub.f32 1.5, %v58
  %v60 = vmul.f32 %v55, %v59
  %vm61 = vweird.f32 %v53
  %vm62 = vweird.f32 %v55
  %vm63 = vmor %vm61, %vm62
  %v64 = vsel %vm63, %v55, %v60
  %v65 = vrsqrt.pop %v54
  %v66 = vmul.f32 %v65, %v54
  %v67 = vmul.f32 %v66, %v65
  %v68 = vmul.f32 0.5, %v67
  %v69 = vsub.f32 1.5, %v68
  %v70 = vmul.f32 %v65, %v69
  %vm71 = vweird.f32 %v54
  %vm72 = vweird.f32 %v65
  %vm73 = vmor %vm71, %vm72
  %v74 = vsel %vm73, %v65, %v70
  %v75 = vmul.f32 %v41, %v64
  %v76 = vmul.f32 %v42, %v74
  %v77 = vld [vmem:[%s1] sm:$0x1]
  %v79 = vperm.slane %v77, 0
  %v81 = vmul.f32 %v75, %v79
  %v82 = vmul.f32 %v76, %v79
  %v83 = vld [vmem:[%s2] sm:$0x1]
  %v85 = vperm.slane %v83, 0
  %v87 = vadd.f32 %v81, %v85
  %v88 = vadd.f32 %v82, %v85
  %v89 = vpack.c.bf16 %v88, %v87
  %v90 = vld [vmem:[%s3] sm:$0xff]
  %v91 = vld [vmem:[%s3 + $0x8] sm:$0xff]
  %v92 = vld [vmem:[%s3 + $0x10] sm:$0xff]
  %v93 = vld [vmem:[%s3 + $0x18] sm:$0xff]
  %v94 = vld [vmem:[%s3 + $0x20] sm:$0xff]
  %v95 = vld [vmem:[%s3 + $0x28] sm:$0xff]
  %v96 = vld [vmem:[%s3 + $0x30] sm:$0xff]
  %v97 = vld [vmem:[%s3 + $0x38] sm:$0xff]
  %v98 = vld [vmem:[%s4] sm:$0x3]
  %v100 = vperm.slane %v98, 0
  %v101 = vperm.slane %v98, 1
  %v112 = vunpack.c.l.b16 %v90
  %v113 = vunpack.c.h.b16 %v90
  %v114 = vunpack.c.l.b16 %v91
  %v115 = vunpack.c.h.b16 %v91
  %v116 = vunpack.c.l.b16 %v92
  %v117 = vunpack.c.h.b16 %v92
  %v118 = vunpack.c.l.b16 %v93
  %v119 = vunpack.c.h.b16 %v93
  %v120 = vunpack.c.l.b16 %v94
  %v121 = vunpack.c.h.b16 %v94
  %v122 = vunpack.c.l.b16 %v95
  %v123 = vunpack.c.h.b16 %v95
  %v124 = vunpack.c.l.b16 %v96
  %v125 = vunpack.c.h.b16 %v96
  %v126 = vunpack.c.l.b16 %v97
  %v127 = vunpack.c.h.b16 %v97
  %v128 = vpack.c.b16 %v114, %v112
  %v129 = vpack.c.b16 %v115, %v113
  %v130 = vpack.c.b16 %v118, %v116
  %v131 = vpack.c.b16 %v119, %v117
  %v132 = vpack.c.b16 %v122, %v120
  %v133 = vpack.c.b16 %v123, %v121
  %v134 = vpack.c.b16 %v126, %v124
  %v135 = vpack.c.b16 %v127, %v125
  %v145 = vsel %vm25, %v89, 0
  %147 = vmatpush.bf16.msra.mxu0 0
  %148 = vmatpush.bf16.msra.mxu0 0
  %149 = vmatpush.bf16.msra.mxu0 0
  %150 = vmatpush.bf16.msra.mxu0 0
  %151 = vmatpush.bf16.msra.mxu0 %v134
  %152 = vmatpush.bf16.msra.mxu0 %v132
  %153 = vmatpush.bf16.msra.mxu0 %v130
  %154 = vmatpush.bf16.msra.mxu0 %v128
  %155 = vmatmul.bf16.gmra.mxu0 %v145
  %v156 = vpop.f32.mrf.mxu0
  %v157 = vadd.f32 %v100, %v156
  %v158 = vpop.f32.mrf.mxu0
  %v159 = vadd.f32 %v100, %v158
  %160 = vdwg.mxu0
  %161 = vmatpush.bf16.msra.mxu0 0
  %162 = vmatpush.bf16.msra.mxu0 0
  %163 = vmatpush.bf16.msra.mxu0 0
  %164 = vmatpush.bf16.msra.mxu0 0
  %165 = vmatpush.bf16.msra.mxu0 %v135
  %166 = vmatpush.bf16.msra.mxu0 %v133
  %167 = vmatpush.bf16.msra.mxu0 %v131
  %168 = vmatpush.bf16.msra.mxu0 %v129
  %169 = vmatmul.bf16.gmra.mxu0 %v145
  %v170 = vpop.f32.mrf.mxu0
  %v171 = vadd.f32 %v101, %v170
  %v172 = vpop.f32.mrf.mxu0
  %v173 = vadd.f32 %v101, %v172
  %174 = vdwg.mxu0
  %v175 = vmul.f32 %v157, %v157
  %v176 = vmul.f32 %v171, %v171
  %v177 = vmul.f32 %v159, %v159
  %v178 = vmul.f32 %v173, %v173
  %v179 = vmul.f32 %v157, %v175
  %v180 = vmul.f32 %v171, %v176
  %v181 = vmul.f32 %v159, %v177
  %v182 = vmul.f32 %v173, %v178
  %v183 = vmul.f32 %v179, 0.044715
  %v184 = vmul.f32 %v180, 0.044715
  %v185 = vmul.f32 %v181, 0.044715
  %v186 = vmul.f32 %v182, 0.044715
  %v187 = vadd.f32 %v157, %v183
  %v188 = vadd.f32 %v171, %v184
  %v189 = vadd.f32 %v159, %v185
  %v190 = vadd.f32 %v173, %v186
  %v191 = vmul.f32 %v187, 0.7978846
  %v192 = vmul.f32 %v188, 0.7978846
  %v193 = vmul.f32 %v189, 0.7978846
  %v194 = vmul.f32 %v190, 0.7978846
  %v195 = vtanh.pop %v191
  %v196 = vtanh.pop %v192
  %v197 = vtanh.pop %v193
  %v198 = vtanh.pop %v194
  %v199 = vadd.f32 %v195, 1.0
  %v200 = vadd.f32 %v196, 1.0
  %v201 = vadd.f32 %v197, 1.0
  %v202 = vadd.f32 %v198, 1.0
  %v203 = vmul.f32 %v199, 0.5
  %v204 = vmul.f32 %v200, 0.5
  %v205 = vmul.f32 %v201, 0.5
  %v206 = vmul.f32 %v202, 0.5
  %v207 = vmul.f32 %v157, %v203
  %v208 = vmul.f32 %v171, %v204
  %v209 = vmul.f32 %v159, %v205
  %v210 = vmul.f32 %v173, %v206
  %v211 = vpack.c.bf16 %v208, %v207
  %v212 = vpack.c.bf16 %v210, %v209
  %213 = vst [vmem:[%s5] sm:$0xff] %v211
  %214 = vst [vmem:[%s5 + $0x8] sm:$0xff] %v212
  // Predicated region
  $region22: #{_lambda_.44} parent=0 // pred_check
    _
  $region23: #{_lambda_.44} parent=0 // pred_check_branch
    %216 = sbr.rel (0) target = $region25
  $region24: #{_lambda_.44} parent=0 // pred_region
    _
  $region25: #{_lambda_.44} parent=0 // pred_fallthru
    _
  // Predicated region
  $region26: #{_lambda_.44} parent=0 // pred_check
    _
  $region27: #{_lambda_.44} parent=0 // pred_check_branch
    %218 = sbr.rel (0) target = $region29
  $region28: #{_lambda_.44} parent=0 // pred_region
    _
  $region29: #{_lambda_.44} parent=0 // pred_fallthru
    _

// kernel: _lambda_.45
$region0: #{_lambda_.45}
  #allocation0 [shape = 'u32[]', space=smem, size = 0x4, offset = 0x4, fixed_abs, tag = 'smem constant byte address 0x4 - core index']
  #allocation1 [shape = 'u32[72,128]{1,0:T(1,128)}', space=vmem, size = 0x9000, scoped, tag = 'internal scratch']
  #allocation2 [shape = 'f32[16,64]{1,0:T(8,128)}', space=vmem, size = 0x2000, scoped, tag = 'scratch operand']
  %s0 = inlined_call_operand.vmem [shape: bf16[16,256], index: 0, kind: input, shape index: {}]
  %s1 = inlined_call_operand.vmem [shape: bf16[256,64], index: 1, kind: input, shape index: {}]
  %s2 = inlined_call_operand.vmem [shape: f32[1,64], index: 2, kind: input, shape index: {}]
  %s3 = inlined_call_operand.vmem [shape: bf16[16,64], index: 3, kind: input, shape index: {}]
  %s4 = inlined_call_operand.vmem [shape: bf16[16,64], index: 4, kind: output, shape index: {}]
  %s5 = sld [smem:[#allocation0]]
  $region34: #{_lambda_.45} parent=0
    _
  %s7 = ssub.s32 1, %s5
  %s8 = scalar_select 0, %s7, %s5
  // Predicated region
  $region2: #{_lambda_.45} parent=0 // pred_check
    _
  $region3: #{_lambda_.45} parent=0 // pred_check_branch
    %10 = sbr.rel (0) target = $region5
  $region4: #{_lambda_.45} parent=0 // pred_region
    _
  $region5: #{_lambda_.45} parent=0 // pred_fallthru
    _
  // Predicated region
  $region6: #{_lambda_.45} parent=0 // pred_check
    _
  $region7: #{_lambda_.45} parent=0 // pred_check_branch
    %12 = sbr.rel (0) target = $region9
  $region8: #{_lambda_.45} parent=0 // pred_region
    _
  $region9: #{_lambda_.45} parent=0 // pred_fallthru
    _
  // Predicated region
  $region10: #{_lambda_.45} parent=0 // pred_check
    _
  $region11: #{_lambda_.45} parent=0 // pred_check_branch
    %14 = sbr.rel (0) target = $region13
  $region12: #{_lambda_.45} parent=0 // pred_region
    _
  $region13: #{_lambda_.45} parent=0 // pred_fallthru
    _
  // Predicated region
  $region14: #{_lambda_.45} parent=0 // pred_check
    _
  $region15: #{_lambda_.45} parent=0 // pred_check_branch
    %16 = sbr.rel (0) target = $region17
  $region16: #{_lambda_.45} parent=0 // pred_region
    _
  $region17: #{_lambda_.45} parent=0 // pred_fallthru
    _
  %p17 = scmp.eq.s32.totalorder 0, 0
  // Predicated region
  $region18: #{_lambda_.45} parent=0 // pred_check
    %p18 = pneg %p17
  $region19: #{_lambda_.45} parent=0 // pred_check_branch
    %20 = sbr.rel (%p18) target = $region21
  $region20: #{_lambda_.45} parent=0 // pred_region
    %vm21 = vcmask 523264
    %22 = vst.msk [vmem:[#allocation2] sm:$0xff] %vm21, 0.0
    %23 = vst.msk [vmem:[#allocation2 + $0x8] sm:$0xff] %vm21, 0.0
  $region21: #{_lambda_.45} parent=0 // pred_fallthru
    _
  %v24 = vld [vmem:[#allocation2] sm:$0xff]
  %v25 = vld [vmem:[#allocation2 + $0x8] sm:$0xff]
  %v26 = vld [vmem:[%s0] sm:$0xff]
  %v27 = vld [vmem:[%s0 + $0x8] sm:$0xff]
  %v28 = vld [vmem:[%s1] sm:$0xf]
  %v29 = vld [vmem:[%s1 + $0x4] sm:$0xf]
  %v30 = vld [vmem:[%s1 + $0x8] sm:$0xf]
  %v31 = vld [vmem:[%s1 + $0xc] sm:$0xf]
  %v32 = vld [vmem:[%s1 + $0x10] sm:$0xf]
  %v33 = vld [vmem:[%s1 + $0x14] sm:$0xf]
  %v34 = vld [vmem:[%s1 + $0x18] sm:$0xf]
  %v35 = vld [vmem:[%s1 + $0x1c] sm:$0xf]
  %v36 = vld [vmem:[%s1 + $0x20] sm:$0xf]
  %v37 = vld [vmem:[%s1 + $0x24] sm:$0xf]
  %v38 = vld [vmem:[%s1 + $0x28] sm:$0xf]
  %v39 = vld [vmem:[%s1 + $0x2c] sm:$0xf]
  %v40 = vld [vmem:[%s1 + $0x30] sm:$0xf]
  %v41 = vld [vmem:[%s1 + $0x34] sm:$0xf]
  %v42 = vld [vmem:[%s1 + $0x38] sm:$0xf]
  %v43 = vld [vmem:[%s1 + $0x3c] sm:$0xf]
  %v44 = vld [vmem:[%s1 + $0x40] sm:$0xf]
  %v45 = vld [vmem:[%s1 + $0x44] sm:$0xf]
  %v46 = vld [vmem:[%s1 + $0x48] sm:$0xf]
  %v47 = vld [vmem:[%s1 + $0x4c] sm:$0xf]
  %v48 = vld [vmem:[%s1 + $0x50] sm:$0xf]
  %v49 = vld [vmem:[%s1 + $0x54] sm:$0xf]
  %v50 = vld [vmem:[%s1 + $0x58] sm:$0xf]
  %v51 = vld [vmem:[%s1 + $0x5c] sm:$0xf]
  %v52 = vld [vmem:[%s1 + $0x60] sm:$0xf]
  %v53 = vld [vmem:[%s1 + $0x64] sm:$0xf]
  %v54 = vld [vmem:[%s1 + $0x68] sm:$0xf]
  %v55 = vld [vmem:[%s1 + $0x6c] sm:$0xf]
  %v56 = vld [vmem:[%s1 + $0x70] sm:$0xf]
  %v57 = vld [vmem:[%s1 + $0x74] sm:$0xf]
  %v58 = vld [vmem:[%s1 + $0x78] sm:$0xf]
  %v59 = vld [vmem:[%s1 + $0x7c] sm:$0xf]
  %v62 = vunpack.c.l.b16 %v26
  %v63 = vunpack.c.h.b16 %v26
  %v64 = vunpack.c.l.b16 %v27
  %v65 = vunpack.c.h.b16 %v27
  %v66 = vpack.c.b16 %v64, %v62
  %v67 = vpack.c.b16 %v65, %v63
  %v102 = vunpack.c.l.b16 %v28
  %v103 = vunpack.c.l.b16 %v29
  %v104 = vunpack.c.l.b16 %v30
  %v105 = vunpack.c.l.b16 %v31
  %v106 = vunpack.c.l.b16 %v32
  %v107 = vunpack.c.l.b16 %v33
  %v108 = vunpack.c.l.b16 %v34
  %v109 = vunpack.c.l.b16 %v35
  %v110 = vunpack.c.l.b16 %v36
  %v111 = vunpack.c.l.b16 %v37
  %v112 = vunpack.c.l.b16 %v38
  %v113 = vunpack.c.l.b16 %v39
  %v114 = vunpack.c.l.b16 %v40
  %v115 = vunpack.c.l.b16 %v41
  %v116 = vunpack.c.l.b16 %v42
  %v117 = vunpack.c.l.b16 %v43
  %v118 = vunpack.c.l.b16 %v44
  %v119 = vunpack.c.l.b16 %v45
  %v120 = vunpack.c.l.b16 %v46
  %v121 = vunpack.c.l.b16 %v47
  %v122 = vunpack.c.l.b16 %v48
  %v123 = vunpack.c.l.b16 %v49
  %v124 = vunpack.c.l.b16 %v50
  %v125 = vunpack.c.l.b16 %v51
  %v126 = vunpack.c.l.b16 %v52
  %v127 = vunpack.c.l.b16 %v53
  %v128 = vunpack.c.l.b16 %v54
  %v129 = vunpack.c.l.b16 %v55
  %v130 = vunpack.c.l.b16 %v56
  %v131 = vunpack.c.l.b16 %v57
  %v132 = vunpack.c.l.b16 %v58
  %v133 = vunpack.c.l.b16 %v59
  %v134 = vpack.c.b16 %v103, %v102
  %v135 = vpack.c.b16 %v105, %v104
  %v136 = vpack.c.b16 %v107, %v106
  %v137 = vpack.c.b16 %v109, %v108
  %v138 = vpack.c.b16 %v111, %v110
  %v139 = vpack.c.b16 %v113, %v112
  %v140 = vpack.c.b16 %v115, %v114
  %v141 = vpack.c.b16 %v117, %v116
  %v142 = vpack.c.b16 %v119, %v118
  %v143 = vpack.c.b16 %v121, %v120
  %v144 = vpack.c.b16 %v123, %v122
  %v145 = vpack.c.b16 %v125, %v124
  %v146 = vpack.c.b16 %v127, %v126
  %v147 = vpack.c.b16 %v129, %v128
  %v148 = vpack.c.b16 %v131, %v130
  %v149 = vpack.c.b16 %v133, %v132
  %166 = vmatpush.bf16.msra.mxu0 %v141
  %167 = vmatpush.bf16.msra.mxu0 %v140
  %168 = vmatpush.bf16.msra.mxu0 %v139
  %169 = vmatpush.bf16.msra.mxu0 %v138
  %170 = vmatpush.bf16.msra.mxu0 %v137
  %171 = vmatpush.bf16.msra.mxu0 %v136
  %172 = vmatpush.bf16.msra.mxu0 %v135
  %173 = vmatpush.bf16.msra.mxu0 %v134
  %174 = vmatmul.bf16.gmra.mxu0 %v66
  %v175 = vpop.f32.mrf.mxu0
  %v176 = vadd.f32 0.0, %v175
  %v177 = vpop.f32.mrf.mxu0
  %v178 = vadd.f32 0.0, %v177
  %179 = vdwg.mxu0
  %180 = vmatpush.bf16.msra.mxu0 %v149
  %181 = vmatpush.bf16.msra.mxu0 %v148
  %182 = vmatpush.bf16.msra.mxu0 %v147
  %183 = vmatpush.bf16.msra.mxu0 %v146
  %184 = vmatpush.bf16.msra.mxu0 %v145
  %185 = vmatpush.bf16.msra.mxu0 %v144
  %186 = vmatpush.bf16.msra.mxu0 %v143
  %187 = vmatpush.bf16.msra.mxu0 %v142
  %188 = vmatmul.bf16.gmra.mxu0 %v67
  %v189 = vpop.f32.mrf.mxu0
  %v190 = vadd.f32 %v176, %v189
  %v191 = vpop.f32.mrf.mxu0
  %v192 = vadd.f32 %v178, %v191
  %193 = vdwg.mxu0
  %v194 = vadd.f32 %v24, %v190
  %v195 = vadd.f32 %v25, %v192
  %vm196 = vcmask 523264
  %197 = vst.msk [vmem:[#allocation2] sm:$0xff] %vm196, %v194
  %198 = vst.msk [vmem:[#allocation2 + $0x8] sm:$0xff] %vm196, %v195
  // Predicated region
  $region22: #{_lambda_.45} parent=0 // pred_check
    %p199 = pneg %p17
  $region23: #{_lambda_.45} parent=0 // pred_check_branch
    %201 = sbr.rel (%p199) target = $region25
  $region24: #{_lambda_.45} parent=0 // pred_region
    %v202 = vld [vmem:[#allocation2] sm:$0xff]
    %v203 = vld [vmem:[#allocation2 + $0x8] sm:$0xff]
    %v204 = vld [vmem:[%s2] sm:$0x1]
    %v206 = vperm.slane %v204, 0
    %v208 = vadd.f32 %v202, %v206
    %v209 = vadd.f32 %v203, %v206
    %v210 = vld [vmem:[%s3] sm:$0xf]
    %v211 = vld [vmem:[%s3 + $0x4] sm:$0xf]
    %v212 = vunpack.c.l.bf16 %v210
    %v213 = vunpack.c.l.bf16 %v211
    %v214 = vadd.f32 %v212, %v208
    %v215 = vadd.f32 %v213, %v209
    %v216 = vpack.c.bf16 %v214, %v214
    %v217 = vpack.c.bf16 %v215, %v215
    %vm218 = vcmask 519168
    %219 = vst.msk [vmem:[%s4] sm:$0xf] %vm218, %v216
    %220 = vst.msk [vmem:[%s4 + $0x4] sm:$0xf] %vm218, %v217
  $region25: #{_lambda_.45} parent=0 // pred_fallthru
    _
  // Predicated region
  $region26: #{_lambda_.45} parent=0 // pred_check
    _
  $region27: #{_lambda_.45} parent=0 // pred_check_branch
    %222 = sbr.rel (0) target = $region29
  $region28: #{_lambda_.45} parent=0 // pred_region
    _
  $region29: #{_lambda_.45} parent=0 // pred_fallthru
    _
  // Predicated region
  $region30: #{_lambda_.45} parent=0 // pred_check
    _
  $region31: #{_lambda_.45} parent=0 // pred_check_branch
    %224 = sbr.rel (0) target = $region33
  $region32: #{_lambda_.45} parent=0 // pred_region
    _
  $region33: #{_lambda_.45} parent=0 // pred_fallthru
    _

// kernel: _lambda_.51
$region0: #{_lambda_.51}
  #allocation0 [shape = 'u32[]', space=smem, size = 0x4, offset = 0x4, fixed_abs, tag = 'smem constant byte address 0x4 - core index']
  #allocation1 [shape = 'u32[72,128]{1,0:T(1,128)}', space=vmem, size = 0x9000, scoped, tag = 'internal scratch']
  %s0 = inlined_call_operand.vmem [shape: bf16[16,64], index: 0, kind: input, shape index: {}]
  %s1 = inlined_call_operand.vmem [shape: f32[1,64], index: 1, kind: input, shape index: {}]
  %s2 = inlined_call_operand.vmem [shape: f32[1,64], index: 2, kind: input, shape index: {}]
  %s3 = inlined_call_operand.vmem [shape: bf16[64,64], index: 3, kind: input, shape index: {}]
  %s4 = inlined_call_operand.vmem [shape: f32[1,64], index: 4, kind: input, shape index: {}]
  %s5 = inlined_call_operand.vmem [shape: bf16[16,64], index: 5, kind: output, shape index: {}]
  %s6 = sld [smem:[#allocation0]]
  $region30: #{_lambda_.51} parent=0
    _
  %s8 = ssub.s32 1, %s6
  %s9 = scalar_select 0, %s8, %s6
  // Predicated region
  $region2: #{_lambda_.51} parent=0 // pred_check
    _
  $region3: #{_lambda_.51} parent=0 // pred_check_branch
    %11 = sbr.rel (0) target = $region5
  $region4: #{_lambda_.51} parent=0 // pred_region
    _
  $region5: #{_lambda_.51} parent=0 // pred_fallthru
    _
  // Predicated region
  $region6: #{_lambda_.51} parent=0 // pred_check
    _
  $region7: #{_lambda_.51} parent=0 // pred_check_branch
    %13 = sbr.rel (0) target = $region9
  $region8: #{_lambda_.51} parent=0 // pred_region
    _
  $region9: #{_lambda_.51} parent=0 // pred_fallthru
    _
  // Predicated region
  $region10: #{_lambda_.51} parent=0 // pred_check
    _
  $region11: #{_lambda_.51} parent=0 // pred_check_branch
    %15 = sbr.rel (0) target = $region13
  $region12: #{_lambda_.51} parent=0 // pred_region
    _
  $region13: #{_lambda_.51} parent=0 // pred_fallthru
    _
  // Predicated region
  $region14: #{_lambda_.51} parent=0 // pred_check
    _
  $region15: #{_lambda_.51} parent=0 // pred_check_branch
    %17 = sbr.rel (0) target = $region17
  $region16: #{_lambda_.51} parent=0 // pred_region
    _
  $region17: #{_lambda_.51} parent=0 // pred_fallthru
    _
  // Predicated region
  $region18: #{_lambda_.51} parent=0 // pred_check
    _
  $region19: #{_lambda_.51} parent=0 // pred_check_branch
    %19 = sbr.rel (0) target = $region21
  $region20: #{_lambda_.51} parent=0 // pred_region
    _
  $region21: #{_lambda_.51} parent=0 // pred_fallthru
    _
  %v21 = vld [vmem:[%s0] sm:$0xf]
  %v22 = vld [vmem:[%s0 + $0x4] sm:$0xf]
  %v23 = vunpack.c.l.bf16 %v21
  %v24 = vunpack.c.l.bf16 %v22
  %vm25 = vcmask 523264
  %v26 = vsel %vm25, %v23, 0.0
  %27 = vadd.xlane.f32.xlu0 %v26
  %v28 = vpop.xlane.xlu0 %27
  %v29 = vsel %vm25, %v24, 0.0
  %30 = vadd.xlane.f32.xlu0 %v29
  %v31 = vpop.xlane.xlu0 %30
  %v32 = vrcp.pop 64.0
  %v33 = vmul.f32 64.0, %v32
  %v34 = vsub.f32 1.0, %v33
  %v35 = vmul.f32 %v32, %v34
  %v36 = vadd.f32 %v32, %v35
  %vm37 = vweird.f32 %v32
  %v38 = vsel %vm37, %v32, %v36
  %v39 = vmul.f32 %v28, %v38
  %v40 = vmul.f32 %v31, %v38
  %v41 = vsub.f32 %v23, %v39
  %v42 = vsub.f32 %v24, %v40
  %v43 = vmul.f32 %v41, %v41
  %v44 = vmul.f32 %v42, %v42
  %v45 = vsel %vm25, %v43, 0.0
  %46 = vadd.xlane.f32.xlu0 %v45
  %v47 = vpop.xlane.xlu0 %46
  %v48 = vsel %vm25, %v44, 0.0
  %49 = vadd.xlane.f32.xlu0 %v48
  %v50 = vpop.xlane.xlu0 %49
  %v51 = vmul.f32 %v47, %v38
  %v52 = vmul.f32 %v50, %v38
  %v53 = vadd.f32 %v51, 1e-06
  %v54 = vadd.f32 %v52, 1e-06
  %v55 = vrsqrt.pop %v53
  %v56 = vmul.f32 %v55, %v53
  %v57 = vmul.f32 %v56, %v55
  %v58 = vmul.f32 0.5, %v57
  %v59 = vsub.f32 1.5, %v58
  %v60 = vmul.f32 %v55, %v59
  %vm61 = vweird.f32 %v53
  %vm62 = vweird.f32 %v55
  %vm63 = vmor %vm61, %vm62
  %v64 = vsel %vm63, %v55, %v60
  %v65 = vrsqrt.pop %v54
  %v66 = vmul.f32 %v65, %v54
  %v67 = vmul.f32 %v66, %v65
  %v68 = vmul.f32 0.5, %v67
  %v69 = vsub.f32 1.5, %v68
  %v70 = vmul.f32 %v65, %v69
  %vm71 = vweird.f32 %v54
  %vm72 = vweird.f32 %v65
  %vm73 = vmor %vm71, %vm72
  %v74 = vsel %vm73, %v65, %v70
  %v75 = vmul.f32 %v41, %v64
  %v76 = vmul.f32 %v42, %v74
  %v77 = vld [vmem:[%s1] sm:$0x1]
  %v79 = vperm.slane %v77, 0
  %v81 = vmul.f32 %v75, %v79
  %v82 = vmul.f32 %v76, %v79
  %v83 = vld [vmem:[%s2] sm:$0x1]
  %v85 = vperm.slane %v83, 0
  %v87 = vadd.f32 %v81, %v85
  %v88 = vadd.f32 %v82, %v85
  %v89 = vpack.c.bf16 %v88, %v87
  %v90 = vld [vmem:[%s3] sm:$0xf]
  %v91 = vld [vmem:[%s3 + $0x4] sm:$0xf]
  %v92 = vld [vmem:[%s3 + $0x8] sm:$0xf]
  %v93 = vld [vmem:[%s3 + $0xc] sm:$0xf]
  %v94 = vld [vmem:[%s3 + $0x10] sm:$0xf]
  %v95 = vld [vmem:[%s3 + $0x14] sm:$0xf]
  %v96 = vld [vmem:[%s3 + $0x18] sm:$0xf]
  %v97 = vld [vmem:[%s3 + $0x1c] sm:$0xf]
  %v98 = vld [vmem:[%s4] sm:$0x1]
  %v100 = vperm.slane %v98, 0
  %v110 = vunpack.c.l.b16 %v90
  %v111 = vunpack.c.l.b16 %v91
  %v112 = vunpack.c.l.b16 %v92
  %v113 = vunpack.c.l.b16 %v93
  %v114 = vunpack.c.l.b16 %v94
  %v115 = vunpack.c.l.b16 %v95
  %v116 = vunpack.c.l.b16 %v96
  %v117 = vunpack.c.l.b16 %v97
  %v118 = vpack.c.b16 %v111, %v110
  %v119 = vpack.c.b16 %v113, %v112
  %v120 = vpack.c.b16 %v115, %v114
  %v121 = vpack.c.b16 %v117, %v116
  %v127 = vsel %vm25, %v89, 0
  %129 = vmatpush.bf16.msra.mxu0 0
  %130 = vmatpush.bf16.msra.mxu0 0
  %131 = vmatpush.bf16.msra.mxu0 0
  %132 = vmatpush.bf16.msra.mxu0 0
  %133 = vmatpush.bf16.msra.mxu0 %v121
  %134 = vmatpush.bf16.msra.mxu0 %v120
  %135 = vmatpush.bf16.msra.mxu0 %v119
  %136 = vmatpush.bf16.msra.mxu0 %v118
  %137 = vmatmul.bf16.gmra.mxu0 %v127
  %v138 = vpop.f32.mrf.mxu0
  %v139 = vadd.f32 %v100, %v138
  %v140 = vpop.f32.mrf.mxu0
  %v141 = vadd.f32 %v100, %v140
  %142 = vdwg.mxu0
  %v143 = vpack.c.bf16 %v139, %v139
  %v144 = vpack.c.bf16 %v141, %v141
  %vm145 = vcmask 519168
  %146 = vst.msk [vmem:[%s5] sm:$0xf] %vm145, %v143
  %147 = vst.msk [vmem:[%s5 + $0x4] sm:$0xf] %vm145, %v144
  // Predicated region
  $region22: #{_lambda_.51} parent=0 // pred_check
    _
  $region23: #{_lambda_.51} parent=0 // pred_check_branch
    %149 = sbr.rel (0) target = $region25
  $region24: #{_lambda_.51} parent=0 // pred_region
    _
  $region25: #{_lambda_.51} parent=0 // pred_fallthru
    _
  // Predicated region
  $region26: #{_lambda_.51} parent=0 // pred_check
    _
  $region27: #{_lambda_.51} parent=0 // pred_check_branch
    %151 = sbr.rel (0) target = $region29
  $region28: #{_lambda_.51} parent=0 // pred_region
    _
  $region29: #{_lambda_.51} parent=0 // pred_fallthru
    _

// kernel: _lambda_.52
$region0: #{_lambda_.52}
  #allocation0 [shape = 'u32[]', space=smem, size = 0x4, offset = 0x4, fixed_abs, tag = 'smem constant byte address 0x4 - core index']
  #allocation1 [shape = 'u32[72,128]{1,0:T(1,128)}', space=vmem, size = 0x9000, scoped, tag = 'internal scratch']
  %s0 = inlined_call_operand.vmem [shape: bf16[40,64], index: 0, kind: input, shape index: {}]
  %s1 = inlined_call_operand.vmem [shape: f32[1,64], index: 1, kind: input, shape index: {}]
  %s2 = inlined_call_operand.vmem [shape: f32[1,64], index: 2, kind: input, shape index: {}]
  %s3 = inlined_call_operand.vmem [shape: bf16[64,192], index: 3, kind: input, shape index: {}]
  %s4 = inlined_call_operand.vmem [shape: f32[1,192], index: 4, kind: input, shape index: {}]
  %s5 = inlined_call_operand.vmem [shape: bf16[40,192], index: 5, kind: output, shape index: {}]
  %s6 = sld [smem:[#allocation0]]
  $region30: #{_lambda_.52} parent=0
    _
  %s8 = ssub.s32 1, %s6
  %s9 = scalar_select 0, %s8, %s6
  // Predicated region
  $region2: #{_lambda_.52} parent=0 // pred_check
    _
  $region3: #{_lambda_.52} parent=0 // pred_check_branch
    %11 = sbr.rel (0) target = $region5
  $region4: #{_lambda_.52} parent=0 // pred_region
    _
  $region5: #{_lambda_.52} parent=0 // pred_fallthru
    _
  // Predicated region
  $region6: #{_lambda_.52} parent=0 // pred_check
    _
  $region7: #{_lambda_.52} parent=0 // pred_check_branch
    %13 = sbr.rel (0) target = $region9
  $region8: #{_lambda_.52} parent=0 // pred_region
    _
  $region9: #{_lambda_.52} parent=0 // pred_fallthru
    _
  // Predicated region
  $region10: #{_lambda_.52} parent=0 // pred_check
    _
  $region11: #{_lambda_.52} parent=0 // pred_check_branch
    %15 = sbr.rel (0) target = $region13
  $region12: #{_lambda_.52} parent=0 // pred_region
    _
  $region13: #{_lambda_.52} parent=0 // pred_fallthru
    _
  // Predicated region
  $region14: #{_lambda_.52} parent=0 // pred_check
    _
  $region15: #{_lambda_.52} parent=0 // pred_check_branch
    %17 = sbr.rel (0) target = $region17
  $region16: #{_lambda_.52} parent=0 // pred_region
    _
  $region17: #{_lambda_.52} parent=0 // pred_fallthru
    _
  // Predicated region
  $region18: #{_lambda_.52} parent=0 // pred_check
    _
  $region19: #{_lambda_.52} parent=0 // pred_check_branch
    %19 = sbr.rel (0) target = $region21
  $region20: #{_lambda_.52} parent=0 // pred_region
    _
  $region21: #{_lambda_.52} parent=0 // pred_fallthru
    _
  %v21 = vld [vmem:[%s0] sm:$0xf]
  %v22 = vld [vmem:[%s0 + $0x4] sm:$0xf]
  %v23 = vld [vmem:[%s0 + $0x8] sm:$0xf]
  %v24 = vld [vmem:[%s0 + $0xc] sm:$0xf]
  %v25 = vld [vmem:[%s0 + $0x10] sm:$0xf]
  %v26 = vunpack.c.l.bf16 %v21
  %v27 = vunpack.c.l.bf16 %v22
  %v28 = vunpack.c.l.bf16 %v23
  %v29 = vunpack.c.l.bf16 %v24
  %v30 = vunpack.c.l.bf16 %v25
  %vm31 = vcmask 523264
  %v32 = vsel %vm31, %v26, 0.0
  %33 = vadd.xlane.f32.xlu0 %v32
  %v34 = vpop.xlane.xlu0 %33
  %v35 = vsel %vm31, %v27, 0.0
  %36 = vadd.xlane.f32.xlu0 %v35
  %v37 = vpop.xlane.xlu0 %36
  %v38 = vsel %vm31, %v28, 0.0
  %39 = vadd.xlane.f32.xlu0 %v38
  %v40 = vpop.xlane.xlu0 %39
  %v41 = vsel %vm31, %v29, 0.0
  %42 = vadd.xlane.f32.xlu0 %v41
  %v43 = vpop.xlane.xlu0 %42
  %v44 = vsel %vm31, %v30, 0.0
  %45 = vadd.xlane.f32.xlu0 %v44
  %v46 = vpop.xlane.xlu0 %45
  %v47 = vrcp.pop 64.0
  %v48 = vmul.f32 64.0, %v47
  %v49 = vsub.f32 1.0, %v48
  %v50 = vmul.f32 %v47, %v49
  %v51 = vadd.f32 %v47, %v50
  %vm52 = vweird.f32 %v47
  %v53 = vsel %vm52, %v47, %v51
  %v54 = vmul.f32 %v34, %v53
  %v55 = vmul.f32 %v37, %v53
  %v56 = vmul.f32 %v40, %v53
  %v57 = vmul.f32 %v43, %v53
  %v58 = vmul.f32 %v46, %v53
  %v59 = vsub.f32 %v26, %v54
  %v60 = vsub.f32 %v27, %v55
  %v61 = vsub.f32 %v28, %v56
  %v62 = vsub.f32 %v29, %v57
  %v63 = vsub.f32 %v30, %v58
  %v64 = vmul.f32 %v59, %v59
  %v65 = vmul.f32 %v60, %v60
  %v66 = vmul.f32 %v61, %v61
  %v67 = vmul.f32 %v62, %v62
  %v68 = vmul.f32 %v63, %v63
  %v69 = vsel %vm31, %v64, 0.0
  %70 = vadd.xlane.f32.xlu0 %v69
  %v71 = vpop.xlane.xlu0 %70
  %v72 = vsel %vm31, %v65, 0.0
  %73 = vadd.xlane.f32.xlu0 %v72
  %v74 = vpop.xlane.xlu0 %73
  %v75 = vsel %vm31, %v66, 0.0
  %76 = vadd.xlane.f32.xlu0 %v75
  %v77 = vpop.xlane.xlu0 %76
  %v78 = vsel %vm31, %v67, 0.0
  %79 = vadd.xlane.f32.xlu0 %v78
  %v80 = vpop.xlane.xlu0 %79
  %v81 = vsel %vm31, %v68, 0.0
  %82 = vadd.xlane.f32.xlu0 %v81
  %v83 = vpop.xlane.xlu0 %82
  %v84 = vmul.f32 %v71, %v53
  %v85 = vmul.f32 %v74, %v53
  %v86 = vmul.f32 %v77, %v53
  %v87 = vmul.f32 %v80, %v53
  %v88 = vmul.f32 %v83, %v53
  %v89 = vadd.f32 %v84, 1e-06
  %v90 = vadd.f32 %v85, 1e-06
  %v91 = vadd.f32 %v86, 1e-06
  %v92 = vadd.f32 %v87, 1e-06
  %v93 = vadd.f32 %v88, 1e-06
  %v94 = vrsqrt.pop %v89
  %v95 = vmul.f32 %v94, %v89
  %v96 = vmul.f32 %v95, %v94
  %v97 = vmul.f32 0.5, %v96
  %v98 = vsub.f32 1.5, %v97
  %v99 = vmul.f32 %v94, %v98
  %vm100 = vweird.f32 %v89
  %vm101 = vweird.f32 %v94
  %vm102 = vmor %vm100, %vm101
  %v103 = vsel %vm102, %v94, %v99
  %v104 = vrsqrt.pop %v90
  %v105 = vmul.f32 %v104, %v90
  %v106 = vmul.f32 %v105, %v104
  %v107 = vmul.f32 0.5, %v106
  %v108 = vsub.f32 1.5, %v107
  %v109 = vmul.f32 %v104, %v108
  %vm110 = vweird.f32 %v90
  %vm111 = vweird.f32 %v104
  %vm112 = vmor %vm110, %vm111
  %v113 = vsel %vm112, %v104, %v109
  %v114 = vrsqrt.pop %v91
  %v115 = vmul.f32 %v114, %v91
  %v116 = vmul.f32 %v115, %v114
  %v117 = vmul.f32 0.5, %v116
  %v118 = vsub.f32 1.5, %v117
  %v119 = vmul.f32 %v114, %v118
  %vm120 = vweird.f32 %v91
  %vm121 = vweird.f32 %v114
  %vm122 = vmor %vm120, %vm121
  %v123 = vsel %vm122, %v114, %v119
  %v124 = vrsqrt.pop %v92
  %v125 = vmul.f32 %v124, %v92
  %v126 = vmul.f32 %v125, %v124
  %v127 = vmul.f32 0.5, %v126
  %v128 = vsub.f32 1.5, %v127
  %v129 = vmul.f32 %v124, %v128
  %vm130 = vweird.f32 %v92
  %vm131 = vweird.f32 %v124
  %vm132 = vmor %vm130, %vm131
  %v133 = vsel %vm132, %v124, %v129
  %v134 = vrsqrt.pop %v93
  %v135 = vmul.f32 %v134, %v93
  %v136 = vmul.f32 %v135, %v134
  %v137 = vmul.f32 0.5, %v136
  %v138 = vsub.f32 1.5, %v137
  %v139 = vmul.f32 %v134, %v138
  %vm140 = vweird.f32 %v93
  %vm141 = vweird.f32 %v134
  %vm142 = vmor %vm140, %vm141
  %v143 = vsel %vm142, %v134, %v139
  %v144 = vmul.f32 %v59, %v103
  %v145 = vmul.f32 %v60, %v113
  %v146 = vmul.f32 %v61, %v123
  %v147 = vmul.f32 %v62, %v133
  %v148 = vmul.f32 %v63, %v143
  %v149 = vld [vmem:[%s1] sm:$0x1]
  %v151 = vperm.slane %v149, 0
  %v153 = vmul.f32 %v144, %v151
  %v154 = vmul.f32 %v145, %v151
  %v155 = vmul.f32 %v146, %v151
  %v156 = vmul.f32 %v147, %v151
  %v157 = vmul.f32 %v148, %v151
  %v158 = vld [vmem:[%s2] sm:$0x1]
  %v160 = vperm.slane %v158, 0
  %v162 = vadd.f32 %v153, %v160
  %v163 = vadd.f32 %v154, %v160
  %v164 = vadd.f32 %v155, %v160
  %v165 = vadd.f32 %v156, %v160
  %v166 = vadd.f32 %v157, %v160
  %v167 = vpack.c.bf16 %v163, %v162
  %v168 = vpack.c.bf16 %v165, %v164
  %v169 = vpack.c.bf16 %v166, %v166
  %v170 = vld [vmem:[%s3] sm:$0xff]
  %v171 = vld [vmem:[%s3 + $0x8] sm:$0xff]
  %v172 = vld [vmem:[%s3 + $0x10] sm:$0xff]
  %v173 = vld [vmem:[%s3 + $0x18] sm:$0xff]
  %v174 = vld [vmem:[%s3 + $0x20] sm:$0xff]
  %v175 = vld [vmem:[%s3 + $0x28] sm:$0xff]
  %v176 = vld [vmem:[%s3 + $0x30] sm:$0xff]
  %v177 = vld [vmem:[%s3 + $0x38] sm:$0xff]
  %v178 = vld [vmem:[%s4] sm:$0x3]
  %v180 = vperm.slane %v178, 0
  %v181 = vperm.slane %v178, 1
  %v192 = vunpack.c.l.b16 %v170
  %v193 = vunpack.c.h.b16 %v170
  %v194 = vunpack.c.l.b16 %v171
  %v195 = vunpack.c.h.b16 %v171
  %v196 = vunpack.c.l.b16 %v172
  %v197 = vunpack.c.h.b16 %v172
  %v198 = vunpack.c.l.b16 %v173
  %v199 = vunpack.c.h.b16 %v173
  %v200 = vunpack.c.l.b16 %v174
  %v201 = vunpack.c.h.b16 %v174
  %v202 = vunpack.c.l.b16 %v175
  %v203 = vunpack.c.h.b16 %v175
  %v204 = vunpack.c.l.b16 %v176
  %v205 = vunpack.c.h.b16 %v176
  %v206 = vunpack.c.l.b16 %v177
  %v207 = vunpack.c.h.b16 %v177
  %v208 = vpack.c.b16 %v194, %v192
  %v209 = vpack.c.b16 %v195, %v193
  %v210 = vpack.c.b16 %v198, %v196
  %v211 = vpack.c.b16 %v199, %v197
  %v212 = vpack.c.b16 %v202, %v200
  %v213 = vpack.c.b16 %v203, %v201
  %v214 = vpack.c.b16 %v206, %v204
  %v215 = vpack.c.b16 %v207, %v205
  %v225 = vsel %vm31, %v167, 0
  %v228 = vsel %vm31, %v168, 0
  %v231 = vsel %vm31, %v169, 0
  %233 = vmatpush.bf16.msra.mxu0 0
  %234 = vmatpush.bf16.msra.mxu0 0
  %235 = vmatpush.bf16.msra.mxu0 0
  %236 = vmatpush.bf16.msra.mxu0 0
  %237 = vmatpush.bf16.msra.mxu0 %v214
  %238 = vmatpush.bf16.msra.mxu0 %v212
  %239 = vmatpush.bf16.msra.mxu0 %v210
  %240 = vmatpush.bf16.msra.mxu0 %v208
  %241 = vmatmul.bf16.gmra.mxu0 %v225
  %v242 = vpop.f32.mrf.mxu0
  %v243 = vadd.f32 %v180, %v242
  %v244 = vpop.f32.mrf.mxu0
  %v245 = vadd.f32 %v180, %v244
  %246 = vmatmul.bf16.gmra.mxu0 %v228
  %v247 = vpop.f32.mrf.mxu0
  %v248 = vadd.f32 %v180, %v247
  %v249 = vpop.f32.mrf.mxu0
  %v250 = vadd.f32 %v180, %v249
  %251 = vmatmul.bf16.gmra.mxu0 %v231
  %v252 = vpop.f32.mrf.mxu0
  %v253 = vadd.f32 %v180, %v252
  %v254 = vpop.f32.mrf.mxu0
  %255 = vdwg.mxu0
  %256 = vmatpush.bf16.msra.mxu0 0
  %257 = vmatpush.bf16.msra.mxu0 0
  %258 = vmatpush.bf16.msra.mxu0 0
  %259 = vmatpush.bf16.msra.mxu0 0
  %260 = vmatpush.bf16.msra.mxu0 %v215
  %261 = vmatpush.bf16.msra.mxu0 %v213
  %262 = vmatpush.bf16.msra.mxu0 %v211
  %263 = vmatpush.bf16.msra.mxu0 %v209
  %264 = vmatmul.bf16.gmra.mxu0 %v225
  %v265 = vpop.f32.mrf.mxu0
  %v266 = vadd.f32 %v181, %v265
  %v267 = vpop.f32.mrf.mxu0
  %v268 = vadd.f32 %v181, %v267
  %269 = vmatmul.bf16.gmra.mxu0 %v228
  %v270 = vpop.f32.mrf.mxu0
  %v271 = vadd.f32 %v181, %v270
  %v272 = vpop.f32.mrf.mxu0
  %v273 = vadd.f32 %v181, %v272
  %274 = vmatmul.bf16.gmra.mxu0 %v231
  %v275 = vpop.f32.mrf.mxu0
  %v276 = vadd.f32 %v181, %v275
  %v277 = vpop.f32.mrf.mxu0
  %278 = vdwg.mxu0
  %v279 = vpack.c.bf16 %v266, %v243
  %v280 = vpack.c.bf16 %v268, %v245
  %v281 = vpack.c.bf16 %v271, %v248
  %v282 = vpack.c.bf16 %v273, %v250
  %v283 = vpack.c.bf16 %v276, %v253
  %vm284 = vcmask 1043456
  %vm285 = vcmask 523268
  %vm286 = vmor %vm285, %vm284
  %287 = vst.msk [vmem:[%s5] sm:$0xff] %vm286, %v279
  %288 = vst.msk [vmem:[%s5 + $0x8] sm:$0xff] %vm286, %v280
  %289 = vst.msk [vmem:[%s5 + $0x10] sm:$0xff] %vm286, %v281
  %290 = vst.msk [vmem:[%s5 + $0x18] sm:$0xff] %vm286, %v282
  %291 = vst.msk [vmem:[%s5 + $0x20] sm:$0xff] %vm286, %v283
  // Predicated region
  $region22: #{_lambda_.52} parent=0 // pred_check
    _
  $region23: #{_lambda_.52} parent=0 // pred_check_branch
    %293 = sbr.rel (0) target = $region25
  $region24: #{_lambda_.52} parent=0 // pred_region
    _
  $region25: #{_lambda_.52} parent=0 // pred_fallthru
    _
  // Predicated region
  $region26: #{_lambda_.52} parent=0 // pred_check
    _
  $region27: #{_lambda_.52} parent=0 // pred_check_branch
    %295 = sbr.rel (0) target = $region29
  $region28: #{_lambda_.52} parent=0 // pred_region
    _
  $region29: #{_lambda_.52} parent=0 // pred_fallthru
    _

// kernel: _lambda_.53
$region0: #{_lambda_.53}
  #allocation0 [shape = 'u32[]', space=smem, size = 0x4, offset = 0x4, fixed_abs, tag = 'smem constant byte address 0x4 - core index']
  #allocation1 [shape = 'u32[72,128]{1,0:T(1,128)}', space=vmem, size = 0x9000, scoped, tag = 'internal scratch']
  %s0 = inlined_call_operand.vmem [shape: bf16[2,20,192], index: 0, kind: input, shape index: {}]
  %s1 = inlined_call_operand.vmem [shape: bf16[2,20,64], index: 1, kind: output, shape index: {}]
  %s2 = sld [smem:[#allocation0]]
  $region37: #{_lambda_.53} parent=0
    _
  %s4 = ssub.s32 1, %s2
  %s5 = scalar_select 0, %s4, %s2
  loop: start=0, step=1, limit=4
  $region2: #{_lambda_.53} parent=0 // loop_pre_header
    _
  $region3: #{_lambda_.53} parent=0 // loop_header
    %s7 = sphi 0, %s11
    %p8 = scmp.ge.s32.totalorder %s7, 4
    %s17 = sphi 0, %s19
    %s20 = sphi 0, %s17
    %s21 = sphi 0, %s20
    %s37 = sphi 0, %s21
    %s43 = sphi 0, %s45
    %s46 = sphi 0, %s43
    %s47 = sphi 0, %s46
    %s63 = sphi 0, %s47
  $region4: #{_lambda_.53} parent=0 // loop_header_branch
    %10 = sbr.rel (%p8) target = $region8
  $region5: #{_lambda_.53} parent=0 // loop_body
    %s12 = ssub.s32 %s7, 1
    %s13 = ssub.s32 %s7, 2
    %s14 = sadd.s32 %s7, 1
    %s15 = ssub.s32 %s7, %s14
    %p16 = scmp.eq.s32.totalorder %s15, 0
    %s18 = sadd.s32 %s17, 1
    %s19 = scalar_select %p16, %s17, %s18
    %p22 = pneg %p16
    %p23 = scmp.eq.s32.totalorder %s7, 1
    %p24 = por %p22, %p23
    %p25 = scmp.ne.s32.totalorder %s17, %s20
    %p26 = scmp.eq.s32.totalorder %s7, 0
    %p27 = por %p25, %p26
    %p28 = scmp.ne.s32.totalorder %s17, %s20
    %p29 = scmp.eq.s32.totalorder %s12, 1
    %p30 = por %p28, %p29
    %p31 = scmp.ne.s32.totalorder %s20, %s21
    %p32 = scmp.eq.s32.totalorder %s12, 0
    %p33 = por %p31, %p32
    %p34 = scmp.ne.s32.totalorder %s20, %s21
    %p35 = scmp.eq.s32.totalorder %s13, 1
    %p36 = por %p34, %p35
    %p38 = scmp.ne.s32.totalorder %s21, %s37
    %p39 = scmp.eq.s32.totalorder %s13, 0
    %p40 = por %p38, %p39
    %s41 = ssub.s32 %s7, %s14
    %p42 = scmp.eq.s32.totalorder %s41, 0
    %s44 = sadd.s32 %s43, 1
    %s45 = scalar_select %p42, %s43, %s44
    %p48 = pneg %p42
    %p49 = scmp.eq.s32.totalorder %s7, 1
    %p50 = por %p48, %p49
    %p51 = scmp.ne.s32.totalorder %s43, %s46
    %p52 = scmp.eq.s32.totalorder %s7, 0
    %p53 = por %p51, %p52
    %p54 = scmp.ne.s32.totalorder %s43, %s46
    %p55 = scmp.eq.s32.totalorder %s12, 1
    %p56 = por %p54, %p55
    %p57 = scmp.ne.s32.totalorder %s46, %s47
    %p58 = scmp.eq.s32.totalorder %s12, 0
    %p59 = por %p57, %p58
    %p60 = scmp.ne.s32.totalorder %s46, %s47
    %p61 = scmp.eq.s32.totalorder %s13, 1
    %p62 = por %p60, %p61
    %p64 = scmp.ne.s32.totalorder %s47, %s63
    %p65 = scmp.eq.s32.totalorder %s13, 0
    %p66 = por %p64, %p65
    %p67 = scmp.le.s32.totalorder 1, %s7
    %p68 = scmp.lt.s32.totalorder %s7, 3
    %p69 = pnand %p67, %p68
    %p70 = pneg %p69
    // Predicated region
    $region9: #{_lambda_.53} parent=5 // pred_check
      _
    $region10: #{_lambda_.53} parent=5 // pred_check_branch
      %72 = sbr.rel (%p69) target = $region12
    $region11: #{_lambda_.53} parent=5 // pred_region
      %s73 = ssub.s32 %s7, 1
    $region12: #{_lambda_.53} parent=5 // pred_fallthru
      _
    %p74 = scmp.lt.s32.totalorder %s7, 2
    // Predicated region
    $region13: #{_lambda_.53} parent=5 // pred_check
      %p75 = pneg %p74
    $region14: #{_lambda_.53} parent=5 // pred_check_branch
      %77 = sbr.rel (%p75) target = $region16
    $region15: #{_lambda_.53} parent=5 // pred_region
      // Predicated region
      $region17: #{_lambda_.53} parent=15 // pred_check
        %p78 = pneg %p27
      $region18: #{_lambda_.53} parent=15 // pred_check_branch
        %80 = sbr.rel (%p78) target = $region20
      $region19: #{_lambda_.53} parent=15 // pred_region
        %p81 = scmp.lt.s32.totalorder %s7, 1
        %s82 = scalar_select %p81, %s7, 1
        %s83 = smul.addr %s82, 6
        %s84 = smul.addr %s83, 4
        %s85 = scalar_lea.vmem %s0, %s84
      $region20: #{_lambda_.53} parent=15 // pred_fallthru
        _
    $region16: #{_lambda_.53} parent=5 // pred_fallthru
      _
    %p86 = scmp.le.s32.totalorder 1, %s7
    %p87 = scmp.lt.s32.totalorder %s7, 3
    %p88 = pnand %p86, %p87
    %p89 = pneg %p88
    // Predicated region
    $region21: #{_lambda_.53} parent=5 // pred_check
      _
    $region22: #{_lambda_.53} parent=5 // pred_check_branch
      %91 = sbr.rel (%p88) target = $region24
    $region23: #{_lambda_.53} parent=5 // pred_region
      %s92 = ssub.s32 %s7, 1
      %p93 = scmp.lt.s32.totalorder %s12, 1
      %s94 = scalar_select %p93, %s12, 1
      %s95 = smul.addr %s94, 6
      %s96 = smul.addr %s95, 4
      %s97 = scalar_lea.vmem %s0, %s96
      %p98 = pneg %p33
      %p99 = pneg %p30
      %p100 = pneg %p59
      %p101 = pneg %p56
      %p102 = scmp.lt.s32.totalorder %s12, 1
      %s103 = scalar_select %p102, %s12, 1
      %s104 = smul.addr %s103, 3
      %s105 = smul.addr %s104, 4
      %s106 = scalar_lea.vmem %s1, %s105
      %p107 = scmp.lt.s32.totalorder %s12, 1
      %s108 = scalar_select %p107, %s12, 1
      %s109 = smul.addr %s108, 6
      %s110 = smul.addr %s109, 4
      %s111 = scalar_lea.vmem %s0, %s110
      %p112 = scmp.lt.s32.totalorder %s12, 1
      %s113 = scalar_select %p112, %s12, 1
      %s114 = smul.addr %s113, 3
      %s115 = smul.addr %s114, 4
      %s116 = scalar_lea.vmem %s1, %s115
      %v118 = vld [vmem:[%s111] sm:$0xf]
      %v119 = vld [vmem:[%s111 + $0x8] sm:$0xf]
      %v120 = vld [vmem:[%s111 + $0x10] sm:$0x3]
      %v121 = vld [vmem:[%s111 + $0x4] sm:$0xf]
      %v122 = vld [vmem:[%s111 + $0xc] sm:$0xf]
      %v123 = vld [vmem:[%s111 + $0x14] sm:$0x3]
      %v124 = vunpack.c.l.bf16 %v118
      %v125 = vunpack.c.l.bf16 %v119
      %v126 = vunpack.c.l.bf16 %v120
      %v127 = vmul.f32 %v124, 0.25
      %v128 = vmul.f32 %v125, 0.25
      %v129 = vmul.f32 %v126, 0.25
      %v130 = vpack.c.bf16 %v128, %v127
      %v131 = vpack.c.bf16 %v129, %v129
      %v135 = vunpack.c.l.b16 %v118
      %v136 = vunpack.c.l.b16 %v119
      %v137 = vunpack.c.l.b16 %v120
      %v138 = vpack.c.b16 %v136, %v135
      %v139 = vpack.c.b16 %v137, %v137
      %140 = vrot.lane.b32.xlu0 %v138, 64
      %v141 = vpop.permute.xlu0 %140
      %142 = vrot.lane.b32.xlu0 %v139, 64
      %v143 = vpop.permute.xlu0 %142
      %vm144 = vcmask 130048
      %v146 = vsel %vm144, %v130, 0
      %v149 = vsel %vm144, %v131, 0
      %v152 = vsel %vm144, %v141, 0
      %v155 = vsel %vm144, %v143, 0
      %157 = vmatpush.bf16.xpose.msra.mxu0 0
      %158 = vmatpush.bf16.xpose.msra.mxu0 0
      %159 = vmatpush.bf16.xpose.msra.mxu0 0
      %160 = vmatpush.bf16.xpose.msra.mxu0 0
      %161 = vmatpush.bf16.xpose.msra.mxu0 0
      %162 = vmatpush.bf16.xpose.msra.mxu0 0
      %163 = vmatpush.bf16.xpose.msra.mxu0 %v155
      %164 = vmatpush.bf16.xpose.msra.mxu0 %v152
      %165 = vmatmul.bf16.gmra.mxu0 %v146
      %v166 = vpop.f32.mrf.mxu0
      %v167 = vadd.f32 0.0, %v166
      %v168 = vpop.f32.mrf.mxu0
      %v169 = vadd.f32 0.0, %v168
      %170 = vmatmul.bf16.gmra.mxu0 %v149
      %v171 = vpop.f32.mrf.mxu0
      %v172 = vadd.f32 0.0, %v171
      %v173 = vpop.f32.mrf.mxu0
      %174 = vdwg.mxu0
      %vm175 = vcmask 162816
      %v176 = vsel %vm175, %v167, -inf
      %177 = vmax.xlane.f32.xlu0 %v176
      %v178 = vpop.xlane.xlu0 %177
      %v179 = vsel %vm175, %v169, -inf
      %180 = vmax.xlane.f32.xlu0 %v179
      %v181 = vpop.xlane.xlu0 %180
      %vm182 = vcmask 158720
      %v183 = vsel %vm182, %v172, -inf
      %184 = vmax.xlane.f32.xlu0 %v183
      %v185 = vpop.xlane.xlu0 %184
      %v186 = vsub.f32 %v167, %v178
      %v187 = vsub.f32 %v169, %v181
      %v188 = vsub.f32 %v172, %v185
      %v189 = vmul.f32 %v186, 1.442695
      %v190 = vpow.pop %v189
      %v191 = vmul.f32 %v187, 1.442695
      %v192 = vpow.pop %v191
      %v193 = vmul.f32 %v188, 1.442695
      %v194 = vpow.pop %v193
      %v195 = vsel %vm175, %v190, 0.0
      %196 = vadd.xlane.f32.xlu0 %v195
      %v197 = vpop.xlane.xlu0 %196
      %v198 = vsel %vm175, %v192, 0.0
      %199 = vadd.xlane.f32.xlu0 %v198
      %v200 = vpop.xlane.xlu0 %199
      %v201 = vsel %vm182, %v194, 0.0
      %202 = vadd.xlane.f32.xlu0 %v201
      %v203 = vpop.xlane.xlu0 %202
      %v204 = vrcp.pop %v197
      %v205 = vrcp.pop %v200
      %v206 = vrcp.pop %v203
      %v207 = vmul.f32 %v190, %v204
      %v208 = vmul.f32 %v192, %v205
      %v209 = vmul.f32 %v194, %v206
      %v210 = vpack.c.bf16 %v208, %v207
      %v211 = vpack.c.bf16 %v209, %v209
      %v215 = vunpack.c.l.b16 %v121
      %v216 = vunpack.c.l.b16 %v122
      %v217 = vunpack.c.l.b16 %v123
      %v218 = vpack.c.b16 %v216, %v215
      %v219 = vpack.c.b16 %v217, %v217
      %v222 = vsel %vm175, %v210, 0
      %v225 = vsel %vm175, %v211, 0
      %vm227 = vcmask 1041408
      %v229 = vsel %vm227, %v219, 0
      %231 = vmatpush.bf16.msra.mxu0 0
      %232 = vmatpush.bf16.msra.mxu0 0
      %233 = vmatpush.bf16.msra.mxu0 0
      %234 = vmatpush.bf16.msra.mxu0 0
      %235 = vmatpush.bf16.msra.mxu0 0
      %236 = vmatpush.bf16.msra.mxu0 0
      %237 = vmatpush.bf16.msra.mxu0 %v229
      %238 = vmatpush.bf16.msra.mxu0 %v218
      %239 = vmatmul.bf16.gmra.mxu0 %v222
      %v240 = vpop.f32.mrf.mxu0
      %v241 = vadd.f32 0.0, %v240
      %v242 = vpop.f32.mrf.mxu0
      %v243 = vadd.f32 0.0, %v242
      %244 = vmatmul.bf16.gmra.mxu0 %v225
      %v245 = vpop.f32.mrf.mxu0
      %v246 = vadd.f32 0.0, %v245
      %v247 = vpop.f32.mrf.mxu0
      %248 = vdwg.mxu0
      %v249 = vpack.c.bf16 %v241, %v241
      %v250 = vpack.c.bf16 %v243, %v243
      %v251 = vpack.c.bf16 %v246, %v246
      %vm252 = vcmask 125952
      %253 = vst.msk [vmem:[%s116] sm:$0xf] %vm252, %v249
      %254 = vst.msk [vmem:[%s116 + $0x4] sm:$0xf] %vm252, %v250
      %vm255 = vcmask 123904
      %256 = vst.msk [vmem:[%s116 + $0x8] sm:$0x3] %vm255, %v251
      %v257 = vld [vmem:[%s111] sm:$0xf]
      %v258 = vld [vmem:[%s111 + $0x8] sm:$0xf]
      %v259 = vld [vmem:[%s111 + $0x10] sm:$0x3]
      %v260 = vld [vmem:[%s111 + $0x4] sm:$0xf]
      %v261 = vld [vmem:[%s111 + $0xc] sm:$0xf]
      %v262 = vld [vmem:[%s111 + $0x14] sm:$0x3]
      %v263 = vunpack.c.l.bf16 %v257
      %v264 = vunpack.c.l.bf16 %v258
      %v265 = vunpack.c.l.bf16 %v259
      %v266 = vmul.f32 %v263, 0.25
      %v267 = vmul.f32 %v264, 0.25
      %v268 = vmul.f32 %v265, 0.25
      %v269 = vpack.c.bf16 %v267, %v266
      %v270 = vpack.c.bf16 %v268, %v268
      %273 = vrot.lane.b32.xlu0 %v269, 112
      %v274 = vpop.permute.xlu0 %273
      %275 = vrot.lane.b32.xlu0 %v270, 112
      %v276 = vpop.permute.xlu0 %275
      %v280 = vunpack.c.l.b16 %v257
      %v281 = vunpack.c.l.b16 %v258
      %v282 = vunpack.c.l.b16 %v259
      %v283 = vpack.c.b16 %v281, %v280
      %v284 = vpack.c.b16 %v282, %v282
      %285 = vrot.lane.b32.xlu0 %v283, 48
      %v286 = vpop.permute.xlu0 %285
      %287 = vrot.lane.b32.xlu0 %v284, 48
      %v288 = vpop.permute.xlu0 %287
      %v290 = vsel %vm144, %v274, 0
      %v293 = vsel %vm144, %v276, 0
      %v296 = vsel %vm144, %v286, 0
      %v299 = vsel %vm144, %v288, 0
      %301 = vmatpush.bf16.xpose.msra.mxu0 0
      %302 = vmatpush.bf16.xpose.msra.mxu0 0
      %303 = vmatpush.bf16.xpose.msra.mxu0 0
      %304 = vmatpush.bf16.xpose.msra.mxu0 0
      %305 = vmatpush.bf16.xpose.msra.mxu0 0
      %306 = vmatpush.bf16.xpose.msra.mxu0 0
      %307 = vmatpush.bf16.xpose.msra.mxu0 %v299
      %308 = vmatpush.bf16.xpose.msra.mxu0 %v296
      %309 = vmatmul.bf16.gmra.mxu0 %v290
      %v310 = vpop.f32.mrf.mxu0
      %v311 = vadd.f32 0.0, %v310
      %v312 = vpop.f32.mrf.mxu0
      %v313 = vadd.f32 0.0, %v312
      %314 = vmatmul.bf16.gmra.mxu0 %v293
      %v315 = vpop.f32.mrf.mxu0
      %v316 = vadd.f32 0.0, %v315
      %v317 = vpop.f32.mrf.mxu0
      %318 = vdwg.mxu0
      %v319 = vsel %vm175, %v311, -inf
      %320 = vmax.xlane.f32.xlu0 %v319
      %v321 = vpop.xlane.xlu0 %320
      %v322 = vsel %vm175, %v313, -inf
      %323 = vmax.xlane.f32.xlu0 %v322
      %v324 = vpop.xlane.xlu0 %323
      %v325 = vsel %vm182, %v316, -inf
      %326 = vmax.xlane.f32.xlu0 %v325
      %v327 = vpop.xlane.xlu0 %326
      %v328 = vsub.f32 %v311, %v321
      %v329 = vsub.f32 %v313, %v324
      %v330 = vsub.f32 %v316, %v327
      %v331 = vmul.f32 %v328, 1.442695
      %v332 = vpow.pop %v331
      %v333 = vmul.f32 %v329, 1.442695
      %v334 = vpow.pop %v333
      %v335 = vmul.f32 %v330, 1.442695
      %v336 = vpow.pop %v335
      %v337 = vsel %vm175, %v332, 0.0
      %338 = vadd.xlane.f32.xlu0 %v337
      %v339 = vpop.xlane.xlu0 %338
      %v340 = vsel %vm175, %v334, 0.0
      %341 = vadd.xlane.f32.xlu0 %v340
      %v342 = vpop.xlane.xlu0 %341
      %v343 = vsel %vm182, %v336, 0.0
      %344 = vadd.xlane.f32.xlu0 %v343
      %v345 = vpop.xlane.xlu0 %344
      %v346 = vrcp.pop %v339
      %v347 = vrcp.pop %v342
      %v348 = vrcp.pop %v345
      %v349 = vmul.f32 %v332, %v346
      %v350 = vmul.f32 %v334, %v347
      %v351 = vmul.f32 %v336, %v348
      %v352 = vpack.c.bf16 %v350, %v349
      %v353 = vpack.c.bf16 %v351, %v351
      %v357 = vunpack.c.l.b16 %v260
      %v358 = vunpack.c.l.b16 %v261
      %v359 = vunpack.c.l.b16 %v262
      %v360 = vpack.c.b16 %v358, %v357
      %v361 = vpack.c.b16 %v359, %v359
      %362 = vrot.lane.b32.xlu0 %v360, 112
      %v363 = vpop.permute.xlu0 %362
      %364 = vrot.lane.b32.xlu0 %v361, 112
      %v365 = vpop.permute.xlu0 %364
      %v368 = vsel %vm175, %v352, 0
      %v371 = vsel %vm175, %v353, 0
      %v374 = vsel %vm227, %v365, 0
      %376 = vmatpush.bf16.msra.mxu0 0
      %377 = vmatpush.bf16.msra.mxu0 0
      %378 = vmatpush.bf16.msra.mxu0 0
      %379 = vmatpush.bf16.msra.mxu0 0
      %380 = vmatpush.bf16.msra.mxu0 0
      %381 = vmatpush.bf16.msra.mxu0 0
      %382 = vmatpush.bf16.msra.mxu0 %v374
      %383 = vmatpush.bf16.msra.mxu0 %v363
      %384 = vmatmul.bf16.gmra.mxu0 %v368
      %v385 = vpop.f32.mrf.mxu0
      %v386 = vadd.f32 0.0, %v385
      %v387 = vpop.f32.mrf.mxu0
      %v388 = vadd.f32 0.0, %v387
      %389 = vmatmul.bf16.gmra.mxu0 %v371
      %v390 = vpop.f32.mrf.mxu0
      %v391 = vadd.f32 0.0, %v390
      %v392 = vpop.f32.mrf.mxu0
      %393 = vdwg.mxu0
      %v394 = vpack.c.bf16 %v386, %v386
      %v395 = vpack.c.bf16 %v388, %v388
      %v396 = vpack.c.bf16 %v391, %v391
      %400 = vrot.lane.b32.xlu0 %v394, 16
      %v401 = vpop.permute.xlu0 %400
      %402 = vrot.lane.b32.xlu0 %v395, 16
      %v403 = vpop.permute.xlu0 %402
      %404 = vrot.lane.b32.xlu0 %v396, 16
      %v405 = vpop.permute.xlu0 %404
      %vm409 = vcmask 257152
      %410 = vst.msk [vmem:[%s116] sm:$0xf] %vm409, %v401
      %411 = vst.msk [vmem:[%s116 + $0x4] sm:$0xf] %vm409, %v403
      %vm412 = vcmask 255104
      %413 = vst.msk [vmem:[%s116 + $0x8] sm:$0x3] %vm412, %v405
      %v414 = vld [vmem:[%s111] sm:$0xf]
      %v415 = vld [vmem:[%s111 + $0x8] sm:$0xf]
      %v416 = vld [vmem:[%s111 + $0x10] sm:$0x3]
      %v417 = vld [vmem:[%s111 + $0x4] sm:$0xf]
      %v418 = vld [vmem:[%s111 + $0xc] sm:$0xf]
      %v419 = vld [vmem:[%s111 + $0x14] sm:$0x3]
      %v420 = vunpack.c.l.bf16 %v414
      %v421 = vunpack.c.l.bf16 %v415
      %v422 = vunpack.c.l.bf16 %v416
      %v423 = vmul.f32 %v420, 0.25
      %v424 = vmul.f32 %v421, 0.25
      %v425 = vmul.f32 %v422, 0.25
      %v426 = vpack.c.bf16 %v424, %v423
      %v427 = vpack.c.bf16 %v425, %v425
      %430 = vrot.lane.b32.xlu0 %v426, 96
      %v431 = vpop.permute.xlu0 %430
      %432 = vrot.lane.b32.xlu0 %v427, 96
      %v433 = vpop.permute.xlu0 %432
      %v437 = vunpack.c.l.b16 %v414
      %v438 = vunpack.c.l.b16 %v415
      %v439 = vunpack.c.l.b16 %v416
      %v440 = vpack.c.b16 %v438, %v437
      %v441 = vpack.c.b16 %v439, %v439
      %442 = vrot.lane.b32.xlu0 %v440, 32
      %v443 = vpop.permute.xlu0 %442
      %444 = vrot.lane.b32.xlu0 %v441, 32
      %v445 = vpop.permute.xlu0 %444
      %v447 = vsel %vm144, %v431, 0
      %v450 = vsel %vm144, %v433, 0
      %v453 = vsel %vm144, %v443, 0
      %v456 = vsel %vm144, %v445, 0
      %458 = vmatpush.bf16.xpose.msra.mxu0 0
      %459 = vmatpush.bf16.xpose.msra.mxu0 0
      %460 = vmatpush.bf16.xpose.msra.mxu0 0
      %461 = vmatpush.bf16.xpose.msra.mxu0 0
      %462 = vmatpush.bf16.xpose.msra.mxu0 0
      %463 = vmatpush.bf16.xpose.msra.mxu0 0
      %464 = vmatpush.bf16.xpose.msra.mxu0 %v456
      %465 = vmatpush.bf16.xpose.msra.mxu0 %v453
      %466 = vmatmul.bf16.gmra.mxu0 %v447
      %v467 = vpop.f32.mrf.mxu0
      %v468 = vadd.f32 0.0, %v467
      %v469 = vpop.f32.mrf.mxu0
      %v470 = vadd.f32 0.0, %v469
      %471 = vmatmul.bf16.gmra.mxu0 %v450
      %v472 = vpop.f32.mrf.mxu0
      %v473 = vadd.f32 0.0, %v472
      %v474 = vpop.f32.mrf.mxu0
      %475 = vdwg.mxu0
      %v476 = vsel %vm175, %v468, -inf
      %477 = vmax.xlane.f32.xlu0 %v476
      %v478 = vpop.xlane.xlu0 %477
      %v479 = vsel %vm175, %v470, -inf
      %480 = vmax.xlane.f32.xlu0 %v479
      %v481 = vpop.xlane.xlu0 %480
      %v482 = vsel %vm182, %v473, -inf
      %483 = vmax.xlane.f32.xlu0 %v482
      %v484 = vpop.xlane.xlu0 %483
      %v485 = vsub.f32 %v468, %v478
      %v486 = vsub.f32 %v470, %v481
      %v487 = vsub.f32 %v473, %v484
      %v488 = vmul.f32 %v485, 1.442695
      %v489 = vpow.pop %v488
      %v490 = vmul.f32 %v486, 1.442695
      %v491 = vpow.pop %v490
      %v492 = vmul.f32 %v487, 1.442695
      %v493 = vpow.pop %v492
      %v494 = vsel %vm175, %v489, 0.0
      %495 = vadd.xlane.f32.xlu0 %v494
      %v496 = vpop.xlane.xlu0 %495
      %v497 = vsel %vm175, %v491, 0.0
      %498 = vadd.xlane.f32.xlu0 %v497
      %v499 = vpop.xlane.xlu0 %498
      %v500 = vsel %vm182, %v493, 0.0
      %501 = vadd.xlane.f32.xlu0 %v500
      %v502 = vpop.xlane.xlu0 %501
      %v503 = vrcp.pop %v496
      %v504 = vrcp.pop %v499
      %v505 = vrcp.pop %v502
      %v506 = vmul.f32 %v489, %v503
      %v507 = vmul.f32 %v491, %v504
      %v508 = vmul.f32 %v493, %v505
      %v509 = vpack.c.bf16 %v507, %v506
      %v510 = vpack.c.bf16 %v508, %v508
      %v514 = vunpack.c.l.b16 %v417
      %v515 = vunpack.c.l.b16 %v418
      %v516 = vunpack.c.l.b16 %v419
      %v517 = vpack.c.b16 %v515, %v514
      %v518 = vpack.c.b16 %v516, %v516
      %519 = vrot.lane.b32.xlu0 %v517, 96
      %v520 = vpop.permute.xlu0 %519
      %521 = vrot.lane.b32.xlu0 %v518, 96
      %v522 = vpop.permute.xlu0 %521
      %v525 = vsel %vm175, %v509, 0
      %v528 = vsel %vm175, %v510, 0
      %v531 = vsel %vm227, %v522, 0
      %533 = vmatpush.bf16.msra.mxu0 0
      %534 = vmatpush.bf16.msra.mxu0 0
      %535 = vmatpush.bf16.msra.mxu0 0
      %536 = vmatpush.bf16.msra.mxu0 0
      %537 = vmatpush.bf16.msra.mxu0 0
      %538 = vmatpush.bf16.msra.mxu0 0
      %539 = vmatpush.bf16.msra.mxu0 %v531
      %540 = vmatpush.bf16.msra.mxu0 %v520
      %541 = vmatmul.bf16.gmra.mxu0 %v525
      %v542 = vpop.f32.mrf.mxu0
      %v543 = vadd.f32 0.0, %v542
      %v544 = vpop.f32.mrf.mxu0
      %v545 = vadd.f32 0.0, %v544
      %546 = vmatmul.bf16.gmra.mxu0 %v528
      %v547 = vpop.f32.mrf.mxu0
      %v548 = vadd.f32 0.0, %v547
      %v549 = vpop.f32.mrf.mxu0
      %550 = vdwg.mxu0
      %v551 = vpack.c.bf16 %v543, %v543
      %v552 = vpack.c.bf16 %v545, %v545
      %v553 = vpack.c.bf16 %v548, %v548
      %557 = vrot.lane.b32.xlu0 %v551, 32
      %v558 = vpop.permute.xlu0 %557
      %559 = vrot.lane.b32.xlu0 %v552, 32
      %v560 = vpop.permute.xlu0 %559
      %561 = vrot.lane.b32.xlu0 %v553, 32
      %v562 = vpop.permute.xlu0 %561
      %vm566 = vcmask 388352
      %567 = vst.msk [vmem:[%s116] sm:$0xf] %vm566, %v558
      %568 = vst.msk [vmem:[%s116 + $0x4] sm:$0xf] %vm566, %v560
      %vm569 = vcmask 386304
      %570 = vst.msk [vmem:[%s116 + $0x8] sm:$0x3] %vm569, %v562
      %v571 = vld [vmem:[%s111] sm:$0xf]
      %v572 = vld [vmem:[%s111 + $0x8] sm:$0xf]
      %v573 = vld [vmem:[%s111 + $0x10] sm:$0x3]
      %v574 = vld [vmem:[%s111 + $0x4] sm:$0xf]
      %v575 = vld [vmem:[%s111 + $0xc] sm:$0xf]
      %v576 = vld [vmem:[%s111 + $0x14] sm:$0x3]
      %v577 = vunpack.c.l.bf16 %v571
      %v578 = vunpack.c.l.bf16 %v572
      %v579 = vunpack.c.l.bf16 %v573
      %v580 = vmul.f32 %v577, 0.25
      %v581 = vmul.f32 %v578, 0.25
      %v582 = vmul.f32 %v579, 0.25
      %v583 = vpack.c.bf16 %v581, %v580
      %v584 = vpack.c.bf16 %v582, %v582
      %587 = vrot.lane.b32.xlu0 %v583, 80
      %v588 = vpop.permute.xlu0 %587
      %589 = vrot.lane.b32.xlu0 %v584, 80
      %v590 = vpop.permute.xlu0 %589
      %v594 = vunpack.c.l.b16 %v571
      %v595 = vunpack.c.l.b16 %v572
      %v596 = vunpack.c.l.b16 %v573
      %v597 = vpack.c.b16 %v595, %v594
      %v598 = vpack.c.b16 %v596, %v596
      %599 = vrot.lane.b32.xlu0 %v597, 16
      %v600 = vpop.permute.xlu0 %599
      %601 = vrot.lane.b32.xlu0 %v598, 16
      %v602 = vpop.permute.xlu0 %601
      %v604 = vsel %vm144, %v588, 0
      %v607 = vsel %vm144, %v590, 0
      %v610 = vsel %vm144, %v600, 0
      %v613 = vsel %vm144, %v602, 0
      %615 = vmatpush.bf16.xpose.msra.mxu0 0
      %616 = vmatpush.bf16.xpose.msra.mxu0 0
      %617 = vmatpush.bf16.xpose.msra.mxu0 0
      %618 = vmatpush.bf16.xpose.msra.mxu0 0
      %619 = vmatpush.bf16.xpose.msra.mxu0 0
      %620 = vmatpush.bf16.xpose.msra.mxu0 0
      %621 = vmatpush.bf16.xpose.msra.mxu0 %v613
      %622 = vmatpush.bf16.xpose.msra.mxu0 %v610
      %623 = vmatmul.bf16.gmra.mxu0 %v604
      %v624 = vpop.f32.mrf.mxu0
      %v625 = vadd.f32 0.0, %v624
      %v626 = vpop.f32.mrf.mxu0
      %v627 = vadd.f32 0.0, %v626
      %628 = vmatmul.bf16.gmra.mxu0 %v607
      %v629 = vpop.f32.mrf.mxu0
      %v630 = vadd.f32 0.0, %v629
      %v631 = vpop.f32.mrf.mxu0
      %632 = vdwg.mxu0
      %v633 = vsel %vm175, %v625, -inf
      %634 = vmax.xlane.f32.xlu0 %v633
      %v635 = vpop.xlane.xlu0 %634
      %v636 = vsel %vm175, %v627, -inf
      %637 = vmax.xlane.f32.xlu0 %v636
      %v638 = vpop.xlane.xlu0 %637
      %v639 = vsel %vm182, %v630, -inf
      %640 = vmax.xlane.f32.xlu0 %v639
      %v641 = vpop.xlane.xlu0 %640
      %v642 = vsub.f32 %v625, %v635
      %v643 = vsub.f32 %v627, %v638
      %v644 = vsub.f32 %v630, %v641
      %v645 = vmul.f32 %v642, 1.442695
      %v646 = vpow.pop %v645
      %v647 = vmul.f32 %v643, 1.442695
      %v648 = vpow.pop %v647
      %v649 = vmul.f32 %v644, 1.442695
      %v650 = vpow.pop %v649
      %v651 = vsel %vm175, %v646, 0.0
      %652 = vadd.xlane.f32.xlu0 %v651
      %v653 = vpop.xlane.xlu0 %652
      %v654 = vsel %vm175, %v648, 0.0
      %655 = vadd.xlane.f32.xlu0 %v654
      %v656 = vpop.xlane.xlu0 %655
      %v657 = vsel %vm182, %v650, 0.0
      %658 = vadd.xlane.f32.xlu0 %v657
      %v659 = vpop.xlane.xlu0 %658
      %v660 = vrcp.pop %v653
      %v661 = vrcp.pop %v656
      %v662 = vrcp.pop %v659
      %v663 = vmul.f32 %v646, %v660
      %v664 = vmul.f32 %v648, %v661
      %v665 = vmul.f32 %v650, %v662
      %v666 = vpack.c.bf16 %v664, %v663
      %v667 = vpack.c.bf16 %v665, %v665
      %v671 = vunpack.c.l.b16 %v574
      %v672 = vunpack.c.l.b16 %v575
      %v673 = vunpack.c.l.b16 %v576
      %v674 = vpack.c.b16 %v672, %v671
      %v675 = vpack.c.b16 %v673, %v673
      %676 = vrot.lane.b32.xlu0 %v674, 80
      %v677 = vpop.permute.xlu0 %676
      %678 = vrot.lane.b32.xlu0 %v675, 80
      %v679 = vpop.permute.xlu0 %678
      %v682 = vsel %vm175, %v666, 0
      %v685 = vsel %vm175, %v667, 0
      %v688 = vsel %vm227, %v679, 0
      %690 = vmatpush.bf16.msra.mxu0 0
      %691 = vmatpush.bf16.msra.mxu0 0
      %692 = vmatpush.bf16.msra.mxu0 0
      %693 = vmatpush.bf16.msra.mxu0 0
      %694 = vmatpush.bf16.msra.mxu0 0
      %695 = vmatpush.bf16.msra.mxu0 0
      %696 = vmatpush.bf16.msra.mxu0 %v688
      %697 = vmatpush.bf16.msra.mxu0 %v677
      %698 = vmatmul.bf16.gmra.mxu0 %v682
      %v699 = vpop.f32.mrf.mxu0
      %v700 = vadd.f32 0.0, %v699
      %v701 = vpop.f32.mrf.mxu0
      %v702 = vadd.f32 0.0, %v701
      %703 = vmatmul.bf16.gmra.mxu0 %v685
      %v704 = vpop.f32.mrf.mxu0
      %v705 = vadd.f32 0.0, %v704
      %v706 = vpop.f32.mrf.mxu0
      %707 = vdwg.mxu0
      %v708 = vpack.c.bf16 %v700, %v700
      %v709 = vpack.c.bf16 %v702, %v702
      %v710 = vpack.c.bf16 %v705, %v705
      %714 = vrot.lane.b32.xlu0 %v708, 48
      %v715 = vpop.permute.xlu0 %714
      %716 = vrot.lane.b32.xlu0 %v709, 48
      %v717 = vpop.permute.xlu0 %716
      %718 = vrot.lane.b32.xlu0 %v710, 48
      %v719 = vpop.permute.xlu0 %718
      %vm723 = vcmask 519552
      %724 = vst.msk [vmem:[%s116] sm:$0xf] %vm723, %v715
      %725 = vst.msk [vmem:[%s116 + $0x4] sm:$0xf] %vm723, %v717
      %vm726 = vcmask 517504
      %727 = vst.msk [vmem:[%s116 + $0x8] sm:$0x3] %vm726, %v719
      %p728 = scmp.lt.s32.totalorder %s12, 1
      %s729 = scalar_select %p728, %s12, 1
      %s730 = smul.addr %s729, 3
      %s731 = smul.addr %s730, 4
      %s732 = scalar_lea.vmem %s1, %s731
      // Predicated region
      $region25: #{_lambda_.53} parent=23 // pred_check
        %p733 = pneg %p56
      $region26: #{_lambda_.53} parent=23 // pred_check_branch
        %735 = sbr.rel (%p733) target = $region28
      $region27: #{_lambda_.53} parent=23 // pred_region
        _
      $region28: #{_lambda_.53} parent=23 // pred_fallthru
        _
    $region24: #{_lambda_.53} parent=5 // pred_fallthru
      _
    %p736 = scmp.le.s32.totalorder 2, %s7
    // Predicated region
    $region29: #{_lambda_.53} parent=5 // pred_check
      %p737 = pneg %p736
    $region30: #{_lambda_.53} parent=5 // pred_check_branch
      %739 = sbr.rel (%p737) target = $region32
    $region31: #{_lambda_.53} parent=5 // pred_region
      %s740 = ssub.s32 %s7, 2
      // Predicated region
      $region33: #{_lambda_.53} parent=31 // pred_check
        %p741 = pneg %p62
      $region34: #{_lambda_.53} parent=31 // pred_check_branch
        %743 = sbr.rel (%p741) target = $region36
      $region35: #{_lambda_.53} parent=31 // pred_region
        %p744 = scmp.lt.s32.totalorder %s13, 1
        %s745 = scalar_select %p744, %s13, 1
        %s746 = smul.addr %s745, 3
        %s747 = smul.addr %s746, 4
        %s748 = scalar_lea.vmem %s1, %s747
      $region36: #{_lambda_.53} parent=31 // pred_fallthru
        _
    $region32: #{_lambda_.53} parent=5 // pred_fallthru
      _
  $region6: #{_lambda_.53} parent=0 // loop_footer
    %s11 = sadd.s32 1, %s7
  $region7: #{_lambda_.53} parent=0 // loop_footer_branch
    %6 = sbr.rel target = $region3
  $region8: #{_lambda_.53} parent=0 // loop_exit
    _

// kernel: _lambda_.54
$region0: #{_lambda_.54}
  #allocation0 [shape = 'u32[]', space=smem, size = 0x4, offset = 0x4, fixed_abs, tag = 'smem constant byte address 0x4 - core index']
  #allocation1 [shape = 'u32[72,128]{1,0:T(1,128)}', space=vmem, size = 0x9000, scoped, tag = 'internal scratch']
  #allocation2 [shape = 'f32[40,64]{1,0:T(8,128)}', space=vmem, size = 0x5000, scoped, tag = 'scratch operand']
  %s0 = inlined_call_operand.vmem [shape: bf16[40,64], index: 0, kind: input, shape index: {}]
  %s1 = inlined_call_operand.vmem [shape: bf16[64,64], index: 1, kind: input, shape index: {}]
  %s2 = inlined_call_operand.vmem [shape: f32[1,64], index: 2, kind: input, shape index: {}]
  %s3 = inlined_call_operand.vmem [shape: bf16[40,64], index: 3, kind: input, shape index: {}]
  %s4 = inlined_call_operand.vmem [shape: bf16[40,64], index: 4, kind: output, shape index: {}]
  %s5 = sld [smem:[#allocation0]]
  $region34: #{_lambda_.54} parent=0
    _
  %s7 = ssub.s32 1, %s5
  %s8 = scalar_select 0, %s7, %s5
  // Predicated region
  $region2: #{_lambda_.54} parent=0 // pred_check
    _
  $region3: #{_lambda_.54} parent=0 // pred_check_branch
    %10 = sbr.rel (0) target = $region5
  $region4: #{_lambda_.54} parent=0 // pred_region
    _
  $region5: #{_lambda_.54} parent=0 // pred_fallthru
    _
  // Predicated region
  $region6: #{_lambda_.54} parent=0 // pred_check
    _
  $region7: #{_lambda_.54} parent=0 // pred_check_branch
    %12 = sbr.rel (0) target = $region9
  $region8: #{_lambda_.54} parent=0 // pred_region
    _
  $region9: #{_lambda_.54} parent=0 // pred_fallthru
    _
  // Predicated region
  $region10: #{_lambda_.54} parent=0 // pred_check
    _
  $region11: #{_lambda_.54} parent=0 // pred_check_branch
    %14 = sbr.rel (0) target = $region13
  $region12: #{_lambda_.54} parent=0 // pred_region
    _
  $region13: #{_lambda_.54} parent=0 // pred_fallthru
    _
  // Predicated region
  $region14: #{_lambda_.54} parent=0 // pred_check
    _
  $region15: #{_lambda_.54} parent=0 // pred_check_branch
    %16 = sbr.rel (0) target = $region17
  $region16: #{_lambda_.54} parent=0 // pred_region
    _
  $region17: #{_lambda_.54} parent=0 // pred_fallthru
    _
  %p18 = scmp.eq.s32.totalorder 0, 0
  // Predicated region
  $region18: #{_lambda_.54} parent=0 // pred_check
    %p19 = pneg %p18
  $region19: #{_lambda_.54} parent=0 // pred_check_branch
    %21 = sbr.rel (%p19) target = $region21
  $region20: #{_lambda_.54} parent=0 // pred_region
    %vm22 = vcmask 523264
    %23 = vst.msk [vmem:[#allocation2] sm:$0xff] %vm22, 0.0
    %24 = vst.msk [vmem:[#allocation2 + $0x8] sm:$0xff] %vm22, 0.0
    %25 = vst.msk [vmem:[#allocation2 + $0x10] sm:$0xff] %vm22, 0.0
    %26 = vst.msk [vmem:[#allocation2 + $0x18] sm:$0xff] %vm22, 0.0
    %27 = vst.msk [vmem:[#allocation2 + $0x20] sm:$0xff] %vm22, 0.0
  $region21: #{_lambda_.54} parent=0 // pred_fallthru
    _
  %v28 = vld [vmem:[#allocation2] sm:$0xff]
  %v29 = vld [vmem:[#allocation2 + $0x8] sm:$0xff]
  %v30 = vld [vmem:[#allocation2 + $0x10] sm:$0xff]
  %v31 = vld [vmem:[#allocation2 + $0x18] sm:$0xff]
  %v32 = vld [vmem:[#allocation2 + $0x20] sm:$0xff]
  %v33 = vld [vmem:[%s0] sm:$0xf]
  %v34 = vld [vmem:[%s0 + $0x4] sm:$0xf]
  %v35 = vld [vmem:[%s0 + $0x8] sm:$0xf]
  %v36 = vld [vmem:[%s0 + $0xc] sm:$0xf]
  %v37 = vld [vmem:[%s0 + $0x10] sm:$0xf]
  %v38 = vld [vmem:[%s1] sm:$0xf]
  %v39 = vld [vmem:[%s1 + $0x4] sm:$0xf]
  %v40 = vld [vmem:[%s1 + $0x8] sm:$0xf]
  %v41 = vld [vmem:[%s1 + $0xc] sm:$0xf]
  %v42 = vld [vmem:[%s1 + $0x10] sm:$0xf]
  %v43 = vld [vmem:[%s1 + $0x14] sm:$0xf]
  %v44 = vld [vmem:[%s1 + $0x18] sm:$0xf]
  %v45 = vld [vmem:[%s1 + $0x1c] sm:$0xf]
  %v51 = vunpack.c.l.b16 %v33
  %v52 = vunpack.c.l.b16 %v34
  %v53 = vunpack.c.l.b16 %v35
  %v54 = vunpack.c.l.b16 %v36
  %v55 = vunpack.c.l.b16 %v37
  %v56 = vpack.c.b16 %v52, %v51
  %v57 = vpack.c.b16 %v54, %v53
  %v58 = vpack.c.b16 %v55, %v55
  %v67 = vunpack.c.l.b16 %v38
  %v68 = vunpack.c.l.b16 %v39
  %v69 = vunpack.c.l.b16 %v40
  %v70 = vunpack.c.l.b16 %v41
  %v71 = vunpack.c.l.b16 %v42
  %v72 = vunpack.c.l.b16 %v43
  %v73 = vunpack.c.l.b16 %v44
  %v74 = vunpack.c.l.b16 %v45
  %v75 = vpack.c.b16 %v68, %v67
  %v76 = vpack.c.b16 %v70, %v69
  %v77 = vpack.c.b16 %v72, %v71
  %v78 = vpack.c.b16 %v74, %v73
  %vm83 = vcmask 523264
  %v85 = vsel %vm83, %v56, 0
  %v88 = vsel %vm83, %v57, 0
  %v91 = vsel %vm83, %v58, 0
  %93 = vmatpush.bf16.msra.mxu0 0
  %94 = vmatpush.bf16.msra.mxu0 0
  %95 = vmatpush.bf16.msra.mxu0 0
  %96 = vmatpush.bf16.msra.mxu0 0
  %97 = vmatpush.bf16.msra.mxu0 %v78
  %98 = vmatpush.bf16.msra.mxu0 %v77
  %99 = vmatpush.bf16.msra.mxu0 %v76
  %100 = vmatpush.bf16.msra.mxu0 %v75
  %101 = vmatmul.bf16.gmra.mxu0 %v85
  %v102 = vpop.f32.mrf.mxu0
  %v103 = vadd.f32 0.0, %v102
  %v104 = vpop.f32.mrf.mxu0
  %v105 = vadd.f32 0.0, %v104
  %106 = vmatmul.bf16.gmra.mxu0 %v88
  %v107 = vpop.f32.mrf.mxu0
  %v108 = vadd.f32 0.0, %v107
  %v109 = vpop.f32.mrf.mxu0
  %v110 = vadd.f32 0.0, %v109
  %111 = vmatmul.bf16.gmra.mxu0 %v91
  %v112 = vpop.f32.mrf.mxu0
  %v113 = vadd.f32 0.0, %v112
  %v114 = vpop.f32.mrf.mxu0
  %115 = vdwg.mxu0
  %v116 = vadd.f32 %v28, %v103
  %v117 = vadd.f32 %v29, %v105
  %v118 = vadd.f32 %v30, %v108
  %v119 = vadd.f32 %v31, %v110
  %v120 = vadd.f32 %v32, %v113
  %121 = vst.msk [vmem:[#allocation2] sm:$0xff] %vm83, %v116
  %122 = vst.msk [vmem:[#allocation2 + $0x8] sm:$0xff] %vm83, %v117
  %123 = vst.msk [vmem:[#allocation2 + $0x10] sm:$0xff] %vm83, %v118
  %124 = vst.msk [vmem:[#allocation2 + $0x18] sm:$0xff] %vm83, %v119
  %125 = vst.msk [vmem:[#allocation2 + $0x20] sm:$0xff] %vm83, %v120
  // Predicated region
  $region22: #{_lambda_.54} parent=0 // pred_check
    %p126 = pneg %p18
  $region23: #{_lambda_.54} parent=0 // pred_check_branch
    %128 = sbr.rel (%p126) target = $region25
  $region24: #{_lambda_.54} parent=0 // pred_region
    %v129 = vld [vmem:[#allocation2] sm:$0xff]
    %v130 = vld [vmem:[#allocation2 + $0x8] sm:$0xff]
    %v131 = vld [vmem:[#allocation2 + $0x10] sm:$0xff]
    %v132 = vld [vmem:[#allocation2 + $0x18] sm:$0xff]
    %v133 = vld [vmem:[#allocation2 + $0x20] sm:$0xff]
    %v134 = vld [vmem:[%s2] sm:$0x1]
    %v136 = vperm.slane %v134, 0
    %v138 = vadd.f32 %v129, %v136
    %v139 = vadd.f32 %v130, %v136
    %v140 = vadd.f32 %v131, %v136
    %v141 = vadd.f32 %v132, %v136
    %v142 = vadd.f32 %v133, %v136
    %v143 = vld [vmem:[%s3] sm:$0xf]
    %v144 = vld [vmem:[%s3 + $0x4] sm:$0xf]
    %v145 = vld [vmem:[%s3 + $0x8] sm:$0xf]
    %v146 = vld [vmem:[%s3 + $0xc] sm:$0xf]
    %v147 = vld [vmem:[%s3 + $0x10] sm:$0xf]
    %v148 = vunpack.c.l.bf16 %v143
    %v149 = vunpack.c.l.bf16 %v144
    %v150 = vunpack.c.l.bf16 %v145
    %v151 = vunpack.c.l.bf16 %v146
    %v152 = vunpack.c.l.bf16 %v147
    %v153 = vadd.f32 %v148, %v138
    %v154 = vadd.f32 %v149, %v139
    %v155 = vadd.f32 %v150, %v140
    %v156 = vadd.f32 %v151, %v141
    %v157 = vadd.f32 %v152, %v142
    %v158 = vpack.c.bf16 %v153, %v153
    %v159 = vpack.c.bf16 %v154, %v154
    %v160 = vpack.c.bf16 %v155, %v155
    %v161 = vpack.c.bf16 %v156, %v156
    %v162 = vpack.c.bf16 %v157, %v157
    %vm163 = vcmask 519168
    %164 = vst.msk [vmem:[%s4] sm:$0xf] %vm163, %v158
    %165 = vst.msk [vmem:[%s4 + $0x4] sm:$0xf] %vm163, %v159
    %166 = vst.msk [vmem:[%s4 + $0x8] sm:$0xf] %vm163, %v160
    %167 = vst.msk [vmem:[%s4 + $0xc] sm:$0xf] %vm163, %v161
    %168 = vst.msk [vmem:[%s4 + $0x10] sm:$0xf] %vm163, %v162
  $region25: #{_lambda_.54} parent=0 // pred_fallthru
    _
  // Predicated region
  $region26: #{_lambda_.54} parent=0 // pred_check
    _
  $region27: #{_lambda_.54} parent=0 // pred_check_branch
    %170 = sbr.rel (0) target = $region29
  $region28: #{_lambda_.54} parent=0 // pred_region
    _
  $region29: #{_lambda_.54} parent=0 // pred_fallthru
    _
  // Predicated region
  $region30: #{_lambda_.54} parent=0 // pred_check
    _
  $region31: #{_lambda_.54} parent=0 // pred_check_branch
    %172 = sbr.rel (0) target = $region33
  $region32: #{_lambda_.54} parent=0 // pred_region
    _
  $region33: #{_lambda_.54} parent=0 // pred_fallthru
    _

// kernel: _lambda_.55
$region0: #{_lambda_.55}
  #allocation0 [shape = 'u32[]', space=smem, size = 0x4, offset = 0x4, fixed_abs, tag = 'smem constant byte address 0x4 - core index']
  #allocation1 [shape = 'u32[72,128]{1,0:T(1,128)}', space=vmem, size = 0x9000, scoped, tag = 'internal scratch']
  %s0 = inlined_call_operand.vmem [shape: bf16[40,64], index: 0, kind: input, shape index: {}]
  %s1 = inlined_call_operand.vmem [shape: f32[1,64], index: 1, kind: input, shape index: {}]
  %s2 = inlined_call_operand.vmem [shape: f32[1,64], index: 2, kind: input, shape index: {}]
  %s3 = inlined_call_operand.vmem [shape: bf16[64,256], index: 3, kind: input, shape index: {}]
  %s4 = inlined_call_operand.vmem [shape: f32[1,256], index: 4, kind: input, shape index: {}]
  %s5 = inlined_call_operand.vmem [shape: bf16[40,256], index: 5, kind: output, shape index: {}]
  %s6 = sld [smem:[#allocation0]]
  $region30: #{_lambda_.55} parent=0
    _
  %s8 = ssub.s32 1, %s6
  %s9 = scalar_select 0, %s8, %s6
  // Predicated region
  $region2: #{_lambda_.55} parent=0 // pred_check
    _
  $region3: #{_lambda_.55} parent=0 // pred_check_branch
    %11 = sbr.rel (0) target = $region5
  $region4: #{_lambda_.55} parent=0 // pred_region
    _
  $region5: #{_lambda_.55} parent=0 // pred_fallthru
    _
  // Predicated region
  $region6: #{_lambda_.55} parent=0 // pred_check
    _
  $region7: #{_lambda_.55} parent=0 // pred_check_branch
    %13 = sbr.rel (0) target = $region9
  $region8: #{_lambda_.55} parent=0 // pred_region
    _
  $region9: #{_lambda_.55} parent=0 // pred_fallthru
    _
  // Predicated region
  $region10: #{_lambda_.55} parent=0 // pred_check
    _
  $region11: #{_lambda_.55} parent=0 // pred_check_branch
    %15 = sbr.rel (0) target = $region13
  $region12: #{_lambda_.55} parent=0 // pred_region
    _
  $region13: #{_lambda_.55} parent=0 // pred_fallthru
    _
  // Predicated region
  $region14: #{_lambda_.55} parent=0 // pred_check
    _
  $region15: #{_lambda_.55} parent=0 // pred_check_branch
    %17 = sbr.rel (0) target = $region17
  $region16: #{_lambda_.55} parent=0 // pred_region
    _
  $region17: #{_lambda_.55} parent=0 // pred_fallthru
    _
  // Predicated region
  $region18: #{_lambda_.55} parent=0 // pred_check
    _
  $region19: #{_lambda_.55} parent=0 // pred_check_branch
    %19 = sbr.rel (0) target = $region21
  $region20: #{_lambda_.55} parent=0 // pred_region
    _
  $region21: #{_lambda_.55} parent=0 // pred_fallthru
    _
  %v21 = vld [vmem:[%s0] sm:$0xf]
  %v22 = vld [vmem:[%s0 + $0x4] sm:$0xf]
  %v23 = vld [vmem:[%s0 + $0x8] sm:$0xf]
  %v24 = vld [vmem:[%s0 + $0xc] sm:$0xf]
  %v25 = vld [vmem:[%s0 + $0x10] sm:$0xf]
  %v26 = vunpack.c.l.bf16 %v21
  %v27 = vunpack.c.l.bf16 %v22
  %v28 = vunpack.c.l.bf16 %v23
  %v29 = vunpack.c.l.bf16 %v24
  %v30 = vunpack.c.l.bf16 %v25
  %vm31 = vcmask 523264
  %v32 = vsel %vm31, %v26, 0.0
  %33 = vadd.xlane.f32.xlu0 %v32
  %v34 = vpop.xlane.xlu0 %33
  %v35 = vsel %vm31, %v27, 0.0
  %36 = vadd.xlane.f32.xlu0 %v35
  %v37 = vpop.xlane.xlu0 %36
  %v38 = vsel %vm31, %v28, 0.0
  %39 = vadd.xlane.f32.xlu0 %v38
  %v40 = vpop.xlane.xlu0 %39
  %v41 = vsel %vm31, %v29, 0.0
  %42 = vadd.xlane.f32.xlu0 %v41
  %v43 = vpop.xlane.xlu0 %42
  %v44 = vsel %vm31, %v30, 0.0
  %45 = vadd.xlane.f32.xlu0 %v44
  %v46 = vpop.xlane.xlu0 %45
  %v47 = vrcp.pop 64.0
  %v48 = vmul.f32 64.0, %v47
  %v49 = vsub.f32 1.0, %v48
  %v50 = vmul.f32 %v47, %v49
  %v51 = vadd.f32 %v47, %v50
  %vm52 = vweird.f32 %v47
  %v53 = vsel %vm52, %v47, %v51
  %v54 = vmul.f32 %v34, %v53
  %v55 = vmul.f32 %v37, %v53
  %v56 = vmul.f32 %v40, %v53
  %v57 = vmul.f32 %v43, %v53
  %v58 = vmul.f32 %v46, %v53
  %v59 = vsub.f32 %v26, %v54
  %v60 = vsub.f32 %v27, %v55
  %v61 = vsub.f32 %v28, %v56
  %v62 = vsub.f32 %v29, %v57
  %v63 = vsub.f32 %v30, %v58
  %v64 = vmul.f32 %v59, %v59
  %v65 = vmul.f32 %v60, %v60
  %v66 = vmul.f32 %v61, %v61
  %v67 = vmul.f32 %v62, %v62
  %v68 = vmul.f32 %v63, %v63
  %v69 = vsel %vm31, %v64, 0.0
  %70 = vadd.xlane.f32.xlu0 %v69
  %v71 = vpop.xlane.xlu0 %70
  %v72 = vsel %vm31, %v65, 0.0
  %73 = vadd.xlane.f32.xlu0 %v72
  %v74 = vpop.xlane.xlu0 %73
  %v75 = vsel %vm31, %v66, 0.0
  %76 = vadd.xlane.f32.xlu0 %v75
  %v77 = vpop.xlane.xlu0 %76
  %v78 = vsel %vm31, %v67, 0.0
  %79 = vadd.xlane.f32.xlu0 %v78
  %v80 = vpop.xlane.xlu0 %79
  %v81 = vsel %vm31, %v68, 0.0
  %82 = vadd.xlane.f32.xlu0 %v81
  %v83 = vpop.xlane.xlu0 %82
  %v84 = vmul.f32 %v71, %v53
  %v85 = vmul.f32 %v74, %v53
  %v86 = vmul.f32 %v77, %v53
  %v87 = vmul.f32 %v80, %v53
  %v88 = vmul.f32 %v83, %v53
  %v89 = vadd.f32 %v84, 1e-06
  %v90 = vadd.f32 %v85, 1e-06
  %v91 = vadd.f32 %v86, 1e-06
  %v92 = vadd.f32 %v87, 1e-06
  %v93 = vadd.f32 %v88, 1e-06
  %v94 = vrsqrt.pop %v89
  %v95 = vmul.f32 %v94, %v89
  %v96 = vmul.f32 %v95, %v94
  %v97 = vmul.f32 0.5, %v96
  %v98 = vsub.f32 1.5, %v97
  %v99 = vmul.f32 %v94, %v98
  %vm100 = vweird.f32 %v89
  %vm101 = vweird.f32 %v94
  %vm102 = vmor %vm100, %vm101
  %v103 = vsel %vm102, %v94, %v99
  %v104 = vrsqrt.pop %v90
  %v105 = vmul.f32 %v104, %v90
  %v106 = vmul.f32 %v105, %v104
  %v107 = vmul.f32 0.5, %v106
  %v108 = vsub.f32 1.5, %v107
  %v109 = vmul.f32 %v104, %v108
  %vm110 = vweird.f32 %v90
  %vm111 = vweird.f32 %v104
  %vm112 = vmor %vm110, %vm111
  %v113 = vsel %vm112, %v104, %v109
  %v114 = vrsqrt.pop %v91
  %v115 = vmul.f32 %v114, %v91
  %v116 = vmul.f32 %v115, %v114
  %v117 = vmul.f32 0.5, %v116
  %v118 = vsub.f32 1.5, %v117
  %v119 = vmul.f32 %v114, %v118
  %vm120 = vweird.f32 %v91
  %vm121 = vweird.f32 %v114
  %vm122 = vmor %vm120, %vm121
  %v123 = vsel %vm122, %v114, %v119
  %v124 = vrsqrt.pop %v92
  %v125 = vmul.f32 %v124, %v92
  %v126 = vmul.f32 %v125, %v124
  %v127 = vmul.f32 0.5, %v126
  %v128 = vsub.f32 1.5, %v127
  %v129 = vmul.f32 %v124, %v128
  %vm130 = vweird.f32 %v92
  %vm131 = vweird.f32 %v124
  %vm132 = vmor %vm130, %vm131
  %v133 = vsel %vm132, %v124, %v129
  %v134 = vrsqrt.pop %v93
  %v135 = vmul.f32 %v134, %v93
  %v136 = vmul.f32 %v135, %v134
  %v137 = vmul.f32 0.5, %v136
  %v138 = vsub.f32 1.5, %v137
  %v139 = vmul.f32 %v134, %v138
  %vm140 = vweird.f32 %v93
  %vm141 = vweird.f32 %v134
  %vm142 = vmor %vm140, %vm141
  %v143 = vsel %vm142, %v134, %v139
  %v144 = vmul.f32 %v59, %v103
  %v145 = vmul.f32 %v60, %v113
  %v146 = vmul.f32 %v61, %v123
  %v147 = vmul.f32 %v62, %v133
  %v148 = vmul.f32 %v63, %v143
  %v149 = vld [vmem:[%s1] sm:$0x1]
  %v151 = vperm.slane %v149, 0
  %v153 = vmul.f32 %v144, %v151
  %v154 = vmul.f32 %v145, %v151
  %v155 = vmul.f32 %v146, %v151
  %v156 = vmul.f32 %v147, %v151
  %v157 = vmul.f32 %v148, %v151
  %v158 = vld [vmem:[%s2] sm:$0x1]
  %v160 = vperm.slane %v158, 0
  %v162 = vadd.f32 %v153, %v160
  %v163 = vadd.f32 %v154, %v160
  %v164 = vadd.f32 %v155, %v160
  %v165 = vadd.f32 %v156, %v160
  %v166 = vadd.f32 %v157, %v160
  %v167 = vpack.c.bf16 %v163, %v162
  %v168 = vpack.c.bf16 %v165, %v164
  %v169 = vpack.c.bf16 %v166, %v166
  %v170 = vld [vmem:[%s3] sm:$0xff]
  %v171 = vld [vmem:[%s3 + $0x8] sm:$0xff]
  %v172 = vld [vmem:[%s3 + $0x10] sm:$0xff]
  %v173 = vld [vmem:[%s3 + $0x18] sm:$0xff]
  %v174 = vld [vmem:[%s3 + $0x20] sm:$0xff]
  %v175 = vld [vmem:[%s3 + $0x28] sm:$0xff]
  %v176 = vld [vmem:[%s3 + $0x30] sm:$0xff]
  %v177 = vld [vmem:[%s3 + $0x38] sm:$0xff]
  %v178 = vld [vmem:[%s4] sm:$0x3]
  %v180 = vperm.slane %v178, 0
  %v181 = vperm.slane %v178, 1
  %v192 = vunpack.c.l.b16 %v170
  %v193 = vunpack.c.h.b16 %v170
  %v194 = vunpack.c.l.b16 %v171
  %v195 = vunpack.c.h.b16 %v171
  %v196 = vunpack.c.l.b16 %v172
  %v197 = vunpack.c.h.b16 %v172
  %v198 = vunpack.c.l.b16 %v173
  %v199 = vunpack.c.h.b16 %v173
  %v200 = vunpack.c.l.b16 %v174
  %v201 = vunpack.c.h.b16 %v174
  %v202 = vunpack.c.l.b16 %v175
  %v203 = vunpack.c.h.b16 %v175
  %v204 = vunpack.c.l.b16 %v176
  %v205 = vunpack.c.h.b16 %v176
  %v206 = vunpack.c.l.b16 %v177
  %v207 = vunpack.c.h.b16 %v177
  %v208 = vpack.c.b16 %v194, %v192
  %v209 = vpack.c.b16 %v195, %v193
  %v210 = vpack.c.b16 %v198, %v196
  %v211 = vpack.c.b16 %v199, %v197
  %v212 = vpack.c.b16 %v202, %v200
  %v213 = vpack.c.b16 %v203, %v201
  %v214 = vpack.c.b16 %v206, %v204
  %v215 = vpack.c.b16 %v207, %v205
  %v225 = vsel %vm31, %v167, 0
  %v228 = vsel %vm31, %v168, 0
  %v231 = vsel %vm31, %v169, 0
  %233 = vmatpush.bf16.msra.mxu0 0
  %234 = vmatpush.bf16.msra.mxu0 0
  %235 = vmatpush.bf16.msra.mxu0 0
  %236 = vmatpush.bf16.msra.mxu0 0
  %237 = vmatpush.bf16.msra.mxu0 %v214
  %238 = vmatpush.bf16.msra.mxu0 %v212
  %239 = vmatpush.bf16.msra.mxu0 %v210
  %240 = vmatpush.bf16.msra.mxu0 %v208
  %241 = vmatmul.bf16.gmra.mxu0 %v225
  %v242 = vpop.f32.mrf.mxu0
  %v243 = vadd.f32 %v180, %v242
  %v244 = vpop.f32.mrf.mxu0
  %v245 = vadd.f32 %v180, %v244
  %246 = vmatmul.bf16.gmra.mxu0 %v228
  %v247 = vpop.f32.mrf.mxu0
  %v248 = vadd.f32 %v180, %v247
  %v249 = vpop.f32.mrf.mxu0
  %v250 = vadd.f32 %v180, %v249
  %251 = vmatmul.bf16.gmra.mxu0 %v231
  %v252 = vpop.f32.mrf.mxu0
  %v253 = vadd.f32 %v180, %v252
  %v254 = vpop.f32.mrf.mxu0
  %255 = vdwg.mxu0
  %256 = vmatpush.bf16.msra.mxu0 0
  %257 = vmatpush.bf16.msra.mxu0 0
  %258 = vmatpush.bf16.msra.mxu0 0
  %259 = vmatpush.bf16.msra.mxu0 0
  %260 = vmatpush.bf16.msra.mxu0 %v215
  %261 = vmatpush.bf16.msra.mxu0 %v213
  %262 = vmatpush.bf16.msra.mxu0 %v211
  %263 = vmatpush.bf16.msra.mxu0 %v209
  %264 = vmatmul.bf16.gmra.mxu0 %v225
  %v265 = vpop.f32.mrf.mxu0
  %v266 = vadd.f32 %v181, %v265
  %v267 = vpop.f32.mrf.mxu0
  %v268 = vadd.f32 %v181, %v267
  %269 = vmatmul.bf16.gmra.mxu0 %v228
  %v270 = vpop.f32.mrf.mxu0
  %v271 = vadd.f32 %v181, %v270
  %v272 = vpop.f32.mrf.mxu0
  %v273 = vadd.f32 %v181, %v272
  %274 = vmatmul.bf16.gmra.mxu0 %v231
  %v275 = vpop.f32.mrf.mxu0
  %v276 = vadd.f32 %v181, %v275
  %v277 = vpop.f32.mrf.mxu0
  %278 = vdwg.mxu0
  %v279 = vmul.f32 %v243, %v243
  %v280 = vmul.f32 %v266, %v266
  %v281 = vmul.f32 %v245, %v245
  %v282 = vmul.f32 %v268, %v268
  %v283 = vmul.f32 %v248, %v248
  %v284 = vmul.f32 %v271, %v271
  %v285 = vmul.f32 %v250, %v250
  %v286 = vmul.f32 %v273, %v273
  %v287 = vmul.f32 %v253, %v253
  %v288 = vmul.f32 %v276, %v276
  %v289 = vmul.f32 %v243, %v279
  %v290 = vmul.f32 %v266, %v280
  %v291 = vmul.f32 %v245, %v281
  %v292 = vmul.f32 %v268, %v282
  %v293 = vmul.f32 %v248, %v283
  %v294 = vmul.f32 %v271, %v284
  %v295 = vmul.f32 %v250, %v285
  %v296 = vmul.f32 %v273, %v286
  %v297 = vmul.f32 %v253, %v287
  %v298 = vmul.f32 %v276, %v288
  %v299 = vmul.f32 %v289, 0.044715
  %v300 = vmul.f32 %v290, 0.044715
  %v301 = vmul.f32 %v291, 0.044715
  %v302 = vmul.f32 %v292, 0.044715
  %v303 = vmul.f32 %v293, 0.044715
  %v304 = vmul.f32 %v294, 0.044715
  %v305 = vmul.f32 %v295, 0.044715
  %v306 = vmul.f32 %v296, 0.044715
  %v307 = vmul.f32 %v297, 0.044715
  %v308 = vmul.f32 %v298, 0.044715
  %v309 = vadd.f32 %v243, %v299
  %v310 = vadd.f32 %v266, %v300
  %v311 = vadd.f32 %v245, %v301
  %v312 = vadd.f32 %v268, %v302
  %v313 = vadd.f32 %v248, %v303
  %v314 = vadd.f32 %v271, %v304
  %v315 = vadd.f32 %v250, %v305
  %v316 = vadd.f32 %v273, %v306
  %v317 = vadd.f32 %v253, %v307
  %v318 = vadd.f32 %v276, %v308
  %v319 = vmul.f32 %v309, 0.7978846
  %v320 = vmul.f32 %v310, 0.7978846
  %v321 = vmul.f32 %v311, 0.7978846
  %v322 = vmul.f32 %v312, 0.7978846
  %v323 = vmul.f32 %v313, 0.7978846
  %v324 = vmul.f32 %v314, 0.7978846
  %v325 = vmul.f32 %v315, 0.7978846
  %v326 = vmul.f32 %v316, 0.7978846
  %v327 = vmul.f32 %v317, 0.7978846
  %v328 = vmul.f32 %v318, 0.7978846
  %v329 = vtanh.pop %v319
  %v330 = vtanh.pop %v320
  %v331 = vtanh.pop %v321
  %v332 = vtanh.pop %v322
  %v333 = vtanh.pop %v323
  %v334 = vtanh.pop %v324
  %v335 = vtanh.pop %v325
  %v336 = vtanh.pop %v326
  %v337 = vtanh.pop %v327
  %v338 = vtanh.pop %v328
  %v339 = vadd.f32 %v329, 1.0
  %v340 = vadd.f32 %v330, 1.0
  %v341 = vadd.f32 %v331, 1.0
  %v342 = vadd.f32 %v332, 1.0
  %v343 = vadd.f32 %v333, 1.0
  %v344 = vadd.f32 %v334, 1.0
  %v345 = vadd.f32 %v335, 1.0
  %v346 = vadd.f32 %v336, 1.0
  %v347 = vadd.f32 %v337, 1.0
  %v348 = vadd.f32 %v338, 1.0
  %v349 = vmul.f32 %v339, 0.5
  %v350 = vmul.f32 %v340, 0.5
  %v351 = vmul.f32 %v341, 0.5
  %v352 = vmul.f32 %v342, 0.5
  %v353 = vmul.f32 %v343, 0.5
  %v354 = vmul.f32 %v344, 0.5
  %v355 = vmul.f32 %v345, 0.5
  %v356 = vmul.f32 %v346, 0.5
  %v357 = vmul.f32 %v347, 0.5
  %v358 = vmul.f32 %v348, 0.5
  %v359 = vmul.f32 %v243, %v349
  %v360 = vmul.f32 %v266, %v350
  %v361 = vmul.f32 %v245, %v351
  %v362 = vmul.f32 %v268, %v352
  %v363 = vmul.f32 %v248, %v353
  %v364 = vmul.f32 %v271, %v354
  %v365 = vmul.f32 %v250, %v355
  %v366 = vmul.f32 %v273, %v356
  %v367 = vmul.f32 %v253, %v357
  %v368 = vmul.f32 %v276, %v358
  %v369 = vpack.c.bf16 %v360, %v359
  %v370 = vpack.c.bf16 %v362, %v361
  %v371 = vpack.c.bf16 %v364, %v363
  %v372 = vpack.c.bf16 %v366, %v365
  %v373 = vpack.c.bf16 %v368, %v367
  %374 = vst [vmem:[%s5] sm:$0xff] %v369
  %375 = vst [vmem:[%s5 + $0x8] sm:$0xff] %v370
  %376 = vst [vmem:[%s5 + $0x10] sm:$0xff] %v371
  %377 = vst [vmem:[%s5 + $0x18] sm:$0xff] %v372
  %378 = vst [vmem:[%s5 + $0x20] sm:$0xff] %v373
  // Predicated region
  $region22: #{_lambda_.55} parent=0 // pred_check
    _
  $region23: #{_lambda_.55} parent=0 // pred_check_branch
    %380 = sbr.rel (0) target = $region25
  $region24: #{_lambda_.55} parent=0 // pred_region
    _
  $region25: #{_lambda_.55} parent=0 // pred_fallthru
    _
  // Predicated region
  $region26: #{_lambda_.55} parent=0 // pred_check
    _
  $region27: #{_lambda_.55} parent=0 // pred_check_branch
    %382 = sbr.rel (0) target = $region29
  $region28: #{_lambda_.55} parent=0 // pred_region
    _
  $region29: #{_lambda_.55} parent=0 // pred_fallthru
    _

// kernel: _lambda_.56
$region0: #{_lambda_.56}
  #allocation0 [shape = 'u32[]', space=smem, size = 0x4, offset = 0x4, fixed_abs, tag = 'smem constant byte address 0x4 - core index']
  #allocation1 [shape = 'u32[72,128]{1,0:T(1,128)}', space=vmem, size = 0x9000, scoped, tag = 'internal scratch']
  #allocation2 [shape = 'f32[40,64]{1,0:T(8,128)}', space=vmem, size = 0x5000, scoped, tag = 'scratch operand']
  %s0 = inlined_call_operand.vmem [shape: bf16[40,256], index: 0, kind: input, shape index: {}]
  %s1 = inlined_call_operand.vmem [shape: bf16[256,64], index: 1, kind: input, shape index: {}]
  %s2 = inlined_call_operand.vmem [shape: f32[1,64], index: 2, kind: input, shape index: {}]
  %s3 = inlined_call_operand.vmem [shape: bf16[40,64], index: 3, kind: input, shape index: {}]
  %s4 = inlined_call_operand.vmem [shape: bf16[40,64], index: 4, kind: output, shape index: {}]
  %s5 = sld [smem:[#allocation0]]
  $region34: #{_lambda_.56} parent=0
    _
  %s7 = ssub.s32 1, %s5
  %s8 = scalar_select 0, %s7, %s5
  // Predicated region
  $region2: #{_lambda_.56} parent=0 // pred_check
    _
  $region3: #{_lambda_.56} parent=0 // pred_check_branch
    %10 = sbr.rel (0) target = $region5
  $region4: #{_lambda_.56} parent=0 // pred_region
    _
  $region5: #{_lambda_.56} parent=0 // pred_fallthru
    _
  // Predicated region
  $region6: #{_lambda_.56} parent=0 // pred_check
    _
  $region7: #{_lambda_.56} parent=0 // pred_check_branch
    %12 = sbr.rel (0) target = $region9
  $region8: #{_lambda_.56} parent=0 // pred_region
    _
  $region9: #{_lambda_.56} parent=0 // pred_fallthru
    _
  // Predicated region
  $region10: #{_lambda_.56} parent=0 // pred_check
    _
  $region11: #{_lambda_.56} parent=0 // pred_check_branch
    %14 = sbr.rel (0) target = $region13
  $region12: #{_lambda_.56} parent=0 // pred_region
    _
  $region13: #{_lambda_.56} parent=0 // pred_fallthru
    _
  // Predicated region
  $region14: #{_lambda_.56} parent=0 // pred_check
    _
  $region15: #{_lambda_.56} parent=0 // pred_check_branch
    %16 = sbr.rel (0) target = $region17
  $region16: #{_lambda_.56} parent=0 // pred_region
    _
  $region17: #{_lambda_.56} parent=0 // pred_fallthru
    _
  %p17 = scmp.eq.s32.totalorder 0, 0
  // Predicated region
  $region18: #{_lambda_.56} parent=0 // pred_check
    %p18 = pneg %p17
  $region19: #{_lambda_.56} parent=0 // pred_check_branch
    %20 = sbr.rel (%p18) target = $region21
  $region20: #{_lambda_.56} parent=0 // pred_region
    %vm21 = vcmask 523264
    %22 = vst.msk [vmem:[#allocation2] sm:$0xff] %vm21, 0.0
    %23 = vst.msk [vmem:[#allocation2 + $0x8] sm:$0xff] %vm21, 0.0
    %24 = vst.msk [vmem:[#allocation2 + $0x10] sm:$0xff] %vm21, 0.0
    %25 = vst.msk [vmem:[#allocation2 + $0x18] sm:$0xff] %vm21, 0.0
    %26 = vst.msk [vmem:[#allocation2 + $0x20] sm:$0xff] %vm21, 0.0
  $region21: #{_lambda_.56} parent=0 // pred_fallthru
    _
  %v27 = vld [vmem:[#allocation2] sm:$0xff]
  %v28 = vld [vmem:[#allocation2 + $0x8] sm:$0xff]
  %v29 = vld [vmem:[#allocation2 + $0x10] sm:$0xff]
  %v30 = vld [vmem:[#allocation2 + $0x18] sm:$0xff]
  %v31 = vld [vmem:[#allocation2 + $0x20] sm:$0xff]
  %v32 = vld [vmem:[%s0] sm:$0xff]
  %v33 = vld [vmem:[%s0 + $0x8] sm:$0xff]
  %v34 = vld [vmem:[%s0 + $0x10] sm:$0xff]
  %v35 = vld [vmem:[%s0 + $0x18] sm:$0xff]
  %v36 = vld [vmem:[%s0 + $0x20] sm:$0xff]
  %v37 = vld [vmem:[%s1] sm:$0xf]
  %v38 = vld [vmem:[%s1 + $0x4] sm:$0xf]
  %v39 = vld [vmem:[%s1 + $0x8] sm:$0xf]
  %v40 = vld [vmem:[%s1 + $0xc] sm:$0xf]
  %v41 = vld [vmem:[%s1 + $0x10] sm:$0xf]
  %v42 = vld [vmem:[%s1 + $0x14] sm:$0xf]
  %v43 = vld [vmem:[%s1 + $0x18] sm:$0xf]
  %v44 = vld [vmem:[%s1 + $0x1c] sm:$0xf]
  %v45 = vld [vmem:[%s1 + $0x20] sm:$0xf]
  %v46 = vld [vmem:[%s1 + $0x24] sm:$0xf]
  %v47 = vld [vmem:[%s1 + $0x28] sm:$0xf]
  %v48 = vld [vmem:[%s1 + $0x2c] sm:$0xf]
  %v49 = vld [vmem:[%s1 + $0x30] sm:$0xf]
  %v50 = vld [vmem:[%s1 + $0x34] sm:$0xf]
  %v51 = vld [vmem:[%s1 + $0x38] sm:$0xf]
  %v52 = vld [vmem:[%s1 + $0x3c] sm:$0xf]
  %v53 = vld [vmem:[%s1 + $0x40] sm:$0xf]
  %v54 = vld [vmem:[%s1 + $0x44] sm:$0xf]
  %v55 = vld [vmem:[%s1 + $0x48] sm:$0xf]
  %v56 = vld [vmem:[%s1 + $0x4c] sm:$0xf]
  %v57 = vld [vmem:[%s1 + $0x50] sm:$0xf]
  %v58 = vld [vmem:[%s1 + $0x54] sm:$0xf]
  %v59 = vld [vmem:[%s1 + $0x58] sm:$0xf]
  %v60 = vld [vmem:[%s1 + $0x5c] sm:$0xf]
  %v61 = vld [vmem:[%s1 + $0x60] sm:$0xf]
  %v62 = vld [vmem:[%s1 + $0x64] sm:$0xf]
  %v63 = vld [vmem:[%s1 + $0x68] sm:$0xf]
  %v64 = vld [vmem:[%s1 + $0x6c] sm:$0xf]
  %v65 = vld [vmem:[%s1 + $0x70] sm:$0xf]
  %v66 = vld [vmem:[%s1 + $0x74] sm:$0xf]
  %v67 = vld [vmem:[%s1 + $0x78] sm:$0xf]
  %v68 = vld [vmem:[%s1 + $0x7c] sm:$0xf]
  %v74 = vunpack.c.l.b16 %v32
  %v75 = vunpack.c.h.b16 %v32
  %v76 = vunpack.c.l.b16 %v33
  %v77 = vunpack.c.h.b16 %v33
  %v78 = vunpack.c.l.b16 %v34
  %v79 = vunpack.c.h.b16 %v34
  %v80 = vunpack.c.l.b16 %v35
  %v81 = vunpack.c.h.b16 %v35
  %v82 = vunpack.c.l.b16 %v36
  %v83 = vunpack.c.h.b16 %v36
  %v84 = vpack.c.b16 %v76, %v74
  %v85 = vpack.c.b16 %v77, %v75
  %v86 = vpack.c.b16 %v80, %v78
  %v87 = vpack.c.b16 %v81, %v79
  %v88 = vpack.c.b16 %v82, %v82
  %v89 = vpack.c.b16 %v83, %v83
  %v128 = vunpack.c.l.b16 %v37
  %v129 = vunpack.c.l.b16 %v38
  %v130 = vunpack.c.l.b16 %v39
  %v131 = vunpack.c.l.b16 %v40
  %v132 = vunpack.c.l.b16 %v41
  %v133 = vunpack.c.l.b16 %v42
  %v134 = vunpack.c.l.b16 %v43
  %v135 = vunpack.c.l.b16 %v44
  %v136 = vunpack.c.l.b16 %v45
  %v137 = vunpack.c.l.b16 %v46
  %v138 = vunpack.c.l.b16 %v47
  %v139 = vunpack.c.l.b16 %v48
  %v140 = vunpack.c.l.b16 %v49
  %v141 = vunpack.c.l.b16 %v50
  %v142 = vunpack.c.l.b16 %v51
  %v143 = vunpack.c.l.b16 %v52
  %v144 = vunpack.c.l.b16 %v53
  %v145 = vunpack.c.l.b16 %v54
  %v146 = vunpack.c.l.b16 %v55
  %v147 = vunpack.c.l.b16 %v56
  %v148 = vunpack.c.l.b16 %v57
  %v149 = vunpack.c.l.b16 %v58
  %v150 = vunpack.c.l.b16 %v59
  %v151 = vunpack.c.l.b16 %v60
  %v152 = vunpack.c.l.b16 %v61
  %v153 = vunpack.c.l.b16 %v62
  %v154 = vunpack.c.l.b16 %v63
  %v155 = vunpack.c.l.b16 %v64
  %v156 = vunpack.c.l.b16 %v65
  %v157 = vunpack.c.l.b16 %v66
  %v158 = vunpack.c.l.b16 %v67
  %v159 = vunpack.c.l.b16 %v68
  %v160 = vpack.c.b16 %v129, %v128
  %v161 = vpack.c.b16 %v131, %v130
  %v162 = vpack.c.b16 %v133, %v132
  %v163 = vpack.c.b16 %v135, %v134
  %v164 = vpack.c.b16 %v137, %v136
  %v165 = vpack.c.b16 %v139, %v138
  %v166 = vpack.c.b16 %v141, %v140
  %v167 = vpack.c.b16 %v143, %v142
  %v168 = vpack.c.b16 %v145, %v144
  %v169 = vpack.c.b16 %v147, %v146
  %v170 = vpack.c.b16 %v149, %v148
  %v171 = vpack.c.b16 %v151, %v150
  %v172 = vpack.c.b16 %v153, %v152
  %v173 = vpack.c.b16 %v155, %v154
  %v174 = vpack.c.b16 %v157, %v156
  %v175 = vpack.c.b16 %v159, %v158
  %192 = vmatpush.bf16.msra.mxu0 %v167
  %193 = vmatpush.bf16.msra.mxu0 %v166
  %194 = vmatpush.bf16.msra.mxu0 %v165
  %195 = vmatpush.bf16.msra.mxu0 %v164
  %196 = vmatpush.bf16.msra.mxu0 %v163
  %197 = vmatpush.bf16.msra.mxu0 %v162
  %198 = vmatpush.bf16.msra.mxu0 %v161
  %199 = vmatpush.bf16.msra.mxu0 %v160
  %200 = vmatmul.bf16.gmra.mxu0 %v84
  %v201 = vpop.f32.mrf.mxu0
  %v202 = vadd.f32 0.0, %v201
  %v203 = vpop.f32.mrf.mxu0
  %v204 = vadd.f32 0.0, %v203
  %205 = vmatmul.bf16.gmra.mxu0 %v86
  %v206 = vpop.f32.mrf.mxu0
  %v207 = vadd.f32 0.0, %v206
  %v208 = vpop.f32.mrf.mxu0
  %v209 = vadd.f32 0.0, %v208
  %210 = vmatmul.bf16.gmra.mxu0 %v88
  %v211 = vpop.f32.mrf.mxu0
  %v212 = vadd.f32 0.0, %v211
  %v213 = vpop.f32.mrf.mxu0
  %214 = vdwg.mxu0
  %215 = vmatpush.bf16.msra.mxu0 %v175
  %216 = vmatpush.bf16.msra.mxu0 %v174
  %217 = vmatpush.bf16.msra.mxu0 %v173
  %218 = vmatpush.bf16.msra.mxu0 %v172
  %219 = vmatpush.bf16.msra.mxu0 %v171
  %220 = vmatpush.bf16.msra.mxu0 %v170
  %221 = vmatpush.bf16.msra.mxu0 %v169
  %222 = vmatpush.bf16.msra.mxu0 %v168
  %223 = vmatmul.bf16.gmra.mxu0 %v85
  %v224 = vpop.f32.mrf.mxu0
  %v225 = vadd.f32 %v202, %v224
  %v226 = vpop.f32.mrf.mxu0
  %v227 = vadd.f32 %v204, %v226
  %228 = vmatmul.bf16.gmra.mxu0 %v87
  %v229 = vpop.f32.mrf.mxu0
  %v230 = vadd.f32 %v207, %v229
  %v231 = vpop.f32.mrf.mxu0
  %v232 = vadd.f32 %v209, %v231
  %233 = vmatmul.bf16.gmra.mxu0 %v89
  %v234 = vpop.f32.mrf.mxu0
  %v235 = vadd.f32 %v212, %v234
  %v236 = vpop.f32.mrf.mxu0
  %237 = vdwg.mxu0
  %v238 = vadd.f32 %v27, %v225
  %v239 = vadd.f32 %v28, %v227
  %v240 = vadd.f32 %v29, %v230
  %v241 = vadd.f32 %v30, %v232
  %v242 = vadd.f32 %v31, %v235
  %vm243 = vcmask 523264
  %244 = vst.msk [vmem:[#allocation2] sm:$0xff] %vm243, %v238
  %245 = vst.msk [vmem:[#allocation2 + $0x8] sm:$0xff] %vm243, %v239
  %246 = vst.msk [vmem:[#allocation2 + $0x10] sm:$0xff] %vm243, %v240
  %247 = vst.msk [vmem:[#allocation2 + $0x18] sm:$0xff] %vm243, %v241
  %248 = vst.msk [vmem:[#allocation2 + $0x20] sm:$0xff] %vm243, %v242
  // Predicated region
  $region22: #{_lambda_.56} parent=0 // pred_check
    %p249 = pneg %p17
  $region23: #{_lambda_.56} parent=0 // pred_check_branch
    %251 = sbr.rel (%p249) target = $region25
  $region24: #{_lambda_.56} parent=0 // pred_region
    %v252 = vld [vmem:[#allocation2] sm:$0xff]
    %v253 = vld [vmem:[#allocation2 + $0x8] sm:$0xff]
    %v254 = vld [vmem:[#allocation2 + $0x10] sm:$0xff]
    %v255 = vld [vmem:[#allocation2 + $0x18] sm:$0xff]
    %v256 = vld [vmem:[#allocation2 + $0x20] sm:$0xff]
    %v257 = vld [vmem:[%s2] sm:$0x1]
    %v259 = vperm.slane %v257, 0
    %v261 = vadd.f32 %v252, %v259
    %v262 = vadd.f32 %v253, %v259
    %v263 = vadd.f32 %v254, %v259
    %v264 = vadd.f32 %v255, %v259
    %v265 = vadd.f32 %v256, %v259
    %v266 = vld [vmem:[%s3] sm:$0xf]
    %v267 = vld [vmem:[%s3 + $0x4] sm:$0xf]
    %v268 = vld [vmem:[%s3 + $0x8] sm:$0xf]
    %v269 = vld [vmem:[%s3 + $0xc] sm:$0xf]
    %v270 = vld [vmem:[%s3 + $0x10] sm:$0xf]
    %v271 = vunpack.c.l.bf16 %v266
    %v272 = vunpack.c.l.bf16 %v267
    %v273 = vunpack.c.l.bf16 %v268
    %v274 = vunpack.c.l.bf16 %v269
    %v275 = vunpack.c.l.bf16 %v270
    %v276 = vadd.f32 %v271, %v261
    %v277 = vadd.f32 %v272, %v262
    %v278 = vadd.f32 %v273, %v263
    %v279 = vadd.f32 %v274, %v264
    %v280 = vadd.f32 %v275, %v265
    %v281 = vpack.c.bf16 %v276, %v276
    %v282 = vpack.c.bf16 %v277, %v277
    %v283 = vpack.c.bf16 %v278, %v278
    %v284 = vpack.c.bf16 %v279, %v279
    %v285 = vpack.c.bf16 %v280, %v280
    %vm286 = vcmask 519168
    %287 = vst.msk [vmem:[%s4] sm:$0xf] %vm286, %v281
    %288 = vst.msk [vmem:[%s4 + $0x4] sm:$0xf] %vm286, %v282
    %289 = vst.msk [vmem:[%s4 + $0x8] sm:$0xf] %vm286, %v283
    %290 = vst.msk [vmem:[%s4 + $0xc] sm:$0xf] %vm286, %v284
    %291 = vst.msk [vmem:[%s4 + $0x10] sm:$0xf] %vm286, %v285
  $region25: #{_lambda_.56} parent=0 // pred_fallthru
    _
  // Predicated region
  $region26: #{_lambda_.56} parent=0 // pred_check
    _
  $region27: #{_lambda_.56} parent=0 // pred_check_branch
    %293 = sbr.rel (0) target = $region29
  $region28: #{_lambda_.56} parent=0 // pred_region
    _
  $region29: #{_lambda_.56} parent=0 // pred_fallthru
    _
  // Predicated region
  $region30: #{_lambda_.56} parent=0 // pred_check
    _
  $region31: #{_lambda_.56} parent=0 // pred_check_branch
    %295 = sbr.rel (0) target = $region33
  $region32: #{_lambda_.56} parent=0 // pred_region
    _
  $region33: #{_lambda_.56} parent=0 // pred_fallthru
    _

// kernel: _lambda_.62
$region0: #{_lambda_.62}
  #allocation0 [shape = 'u32[]', space=smem, size = 0x4, offset = 0x4, fixed_abs, tag = 'smem constant byte address 0x4 - core index']
  #allocation1 [shape = 'u32[72,128]{1,0:T(1,128)}', space=vmem, size = 0x9000, scoped, tag = 'internal scratch']
  %s0 = inlined_call_operand.vmem [shape: bf16[2,16,64], index: 0, kind: input, shape index: {}]
  %s1 = inlined_call_operand.vmem [shape: f32[1,16,64], index: 1, kind: input, shape index: {}]
  %s2 = inlined_call_operand.vmem [shape: f32[1,64], index: 2, kind: input, shape index: {}]
  %s3 = inlined_call_operand.vmem [shape: f32[1,64], index: 3, kind: input, shape index: {}]
  %s4 = inlined_call_operand.vmem [shape: bf16[64,64], index: 4, kind: input, shape index: {}]
  %s5 = inlined_call_operand.vmem [shape: f32[1,64], index: 5, kind: input, shape index: {}]
  %s6 = inlined_call_operand.vmem [shape: f32[2,16,64], index: 6, kind: output, shape index: {}]
  %s7 = sld [smem:[#allocation0]]
  $region57: #{_lambda_.62} parent=0
    _
  %s9 = ssub.s32 1, %s7
  %s10 = scalar_select 0, %s9, %s7
  loop: start=0, step=1, limit=4
  $region2: #{_lambda_.62} parent=0 // loop_pre_header
    _
  $region3: #{_lambda_.62} parent=0 // loop_header
    %s12 = sphi 0, %s16
    %p13 = scmp.ge.s32.totalorder %s12, 4
    %s19 = sphi 0, %s31
    %s20 = sphi 0, %s27
    %s21 = sphi 0, %s19
    %s22 = sphi 0, %s20
    %s23 = sphi 0, %s21
    %s24 = sphi 0, %s22
    %s34 = sphi 0, %s36
    %s37 = sphi 0, %s34
    %s38 = sphi 0, %s37
    %s54 = sphi 0, %s38
    %s58 = sphi 0, %s58
    %s60 = sphi 0, %s58
    %s61 = sphi 0, %s60
    %s75 = sphi 0, %s61
    %s79 = sphi 0, %s79
    %s81 = sphi 0, %s79
    %s82 = sphi 0, %s81
    %s96 = sphi 0, %s82
    %s100 = sphi 0, %s100
    %s102 = sphi 0, %s100
    %s103 = sphi 0, %s102
    %s117 = sphi 0, %s103
    %s123 = sphi 0, %s125
    %s126 = sphi 0, %s123
    %s127 = sphi 0, %s126
    %s143 = sphi 0, %s127
    %s149 = sphi 0, %s151
    %s152 = sphi 0, %s149
    %s153 = sphi 0, %s152
    %s169 = sphi 0, %s153
    %s177 = sphi 0, %s179
    %s180 = sphi 0, %s177
    %s181 = sphi 0, %s180
    %s197 = sphi 0, %s181
  $region4: #{_lambda_.62} parent=0 // loop_header_branch
    %15 = sbr.rel (%p13) target = $region8
  $region5: #{_lambda_.62} parent=0 // loop_body
    %s17 = ssub.s32 %s12, 1
    %s18 = ssub.s32 %s12, 2
    %s25 = sadd.s32 1, %s20
    %p26 = scmp.ge.s32.totalorder %s25, 1
    %s27 = scalar_select %p26, 0, %s25
    %s28 = sadd.s32 1, %s19
    %s29 = scalar_select %p26, %s28, %s19
    %p30 = scmp.ge.s32.totalorder %s29, 2
    %s31 = scalar_select %p30, 0, %s29
    %s32 = ssub.s32 %s19, %s31
    %p33 = scmp.eq.s32.totalorder %s32, 0
    %s35 = sadd.s32 %s34, 1
    %s36 = scalar_select %p33, %s34, %s35
    %p39 = pneg %p33
    %p40 = scmp.eq.s32.totalorder %s12, 1
    %p41 = por %p39, %p40
    %p42 = scmp.ne.s32.totalorder %s34, %s37
    %p43 = scmp.eq.s32.totalorder %s12, 0
    %p44 = por %p42, %p43
    %p45 = scmp.ne.s32.totalorder %s34, %s37
    %p46 = scmp.eq.s32.totalorder %s17, 1
    %p47 = por %p45, %p46
    %p48 = scmp.ne.s32.totalorder %s37, %s38
    %p49 = scmp.eq.s32.totalorder %s17, 0
    %p50 = por %p48, %p49
    %p51 = scmp.ne.s32.totalorder %s37, %s38
    %p52 = scmp.eq.s32.totalorder %s18, 1
    %p53 = por %p51, %p52
    %p55 = scmp.ne.s32.totalorder %s38, %s54
    %p56 = scmp.eq.s32.totalorder %s18, 0
    %p57 = por %p55, %p56
    %s59 = sadd.s32 %s58, 1
    %p62 = scmp.eq.s32.totalorder %s12, 1
    %p63 = scmp.ne.s32.totalorder %s58, %s60
    %p64 = scmp.eq.s32.totalorder %s12, 0
    %p65 = por %p63, %p64
    %p66 = scmp.ne.s32.totalorder %s58, %s60
    %p67 = scmp.eq.s32.totalorder %s17, 1
    %p68 = por %p66, %p67
    %p69 = scmp.ne.s32.totalorder %s60, %s61
    %p70 = scmp.eq.s32.totalorder %s17, 0
    %p71 = por %p69, %p70
    %p72 = scmp.ne.s32.totalorder %s60, %s61
    %p73 = scmp.eq.s32.totalorder %s18, 1
    %p74 = por %p72, %p73
    %p76 = scmp.ne.s32.totalorder %s61, %s75
    %p77 = scmp.eq.s32.totalorder %s18, 0
    %p78 = por %p76, %p77
    %s80 = sadd.s32 %s79, 1
    %p83 = scmp.eq.s32.totalorder %s12, 1
    %p84 = scmp.ne.s32.totalorder %s79, %s81
    %p85 = scmp.eq.s32.totalorder %s12, 0
    %p86 = por %p84, %p85
    %p87 = scmp.ne.s32.totalorder %s79, %s81
    %p88 = scmp.eq.s32.totalorder %s17, 1
    %p89 = por %p87, %p88
    %p90 = scmp.ne.s32.totalorder %s81, %s82
    %p91 = scmp.eq.s32.totalorder %s17, 0
    %p92 = por %p90, %p91
    %p93 = scmp.ne.s32.totalorder %s81, %s82
    %p94 = scmp.eq.s32.totalorder %s18, 1
    %p95 = por %p93, %p94
    %p97 = scmp.ne.s32.totalorder %s82, %s96
    %p98 = scmp.eq.s32.totalorder %s18, 0
    %p99 = por %p97, %p98
    %s101 = sadd.s32 %s100, 1
    %p104 = scmp.eq.s32.totalorder %s12, 1
    %p105 = scmp.ne.s32.totalorder %s100, %s102
    %p106 = scmp.eq.s32.totalorder %s12, 0
    %p107 = por %p105, %p106
    %p108 = scmp.ne.s32.totalorder %s100, %s102
    %p109 = scmp.eq.s32.totalorder %s17, 1
    %p110 = por %p108, %p109
    %p111 = scmp.ne.s32.totalorder %s102, %s103
    %p112 = scmp.eq.s32.totalorder %s17, 0
    %p113 = por %p111, %p112
    %p114 = scmp.ne.s32.totalorder %s102, %s103
    %p115 = scmp.eq.s32.totalorder %s18, 1
    %p116 = por %p114, %p115
    %p118 = scmp.ne.s32.totalorder %s103, %s117
    %p119 = scmp.eq.s32.totalorder %s18, 0
    %p120 = por %p118, %p119
    %s121 = ssub.s32 %s20, %s27
    %p122 = scmp.eq.s32.totalorder %s121, 0
    %s124 = sadd.s32 %s123, 1
    %s125 = scalar_select %p122, %s123, %s124
    %p128 = pneg %p122
    %p129 = scmp.eq.s32.totalorder %s12, 1
    %p130 = por %p128, %p129
    %p131 = scmp.ne.s32.totalorder %s123, %s126
    %p132 = scmp.eq.s32.totalorder %s12, 0
    %p133 = por %p131, %p132
    %p134 = scmp.ne.s32.totalorder %s123, %s126
    %p135 = scmp.eq.s32.totalorder %s17, 1
    %p136 = por %p134, %p135
    %p137 = scmp.ne.s32.totalorder %s126, %s127
    %p138 = scmp.eq.s32.totalorder %s17, 0
    %p139 = por %p137, %p138
    %p140 = scmp.ne.s32.totalorder %s126, %s127
    %p141 = scmp.eq.s32.totalorder %s18, 1
    %p142 = por %p140, %p141
    %p144 = scmp.ne.s32.totalorder %s127, %s143
    %p145 = scmp.eq.s32.totalorder %s18, 0
    %p146 = por %p144, %p145
    %s147 = ssub.s32 %s20, %s27
    %p148 = scmp.eq.s32.totalorder %s147, 0
    %s150 = sadd.s32 %s149, 1
    %s151 = scalar_select %p148, %s149, %s150
    %p154 = pneg %p148
    %p155 = scmp.eq.s32.totalorder %s12, 1
    %p156 = por %p154, %p155
    %p157 = scmp.ne.s32.totalorder %s149, %s152
    %p158 = scmp.eq.s32.totalorder %s12, 0
    %p159 = por %p157, %p158
    %p160 = scmp.ne.s32.totalorder %s149, %s152
    %p161 = scmp.eq.s32.totalorder %s17, 1
    %p162 = por %p160, %p161
    %p163 = scmp.ne.s32.totalorder %s152, %s153
    %p164 = scmp.eq.s32.totalorder %s17, 0
    %p165 = por %p163, %p164
    %p166 = scmp.ne.s32.totalorder %s152, %s153
    %p167 = scmp.eq.s32.totalorder %s18, 1
    %p168 = por %p166, %p167
    %p170 = scmp.ne.s32.totalorder %s153, %s169
    %p171 = scmp.eq.s32.totalorder %s18, 0
    %p172 = por %p170, %p171
    %s173 = ssub.s32 %s19, %s31
    %s174 = ssub.s32 %s20, %s27
    %s175 = sor.u32 %s173, %s174
    %p176 = scmp.eq.s32.totalorder %s175, 0
    %s178 = sadd.s32 %s177, 1
    %s179 = scalar_select %p176, %s177, %s178
    %p182 = pneg %p176
    %p183 = scmp.eq.s32.totalorder %s12, 1
    %p184 = por %p182, %p183
    %p185 = scmp.ne.s32.totalorder %s177, %s180
    %p186 = scmp.eq.s32.totalorder %s12, 0
    %p187 = por %p185, %p186
    %p188 = scmp.ne.s32.totalorder %s177, %s180
    %p189 = scmp.eq.s32.totalorder %s17, 1
    %p190 = por %p188, %p189
    %p191 = scmp.ne.s32.totalorder %s180, %s181
    %p192 = scmp.eq.s32.totalorder %s17, 0
    %p193 = por %p191, %p192
    %p194 = scmp.ne.s32.totalorder %s180, %s181
    %p195 = scmp.eq.s32.totalorder %s18, 1
    %p196 = por %p194, %p195
    %p198 = scmp.ne.s32.totalorder %s181, %s197
    %p199 = scmp.eq.s32.totalorder %s18, 0
    %p200 = por %p198, %p199
    %p201 = scmp.le.s32.totalorder 1, %s12
    %p202 = scmp.lt.s32.totalorder %s12, 3
    %p203 = pnand %p201, %p202
    %p204 = pneg %p203
    // Predicated region
    $region9: #{_lambda_.62} parent=5 // pred_check
      _
    $region10: #{_lambda_.62} parent=5 // pred_check_branch
      %206 = sbr.rel (%p203) target = $region12
    $region11: #{_lambda_.62} parent=5 // pred_region
      %s207 = ssub.s32 %s12, 1
      // Predicated region
      $region13: #{_lambda_.62} parent=11 // pred_check
        %p208 = pneg %p71
      $region14: #{_lambda_.62} parent=11 // pred_check_branch
        %210 = sbr.rel (%p208) target = $region16
      $region15: #{_lambda_.62} parent=11 // pred_region
        _
      $region16: #{_lambda_.62} parent=11 // pred_fallthru
        _
      // Predicated region
      $region17: #{_lambda_.62} parent=11 // pred_check
        %p211 = pneg %p92
      $region18: #{_lambda_.62} parent=11 // pred_check_branch
        %213 = sbr.rel (%p211) target = $region20
      $region19: #{_lambda_.62} parent=11 // pred_region
        _
      $region20: #{_lambda_.62} parent=11 // pred_fallthru
        _
      // Predicated region
      $region21: #{_lambda_.62} parent=11 // pred_check
        %p214 = pneg %p113
      $region22: #{_lambda_.62} parent=11 // pred_check_branch
        %216 = sbr.rel (%p214) target = $region24
      $region23: #{_lambda_.62} parent=11 // pred_region
        _
      $region24: #{_lambda_.62} parent=11 // pred_fallthru
        _
      // Predicated region
      $region25: #{_lambda_.62} parent=11 // pred_check
        %p217 = pneg %p139
      $region26: #{_lambda_.62} parent=11 // pred_check_branch
        %219 = sbr.rel (%p217) target = $region28
      $region27: #{_lambda_.62} parent=11 // pred_region
        %p220 = scmp.lt.s32.totalorder %s22, 0
        %s221 = scalar_select %p220, %s22, 0
        %s222 = smul.addr %s221, 4
        %s223 = scalar_lea.vmem %s4, %s222
      $region28: #{_lambda_.62} parent=11 // pred_fallthru
        _
      // Predicated region
      $region29: #{_lambda_.62} parent=11 // pred_check
        %p224 = pneg %p165
      $region30: #{_lambda_.62} parent=11 // pred_check_branch
        %226 = sbr.rel (%p224) target = $region32
      $region31: #{_lambda_.62} parent=11 // pred_region
        %p227 = scmp.lt.s32.totalorder %s22, 0
        %s228 = scalar_select %p227, %s22, 0
        %s229 = scalar_lea.vmem %s5, %s228
      $region32: #{_lambda_.62} parent=11 // pred_fallthru
        _
    $region12: #{_lambda_.62} parent=5 // pred_fallthru
      _
    %p230 = scmp.lt.s32.totalorder %s12, 2
    // Predicated region
    $region33: #{_lambda_.62} parent=5 // pred_check
      %p231 = pneg %p230
    $region34: #{_lambda_.62} parent=5 // pred_check_branch
      %233 = sbr.rel (%p231) target = $region36
    $region35: #{_lambda_.62} parent=5 // pred_region
      // Predicated region
      $region37: #{_lambda_.62} parent=35 // pred_check
        %p234 = pneg %p44
      $region38: #{_lambda_.62} parent=35 // pred_check_branch
        %236 = sbr.rel (%p234) target = $region40
      $region39: #{_lambda_.62} parent=35 // pred_region
        %p237 = scmp.lt.s32.totalorder %s19, 1
        %s238 = scalar_select %p237, %s19, 1
        %s239 = smul.addr %s238, 2
        %s240 = smul.addr %s239, 4
        %s241 = scalar_lea.vmem %s0, %s240
      $region40: #{_lambda_.62} parent=35 // pred_fallthru
        _
    $region36: #{_lambda_.62} parent=5 // pred_fallthru
      _
    %p242 = scmp.le.s32.totalorder 1, %s12
    %p243 = scmp.lt.s32.totalorder %s12, 3
    %p244 = pnand %p242, %p243
    %p245 = pneg %p244
    // Predicated region
    $region41: #{_lambda_.62} parent=5 // pred_check
      _
    $region42: #{_lambda_.62} parent=5 // pred_check_branch
      %247 = sbr.rel (%p244) target = $region44
    $region43: #{_lambda_.62} parent=5 // pred_region
      %s248 = ssub.s32 %s12, 1
      %p249 = scmp.lt.s32.totalorder %s21, 1
      %s250 = scalar_select %p249, %s21, 1
      %s251 = smul.addr %s250, 2
      %s252 = smul.addr %s251, 4
      %s253 = scalar_lea.vmem %s0, %s252
      %p254 = pneg %p50
      %p255 = pneg %p47
      %p256 = pneg %p71
      %p257 = pneg %p68
      %p258 = pneg %p92
      %p259 = pneg %p89
      %p260 = pneg %p113
      %p261 = pneg %p110
      %p262 = scmp.lt.s32.totalorder %s22, 0
      %s263 = scalar_select %p262, %s22, 0
      %s264 = smul.addr %s263, 4
      %s265 = scalar_lea.vmem %s4, %s264
      %p266 = pneg %p139
      %p267 = pneg %p136
      %p268 = scmp.lt.s32.totalorder %s22, 0
      %s269 = scalar_select %p268, %s22, 0
      %s270 = scalar_lea.vmem %s5, %s269
      %p271 = pneg %p165
      %p272 = pneg %p162
      %p273 = pneg %p193
      %p274 = pneg %p190
      %p275 = scmp.lt.s32.totalorder %s21, 1
      %s276 = scalar_select %p275, %s21, 1
      %p277 = scmp.lt.s32.totalorder %s22, 0
      %s278 = scalar_select %p277, %s22, 0
      %s279 = smul.addr %s276, 2
      %s280 = sadd.s32 %s278, %s279
      %s281 = smul.addr %s280, 8
      %s282 = scalar_lea.vmem %s6, %s281
      %p283 = scmp.lt.s32.totalorder %s21, 1
      %s284 = scalar_select %p283, %s21, 1
      %s285 = smul.addr %s284, 2
      %s286 = smul.addr %s285, 4
      %s287 = scalar_lea.vmem %s0, %s286
      %p288 = scmp.lt.s32.totalorder %s22, 0
      %s289 = scalar_select %p288, %s22, 0
      %s290 = smul.addr %s289, 4
      %s291 = scalar_lea.vmem %s4, %s290
      %p292 = scmp.lt.s32.totalorder %s22, 0
      %s293 = scalar_select %p292, %s22, 0
      %s294 = scalar_lea.vmem %s5, %s293
      %p295 = scmp.lt.s32.totalorder %s21, 1
      %s296 = scalar_select %p295, %s21, 1
      %p297 = scmp.lt.s32.totalorder %s22, 0
      %s298 = scalar_select %p297, %s22, 0
      %s299 = smul.addr %s296, 2
      %s300 = sadd.s32 %s298, %s299
      %s301 = smul.addr %s300, 8
      %s302 = scalar_lea.vmem %s6, %s301
      %v304 = vld [vmem:[%s287] sm:$0xf]
      %v305 = vld [vmem:[%s287 + $0x4] sm:$0xf]
      %v306 = vunpack.c.l.bf16 %v304
      %v307 = vunpack.c.l.bf16 %v305
      %vm308 = vcmask 523264
      %v309 = vsel %vm308, %v306, 0.0
      %310 = vadd.xlane.f32.xlu0 %v309
      %v311 = vpop.xlane.xlu0 %310
      %v312 = vsel %vm308, %v307, 0.0
      %313 = vadd.xlane.f32.xlu0 %v312
      %v314 = vpop.xlane.xlu0 %313
      %v315 = vrcp.pop 64.0
      %v316 = vmul.f32 64.0, %v315
      %v317 = vsub.f32 1.0, %v316
      %v318 = vmul.f32 %v315, %v317
      %v319 = vadd.f32 %v315, %v318
      %vm320 = vweird.f32 %v315
      %v321 = vsel %vm320, %v315, %v319
      %v322 = vmul.f32 %v311, %v321
      %v323 = vmul.f32 %v314, %v321
      %v324 = vsub.f32 %v306, %v322
      %v325 = vsub.f32 %v307, %v323
      %v326 = vmul.f32 %v324, %v324
      %v327 = vmul.f32 %v325, %v325
      %v328 = vsel %vm308, %v326, 0.0
      %329 = vadd.xlane.f32.xlu0 %v328
      %v330 = vpop.xlane.xlu0 %329
      %v331 = vsel %vm308, %v327, 0.0
      %332 = vadd.xlane.f32.xlu0 %v331
      %v333 = vpop.xlane.xlu0 %332
      %v334 = vmul.f32 %v330, %v321
      %v335 = vmul.f32 %v333, %v321
      %v336 = vadd.f32 %v334, 1e-06
      %v337 = vadd.f32 %v335, 1e-06
      %v338 = vrsqrt.pop %v336
      %v339 = vmul.f32 %v338, %v336
      %v340 = vmul.f32 %v339, %v338
      %v341 = vmul.f32 0.5, %v340
      %v342 = vsub.f32 1.5, %v341
      %v343 = vmul.f32 %v338, %v342
      %vm344 = vweird.f32 %v336
      %vm345 = vweird.f32 %v338
      %vm346 = vmor %vm344, %vm345
      %v347 = vsel %vm346, %v338, %v343
      %v348 = vrsqrt.pop %v337
      %v349 = vmul.f32 %v348, %v337
      %v350 = vmul.f32 %v349, %v348
      %v351 = vmul.f32 0.5, %v350
      %v352 = vsub.f32 1.5, %v351
      %v353 = vmul.f32 %v348, %v352
      %vm354 = vweird.f32 %v337
      %vm355 = vweird.f32 %v348
      %vm356 = vmor %vm354, %vm355
      %v357 = vsel %vm356, %v348, %v353
      %v358 = vmul.f32 %v324, %v347
      %v359 = vmul.f32 %v325, %v357
      %v360 = vld [vmem:[%s2] sm:$0x1]
      %v362 = vperm.slane %v360, 0
      %v364 = vmul.f32 %v358, %v362
      %v365 = vmul.f32 %v359, %v362
      %v366 = vld [vmem:[%s3] sm:$0x1]
      %v368 = vperm.slane %v366, 0
      %v370 = vadd.f32 %v364, %v368
      %v371 = vadd.f32 %v365, %v368
      %v372 = vld [vmem:[%s1] sm:$0xff]
      %v373 = vld [vmem:[%s1 + $0x8] sm:$0xff]
      %v374 = vadd.f32 %v370, %v372
      %v375 = vadd.f32 %v371, %v373
      %v376 = vpack.c.bf16 %v375, %v374
      %v377 = vld [vmem:[%s291] sm:$0xf]
      %v378 = vld [vmem:[%s291 + $0x4] sm:$0xf]
      %v379 = vld [vmem:[%s291 + $0x8] sm:$0xf]
      %v380 = vld [vmem:[%s291 + $0xc] sm:$0xf]
      %v381 = vld [vmem:[%s291 + $0x10] sm:$0xf]
      %v382 = vld [vmem:[%s291 + $0x14] sm:$0xf]
      %v383 = vld [vmem:[%s291 + $0x18] sm:$0xf]
      %v384 = vld [vmem:[%s291 + $0x1c] sm:$0xf]
      %v385 = vld [vmem:[%s294] sm:$0x1]
      %v387 = vperm.slane %v385, 0
      %v397 = vunpack.c.l.b16 %v377
      %v398 = vunpack.c.l.b16 %v378
      %v399 = vunpack.c.l.b16 %v379
      %v400 = vunpack.c.l.b16 %v380
      %v401 = vunpack.c.l.b16 %v381
      %v402 = vunpack.c.l.b16 %v382
      %v403 = vunpack.c.l.b16 %v383
      %v404 = vunpack.c.l.b16 %v384
      %v405 = vpack.c.b16 %v398, %v397
      %v406 = vpack.c.b16 %v400, %v399
      %v407 = vpack.c.b16 %v402, %v401
      %v408 = vpack.c.b16 %v404, %v403
      %v414 = vsel %vm308, %v376, 0
      %416 = vmatpush.bf16.msra.mxu0 0
      %417 = vmatpush.bf16.msra.mxu0 0
      %418 = vmatpush.bf16.msra.mxu0 0
      %419 = vmatpush.bf16.msra.mxu0 0
      %420 = vmatpush.bf16.msra.mxu0 %v408
      %421 = vmatpush.bf16.msra.mxu0 %v407
      %422 = vmatpush.bf16.msra.mxu0 %v406
      %423 = vmatpush.bf16.msra.mxu0 %v405
      %424 = vmatmul.bf16.gmra.mxu0 %v414
      %v425 = vpop.f32.mrf.mxu0
      %v426 = vadd.f32 %v387, %v425
      %v427 = vpop.f32.mrf.mxu0
      %v428 = vadd.f32 %v387, %v427
      %429 = vdwg.mxu0
      %430 = vst.msk [vmem:[%s302] sm:$0xff] %vm308, %v426
      %431 = vst.msk [vmem:[%s302 + $0x8] sm:$0xff] %vm308, %v428
      %p432 = scmp.lt.s32.totalorder %s21, 1
      %s433 = scalar_select %p432, %s21, 1
      %p434 = scmp.lt.s32.totalorder %s22, 0
      %s435 = scalar_select %p434, %s22, 0
      %s436 = smul.addr %s433, 2
      %s437 = sadd.s32 %s435, %s436
      %s438 = smul.addr %s437, 8
      %s439 = scalar_lea.vmem %s6, %s438
      // Predicated region
      $region45: #{_lambda_.62} parent=43 // pred_check
        %p440 = pneg %p190
      $region46: #{_lambda_.62} parent=43 // pred_check_branch
        %442 = sbr.rel (%p440) target = $region48
      $region47: #{_lambda_.62} parent=43 // pred_region
        _
      $region48: #{_lambda_.62} parent=43 // pred_fallthru
        _
    $region44: #{_lambda_.62} parent=5 // pred_fallthru
      _
    %p443 = scmp.le.s32.totalorder 2, %s12
    // Predicated region
    $region49: #{_lambda_.62} parent=5 // pred_check
      %p444 = pneg %p443
    $region50: #{_lambda_.62} parent=5 // pred_check_branch
      %446 = sbr.rel (%p444) target = $region52
    $region51: #{_lambda_.62} parent=5 // pred_region
      %s447 = ssub.s32 %s12, 2
      // Predicated region
      $region53: #{_lambda_.62} parent=51 // pred_check
        %p448 = pneg %p196
      $region54: #{_lambda_.62} parent=51 // pred_check_branch
        %450 = sbr.rel (%p448) target = $region56
      $region55: #{_lambda_.62} parent=51 // pred_region
        %p451 = scmp.lt.s32.totalorder %s23, 1
        %s452 = scalar_select %p451, %s23, 1
        %p453 = scmp.lt.s32.totalorder %s24, 0
        %s454 = scalar_select %p453, %s24, 0
        %s455 = smul.addr %s452, 2
        %s456 = sadd.s32 %s454, %s455
        %s457 = smul.addr %s456, 8
        %s458 = scalar_lea.vmem %s6, %s457
      $region56: #{_lambda_.62} parent=51 // pred_fallthru
        _
    $region52: #{_lambda_.62} parent=5 // pred_fallthru
      _
  $region6: #{_lambda_.62} parent=0 // loop_footer
    %s16 = sadd.s32 1, %s12
  $region7: #{_lambda_.62} parent=0 // loop_footer_branch
    %11 = sbr.rel target = $region3
  $region8: #{_lambda_.62} parent=0 // loop_exit
    _

// kernel: _lambda_.38
$region0: #{_lambda_.38}
  #allocation0 [shape = 'u32[]', space=smem, size = 0x4, offset = 0x4, fixed_abs, tag = 'smem constant byte address 0x4 - core index']
  #allocation1 [shape = 'u32[72,128]{1,0:T(1,128)}', space=vmem, size = 0x9000, scoped, tag = 'internal scratch']
  #allocation2 [shape = 'f32[64,64]{1,0:T(8,128)}', space=vmem, size = 0x8000, scoped, tag = 'scratch operand']
  %s0 = inlined_call_operand.vmem [shape: bf16[64,64], index: 0, kind: input, shape index: {}]
  %s1 = inlined_call_operand.vmem [shape: bf16[64,64], index: 1, kind: input, shape index: {}]
  %s2 = inlined_call_operand.vmem [shape: f32[1,64], index: 2, kind: input, shape index: {}]
  %s3 = inlined_call_operand.vmem [shape: f32[64,64], index: 3, kind: output, shape index: {}]
  %s4 = sld [smem:[#allocation0]]
  $region30: #{_lambda_.38} parent=0
    _
  %s6 = ssub.s32 1, %s4
  %s7 = scalar_select 0, %s6, %s4
  // Predicated region
  $region2: #{_lambda_.38} parent=0 // pred_check
    _
  $region3: #{_lambda_.38} parent=0 // pred_check_branch
    %9 = sbr.rel (0) target = $region5
  $region4: #{_lambda_.38} parent=0 // pred_region
    _
  $region5: #{_lambda_.38} parent=0 // pred_fallthru
    _
  // Predicated region
  $region6: #{_lambda_.38} parent=0 // pred_check
    _
  $region7: #{_lambda_.38} parent=0 // pred_check_branch
    %11 = sbr.rel (0) target = $region9
  $region8: #{_lambda_.38} parent=0 // pred_region
    _
  $region9: #{_lambda_.38} parent=0 // pred_fallthru
    _
  // Predicated region
  $region10: #{_lambda_.38} parent=0 // pred_check
    _
  $region11: #{_lambda_.38} parent=0 // pred_check_branch
    %13 = sbr.rel (0) target = $region13
  $region12: #{_lambda_.38} parent=0 // pred_region
    _
  $region13: #{_lambda_.38} parent=0 // pred_fallthru
    _
  %p15 = scmp.eq.s32.totalorder 0, 0
  // Predicated region
  $region14: #{_lambda_.38} parent=0 // pred_check
    %p16 = pneg %p15
  $region15: #{_lambda_.38} parent=0 // pred_check_branch
    %18 = sbr.rel (%p16) target = $region17
  $region16: #{_lambda_.38} parent=0 // pred_region
    %vm19 = vcmask 523264
    %20 = vst.msk [vmem:[#allocation2] sm:$0xff] %vm19, 0.0
    %21 = vst.msk [vmem:[#allocation2 + $0x8] sm:$0xff] %vm19, 0.0
    %22 = vst.msk [vmem:[#allocation2 + $0x10] sm:$0xff] %vm19, 0.0
    %23 = vst.msk [vmem:[#allocation2 + $0x18] sm:$0xff] %vm19, 0.0
    %24 = vst.msk [vmem:[#allocation2 + $0x20] sm:$0xff] %vm19, 0.0
    %25 = vst.msk [vmem:[#allocation2 + $0x28] sm:$0xff] %vm19, 0.0
    %26 = vst.msk [vmem:[#allocation2 + $0x30] sm:$0xff] %vm19, 0.0
    %27 = vst.msk [vmem:[#allocation2 + $0x38] sm:$0xff] %vm19, 0.0
  $region17: #{_lambda_.38} parent=0 // pred_fallthru
    _
  %v28 = vld [vmem:[#allocation2] sm:$0xff]
  %v29 = vld [vmem:[#allocation2 + $0x8] sm:$0xff]
  %v30 = vld [vmem:[#allocation2 + $0x10] sm:$0xff]
  %v31 = vld [vmem:[#allocation2 + $0x18] sm:$0xff]
  %v32 = vld [vmem:[#allocation2 + $0x20] sm:$0xff]
  %v33 = vld [vmem:[#allocation2 + $0x28] sm:$0xff]
  %v34 = vld [vmem:[#allocation2 + $0x30] sm:$0xff]
  %v35 = vld [vmem:[#allocation2 + $0x38] sm:$0xff]
  %v36 = vld [vmem:[%s0] sm:$0xf]
  %v37 = vld [vmem:[%s0 + $0x4] sm:$0xf]
  %v38 = vld [vmem:[%s0 + $0x8] sm:$0xf]
  %v39 = vld [vmem:[%s0 + $0xc] sm:$0xf]
  %v40 = vld [vmem:[%s0 + $0x10] sm:$0xf]
  %v41 = vld [vmem:[%s0 + $0x14] sm:$0xf]
  %v42 = vld [vmem:[%s0 + $0x18] sm:$0xf]
  %v43 = vld [vmem:[%s0 + $0x1c] sm:$0xf]
  %v44 = vld [vmem:[%s1] sm:$0xf]
  %v45 = vld [vmem:[%s1 + $0x4] sm:$0xf]
  %v46 = vld [vmem:[%s1 + $0x8] sm:$0xf]
  %v47 = vld [vmem:[%s1 + $0xc] sm:$0xf]
  %v48 = vld [vmem:[%s1 + $0x10] sm:$0xf]
  %v49 = vld [vmem:[%s1 + $0x14] sm:$0xf]
  %v50 = vld [vmem:[%s1 + $0x18] sm:$0xf]
  %v51 = vld [vmem:[%s1 + $0x1c] sm:$0xf]
  %v60 = vunpack.c.l.b16 %v36
  %v61 = vunpack.c.l.b16 %v37
  %v62 = vunpack.c.l.b16 %v38
  %v63 = vunpack.c.l.b16 %v39
  %v64 = vunpack.c.l.b16 %v40
  %v65 = vunpack.c.l.b16 %v41
  %v66 = vunpack.c.l.b16 %v42
  %v67 = vunpack.c.l.b16 %v43
  %v68 = vpack.c.b16 %v61, %v60
  %v69 = vpack.c.b16 %v63, %v62
  %v70 = vpack.c.b16 %v65, %v64
  %v71 = vpack.c.b16 %v67, %v66
  %v80 = vunpack.c.l.b16 %v44
  %v81 = vunpack.c.l.b16 %v45
  %v82 = vunpack.c.l.b16 %v46
  %v83 = vunpack.c.l.b16 %v47
  %v84 = vunpack.c.l.b16 %v48
  %v85 = vunpack.c.l.b16 %v49
  %v86 = vunpack.c.l.b16 %v50
  %v87 = vunpack.c.l.b16 %v51
  %v88 = vpack.c.b16 %v81, %v80
  %v89 = vpack.c.b16 %v83, %v82
  %v90 = vpack.c.b16 %v85, %v84
  %v91 = vpack.c.b16 %v87, %v86
  %vm96 = vcmask 523264
  %v98 = vsel %vm96, %v68, 0
  %v101 = vsel %vm96, %v69, 0
  %v104 = vsel %vm96, %v70, 0
  %v107 = vsel %vm96, %v71, 0
  %109 = vmatpush.bf16.msra.mxu0 0
  %110 = vmatpush.bf16.msra.mxu0 0
  %111 = vmatpush.bf16.msra.mxu0 0
  %112 = vmatpush.bf16.msra.mxu0 0
  %113 = vmatpush.bf16.msra.mxu0 %v91
  %114 = vmatpush.bf16.msra.mxu0 %v90
  %115 = vmatpush.bf16.msra.mxu0 %v89
  %116 = vmatpush.bf16.msra.mxu0 %v88
  %117 = vmatmul.bf16.gmra.mxu0 %v98
  %v118 = vpop.f32.mrf.mxu0
  %v119 = vadd.f32 0.0, %v118
  %v120 = vpop.f32.mrf.mxu0
  %v121 = vadd.f32 0.0, %v120
  %122 = vmatmul.bf16.gmra.mxu0 %v101
  %v123 = vpop.f32.mrf.mxu0
  %v124 = vadd.f32 0.0, %v123
  %v125 = vpop.f32.mrf.mxu0
  %v126 = vadd.f32 0.0, %v125
  %127 = vmatmul.bf16.gmra.mxu0 %v104
  %v128 = vpop.f32.mrf.mxu0
  %v129 = vadd.f32 0.0, %v128
  %v130 = vpop.f32.mrf.mxu0
  %v131 = vadd.f32 0.0, %v130
  %132 = vmatmul.bf16.gmra.mxu0 %v107
  %v133 = vpop.f32.mrf.mxu0
  %v134 = vadd.f32 0.0, %v133
  %v135 = vpop.f32.mrf.mxu0
  %v136 = vadd.f32 0.0, %v135
  %137 = vdwg.mxu0
  %v138 = vadd.f32 %v28, %v119
  %v139 = vadd.f32 %v29, %v121
  %v140 = vadd.f32 %v30, %v124
  %v141 = vadd.f32 %v31, %v126
  %v142 = vadd.f32 %v32, %v129
  %v143 = vadd.f32 %v33, %v131
  %v144 = vadd.f32 %v34, %v134
  %v145 = vadd.f32 %v35, %v136
  %146 = vst.msk [vmem:[#allocation2] sm:$0xff] %vm96, %v138
  %147 = vst.msk [vmem:[#allocation2 + $0x8] sm:$0xff] %vm96, %v139
  %148 = vst.msk [vmem:[#allocation2 + $0x10] sm:$0xff] %vm96, %v140
  %149 = vst.msk [vmem:[#allocation2 + $0x18] sm:$0xff] %vm96, %v141
  %150 = vst.msk [vmem:[#allocation2 + $0x20] sm:$0xff] %vm96, %v142
  %151 = vst.msk [vmem:[#allocation2 + $0x28] sm:$0xff] %vm96, %v143
  %152 = vst.msk [vmem:[#allocation2 + $0x30] sm:$0xff] %vm96, %v144
  %153 = vst.msk [vmem:[#allocation2 + $0x38] sm:$0xff] %vm96, %v145
  // Predicated region
  $region18: #{_lambda_.38} parent=0 // pred_check
    %p154 = pneg %p15
  $region19: #{_lambda_.38} parent=0 // pred_check_branch
    %156 = sbr.rel (%p154) target = $region21
  $region20: #{_lambda_.38} parent=0 // pred_region
    %v157 = vld [vmem:[#allocation2] sm:$0xff]
    %v158 = vld [vmem:[#allocation2 + $0x8] sm:$0xff]
    %v159 = vld [vmem:[#allocation2 + $0x10] sm:$0xff]
    %v160 = vld [vmem:[#allocation2 + $0x18] sm:$0xff]
    %v161 = vld [vmem:[#allocation2 + $0x20] sm:$0xff]
    %v162 = vld [vmem:[#allocation2 + $0x28] sm:$0xff]
    %v163 = vld [vmem:[#allocation2 + $0x30] sm:$0xff]
    %v164 = vld [vmem:[#allocation2 + $0x38] sm:$0xff]
    %v165 = vld [vmem:[%s2] sm:$0x1]
    %v167 = vperm.slane %v165, 0
    %v169 = vadd.f32 %v157, %v167
    %v170 = vadd.f32 %v158, %v167
    %v171 = vadd.f32 %v159, %v167
    %v172 = vadd.f32 %v160, %v167
    %v173 = vadd.f32 %v161, %v167
    %v174 = vadd.f32 %v162, %v167
    %v175 = vadd.f32 %v163, %v167
    %v176 = vadd.f32 %v164, %v167
    %177 = vst.msk [vmem:[%s3] sm:$0xff] %vm96, %v169
    %178 = vst.msk [vmem:[%s3 + $0x8] sm:$0xff] %vm96, %v170
    %179 = vst.msk [vmem:[%s3 + $0x10] sm:$0xff] %vm96, %v171
    %180 = vst.msk [vmem:[%s3 + $0x18] sm:$0xff] %vm96, %v172
    %181 = vst.msk [vmem:[%s3 + $0x20] sm:$0xff] %vm96, %v173
    %182 = vst.msk [vmem:[%s3 + $0x28] sm:$0xff] %vm96, %v174
    %183 = vst.msk [vmem:[%s3 + $0x30] sm:$0xff] %vm96, %v175
    %184 = vst.msk [vmem:[%s3 + $0x38] sm:$0xff] %vm96, %v176
  $region21: #{_lambda_.38} parent=0 // pred_fallthru
    _
  // Predicated region
  $region22: #{_lambda_.38} parent=0 // pred_check
    _
  $region23: #{_lambda_.38} parent=0 // pred_check_branch
    %186 = sbr.rel (0) target = $region25
  $region24: #{_lambda_.38} parent=0 // pred_region
    _
  $region25: #{_lambda_.38} parent=0 // pred_fallthru
    _
  // Predicated region
  $region26: #{_lambda_.38} parent=0 // pred_check
    _
  $region27: #{_lambda_.38} parent=0 // pred_check_branch
    %188 = sbr.rel (0) target = $region29
  $region28: #{_lambda_.38} parent=0 // pred_region
    _
  $region29: #{_lambda_.38} parent=0 // pred_fallthru
    _

// kernel: _lambda_.37
$region0: #{_lambda_.37}
  #allocation0 [shape = 'u32[]', space=smem, size = 0x4, offset = 0x4, fixed_abs, tag = 'smem constant byte address 0x4 - core index']
  #allocation1 [shape = 'u32[72,128]{1,0:T(1,128)}', space=vmem, size = 0x9000, scoped, tag = 'internal scratch']
  #allocation2 [shape = 'f32[64,64]{1,0:T(8,128)}', space=vmem, size = 0x8000, scoped, tag = 'scratch operand']
  %s0 = inlined_call_operand.vmem [shape: bf16[64,64], index: 0, kind: input, shape index: {}]
  %s1 = inlined_call_operand.vmem [shape: bf16[64,64], index: 1, kind: input, shape index: {}]
  %s2 = inlined_call_operand.vmem [shape: f32[1,64], index: 2, kind: input, shape index: {}]
  %s3 = inlined_call_operand.vmem [shape: bf16[64,64], index: 3, kind: output, shape index: {}]
  %s4 = sld [smem:[#allocation0]]
  $region30: #{_lambda_.37} parent=0
    _
  %s6 = ssub.s32 1, %s4
  %s7 = scalar_select 0, %s6, %s4
  // Predicated region
  $region2: #{_lambda_.37} parent=0 // pred_check
    _
  $region3: #{_lambda_.37} parent=0 // pred_check_branch
    %9 = sbr.rel (0) target = $region5
  $region4: #{_lambda_.37} parent=0 // pred_region
    _
  $region5: #{_lambda_.37} parent=0 // pred_fallthru
    _
  // Predicated region
  $region6: #{_lambda_.37} parent=0 // pred_check
    _
  $region7: #{_lambda_.37} parent=0 // pred_check_branch
    %11 = sbr.rel (0) target = $region9
  $region8: #{_lambda_.37} parent=0 // pred_region
    _
  $region9: #{_lambda_.37} parent=0 // pred_fallthru
    _
  // Predicated region
  $region10: #{_lambda_.37} parent=0 // pred_check
    _
  $region11: #{_lambda_.37} parent=0 // pred_check_branch
    %13 = sbr.rel (0) target = $region13
  $region12: #{_lambda_.37} parent=0 // pred_region
    _
  $region13: #{_lambda_.37} parent=0 // pred_fallthru
    _
  %p15 = scmp.eq.s32.totalorder 0, 0
  // Predicated region
  $region14: #{_lambda_.37} parent=0 // pred_check
    %p16 = pneg %p15
  $region15: #{_lambda_.37} parent=0 // pred_check_branch
    %18 = sbr.rel (%p16) target = $region17
  $region16: #{_lambda_.37} parent=0 // pred_region
    %vm19 = vcmask 523264
    %20 = vst.msk [vmem:[#allocation2] sm:$0xff] %vm19, 0.0
    %21 = vst.msk [vmem:[#allocation2 + $0x8] sm:$0xff] %vm19, 0.0
    %22 = vst.msk [vmem:[#allocation2 + $0x10] sm:$0xff] %vm19, 0.0
    %23 = vst.msk [vmem:[#allocation2 + $0x18] sm:$0xff] %vm19, 0.0
    %24 = vst.msk [vmem:[#allocation2 + $0x20] sm:$0xff] %vm19, 0.0
    %25 = vst.msk [vmem:[#allocation2 + $0x28] sm:$0xff] %vm19, 0.0
    %26 = vst.msk [vmem:[#allocation2 + $0x30] sm:$0xff] %vm19, 0.0
    %27 = vst.msk [vmem:[#allocation2 + $0x38] sm:$0xff] %vm19, 0.0
  $region17: #{_lambda_.37} parent=0 // pred_fallthru
    _
  %v28 = vld [vmem:[#allocation2] sm:$0xff]
  %v29 = vld [vmem:[#allocation2 + $0x8] sm:$0xff]
  %v30 = vld [vmem:[#allocation2 + $0x10] sm:$0xff]
  %v31 = vld [vmem:[#allocation2 + $0x18] sm:$0xff]
  %v32 = vld [vmem:[#allocation2 + $0x20] sm:$0xff]
  %v33 = vld [vmem:[#allocation2 + $0x28] sm:$0xff]
  %v34 = vld [vmem:[#allocation2 + $0x30] sm:$0xff]
  %v35 = vld [vmem:[#allocation2 + $0x38] sm:$0xff]
  %v36 = vld [vmem:[%s0] sm:$0xf]
  %v37 = vld [vmem:[%s0 + $0x4] sm:$0xf]
  %v38 = vld [vmem:[%s0 + $0x8] sm:$0xf]
  %v39 = vld [vmem:[%s0 + $0xc] sm:$0xf]
  %v40 = vld [vmem:[%s0 + $0x10] sm:$0xf]
  %v41 = vld [vmem:[%s0 + $0x14] sm:$0xf]
  %v42 = vld [vmem:[%s0 + $0x18] sm:$0xf]
  %v43 = vld [vmem:[%s0 + $0x1c] sm:$0xf]
  %v44 = vld [vmem:[%s1] sm:$0xf]
  %v45 = vld [vmem:[%s1 + $0x4] sm:$0xf]
  %v46 = vld [vmem:[%s1 + $0x8] sm:$0xf]
  %v47 = vld [vmem:[%s1 + $0xc] sm:$0xf]
  %v48 = vld [vmem:[%s1 + $0x10] sm:$0xf]
  %v49 = vld [vmem:[%s1 + $0x14] sm:$0xf]
  %v50 = vld [vmem:[%s1 + $0x18] sm:$0xf]
  %v51 = vld [vmem:[%s1 + $0x1c] sm:$0xf]
  %v60 = vunpack.c.l.b16 %v36
  %v61 = vunpack.c.l.b16 %v37
  %v62 = vunpack.c.l.b16 %v38
  %v63 = vunpack.c.l.b16 %v39
  %v64 = vunpack.c.l.b16 %v40
  %v65 = vunpack.c.l.b16 %v41
  %v66 = vunpack.c.l.b16 %v42
  %v67 = vunpack.c.l.b16 %v43
  %v68 = vpack.c.b16 %v61, %v60
  %v69 = vpack.c.b16 %v63, %v62
  %v70 = vpack.c.b16 %v65, %v64
  %v71 = vpack.c.b16 %v67, %v66
  %v80 = vunpack.c.l.b16 %v44
  %v81 = vunpack.c.l.b16 %v45
  %v82 = vunpack.c.l.b16 %v46
  %v83 = vunpack.c.l.b16 %v47
  %v84 = vunpack.c.l.b16 %v48
  %v85 = vunpack.c.l.b16 %v49
  %v86 = vunpack.c.l.b16 %v50
  %v87 = vunpack.c.l.b16 %v51
  %v88 = vpack.c.b16 %v81, %v80
  %v89 = vpack.c.b16 %v83, %v82
  %v90 = vpack.c.b16 %v85, %v84
  %v91 = vpack.c.b16 %v87, %v86
  %vm96 = vcmask 523264
  %v98 = vsel %vm96, %v68, 0
  %v101 = vsel %vm96, %v69, 0
  %v104 = vsel %vm96, %v70, 0
  %v107 = vsel %vm96, %v71, 0
  %109 = vmatpush.bf16.msra.mxu0 0
  %110 = vmatpush.bf16.msra.mxu0 0
  %111 = vmatpush.bf16.msra.mxu0 0
  %112 = vmatpush.bf16.msra.mxu0 0
  %113 = vmatpush.bf16.msra.mxu0 %v91
  %114 = vmatpush.bf16.msra.mxu0 %v90
  %115 = vmatpush.bf16.msra.mxu0 %v89
  %116 = vmatpush.bf16.msra.mxu0 %v88
  %117 = vmatmul.bf16.gmra.mxu0 %v98
  %v118 = vpop.f32.mrf.mxu0
  %v119 = vadd.f32 0.0, %v118
  %v120 = vpop.f32.mrf.mxu0
  %v121 = vadd.f32 0.0, %v120
  %122 = vmatmul.bf16.gmra.mxu0 %v101
  %v123 = vpop.f32.mrf.mxu0
  %v124 = vadd.f32 0.0, %v123
  %v125 = vpop.f32.mrf.mxu0
  %v126 = vadd.f32 0.0, %v125
  %127 = vmatmul.bf16.gmra.mxu0 %v104
  %v128 = vpop.f32.mrf.mxu0
  %v129 = vadd.f32 0.0, %v128
  %v130 = vpop.f32.mrf.mxu0
  %v131 = vadd.f32 0.0, %v130
  %132 = vmatmul.bf16.gmra.mxu0 %v107
  %v133 = vpop.f32.mrf.mxu0
  %v134 = vadd.f32 0.0, %v133
  %v135 = vpop.f32.mrf.mxu0
  %v136 = vadd.f32 0.0, %v135
  %137 = vdwg.mxu0
  %v138 = vadd.f32 %v28, %v119
  %v139 = vadd.f32 %v29, %v121
  %v140 = vadd.f32 %v30, %v124
  %v141 = vadd.f32 %v31, %v126
  %v142 = vadd.f32 %v32, %v129
  %v143 = vadd.f32 %v33, %v131
  %v144 = vadd.f32 %v34, %v134
  %v145 = vadd.f32 %v35, %v136
  %146 = vst.msk [vmem:[#allocation2] sm:$0xff] %vm96, %v138
  %147 = vst.msk [vmem:[#allocation2 + $0x8] sm:$0xff] %vm96, %v139
  %148 = vst.msk [vmem:[#allocation2 + $0x10] sm:$0xff] %vm96, %v140
  %149 = vst.msk [vmem:[#allocation2 + $0x18] sm:$0xff] %vm96, %v141
  %150 = vst.msk [vmem:[#allocation2 + $0x20] sm:$0xff] %vm96, %v142
  %151 = vst.msk [vmem:[#allocation2 + $0x28] sm:$0xff] %vm96, %v143
  %152 = vst.msk [vmem:[#allocation2 + $0x30] sm:$0xff] %vm96, %v144
  %153 = vst.msk [vmem:[#allocation2 + $0x38] sm:$0xff] %vm96, %v145
  // Predicated region
  $region18: #{_lambda_.37} parent=0 // pred_check
    %p154 = pneg %p15
  $region19: #{_lambda_.37} parent=0 // pred_check_branch
    %156 = sbr.rel (%p154) target = $region21
  $region20: #{_lambda_.37} parent=0 // pred_region
    %v157 = vld [vmem:[#allocation2] sm:$0xff]
    %v158 = vld [vmem:[#allocation2 + $0x8] sm:$0xff]
    %v159 = vld [vmem:[#allocation2 + $0x10] sm:$0xff]
    %v160 = vld [vmem:[#allocation2 + $0x18] sm:$0xff]
    %v161 = vld [vmem:[#allocation2 + $0x20] sm:$0xff]
    %v162 = vld [vmem:[#allocation2 + $0x28] sm:$0xff]
    %v163 = vld [vmem:[#allocation2 + $0x30] sm:$0xff]
    %v164 = vld [vmem:[#allocation2 + $0x38] sm:$0xff]
    %v165 = vld [vmem:[%s2] sm:$0x1]
    %v167 = vperm.slane %v165, 0
    %v169 = vadd.f32 %v157, %v167
    %v170 = vadd.f32 %v158, %v167
    %v171 = vadd.f32 %v159, %v167
    %v172 = vadd.f32 %v160, %v167
    %v173 = vadd.f32 %v161, %v167
    %v174 = vadd.f32 %v162, %v167
    %v175 = vadd.f32 %v163, %v167
    %v176 = vadd.f32 %v164, %v167
    %v177 = vxor.u32 %v169, 2147483648
    %v178 = vxor.u32 %v170, 2147483648
    %v179 = vxor.u32 %v171, 2147483648
    %v180 = vxor.u32 %v172, 2147483648
    %v181 = vxor.u32 %v173, 2147483648
    %v182 = vxor.u32 %v174, 2147483648
    %v183 = vxor.u32 %v175, 2147483648
    %v184 = vxor.u32 %v176, 2147483648
    %v185 = vmul.f32 %v177, 1.442695
    %v186 = vpow.pop %v185
    %v187 = vmul.f32 %v178, 1.442695
    %v188 = vpow.pop %v187
    %v189 = vmul.f32 %v179, 1.442695
    %v190 = vpow.pop %v189
    %v191 = vmul.f32 %v180, 1.442695
    %v192 = vpow.pop %v191
    %v193 = vmul.f32 %v181, 1.442695
    %v194 = vpow.pop %v193
    %v195 = vmul.f32 %v182, 1.442695
    %v196 = vpow.pop %v195
    %v197 = vmul.f32 %v183, 1.442695
    %v198 = vpow.pop %v197
    %v199 = vmul.f32 %v184, 1.442695
    %v200 = vpow.pop %v199
    %v201 = vadd.f32 %v186, 1.0
    %v202 = vadd.f32 %v188, 1.0
    %v203 = vadd.f32 %v190, 1.0
    %v204 = vadd.f32 %v192, 1.0
    %v205 = vadd.f32 %v194, 1.0
    %v206 = vadd.f32 %v196, 1.0
    %v207 = vadd.f32 %v198, 1.0
    %v208 = vadd.f32 %v200, 1.0
    %v209 = vrcp.pop %v201
    %v210 = vmul.f32 %v201, %v209
    %v211 = vsub.f32 1.0, %v210
    %v212 = vmul.f32 %v209, %v211
    %v213 = vadd.f32 %v209, %v212
    %vm214 = vweird.f32 %v201
    %vm215 = vweird.f32 %v209
    %vm216 = vmor %vm214, %vm215
    %v217 = vsel %vm216, %v209, %v213
    %v218 = vand.u32 2147483647, %v201
    %vm219 = vcmp.eq.f32.partialorder %v218, 8.507059e+37
    %v220 = vand.u32 %v201, 2147483648
    %v221 = vor.u32 1.1754944e-38, %v220
    %v222 = vsel %vm219, %v221, %v217
    %v223 = vmul.f32 1.0, %v222
    %v224 = vrcp.pop %v202
    %v225 = vmul.f32 %v202, %v224
    %v226 = vsub.f32 1.0, %v225
    %v227 = vmul.f32 %v224, %v226
    %v228 = vadd.f32 %v224, %v227
    %vm229 = vweird.f32 %v202
    %vm230 = vweird.f32 %v224
    %vm231 = vmor %vm229, %vm230
    %v232 = vsel %vm231, %v224, %v228
    %v233 = vand.u32 2147483647, %v202
    %vm234 = vcmp.eq.f32.partialorder %v233, 8.507059e+37
    %v235 = vand.u32 %v202, 2147483648
    %v236 = vor.u32 1.1754944e-38, %v235
    %v237 = vsel %vm234, %v236, %v232
    %v238 = vmul.f32 1.0, %v237
    %v239 = vrcp.pop %v203
    %v240 = vmul.f32 %v203, %v239
    %v241 = vsub.f32 1.0, %v240
    %v242 = vmul.f32 %v239, %v241
    %v243 = vadd.f32 %v239, %v242
    %vm244 = vweird.f32 %v203
    %vm245 = vweird.f32 %v239
    %vm246 = vmor %vm244, %vm245
    %v247 = vsel %vm246, %v239, %v243
    %v248 = vand.u32 2147483647, %v203
    %vm249 = vcmp.eq.f32.partialorder %v248, 8.507059e+37
    %v250 = vand.u32 %v203, 2147483648
    %v251 = vor.u32 1.1754944e-38, %v250
    %v252 = vsel %vm249, %v251, %v247
    %v253 = vmul.f32 1.0, %v252
    %v254 = vrcp.pop %v204
    %v255 = vmul.f32 %v204, %v254
    %v256 = vsub.f32 1.0, %v255
    %v257 = vmul.f32 %v254, %v256
    %v258 = vadd.f32 %v254, %v257
    %vm259 = vweird.f32 %v204
    %vm260 = vweird.f32 %v254
    %vm261 = vmor %vm259, %vm260
    %v262 = vsel %vm261, %v254, %v258
    %v263 = vand.u32 2147483647, %v204
    %vm264 = vcmp.eq.f32.partialorder %v263, 8.507059e+37
    %v265 = vand.u32 %v204, 2147483648
    %v266 = vor.u32 1.1754944e-38, %v265
    %v267 = vsel %vm264, %v266, %v262
    %v268 = vmul.f32 1.0, %v267
    %v269 = vrcp.pop %v205
    %v270 = vmul.f32 %v205, %v269
    %v271 = vsub.f32 1.0, %v270
    %v272 = vmul.f32 %v269, %v271
    %v273 = vadd.f32 %v269, %v272
    %vm274 = vweird.f32 %v205
    %vm275 = vweird.f32 %v269
    %vm276 = vmor %vm274, %vm275
    %v277 = vsel %vm276, %v269, %v273
    %v278 = vand.u32 2147483647, %v205
    %vm279 = vcmp.eq.f32.partialorder %v278, 8.507059e+37
    %v280 = vand.u32 %v205, 2147483648
    %v281 = vor.u32 1.1754944e-38, %v280
    %v282 = vsel %vm279, %v281, %v277
    %v283 = vmul.f32 1.0, %v282
    %v284 = vrcp.pop %v206
    %v285 = vmul.f32 %v206, %v284
    %v286 = vsub.f32 1.0, %v285
    %v287 = vmul.f32 %v284, %v286
    %v288 = vadd.f32 %v284, %v287
    %vm289 = vweird.f32 %v206
    %vm290 = vweird.f32 %v284
    %vm291 = vmor %vm289, %vm290
    %v292 = vsel %vm291, %v284, %v288
    %v293 = vand.u32 2147483647, %v206
    %vm294 = vcmp.eq.f32.partialorder %v293, 8.507059e+37
    %v295 = vand.u32 %v206, 2147483648
    %v296 = vor.u32 1.1754944e-38, %v295
    %v297 = vsel %vm294, %v296, %v292
    %v298 = vmul.f32 1.0, %v297
    %v299 = vrcp.pop %v207
    %v300 = vmul.f32 %v207, %v299
    %v301 = vsub.f32 1.0, %v300
    %v302 = vmul.f32 %v299, %v301
    %v303 = vadd.f32 %v299, %v302
    %vm304 = vweird.f32 %v207
    %vm305 = vweird.f32 %v299
    %vm306 = vmor %vm304, %vm305
    %v307 = vsel %vm306, %v299, %v303
    %v308 = vand.u32 2147483647, %v207
    %vm309 = vcmp.eq.f32.partialorder %v308, 8.507059e+37
    %v310 = vand.u32 %v207, 2147483648
    %v311 = vor.u32 1.1754944e-38, %v310
    %v312 = vsel %vm309, %v311, %v307
    %v313 = vmul.f32 1.0, %v312
    %v314 = vrcp.pop %v208
    %v315 = vmul.f32 %v208, %v314
    %v316 = vsub.f32 1.0, %v315
    %v317 = vmul.f32 %v314, %v316
    %v318 = vadd.f32 %v314, %v317
    %vm319 = vweird.f32 %v208
    %vm320 = vweird.f32 %v314
    %vm321 = vmor %vm319, %vm320
    %v322 = vsel %vm321, %v314, %v318
    %v323 = vand.u32 2147483647, %v208
    %vm324 = vcmp.eq.f32.partialorder %v323, 8.507059e+37
    %v325 = vand.u32 %v208, 2147483648
    %v326 = vor.u32 1.1754944e-38, %v325
    %v327 = vsel %vm324, %v326, %v322
    %v328 = vmul.f32 1.0, %v327
    %v329 = vmul.f32 %v169, %v223
    %v330 = vmul.f32 %v170, %v238
    %v331 = vmul.f32 %v171, %v253
    %v332 = vmul.f32 %v172, %v268
    %v333 = vmul.f32 %v173, %v283
    %v334 = vmul.f32 %v174, %v298
    %v335 = vmul.f32 %v175, %v313
    %v336 = vmul.f32 %v176, %v328
    %v337 = vpack.c.bf16 %v329, %v329
    %v338 = vpack.c.bf16 %v330, %v330
    %v339 = vpack.c.bf16 %v331, %v331
    %v340 = vpack.c.bf16 %v332, %v332
    %v341 = vpack.c.bf16 %v333, %v333
    %v342 = vpack.c.bf16 %v334, %v334
    %v343 = vpack.c.bf16 %v335, %v335
    %v344 = vpack.c.bf16 %v336, %v336
    %vm345 = vcmask 519168
    %346 = vst.msk [vmem:[%s3] sm:$0xf] %vm345, %v337
    %347 = vst.msk [vmem:[%s3 + $0x4] sm:$0xf] %vm345, %v338
    %348 = vst.msk [vmem:[%s3 + $0x8] sm:$0xf] %vm345, %v339
    %349 = vst.msk [vmem:[%s3 + $0xc] sm:$0xf] %vm345, %v340
    %350 = vst.msk [vmem:[%s3 + $0x10] sm:$0xf] %vm345, %v341
    %351 = vst.msk [vmem:[%s3 + $0x14] sm:$0xf] %vm345, %v342
    %352 = vst.msk [vmem:[%s3 + $0x18] sm:$0xf] %vm345, %v343
    %353 = vst.msk [vmem:[%s3 + $0x1c] sm:$0xf] %vm345, %v344
  $region21: #{_lambda_.37} parent=0 // pred_fallthru
    _
  // Predicated region
  $region22: #{_lambda_.37} parent=0 // pred_check
    _
  $region23: #{_lambda_.37} parent=0 // pred_check_branch
    %355 = sbr.rel (0) target = $region25
  $region24: #{_lambda_.37} parent=0 // pred_region
    _
  $region25: #{_lambda_.37} parent=0 // pred_fallthru
    _
  // Predicated region
  $region26: #{_lambda_.37} parent=0 // pred_check
    _
  $region27: #{_lambda_.37} parent=0 // pred_check_branch
    %357 = sbr.rel (0) target = $region29
  $region28: #{_lambda_.37} parent=0 // pred_region
    _
  $region29: #{_lambda_.37} parent=0 // pred_fallthru
    _

// kernel: _lambda_.63
$region0: #{_lambda_.63}
  #allocation0 [shape = 'u32[]', space=smem, size = 0x4, offset = 0x4, fixed_abs, tag = 'smem constant byte address 0x4 - core index']
  #allocation1 [shape = 'u32[72,128]{1,0:T(1,128)}', space=vmem, size = 0x9000, scoped, tag = 'internal scratch']
  #allocation2 [shape = 'f32[64,192]{1,0:T(8,128)}', space=vmem, size = 0x10000, scoped, tag = 'scratch operand']
  %s0 = inlined_call_operand.vmem [shape: bf16[64,64], index: 0, kind: input, shape index: {}]
  %s1 = inlined_call_operand.vmem [shape: bf16[64,192], index: 1, kind: input, shape index: {}]
  %s2 = inlined_call_operand.vmem [shape: f32[1,192], index: 2, kind: input, shape index: {}]
  %s3 = inlined_call_operand.vmem [shape: bf16[64,192], index: 3, kind: output, shape index: {}]
  %s4 = sld [smem:[#allocation0]]
  $region30: #{_lambda_.63} parent=0
    _
  %s6 = ssub.s32 1, %s4
  %s7 = scalar_select 0, %s6, %s4
  // Predicated region
  $region2: #{_lambda_.63} parent=0 // pred_check
    _
  $region3: #{_lambda_.63} parent=0 // pred_check_branch
    %9 = sbr.rel (0) target = $region5
  $region4: #{_lambda_.63} parent=0 // pred_region
    _
  $region5: #{_lambda_.63} parent=0 // pred_fallthru
    _
  // Predicated region
  $region6: #{_lambda_.63} parent=0 // pred_check
    _
  $region7: #{_lambda_.63} parent=0 // pred_check_branch
    %11 = sbr.rel (0) target = $region9
  $region8: #{_lambda_.63} parent=0 // pred_region
    _
  $region9: #{_lambda_.63} parent=0 // pred_fallthru
    _
  // Predicated region
  $region10: #{_lambda_.63} parent=0 // pred_check
    _
  $region11: #{_lambda_.63} parent=0 // pred_check_branch
    %13 = sbr.rel (0) target = $region13
  $region12: #{_lambda_.63} parent=0 // pred_region
    _
  $region13: #{_lambda_.63} parent=0 // pred_fallthru
    _
  %p15 = scmp.eq.s32.totalorder 0, 0
  // Predicated region
  $region14: #{_lambda_.63} parent=0 // pred_check
    %p16 = pneg %p15
  $region15: #{_lambda_.63} parent=0 // pred_check_branch
    %18 = sbr.rel (%p16) target = $region17
  $region16: #{_lambda_.63} parent=0 // pred_region
    %19 = vst [vmem:[#allocation2] sm:$0xff] 0.0
    %vm20 = vcmask 523264
    %21 = vst.msk [vmem:[#allocation2 + $0x8] sm:$0xff] %vm20, 0.0
    %22 = vst [vmem:[#allocation2 + $0x10] sm:$0xff] 0.0
    %23 = vst.msk [vmem:[#allocation2 + $0x18] sm:$0xff] %vm20, 0.0
    %24 = vst [vmem:[#allocation2 + $0x20] sm:$0xff] 0.0
    %25 = vst.msk [vmem:[#allocation2 + $0x28] sm:$0xff] %vm20, 0.0
    %26 = vst [vmem:[#allocation2 + $0x30] sm:$0xff] 0.0
    %27 = vst.msk [vmem:[#allocation2 + $0x38] sm:$0xff] %vm20, 0.0
    %28 = vst [vmem:[#allocation2 + $0x40] sm:$0xff] 0.0
    %29 = vst.msk [vmem:[#allocation2 + $0x48] sm:$0xff] %vm20, 0.0
    %30 = vst [vmem:[#allocation2 + $0x50] sm:$0xff] 0.0
    %31 = vst.msk [vmem:[#allocation2 + $0x58] sm:$0xff] %vm20, 0.0
    %32 = vst [vmem:[#allocation2 + $0x60] sm:$0xff] 0.0
    %33 = vst.msk [vmem:[#allocation2 + $0x68] sm:$0xff] %vm20, 0.0
    %34 = vst [vmem:[#allocation2 + $0x70] sm:$0xff] 0.0
    %35 = vst.msk [vmem:[#allocation2 + $0x78] sm:$0xff] %vm20, 0.0
  $region17: #{_lambda_.63} parent=0 // pred_fallthru
    _
  %v36 = vld [vmem:[#allocation2] sm:$0xff]
  %v37 = vld [vmem:[#allocation2 + $0x8] sm:$0xff]
  %v38 = vld [vmem:[#allocation2 + $0x10] sm:$0xff]
  %v39 = vld [vmem:[#allocation2 + $0x18] sm:$0xff]
  %v40 = vld [vmem:[#allocation2 + $0x20] sm:$0xff]
  %v41 = vld [vmem:[#allocation2 + $0x28] sm:$0xff]
  %v42 = vld [vmem:[#allocation2 + $0x30] sm:$0xff]
  %v43 = vld [vmem:[#allocation2 + $0x38] sm:$0xff]
  %v44 = vld [vmem:[#allocation2 + $0x40] sm:$0xff]
  %v45 = vld [vmem:[#allocation2 + $0x48] sm:$0xff]
  %v46 = vld [vmem:[#allocation2 + $0x50] sm:$0xff]
  %v47 = vld [vmem:[#allocation2 + $0x58] sm:$0xff]
  %v48 = vld [vmem:[#allocation2 + $0x60] sm:$0xff]
  %v49 = vld [vmem:[#allocation2 + $0x68] sm:$0xff]
  %v50 = vld [vmem:[#allocation2 + $0x70] sm:$0xff]
  %v51 = vld [vmem:[#allocation2 + $0x78] sm:$0xff]
  %v52 = vld [vmem:[%s0] sm:$0xf]
  %v53 = vld [vmem:[%s0 + $0x4] sm:$0xf]
  %v54 = vld [vmem:[%s0 + $0x8] sm:$0xf]
  %v55 = vld [vmem:[%s0 + $0xc] sm:$0xf]
  %v56 = vld [vmem:[%s0 + $0x10] sm:$0xf]
  %v57 = vld [vmem:[%s0 + $0x14] sm:$0xf]
  %v58 = vld [vmem:[%s0 + $0x18] sm:$0xf]
  %v59 = vld [vmem:[%s0 + $0x1c] sm:$0xf]
  %v60 = vld [vmem:[%s1] sm:$0xff]
  %v61 = vld [vmem:[%s1 + $0x8] sm:$0xff]
  %v62 = vld [vmem:[%s1 + $0x10] sm:$0xff]
  %v63 = vld [vmem:[%s1 + $0x18] sm:$0xff]
  %v64 = vld [vmem:[%s1 + $0x20] sm:$0xff]
  %v65 = vld [vmem:[%s1 + $0x28] sm:$0xff]
  %v66 = vld [vmem:[%s1 + $0x30] sm:$0xff]
  %v67 = vld [vmem:[%s1 + $0x38] sm:$0xff]
  %v76 = vunpack.c.l.b16 %v52
  %v77 = vunpack.c.l.b16 %v53
  %v78 = vunpack.c.l.b16 %v54
  %v79 = vunpack.c.l.b16 %v55
  %v80 = vunpack.c.l.b16 %v56
  %v81 = vunpack.c.l.b16 %v57
  %v82 = vunpack.c.l.b16 %v58
  %v83 = vunpack.c.l.b16 %v59
  %v84 = vpack.c.b16 %v77, %v76
  %v85 = vpack.c.b16 %v79, %v78
  %v86 = vpack.c.b16 %v81, %v80
  %v87 = vpack.c.b16 %v83, %v82
  %v96 = vunpack.c.l.b16 %v60
  %v97 = vunpack.c.h.b16 %v60
  %v98 = vunpack.c.l.b16 %v61
  %v99 = vunpack.c.h.b16 %v61
  %v100 = vunpack.c.l.b16 %v62
  %v101 = vunpack.c.h.b16 %v62
  %v102 = vunpack.c.l.b16 %v63
  %v103 = vunpack.c.h.b16 %v63
  %v104 = vunpack.c.l.b16 %v64
  %v105 = vunpack.c.h.b16 %v64
  %v106 = vunpack.c.l.b16 %v65
  %v107 = vunpack.c.h.b16 %v65
  %v108 = vunpack.c.l.b16 %v66
  %v109 = vunpack.c.h.b16 %v66
  %v110 = vunpack.c.l.b16 %v67
  %v111 = vunpack.c.h.b16 %v67
  %v112 = vpack.c.b16 %v98, %v96
  %v113 = vpack.c.b16 %v99, %v97
  %v114 = vpack.c.b16 %v102, %v100
  %v115 = vpack.c.b16 %v103, %v101
  %v116 = vpack.c.b16 %v106, %v104
  %v117 = vpack.c.b16 %v107, %v105
  %v118 = vpack.c.b16 %v110, %v108
  %v119 = vpack.c.b16 %v111, %v109
  %vm128 = vcmask 523264
  %v130 = vsel %vm128, %v84, 0
  %v133 = vsel %vm128, %v85, 0
  %v136 = vsel %vm128, %v86, 0
  %v139 = vsel %vm128, %v87, 0
  %141 = vmatpush.bf16.msra.mxu0 0
  %142 = vmatpush.bf16.msra.mxu0 0
  %143 = vmatpush.bf16.msra.mxu0 0
  %144 = vmatpush.bf16.msra.mxu0 0
  %145 = vmatpush.bf16.msra.mxu0 %v118
  %146 = vmatpush.bf16.msra.mxu0 %v116
  %147 = vmatpush.bf16.msra.mxu0 %v114
  %148 = vmatpush.bf16.msra.mxu0 %v112
  %149 = vmatmul.bf16.gmra.mxu0 %v130
  %v150 = vpop.f32.mrf.mxu0
  %v151 = vadd.f32 0.0, %v150
  %v152 = vpop.f32.mrf.mxu0
  %v153 = vadd.f32 0.0, %v152
  %154 = vmatmul.bf16.gmra.mxu0 %v133
  %v155 = vpop.f32.mrf.mxu0
  %v156 = vadd.f32 0.0, %v155
  %v157 = vpop.f32.mrf.mxu0
  %v158 = vadd.f32 0.0, %v157
  %159 = vmatmul.bf16.gmra.mxu0 %v136
  %v160 = vpop.f32.mrf.mxu0
  %v161 = vadd.f32 0.0, %v160
  %v162 = vpop.f32.mrf.mxu0
  %v163 = vadd.f32 0.0, %v162
  %164 = vmatmul.bf16.gmra.mxu0 %v139
  %v165 = vpop.f32.mrf.mxu0
  %v166 = vadd.f32 0.0, %v165
  %v167 = vpop.f32.mrf.mxu0
  %v168 = vadd.f32 0.0, %v167
  %169 = vdwg.mxu0
  %170 = vmatpush.bf16.msra.mxu0 0
  %171 = vmatpush.bf16.msra.mxu0 0
  %172 = vmatpush.bf16.msra.mxu0 0
  %173 = vmatpush.bf16.msra.mxu0 0
  %174 = vmatpush.bf16.msra.mxu0 %v119
  %175 = vmatpush.bf16.msra.mxu0 %v117
  %176 = vmatpush.bf16.msra.mxu0 %v115
  %177 = vmatpush.bf16.msra.mxu0 %v113
  %178 = vmatmul.bf16.gmra.mxu0 %v130
  %v179 = vpop.f32.mrf.mxu0
  %v180 = vadd.f32 0.0, %v179
  %v181 = vpop.f32.mrf.mxu0
  %v182 = vadd.f32 0.0, %v181
  %183 = vmatmul.bf16.gmra.mxu0 %v133
  %v184 = vpop.f32.mrf.mxu0
  %v185 = vadd.f32 0.0, %v184
  %v186 = vpop.f32.mrf.mxu0
  %v187 = vadd.f32 0.0, %v186
  %188 = vmatmul.bf16.gmra.mxu0 %v136
  %v189 = vpop.f32.mrf.mxu0
  %v190 = vadd.f32 0.0, %v189
  %v191 = vpop.f32.mrf.mxu0
  %v192 = vadd.f32 0.0, %v191
  %193 = vmatmul.bf16.gmra.mxu0 %v139
  %v194 = vpop.f32.mrf.mxu0
  %v195 = vadd.f32 0.0, %v194
  %v196 = vpop.f32.mrf.mxu0
  %v197 = vadd.f32 0.0, %v196
  %198 = vdwg.mxu0
  %v199 = vadd.f32 %v36, %v151
  %v200 = vadd.f32 %v37, %v180
  %v201 = vadd.f32 %v38, %v153
  %v202 = vadd.f32 %v39, %v182
  %v203 = vadd.f32 %v40, %v156
  %v204 = vadd.f32 %v41, %v185
  %v205 = vadd.f32 %v42, %v158
  %v206 = vadd.f32 %v43, %v187
  %v207 = vadd.f32 %v44, %v161
  %v208 = vadd.f32 %v45, %v190
  %v209 = vadd.f32 %v46, %v163
  %v210 = vadd.f32 %v47, %v192
  %v211 = vadd.f32 %v48, %v166
  %v212 = vadd.f32 %v49, %v195
  %v213 = vadd.f32 %v50, %v168
  %v214 = vadd.f32 %v51, %v197
  %215 = vst [vmem:[#allocation2] sm:$0xff] %v199
  %216 = vst.msk [vmem:[#allocation2 + $0x8] sm:$0xff] %vm128, %v200
  %217 = vst [vmem:[#allocation2 + $0x10] sm:$0xff] %v201
  %218 = vst.msk [vmem:[#allocation2 + $0x18] sm:$0xff] %vm128, %v202
  %219 = vst [vmem:[#allocation2 + $0x20] sm:$0xff] %v203
  %220 = vst.msk [vmem:[#allocation2 + $0x28] sm:$0xff] %vm128, %v204
  %221 = vst [vmem:[#allocation2 + $0x30] sm:$0xff] %v205
  %222 = vst.msk [vmem:[#allocation2 + $0x38] sm:$0xff] %vm128, %v206
  %223 = vst [vmem:[#allocation2 + $0x40] sm:$0xff] %v207
  %224 = vst.msk [vmem:[#allocation2 + $0x48] sm:$0xff] %vm128, %v208
  %225 = vst [vmem:[#allocation2 + $0x50] sm:$0xff] %v209
  %226 = vst.msk [vmem:[#allocation2 + $0x58] sm:$0xff] %vm128, %v210
  %227 = vst [vmem:[#allocation2 + $0x60] sm:$0xff] %v211
  %228 = vst.msk [vmem:[#allocation2 + $0x68] sm:$0xff] %vm128, %v212
  %229 = vst [vmem:[#allocation2 + $0x70] sm:$0xff] %v213
  %230 = vst.msk [vmem:[#allocation2 + $0x78] sm:$0xff] %vm128, %v214
  // Predicated region
  $region18: #{_lambda_.63} parent=0 // pred_check
    %p231 = pneg %p15
  $region19: #{_lambda_.63} parent=0 // pred_check_branch
    %233 = sbr.rel (%p231) target = $region21
  $region20: #{_lambda_.63} parent=0 // pred_region
    %v234 = vld [vmem:[#allocation2] sm:$0xff]
    %v235 = vld [vmem:[#allocation2 + $0x8] sm:$0xff]
    %v236 = vld [vmem:[#allocation2 + $0x10] sm:$0xff]
    %v237 = vld [vmem:[#allocation2 + $0x18] sm:$0xff]
    %v238 = vld [vmem:[#allocation2 + $0x20] sm:$0xff]
    %v239 = vld [vmem:[#allocation2 + $0x28] sm:$0xff]
    %v240 = vld [vmem:[#allocation2 + $0x30] sm:$0xff]
    %v241 = vld [vmem:[#allocation2 + $0x38] sm:$0xff]
    %v242 = vld [vmem:[#allocation2 + $0x40] sm:$0xff]
    %v243 = vld [vmem:[#allocation2 + $0x48] sm:$0xff]
    %v244 = vld [vmem:[#allocation2 + $0x50] sm:$0xff]
    %v245 = vld [vmem:[#allocation2 + $0x58] sm:$0xff]
    %v246 = vld [vmem:[#allocation2 + $0x60] sm:$0xff]
    %v247 = vld [vmem:[#allocation2 + $0x68] sm:$0xff]
    %v248 = vld [vmem:[#allocation2 + $0x70] sm:$0xff]
    %v249 = vld [vmem:[#allocation2 + $0x78] sm:$0xff]
    %v250 = vld [vmem:[%s2] sm:$0x3]
    %v252 = vperm.slane %v250, 0
    %v253 = vperm.slane %v250, 1
    %v256 = vadd.f32 %v234, %v252
    %v257 = vadd.f32 %v235, %v253
    %v258 = vadd.f32 %v236, %v252
    %v259 = vadd.f32 %v237, %v253
    %v260 = vadd.f32 %v238, %v252
    %v261 = vadd.f32 %v239, %v253
    %v262 = vadd.f32 %v240, %v252
    %v263 = vadd.f32 %v241, %v253
    %v264 = vadd.f32 %v242, %v252
    %v265 = vadd.f32 %v243, %v253
    %v266 = vadd.f32 %v244, %v252
    %v267 = vadd.f32 %v245, %v253
    %v268 = vadd.f32 %v246, %v252
    %v269 = vadd.f32 %v247, %v253
    %v270 = vadd.f32 %v248, %v252
    %v271 = vadd.f32 %v249, %v253
    %v272 = vpack.c.bf16 %v257, %v256
    %v273 = vpack.c.bf16 %v259, %v258
    %v274 = vpack.c.bf16 %v261, %v260
    %v275 = vpack.c.bf16 %v263, %v262
    %v276 = vpack.c.bf16 %v265, %v264
    %v277 = vpack.c.bf16 %v267, %v266
    %v278 = vpack.c.bf16 %v269, %v268
    %v279 = vpack.c.bf16 %v271, %v270
    %vm280 = vcmask 1043456
    %vm281 = vcmask 523268
    %vm282 = vmor %vm281, %vm280
    %283 = vst.msk [vmem:[%s3] sm:$0xff] %vm282, %v272
    %284 = vst.msk [vmem:[%s3 + $0x8] sm:$0xff] %vm282, %v273
    %285 = vst.msk [vmem:[%s3 + $0x10] sm:$0xff] %vm282, %v274
    %286 = vst.msk [vmem:[%s3 + $0x18] sm:$0xff] %vm282, %v275
    %287 = vst.msk [vmem:[%s3 + $0x20] sm:$0xff] %vm282, %v276
    %288 = vst.msk [vmem:[%s3 + $0x28] sm:$0xff] %vm282, %v277
    %289 = vst.msk [vmem:[%s3 + $0x30] sm:$0xff] %vm282, %v278
    %290 = vst.msk [vmem:[%s3 + $0x38] sm:$0xff] %vm282, %v279
  $region21: #{_lambda_.63} parent=0 // pred_fallthru
    _
  // Predicated region
  $region22: #{_lambda_.63} parent=0 // pred_check
    _
  $region23: #{_lambda_.63} parent=0 // pred_check_branch
    %292 = sbr.rel (0) target = $region25
  $region24: #{_lambda_.63} parent=0 // pred_region
    _
  $region25: #{_lambda_.63} parent=0 // pred_fallthru
    _
  // Predicated region
  $region26: #{_lambda_.63} parent=0 // pred_check
    _
  $region27: #{_lambda_.63} parent=0 // pred_check_branch
    %294 = sbr.rel (0) target = $region29
  $region28: #{_lambda_.63} parent=0 // pred_region
    _
  $region29: #{_lambda_.63} parent=0 // pred_fallthru
    _

// kernel: _lambda_.36
$region0: #{_lambda_.36}
  #allocation0 [shape = 'u32[]', space=smem, size = 0x4, offset = 0x4, fixed_abs, tag = 'smem constant byte address 0x4 - core index']
  #allocation1 [shape = 'u32[72,128]{1,0:T(1,128)}', space=vmem, size = 0x9000, scoped, tag = 'internal scratch']
  #allocation2 [shape = 'f32[64,64]{1,0:T(8,128)}', space=vmem, size = 0x8000, scoped, tag = 'scratch operand']
  %s0 = inlined_call_operand.vmem [shape: bf16[64,4], index: 0, kind: input, shape index: {}]
  %s1 = inlined_call_operand.vmem [shape: bf16[4,64], index: 1, kind: input, shape index: {}]
  %s2 = inlined_call_operand.vmem [shape: f32[1,64], index: 2, kind: input, shape index: {}]
  %s3 = inlined_call_operand.vmem [shape: bf16[64,64], index: 3, kind: output, shape index: {}]
  %s4 = sld [smem:[#allocation0]]
  $region30: #{_lambda_.36} parent=0
    _
  %s6 = ssub.s32 1, %s4
  %s7 = scalar_select 0, %s6, %s4
  // Predicated region
  $region2: #{_lambda_.36} parent=0 // pred_check
    _
  $region3: #{_lambda_.36} parent=0 // pred_check_branch
    %9 = sbr.rel (0) target = $region5
  $region4: #{_lambda_.36} parent=0 // pred_region
    _
  $region5: #{_lambda_.36} parent=0 // pred_fallthru
    _
  // Predicated region
  $region6: #{_lambda_.36} parent=0 // pred_check
    _
  $region7: #{_lambda_.36} parent=0 // pred_check_branch
    %11 = sbr.rel (0) target = $region9
  $region8: #{_lambda_.36} parent=0 // pred_region
    _
  $region9: #{_lambda_.36} parent=0 // pred_fallthru
    _
  // Predicated region
  $region10: #{_lambda_.36} parent=0 // pred_check
    _
  $region11: #{_lambda_.36} parent=0 // pred_check_branch
    %13 = sbr.rel (0) target = $region13
  $region12: #{_lambda_.36} parent=0 // pred_region
    _
  $region13: #{_lambda_.36} parent=0 // pred_fallthru
    _
  %p15 = scmp.eq.s32.totalorder 0, 0
  // Predicated region
  $region14: #{_lambda_.36} parent=0 // pred_check
    %p16 = pneg %p15
  $region15: #{_lambda_.36} parent=0 // pred_check_branch
    %18 = sbr.rel (%p16) target = $region17
  $region16: #{_lambda_.36} parent=0 // pred_region
    %vm19 = vcmask 523264
    %20 = vst.msk [vmem:[#allocation2] sm:$0xff] %vm19, 0.0
    %21 = vst.msk [vmem:[#allocation2 + $0x8] sm:$0xff] %vm19, 0.0
    %22 = vst.msk [vmem:[#allocation2 + $0x10] sm:$0xff] %vm19, 0.0
    %23 = vst.msk [vmem:[#allocation2 + $0x18] sm:$0xff] %vm19, 0.0
    %24 = vst.msk [vmem:[#allocation2 + $0x20] sm:$0xff] %vm19, 0.0
    %25 = vst.msk [vmem:[#allocation2 + $0x28] sm:$0xff] %vm19, 0.0
    %26 = vst.msk [vmem:[#allocation2 + $0x30] sm:$0xff] %vm19, 0.0
    %27 = vst.msk [vmem:[#allocation2 + $0x38] sm:$0xff] %vm19, 0.0
  $region17: #{_lambda_.36} parent=0 // pred_fallthru
    _
  %v28 = vld [vmem:[#allocation2] sm:$0xff]
  %v29 = vld [vmem:[#allocation2 + $0x8] sm:$0xff]
  %v30 = vld [vmem:[#allocation2 + $0x10] sm:$0xff]
  %v31 = vld [vmem:[#allocation2 + $0x18] sm:$0xff]
  %v32 = vld [vmem:[#allocation2 + $0x20] sm:$0xff]
  %v33 = vld [vmem:[#allocation2 + $0x28] sm:$0xff]
  %v34 = vld [vmem:[#allocation2 + $0x30] sm:$0xff]
  %v35 = vld [vmem:[#allocation2 + $0x38] sm:$0xff]
  %v36 = vld [vmem:[%s0] sm:$0xf]
  %v37 = vld [vmem:[%s0 + $0x4] sm:$0xf]
  %v38 = vld [vmem:[%s0 + $0x8] sm:$0xf]
  %v39 = vld [vmem:[%s0 + $0xc] sm:$0xf]
  %v40 = vld [vmem:[%s0 + $0x10] sm:$0xf]
  %v41 = vld [vmem:[%s0 + $0x14] sm:$0xf]
  %v42 = vld [vmem:[%s0 + $0x18] sm:$0xf]
  %v43 = vld [vmem:[%s0 + $0x1c] sm:$0xf]
  %v44 = vld [vmem:[%s1] sm:$0x3]
  %v53 = vunpack.c.l.b16 %v36
  %v54 = vunpack.c.l.b16 %v37
  %v55 = vunpack.c.l.b16 %v38
  %v56 = vunpack.c.l.b16 %v39
  %v57 = vunpack.c.l.b16 %v40
  %v58 = vunpack.c.l.b16 %v41
  %v59 = vunpack.c.l.b16 %v42
  %v60 = vunpack.c.l.b16 %v43
  %v61 = vpack.c.b16 %v54, %v53
  %v62 = vpack.c.b16 %v56, %v55
  %v63 = vpack.c.b16 %v58, %v57
  %v64 = vpack.c.b16 %v60, %v59
  %vm65 = vcmask 31744
  %v67 = vsel %vm65, %v61, 0
  %v70 = vsel %vm65, %v62, 0
  %v73 = vsel %vm65, %v63, 0
  %v76 = vsel %vm65, %v64, 0
  %vm78 = vcmask 1041408
  %v80 = vsel %vm78, %v44, 0
  %82 = vmatpush.bf16.msra.mxu0 0
  %83 = vmatpush.bf16.msra.mxu0 0
  %84 = vmatpush.bf16.msra.mxu0 0
  %85 = vmatpush.bf16.msra.mxu0 0
  %86 = vmatpush.bf16.msra.mxu0 0
  %87 = vmatpush.bf16.msra.mxu0 0
  %88 = vmatpush.bf16.msra.mxu0 0
  %89 = vmatpush.bf16.msra.mxu0 %v80
  %90 = vmatmul.bf16.gmra.mxu0 %v67
  %v91 = vpop.f32.mrf.mxu0
  %v92 = vadd.f32 0.0, %v91
  %v93 = vpop.f32.mrf.mxu0
  %v94 = vadd.f32 0.0, %v93
  %95 = vmatmul.bf16.gmra.mxu0 %v70
  %v96 = vpop.f32.mrf.mxu0
  %v97 = vadd.f32 0.0, %v96
  %v98 = vpop.f32.mrf.mxu0
  %v99 = vadd.f32 0.0, %v98
  %100 = vmatmul.bf16.gmra.mxu0 %v73
  %v101 = vpop.f32.mrf.mxu0
  %v102 = vadd.f32 0.0, %v101
  %v103 = vpop.f32.mrf.mxu0
  %v104 = vadd.f32 0.0, %v103
  %105 = vmatmul.bf16.gmra.mxu0 %v76
  %v106 = vpop.f32.mrf.mxu0
  %v107 = vadd.f32 0.0, %v106
  %v108 = vpop.f32.mrf.mxu0
  %v109 = vadd.f32 0.0, %v108
  %110 = vdwg.mxu0
  %v111 = vadd.f32 %v28, %v92
  %v112 = vadd.f32 %v29, %v94
  %v113 = vadd.f32 %v30, %v97
  %v114 = vadd.f32 %v31, %v99
  %v115 = vadd.f32 %v32, %v102
  %v116 = vadd.f32 %v33, %v104
  %v117 = vadd.f32 %v34, %v107
  %v118 = vadd.f32 %v35, %v109
  %vm119 = vcmask 523264
  %120 = vst.msk [vmem:[#allocation2] sm:$0xff] %vm119, %v111
  %121 = vst.msk [vmem:[#allocation2 + $0x8] sm:$0xff] %vm119, %v112
  %122 = vst.msk [vmem:[#allocation2 + $0x10] sm:$0xff] %vm119, %v113
  %123 = vst.msk [vmem:[#allocation2 + $0x18] sm:$0xff] %vm119, %v114
  %124 = vst.msk [vmem:[#allocation2 + $0x20] sm:$0xff] %vm119, %v115
  %125 = vst.msk [vmem:[#allocation2 + $0x28] sm:$0xff] %vm119, %v116
  %126 = vst.msk [vmem:[#allocation2 + $0x30] sm:$0xff] %vm119, %v117
  %127 = vst.msk [vmem:[#allocation2 + $0x38] sm:$0xff] %vm119, %v118
  // Predicated region
  $region18: #{_lambda_.36} parent=0 // pred_check
    %p128 = pneg %p15
  $region19: #{_lambda_.36} parent=0 // pred_check_branch
    %130 = sbr.rel (%p128) target = $region21
  $region20: #{_lambda_.36} parent=0 // pred_region
    %v131 = vld [vmem:[#allocation2] sm:$0xff]
    %v132 = vld [vmem:[#allocation2 + $0x8] sm:$0xff]
    %v133 = vld [vmem:[#allocation2 + $0x10] sm:$0xff]
    %v134 = vld [vmem:[#allocation2 + $0x18] sm:$0xff]
    %v135 = vld [vmem:[#allocation2 + $0x20] sm:$0xff]
    %v136 = vld [vmem:[#allocation2 + $0x28] sm:$0xff]
    %v137 = vld [vmem:[#allocation2 + $0x30] sm:$0xff]
    %v138 = vld [vmem:[#allocation2 + $0x38] sm:$0xff]
    %v139 = vld [vmem:[%s2] sm:$0x1]
    %v141 = vperm.slane %v139, 0
    %v143 = vadd.f32 %v131, %v141
    %v144 = vadd.f32 %v132, %v141
    %v145 = vadd.f32 %v133, %v141
    %v146 = vadd.f32 %v134, %v141
    %v147 = vadd.f32 %v135, %v141
    %v148 = vadd.f32 %v136, %v141
    %v149 = vadd.f32 %v137, %v141
    %v150 = vadd.f32 %v138, %v141
    %v151 = vpack.c.bf16 %v143, %v143
    %v152 = vpack.c.bf16 %v144, %v144
    %v153 = vpack.c.bf16 %v145, %v145
    %v154 = vpack.c.bf16 %v146, %v146
    %v155 = vpack.c.bf16 %v147, %v147
    %v156 = vpack.c.bf16 %v148, %v148
    %v157 = vpack.c.bf16 %v149, %v149
    %v158 = vpack.c.bf16 %v150, %v150
    %vm159 = vcmask 519168
    %160 = vst.msk [vmem:[%s3] sm:$0xf] %vm159, %v151
    %161 = vst.msk [vmem:[%s3 + $0x4] sm:$0xf] %vm159, %v152
    %162 = vst.msk [vmem:[%s3 + $0x8] sm:$0xf] %vm159, %v153
    %163 = vst.msk [vmem:[%s3 + $0xc] sm:$0xf] %vm159, %v154
    %164 = vst.msk [vmem:[%s3 + $0x10] sm:$0xf] %vm159, %v155
    %165 = vst.msk [vmem:[%s3 + $0x14] sm:$0xf] %vm159, %v156
    %166 = vst.msk [vmem:[%s3 + $0x18] sm:$0xf] %vm159, %v157
    %167 = vst.msk [vmem:[%s3 + $0x1c] sm:$0xf] %vm159, %v158
  $region21: #{_lambda_.36} parent=0 // pred_fallthru
    _
  // Predicated region
  $region22: #{_lambda_.36} parent=0 // pred_check
    _
  $region23: #{_lambda_.36} parent=0 // pred_check_branch
    %169 = sbr.rel (0) target = $region25
  $region24: #{_lambda_.36} parent=0 // pred_region
    _
  $region25: #{_lambda_.36} parent=0 // pred_fallthru
    _
  // Predicated region
  $region26: #{_lambda_.36} parent=0 // pred_check
    _
  $region27: #{_lambda_.36} parent=0 // pred_check_branch
    %171 = sbr.rel (0) target = $region29
  $region28: #{_lambda_.36} parent=0 // pred_region
    _
  $region29: #{_lambda_.36} parent=0 // pred_fallthru
    _

// kernel: _lambda_.64
$region0: #{_lambda_.64}
  #allocation0 [shape = 'u32[]', space=smem, size = 0x4, offset = 0x4, fixed_abs, tag = 'smem constant byte address 0x4 - core index']
  #allocation1 [shape = 'u32[72,128]{1,0:T(1,128)}', space=vmem, size = 0x9000, scoped, tag = 'internal scratch']
  %s0 = inlined_call_operand.vmem [shape: bf16[64,64], index: 0, kind: input, shape index: {}]
  %s1 = inlined_call_operand.vmem [shape: f32[1,64], index: 1, kind: input, shape index: {}]
  %s2 = inlined_call_operand.vmem [shape: f32[1,64], index: 2, kind: input, shape index: {}]
  %s3 = inlined_call_operand.vmem [shape: bf16[64,192], index: 3, kind: input, shape index: {}]
  %s4 = inlined_call_operand.vmem [shape: bf16[64,64], index: 4, kind: input, shape index: {}]
  %s5 = inlined_call_operand.vmem [shape: f32[1,64], index: 5, kind: input, shape index: {}]
  %s6 = inlined_call_operand.vmem [shape: bf16[64,64], index: 6, kind: output, shape index: {}]
  %s7 = sld [smem:[#allocation0]]
  $region34: #{_lambda_.64} parent=0
    _
  %s9 = ssub.s32 1, %s7
  %s10 = scalar_select 0, %s9, %s7
  // Predicated region
  $region2: #{_lambda_.64} parent=0 // pred_check
    _
  $region3: #{_lambda_.64} parent=0 // pred_check_branch
    %12 = sbr.rel (0) target = $region5
  $region4: #{_lambda_.64} parent=0 // pred_region
    _
  $region5: #{_lambda_.64} parent=0 // pred_fallthru
    _
  // Predicated region
  $region6: #{_lambda_.64} parent=0 // pred_check
    _
  $region7: #{_lambda_.64} parent=0 // pred_check_branch
    %14 = sbr.rel (0) target = $region9
  $region8: #{_lambda_.64} parent=0 // pred_region
    _
  $region9: #{_lambda_.64} parent=0 // pred_fallthru
    _
  // Predicated region
  $region10: #{_lambda_.64} parent=0 // pred_check
    _
  $region11: #{_lambda_.64} parent=0 // pred_check_branch
    %16 = sbr.rel (0) target = $region13
  $region12: #{_lambda_.64} parent=0 // pred_region
    _
  $region13: #{_lambda_.64} parent=0 // pred_fallthru
    _
  // Predicated region
  $region14: #{_lambda_.64} parent=0 // pred_check
    _
  $region15: #{_lambda_.64} parent=0 // pred_check_branch
    %18 = sbr.rel (0) target = $region17
  $region16: #{_lambda_.64} parent=0 // pred_region
    _
  $region17: #{_lambda_.64} parent=0 // pred_fallthru
    _
  // Predicated region
  $region18: #{_lambda_.64} parent=0 // pred_check
    _
  $region19: #{_lambda_.64} parent=0 // pred_check_branch
    %20 = sbr.rel (0) target = $region21
  $region20: #{_lambda_.64} parent=0 // pred_region
    _
  $region21: #{_lambda_.64} parent=0 // pred_fallthru
    _
  // Predicated region
  $region22: #{_lambda_.64} parent=0 // pred_check
    _
  $region23: #{_lambda_.64} parent=0 // pred_check_branch
    %22 = sbr.rel (0) target = $region25
  $region24: #{_lambda_.64} parent=0 // pred_region
    _
  $region25: #{_lambda_.64} parent=0 // pred_fallthru
    _
  %v24 = vld [vmem:[%s0] sm:$0xf]
  %v25 = vld [vmem:[%s0 + $0x4] sm:$0xf]
  %v26 = vld [vmem:[%s0 + $0x8] sm:$0xf]
  %v27 = vld [vmem:[%s0 + $0xc] sm:$0xf]
  %v28 = vld [vmem:[%s0 + $0x10] sm:$0xf]
  %v29 = vld [vmem:[%s0 + $0x14] sm:$0xf]
  %v30 = vld [vmem:[%s0 + $0x18] sm:$0xf]
  %v31 = vld [vmem:[%s0 + $0x1c] sm:$0xf]
  %v32 = vunpack.c.l.bf16 %v24
  %v33 = vunpack.c.l.bf16 %v25
  %v34 = vunpack.c.l.bf16 %v26
  %v35 = vunpack.c.l.bf16 %v27
  %v36 = vunpack.c.l.bf16 %v28
  %v37 = vunpack.c.l.bf16 %v29
  %v38 = vunpack.c.l.bf16 %v30
  %v39 = vunpack.c.l.bf16 %v31
  %vm40 = vcmask 523264
  %v41 = vsel %vm40, %v32, 0.0
  %42 = vadd.xlane.f32.xlu0 %v41
  %v43 = vpop.xlane.xlu0 %42
  %v44 = vsel %vm40, %v33, 0.0
  %45 = vadd.xlane.f32.xlu0 %v44
  %v46 = vpop.xlane.xlu0 %45
  %v47 = vsel %vm40, %v34, 0.0
  %48 = vadd.xlane.f32.xlu0 %v47
  %v49 = vpop.xlane.xlu0 %48
  %v50 = vsel %vm40, %v35, 0.0
  %51 = vadd.xlane.f32.xlu0 %v50
  %v52 = vpop.xlane.xlu0 %51
  %v53 = vsel %vm40, %v36, 0.0
  %54 = vadd.xlane.f32.xlu0 %v53
  %v55 = vpop.xlane.xlu0 %54
  %v56 = vsel %vm40, %v37, 0.0
  %57 = vadd.xlane.f32.xlu0 %v56
  %v58 = vpop.xlane.xlu0 %57
  %v59 = vsel %vm40, %v38, 0.0
  %60 = vadd.xlane.f32.xlu0 %v59
  %v61 = vpop.xlane.xlu0 %60
  %v62 = vsel %vm40, %v39, 0.0
  %63 = vadd.xlane.f32.xlu0 %v62
  %v64 = vpop.xlane.xlu0 %63
  %v65 = vrcp.pop 64.0
  %v66 = vmul.f32 64.0, %v65
  %v67 = vsub.f32 1.0, %v66
  %v68 = vmul.f32 %v65, %v67
  %v69 = vadd.f32 %v65, %v68
  %vm70 = vweird.f32 %v65
  %v71 = vsel %vm70, %v65, %v69
  %v72 = vmul.f32 %v43, %v71
  %v73 = vmul.f32 %v46, %v71
  %v74 = vmul.f32 %v49, %v71
  %v75 = vmul.f32 %v52, %v71
  %v76 = vmul.f32 %v55, %v71
  %v77 = vmul.f32 %v58, %v71
  %v78 = vmul.f32 %v61, %v71
  %v79 = vmul.f32 %v64, %v71
  %v80 = vsub.f32 %v32, %v72
  %v81 = vsub.f32 %v33, %v73
  %v82 = vsub.f32 %v34, %v74
  %v83 = vsub.f32 %v35, %v75
  %v84 = vsub.f32 %v36, %v76
  %v85 = vsub.f32 %v37, %v77
  %v86 = vsub.f32 %v38, %v78
  %v87 = vsub.f32 %v39, %v79
  %v88 = vmul.f32 %v80, %v80
  %v89 = vmul.f32 %v81, %v81
  %v90 = vmul.f32 %v82, %v82
  %v91 = vmul.f32 %v83, %v83
  %v92 = vmul.f32 %v84, %v84
  %v93 = vmul.f32 %v85, %v85
  %v94 = vmul.f32 %v86, %v86
  %v95 = vmul.f32 %v87, %v87
  %v96 = vsel %vm40, %v88, 0.0
  %97 = vadd.xlane.f32.xlu0 %v96
  %v98 = vpop.xlane.xlu0 %97
  %v99 = vsel %vm40, %v89, 0.0
  %100 = vadd.xlane.f32.xlu0 %v99
  %v101 = vpop.xlane.xlu0 %100
  %v102 = vsel %vm40, %v90, 0.0
  %103 = vadd.xlane.f32.xlu0 %v102
  %v104 = vpop.xlane.xlu0 %103
  %v105 = vsel %vm40, %v91, 0.0
  %106 = vadd.xlane.f32.xlu0 %v105
  %v107 = vpop.xlane.xlu0 %106
  %v108 = vsel %vm40, %v92, 0.0
  %109 = vadd.xlane.f32.xlu0 %v108
  %v110 = vpop.xlane.xlu0 %109
  %v111 = vsel %vm40, %v93, 0.0
  %112 = vadd.xlane.f32.xlu0 %v111
  %v113 = vpop.xlane.xlu0 %112
  %v114 = vsel %vm40, %v94, 0.0
  %115 = vadd.xlane.f32.xlu0 %v114
  %v116 = vpop.xlane.xlu0 %115
  %v117 = vsel %vm40, %v95, 0.0
  %118 = vadd.xlane.f32.xlu0 %v117
  %v119 = vpop.xlane.xlu0 %118
  %v120 = vmul.f32 %v98, %v71
  %v121 = vmul.f32 %v101, %v71
  %v122 = vmul.f32 %v104, %v71
  %v123 = vmul.f32 %v107, %v71
  %v124 = vmul.f32 %v110, %v71
  %v125 = vmul.f32 %v113, %v71
  %v126 = vmul.f32 %v116, %v71
  %v127 = vmul.f32 %v119, %v71
  %v128 = vadd.f32 %v120, 1e-06
  %v129 = vadd.f32 %v121, 1e-06
  %v130 = vadd.f32 %v122, 1e-06
  %v131 = vadd.f32 %v123, 1e-06
  %v132 = vadd.f32 %v124, 1e-06
  %v133 = vadd.f32 %v125, 1e-06
  %v134 = vadd.f32 %v126, 1e-06
  %v135 = vadd.f32 %v127, 1e-06
  %v136 = vrsqrt.pop %v128
  %v137 = vmul.f32 %v136, %v128
  %v138 = vmul.f32 %v137, %v136
  %v139 = vmul.f32 0.5, %v138
  %v140 = vsub.f32 1.5, %v139
  %v141 = vmul.f32 %v136, %v140
  %vm142 = vweird.f32 %v128
  %vm143 = vweird.f32 %v136
  %vm144 = vmor %vm142, %vm143
  %v145 = vsel %vm144, %v136, %v141
  %v146 = vrsqrt.pop %v129
  %v147 = vmul.f32 %v146, %v129
  %v148 = vmul.f32 %v147, %v146
  %v149 = vmul.f32 0.5, %v148
  %v150 = vsub.f32 1.5, %v149
  %v151 = vmul.f32 %v146, %v150
  %vm152 = vweird.f32 %v129
  %vm153 = vweird.f32 %v146
  %vm154 = vmor %vm152, %vm153
  %v155 = vsel %vm154, %v146, %v151
  %v156 = vrsqrt.pop %v130
  %v157 = vmul.f32 %v156, %v130
  %v158 = vmul.f32 %v157, %v156
  %v159 = vmul.f32 0.5, %v158
  %v160 = vsub.f32 1.5, %v159
  %v161 = vmul.f32 %v156, %v160
  %vm162 = vweird.f32 %v130
  %vm163 = vweird.f32 %v156
  %vm164 = vmor %vm162, %vm163
  %v165 = vsel %vm164, %v156, %v161
  %v166 = vrsqrt.pop %v131
  %v167 = vmul.f32 %v166, %v131
  %v168 = vmul.f32 %v167, %v166
  %v169 = vmul.f32 0.5, %v168
  %v170 = vsub.f32 1.5, %v169
  %v171 = vmul.f32 %v166, %v170
  %vm172 = vweird.f32 %v131
  %vm173 = vweird.f32 %v166
  %vm174 = vmor %vm172, %vm173
  %v175 = vsel %vm174, %v166, %v171
  %v176 = vrsqrt.pop %v132
  %v177 = vmul.f32 %v176, %v132
  %v178 = vmul.f32 %v177, %v176
  %v179 = vmul.f32 0.5, %v178
  %v180 = vsub.f32 1.5, %v179
  %v181 = vmul.f32 %v176, %v180
  %vm182 = vweird.f32 %v132
  %vm183 = vweird.f32 %v176
  %vm184 = vmor %vm182, %vm183
  %v185 = vsel %vm184, %v176, %v181
  %v186 = vrsqrt.pop %v133
  %v187 = vmul.f32 %v186, %v133
  %v188 = vmul.f32 %v187, %v186
  %v189 = vmul.f32 0.5, %v188
  %v190 = vsub.f32 1.5, %v189
  %v191 = vmul.f32 %v186, %v190
  %vm192 = vweird.f32 %v133
  %vm193 = vweird.f32 %v186
  %vm194 = vmor %vm192, %vm193
  %v195 = vsel %vm194, %v186, %v191
  %v196 = vrsqrt.pop %v134
  %v197 = vmul.f32 %v196, %v134
  %v198 = vmul.f32 %v197, %v196
  %v199 = vmul.f32 0.5, %v198
  %v200 = vsub.f32 1.5, %v199
  %v201 = vmul.f32 %v196, %v200
  %vm202 = vweird.f32 %v134
  %vm203 = vweird.f32 %v196
  %vm204 = vmor %vm202, %vm203
  %v205 = vsel %vm204, %v196, %v201
  %v206 = vrsqrt.pop %v135
  %v207 = vmul.f32 %v206, %v135
  %v208 = vmul.f32 %v207, %v206
  %v209 = vmul.f32 0.5, %v208
  %v210 = vsub.f32 1.5, %v209
  %v211 = vmul.f32 %v206, %v210
  %vm212 = vweird.f32 %v135
  %vm213 = vweird.f32 %v206
  %vm214 = vmor %vm212, %vm213
  %v215 = vsel %vm214, %v206, %v211
  %v216 = vmul.f32 %v80, %v145
  %v217 = vmul.f32 %v81, %v155
  %v218 = vmul.f32 %v82, %v165
  %v219 = vmul.f32 %v83, %v175
  %v220 = vmul.f32 %v84, %v185
  %v221 = vmul.f32 %v85, %v195
  %v222 = vmul.f32 %v86, %v205
  %v223 = vmul.f32 %v87, %v215
  %v224 = vld [vmem:[%s1] sm:$0x1]
  %v226 = vperm.slane %v224, 0
  %v228 = vmul.f32 %v216, %v226
  %v229 = vmul.f32 %v217, %v226
  %v230 = vmul.f32 %v218, %v226
  %v231 = vmul.f32 %v219, %v226
  %v232 = vmul.f32 %v220, %v226
  %v233 = vmul.f32 %v221, %v226
  %v234 = vmul.f32 %v222, %v226
  %v235 = vmul.f32 %v223, %v226
  %v236 = vld [vmem:[%s2] sm:$0x1]
  %v238 = vperm.slane %v236, 0
  %v240 = vadd.f32 %v228, %v238
  %v241 = vadd.f32 %v229, %v238
  %v242 = vadd.f32 %v230, %v238
  %v243 = vadd.f32 %v231, %v238
  %v244 = vadd.f32 %v232, %v238
  %v245 = vadd.f32 %v233, %v238
  %v246 = vadd.f32 %v234, %v238
  %v247 = vadd.f32 %v235, %v238
  %v248 = vld [vmem:[%s3] sm:$0xf]
  %v249 = vld [vmem:[%s3 + $0x8] sm:$0xf]
  %v250 = vld [vmem:[%s3 + $0x10] sm:$0xf]
  %v251 = vld [vmem:[%s3 + $0x18] sm:$0xf]
  %v252 = vld [vmem:[%s3 + $0x20] sm:$0xf]
  %v253 = vld [vmem:[%s3 + $0x28] sm:$0xf]
  %v254 = vld [vmem:[%s3 + $0x30] sm:$0xf]
  %v255 = vld [vmem:[%s3 + $0x38] sm:$0xf]
  %v256 = vunpack.c.l.bf16 %v248
  %v257 = vunpack.c.l.bf16 %v249
  %v258 = vunpack.c.l.bf16 %v250
  %v259 = vunpack.c.l.bf16 %v251
  %v260 = vunpack.c.l.bf16 %v252
  %v261 = vunpack.c.l.bf16 %v253
  %v262 = vunpack.c.l.bf16 %v254
  %v263 = vunpack.c.l.bf16 %v255
  %v264 = vadd.f32 %v256, 1.0
  %v265 = vadd.f32 %v257, 1.0
  %v266 = vadd.f32 %v258, 1.0
  %v267 = vadd.f32 %v259, 1.0
  %v268 = vadd.f32 %v260, 1.0
  %v269 = vadd.f32 %v261, 1.0
  %v270 = vadd.f32 %v262, 1.0
  %v271 = vadd.f32 %v263, 1.0
  %280 = vrot.lane.b32.xlu0 %v264, 64
  %v281 = vpop.permute.xlu0 %280
  %282 = vrot.lane.b32.xlu0 %v265, 64
  %v283 = vpop.permute.xlu0 %282
  %284 = vrot.lane.b32.xlu0 %v266, 64
  %v285 = vpop.permute.xlu0 %284
  %286 = vrot.lane.b32.xlu0 %v267, 64
  %v287 = vpop.permute.xlu0 %286
  %288 = vrot.lane.b32.xlu0 %v268, 64
  %v289 = vpop.permute.xlu0 %288
  %290 = vrot.lane.b32.xlu0 %v269, 64
  %v291 = vpop.permute.xlu0 %290
  %292 = vrot.lane.b32.xlu0 %v270, 64
  %v293 = vpop.permute.xlu0 %292
  %294 = vrot.lane.b32.xlu0 %v271, 64
  %v295 = vpop.permute.xlu0 %294
  %v304 = vmul.f32 %v240, %v281
  %v305 = vmul.f32 %v241, %v283
  %v306 = vmul.f32 %v242, %v285
  %v307 = vmul.f32 %v243, %v287
  %v308 = vmul.f32 %v244, %v289
  %v309 = vmul.f32 %v245, %v291
  %v310 = vmul.f32 %v246, %v293
  %v311 = vmul.f32 %v247, %v295
  %v312 = vadd.f32 %v304, %v256
  %v313 = vadd.f32 %v305, %v257
  %v314 = vadd.f32 %v306, %v258
  %v315 = vadd.f32 %v307, %v259
  %v316 = vadd.f32 %v308, %v260
  %v317 = vadd.f32 %v309, %v261
  %v318 = vadd.f32 %v310, %v262
  %v319 = vadd.f32 %v311, %v263
  %v320 = vpack.c.bf16 %v313, %v312
  %v321 = vpack.c.bf16 %v315, %v314
  %v322 = vpack.c.bf16 %v317, %v316
  %v323 = vpack.c.bf16 %v319, %v318
  %v324 = vld [vmem:[%s4] sm:$0xf]
  %v325 = vld [vmem:[%s4 + $0x4] sm:$0xf]
  %v326 = vld [vmem:[%s4 + $0x8] sm:$0xf]
  %v327 = vld [vmem:[%s4 + $0xc] sm:$0xf]
  %v328 = vld [vmem:[%s4 + $0x10] sm:$0xf]
  %v329 = vld [vmem:[%s4 + $0x14] sm:$0xf]
  %v330 = vld [vmem:[%s4 + $0x18] sm:$0xf]
  %v331 = vld [vmem:[%s4 + $0x1c] sm:$0xf]
  %v332 = vld [vmem:[%s5] sm:$0x1]
  %v334 = vperm.slane %v332, 0
  %v344 = vunpack.c.l.b16 %v324
  %v345 = vunpack.c.l.b16 %v325
  %v346 = vunpack.c.l.b16 %v326
  %v347 = vunpack.c.l.b16 %v327
  %v348 = vunpack.c.l.b16 %v328
  %v349 = vunpack.c.l.b16 %v329
  %v350 = vunpack.c.l.b16 %v330
  %v351 = vunpack.c.l.b16 %v331
  %v352 = vpack.c.b16 %v345, %v344
  %v353 = vpack.c.b16 %v347, %v346
  %v354 = vpack.c.b16 %v349, %v348
  %v355 = vpack.c.b16 %v351, %v350
  %v361 = vsel %vm40, %v320, 0
  %v364 = vsel %vm40, %v321, 0
  %v367 = vsel %vm40, %v322, 0
  %v370 = vsel %vm40, %v323, 0
  %372 = vmatpush.bf16.msra.mxu0 0
  %373 = vmatpush.bf16.msra.mxu0 0
  %374 = vmatpush.bf16.msra.mxu0 0
  %375 = vmatpush.bf16.msra.mxu0 0
  %376 = vmatpush.bf16.msra.mxu0 %v355
  %377 = vmatpush.bf16.msra.mxu0 %v354
  %378 = vmatpush.bf16.msra.mxu0 %v353
  %379 = vmatpush.bf16.msra.mxu0 %v352
  %380 = vmatmul.bf16.gmra.mxu0 %v361
  %v381 = vpop.f32.mrf.mxu0
  %v382 = vadd.f32 %v334, %v381
  %v383 = vpop.f32.mrf.mxu0
  %v384 = vadd.f32 %v334, %v383
  %385 = vmatmul.bf16.gmra.mxu0 %v364
  %v386 = vpop.f32.mrf.mxu0
  %v387 = vadd.f32 %v334, %v386
  %v388 = vpop.f32.mrf.mxu0
  %v389 = vadd.f32 %v334, %v388
  %390 = vmatmul.bf16.gmra.mxu0 %v367
  %v391 = vpop.f32.mrf.mxu0
  %v392 = vadd.f32 %v334, %v391
  %v393 = vpop.f32.mrf.mxu0
  %v394 = vadd.f32 %v334, %v393
  %395 = vmatmul.bf16.gmra.mxu0 %v370
  %v396 = vpop.f32.mrf.mxu0
  %v397 = vadd.f32 %v334, %v396
  %v398 = vpop.f32.mrf.mxu0
  %v399 = vadd.f32 %v334, %v398
  %400 = vdwg.mxu0
  %v401 = vxor.u32 %v382, 2147483648
  %v402 = vxor.u32 %v384, 2147483648
  %v403 = vxor.u32 %v387, 2147483648
  %v404 = vxor.u32 %v389, 2147483648
  %v405 = vxor.u32 %v392, 2147483648
  %v406 = vxor.u32 %v394, 2147483648
  %v407 = vxor.u32 %v397, 2147483648
  %v408 = vxor.u32 %v399, 2147483648
  %v409 = vmul.f32 %v401, 1.442695
  %v410 = vpow.pop %v409
  %v411 = vmul.f32 %v402, 1.442695
  %v412 = vpow.pop %v411
  %v413 = vmul.f32 %v403, 1.442695
  %v414 = vpow.pop %v413
  %v415 = vmul.f32 %v404, 1.442695
  %v416 = vpow.pop %v415
  %v417 = vmul.f32 %v405, 1.442695
  %v418 = vpow.pop %v417
  %v419 = vmul.f32 %v406, 1.442695
  %v420 = vpow.pop %v419
  %v421 = vmul.f32 %v407, 1.442695
  %v422 = vpow.pop %v421
  %v423 = vmul.f32 %v408, 1.442695
  %v424 = vpow.pop %v423
  %v425 = vadd.f32 %v410, 1.0
  %v426 = vadd.f32 %v412, 1.0
  %v427 = vadd.f32 %v414, 1.0
  %v428 = vadd.f32 %v416, 1.0
  %v429 = vadd.f32 %v418, 1.0
  %v430 = vadd.f32 %v420, 1.0
  %v431 = vadd.f32 %v422, 1.0
  %v432 = vadd.f32 %v424, 1.0
  %v433 = vrcp.pop %v425
  %v434 = vmul.f32 %v425, %v433
  %v435 = vsub.f32 1.0, %v434
  %v436 = vmul.f32 %v433, %v435
  %v437 = vadd.f32 %v433, %v436
  %vm438 = vweird.f32 %v425
  %vm439 = vweird.f32 %v433
  %vm440 = vmor %vm438, %vm439
  %v441 = vsel %vm440, %v433, %v437
  %v442 = vand.u32 2147483647, %v425
  %vm443 = vcmp.eq.f32.partialorder %v442, 8.507059e+37
  %v444 = vand.u32 %v425, 2147483648
  %v445 = vor.u32 1.1754944e-38, %v444
  %v446 = vsel %vm443, %v445, %v441
  %v447 = vmul.f32 1.0, %v446
  %v448 = vrcp.pop %v426
  %v449 = vmul.f32 %v426, %v448
  %v450 = vsub.f32 1.0, %v449
  %v451 = vmul.f32 %v448, %v450
  %v452 = vadd.f32 %v448, %v451
  %vm453 = vweird.f32 %v426
  %vm454 = vweird.f32 %v448
  %vm455 = vmor %vm453, %vm454
  %v456 = vsel %vm455, %v448, %v452
  %v457 = vand.u32 2147483647, %v426
  %vm458 = vcmp.eq.f32.partialorder %v457, 8.507059e+37
  %v459 = vand.u32 %v426, 2147483648
  %v460 = vor.u32 1.1754944e-38, %v459
  %v461 = vsel %vm458, %v460, %v456
  %v462 = vmul.f32 1.0, %v461
  %v463 = vrcp.pop %v427
  %v464 = vmul.f32 %v427, %v463
  %v465 = vsub.f32 1.0, %v464
  %v466 = vmul.f32 %v463, %v465
  %v467 = vadd.f32 %v463, %v466
  %vm468 = vweird.f32 %v427
  %vm469 = vweird.f32 %v463
  %vm470 = vmor %vm468, %vm469
  %v471 = vsel %vm470, %v463, %v467
  %v472 = vand.u32 2147483647, %v427
  %vm473 = vcmp.eq.f32.partialorder %v472, 8.507059e+37
  %v474 = vand.u32 %v427, 2147483648
  %v475 = vor.u32 1.1754944e-38, %v474
  %v476 = vsel %vm473, %v475, %v471
  %v477 = vmul.f32 1.0, %v476
  %v478 = vrcp.pop %v428
  %v479 = vmul.f32 %v428, %v478
  %v480 = vsub.f32 1.0, %v479
  %v481 = vmul.f32 %v478, %v480
  %v482 = vadd.f32 %v478, %v481
  %vm483 = vweird.f32 %v428
  %vm484 = vweird.f32 %v478
  %vm485 = vmor %vm483, %vm484
  %v486 = vsel %vm485, %v478, %v482
  %v487 = vand.u32 2147483647, %v428
  %vm488 = vcmp.eq.f32.partialorder %v487, 8.507059e+37
  %v489 = vand.u32 %v428, 2147483648
  %v490 = vor.u32 1.1754944e-38, %v489
  %v491 = vsel %vm488, %v490, %v486
  %v492 = vmul.f32 1.0, %v491
  %v493 = vrcp.pop %v429
  %v494 = vmul.f32 %v429, %v493
  %v495 = vsub.f32 1.0, %v494
  %v496 = vmul.f32 %v493, %v495
  %v497 = vadd.f32 %v493, %v496
  %vm498 = vweird.f32 %v429
  %vm499 = vweird.f32 %v493
  %vm500 = vmor %vm498, %vm499
  %v501 = vsel %vm500, %v493, %v497
  %v502 = vand.u32 2147483647, %v429
  %vm503 = vcmp.eq.f32.partialorder %v502, 8.507059e+37
  %v504 = vand.u32 %v429, 2147483648
  %v505 = vor.u32 1.1754944e-38, %v504
  %v506 = vsel %vm503, %v505, %v501
  %v507 = vmul.f32 1.0, %v506
  %v508 = vrcp.pop %v430
  %v509 = vmul.f32 %v430, %v508
  %v510 = vsub.f32 1.0, %v509
  %v511 = vmul.f32 %v508, %v510
  %v512 = vadd.f32 %v508, %v511
  %vm513 = vweird.f32 %v430
  %vm514 = vweird.f32 %v508
  %vm515 = vmor %vm513, %vm514
  %v516 = vsel %vm515, %v508, %v512
  %v517 = vand.u32 2147483647, %v430
  %vm518 = vcmp.eq.f32.partialorder %v517, 8.507059e+37
  %v519 = vand.u32 %v430, 2147483648
  %v520 = vor.u32 1.1754944e-38, %v519
  %v521 = vsel %vm518, %v520, %v516
  %v522 = vmul.f32 1.0, %v521
  %v523 = vrcp.pop %v431
  %v524 = vmul.f32 %v431, %v523
  %v525 = vsub.f32 1.0, %v524
  %v526 = vmul.f32 %v523, %v525
  %v527 = vadd.f32 %v523, %v526
  %vm528 = vweird.f32 %v431
  %vm529 = vweird.f32 %v523
  %vm530 = vmor %vm528, %vm529
  %v531 = vsel %vm530, %v523, %v527
  %v532 = vand.u32 2147483647, %v431
  %vm533 = vcmp.eq.f32.partialorder %v532, 8.507059e+37
  %v534 = vand.u32 %v431, 2147483648
  %v535 = vor.u32 1.1754944e-38, %v534
  %v536 = vsel %vm533, %v535, %v531
  %v537 = vmul.f32 1.0, %v536
  %v538 = vrcp.pop %v432
  %v539 = vmul.f32 %v432, %v538
  %v540 = vsub.f32 1.0, %v539
  %v541 = vmul.f32 %v538, %v540
  %v542 = vadd.f32 %v538, %v541
  %vm543 = vweird.f32 %v432
  %vm544 = vweird.f32 %v538
  %vm545 = vmor %vm543, %vm544
  %v546 = vsel %vm545, %v538, %v542
  %v547 = vand.u32 2147483647, %v432
  %vm548 = vcmp.eq.f32.partialorder %v547, 8.507059e+37
  %v549 = vand.u32 %v432, 2147483648
  %v550 = vor.u32 1.1754944e-38, %v549
  %v551 = vsel %vm548, %v550, %v546
  %v552 = vmul.f32 1.0, %v551
  %v553 = vmul.f32 %v382, %v447
  %v554 = vmul.f32 %v384, %v462
  %v555 = vmul.f32 %v387, %v477
  %v556 = vmul.f32 %v389, %v492
  %v557 = vmul.f32 %v392, %v507
  %v558 = vmul.f32 %v394, %v522
  %v559 = vmul.f32 %v397, %v537
  %v560 = vmul.f32 %v399, %v552
  %v561 = vpack.c.bf16 %v553, %v553
  %v562 = vpack.c.bf16 %v554, %v554
  %v563 = vpack.c.bf16 %v555, %v555
  %v564 = vpack.c.bf16 %v556, %v556
  %v565 = vpack.c.bf16 %v557, %v557
  %v566 = vpack.c.bf16 %v558, %v558
  %v567 = vpack.c.bf16 %v559, %v559
  %v568 = vpack.c.bf16 %v560, %v560
  %vm569 = vcmask 519168
  %570 = vst.msk [vmem:[%s6] sm:$0xf] %vm569, %v561
  %571 = vst.msk [vmem:[%s6 + $0x4] sm:$0xf] %vm569, %v562
  %572 = vst.msk [vmem:[%s6 + $0x8] sm:$0xf] %vm569, %v563
  %573 = vst.msk [vmem:[%s6 + $0xc] sm:$0xf] %vm569, %v564
  %574 = vst.msk [vmem:[%s6 + $0x10] sm:$0xf] %vm569, %v565
  %575 = vst.msk [vmem:[%s6 + $0x14] sm:$0xf] %vm569, %v566
  %576 = vst.msk [vmem:[%s6 + $0x18] sm:$0xf] %vm569, %v567
  %577 = vst.msk [vmem:[%s6 + $0x1c] sm:$0xf] %vm569, %v568
  // Predicated region
  $region26: #{_lambda_.64} parent=0 // pred_check
    _
  $region27: #{_lambda_.64} parent=0 // pred_check_branch
    %579 = sbr.rel (0) target = $region29
  $region28: #{_lambda_.64} parent=0 // pred_region
    _
  $region29: #{_lambda_.64} parent=0 // pred_fallthru
    _
  // Predicated region
  $region30: #{_lambda_.64} parent=0 // pred_check
    _
  $region31: #{_lambda_.64} parent=0 // pred_check_branch
    %581 = sbr.rel (0) target = $region33
  $region32: #{_lambda_.64} parent=0 // pred_region
    _
  $region33: #{_lambda_.64} parent=0 // pred_fallthru
    _

// kernel: tile.31
$region0: #{tile.31}
  %s0 = inlined_call_operand.vmem [shape: f32[2,16], index: 0, kind: input, shape index: {}]
  %s1 = inlined_call_operand.vmem [shape: f32[32], index: 1, kind: output, shape index: {}]
  $region1: #{tile.31} parent=0
    #allocation0 [shape = 'u8[4096]{0}', space=vmem, size = 0x1000, scoped, tag = 'scoped mem for output reshape']
    #allocation1 [shape = 'u8[4096]{0}', space=vmem, size = 0x1000, scoped, tag = 'scoped mem for input reshape']
    %s3 = ssub.s32 4, 1
    %v4 = vld [vmem:[%s0] sm:%s3]
    %5 = vst [vmem:[#allocation1] sm:%s3] %v4
    %v6 = vld [vmem:[#allocation1] sm:$0x1]
    %vm7 = vcmask 130048
    %8 = vst.msk [vmem:[#allocation0] sm:$0x1] %vm7, %v6
    %s9 = scalar_lea.vmem [#allocation1], 1
    %v10 = vld [vmem:[%s9] sm:$0x1]
    %11 = vrot.lane.b32.xlu0 %v10, 16
    %v12 = vpop.permute.xlu0 %11
    %vm13 = vcmask 261248
    %14 = vst.msk [vmem:[#allocation0] sm:$0x1] %vm13, %v12
    %s16 = ssub.s32 2, 1
    %v17 = vld [vmem:[#allocation0] sm:%s16]
    %s19 = ssub.s32 2, 1
    %20 = vst [vmem:[%s1] sm:%s19] %v17

// kernel: tile.32
$region0: #{tile.32}
  #allocation0 [shape = 's32[1]{0}', space=sflag, size = 0x4, scoped, tag = 'scoped memory for tile.32']
  %s0 = inlined_call_operand.vmem [shape: f32[32], index: 0, kind: input, shape index: {}]
  %s1 = inlined_call_operand.vmem [shape: f32[2,32], index: 1, kind: output, shape index: {}]
  // Predicated region
  $region2: #{tile.32} parent=0 // pred_check
    _
  $region3: #{tile.32} parent=0 // pred_check_branch
    %3 = sbr.rel (0) target = $region5
  $region4: #{tile.32} parent=0 // pred_region
    _
  $region5: #{tile.32} parent=0 // pred_fallthru
    _
  %v4 = vld [vmem:[%s0] ss:$0 sm:$0xff]
  %5 = vst [vmem:[%s1] sm:$0x3] %v4

// kernel: tile.0
$region0: #{tile.0}
  %s0 = inlined_call_operand.vmem [shape: f32[2,32], index: 0, kind: input, shape index: {}]
  %s1 = inlined_call_operand.vmem [shape: f32[64,1], index: 1, kind: output, shape index: {}]
  $region1: #{tile.0} parent=0
    #allocation0 [shape = 'u8[4096]{0}', space=vmem, size = 0x1000, scoped, tag = 'scoped mem for input reshape']
    %s3 = ssub.s32 4, 1
    %v4 = vld [vmem:[%s0] sm:%s3]
    %5 = vst [vmem:[#allocation0] sm:%s3] %v4
    %v6 = vld [vmem:[#allocation0] sm:$0x3]
    %vm7 = vcmask 7168
    %8 = vst.msk [vmem:[%s1] sm:$0x1] %vm7, %v6
    %s9 = scalar_lea.vmem %s1, 31
    %10 = vst.msk [vmem:[%s9] sm:$0x2] %vm7, %v6
    %v11 = vld [vmem:[#allocation0] sm:$0x3]
    %12 = vrot.lane.b32.xlu0 %v11, 127
    %v13 = vpop.permute.xlu0 %12
    %vm14 = vcmask 7168
    %s15 = scalar_lea.vmem %s1, 1
    %16 = vst.msk [vmem:[%s15] sm:$0x1] %vm14, %v13
    %s17 = scalar_lea.vmem %s1, 32
    %18 = vst.msk [vmem:[%s17] sm:$0x2] %vm14, %v13
    %v19 = vld [vmem:[#allocation0] sm:$0x3]
    %20 = vrot.lane.b32.xlu0 %v19, 126
    %v21 = vpop.permute.xlu0 %20
    %vm22 = vcmask 7168
    %s23 = scalar_lea.vmem %s1, 2
    %24 = vst.msk [vmem:[%s23] sm:$0x1] %vm22, %v21
    %s25 = scalar_lea.vmem %s1, 33
    %26 = vst.msk [vmem:[%s25] sm:$0x2] %vm22, %v21
    %v27 = vld [vmem:[#allocation0] sm:$0x3]
    %28 = vrot.lane.b32.xlu0 %v27, 125
    %v29 = vpop.permute.xlu0 %28
    %vm30 = vcmask 7168
    %s31 = scalar_lea.vmem %s1, 3
    %32 = vst.msk [vmem:[%s31] sm:$0x1] %vm30, %v29
    %s33 = scalar_lea.vmem %s1, 34
    %34 = vst.msk [vmem:[%s33] sm:$0x2] %vm30, %v29
    %v35 = vld [vmem:[#allocation0] sm:$0x3]
    %36 = vrot.lane.b32.xlu0 %v35, 124
    %v37 = vpop.permute.xlu0 %36
    %vm38 = vcmask 7168
    %s39 = scalar_lea.vmem %s1, 4
    %40 = vst.msk [vmem:[%s39] sm:$0x1] %vm38, %v37
    %s41 = scalar_lea.vmem %s1, 35
    %42 = vst.msk [vmem:[%s41] sm:$0x2] %vm38, %v37
    %v43 = vld [vmem:[#allocation0] sm:$0x3]
    %44 = vrot.lane.b32.xlu0 %v43, 123
    %v45 = vpop.permute.xlu0 %44
    %vm46 = vcmask 7168
    %s47 = scalar_lea.vmem %s1, 5
    %48 = vst.msk [vmem:[%s47] sm:$0x1] %vm46, %v45
    %s49 = scalar_lea.vmem %s1, 36
    %50 = vst.msk [vmem:[%s49] sm:$0x2] %vm46, %v45
    %v51 = vld [vmem:[#allocation0] sm:$0x3]
    %52 = vrot.lane.b32.xlu0 %v51, 122
    %v53 = vpop.permute.xlu0 %52
    %vm54 = vcmask 7168
    %s55 = scalar_lea.vmem %s1, 6
    %56 = vst.msk [vmem:[%s55] sm:$0x1] %vm54, %v53
    %s57 = scalar_lea.vmem %s1, 37
    %58 = vst.msk [vmem:[%s57] sm:$0x2] %vm54, %v53
    %v59 = vld [vmem:[#allocation0] sm:$0x3]
    %60 = vrot.lane.b32.xlu0 %v59, 121
    %v61 = vpop.permute.xlu0 %60
    %vm62 = vcmask 7168
    %s63 = scalar_lea.vmem %s1, 7
    %64 = vst.msk [vmem:[%s63] sm:$0x1] %vm62, %v61
    %s65 = scalar_lea.vmem %s1, 38
    %66 = vst.msk [vmem:[%s65] sm:$0x2] %vm62, %v61
    %v67 = vld [vmem:[#allocation0] sm:$0x3]
    %68 = vrot.lane.b32.xlu0 %v67, 120
    %v69 = vpop.permute.xlu0 %68
    %vm70 = vcmask 7168
    %s71 = scalar_lea.vmem %s1, 8
    %72 = vst.msk [vmem:[%s71] sm:$0x1] %vm70, %v69
    %s73 = scalar_lea.vmem %s1, 39
    %74 = vst.msk [vmem:[%s73] sm:$0x2] %vm70, %v69
    %v75 = vld [vmem:[#allocation0] sm:$0x3]
    %76 = vrot.lane.b32.xlu0 %v75, 119
    %v77 = vpop.permute.xlu0 %76
    %vm78 = vcmask 7168
    %s79 = scalar_lea.vmem %s1, 9
    %80 = vst.msk [vmem:[%s79] sm:$0x1] %vm78, %v77
    %s81 = scalar_lea.vmem %s1, 40
    %82 = vst.msk [vmem:[%s81] sm:$0x2] %vm78, %v77
    %v83 = vld [vmem:[#allocation0] sm:$0x3]
    %84 = vrot.lane.b32.xlu0 %v83, 118
    %v85 = vpop.permute.xlu0 %84
    %vm86 = vcmask 7168
    %s87 = scalar_lea.vmem %s1, 10
    %88 = vst.msk [vmem:[%s87] sm:$0x1] %vm86, %v85
    %s89 = scalar_lea.vmem %s1, 41
    %90 = vst.msk [vmem:[%s89] sm:$0x2] %vm86, %v85
    %v91 = vld [vmem:[#allocation0] sm:$0x3]
    %92 = vrot.lane.b32.xlu0 %v91, 117
    %v93 = vpop.permute.xlu0 %92
    %vm94 = vcmask 7168
    %s95 = scalar_lea.vmem %s1, 11
    %96 = vst.msk [vmem:[%s95] sm:$0x1] %vm94, %v93
    %s97 = scalar_lea.vmem %s1, 42
    %98 = vst.msk [vmem:[%s97] sm:$0x2] %vm94, %v93
    %v99 = vld [vmem:[#allocation0] sm:$0x3]
    %100 = vrot.lane.b32.xlu0 %v99, 116
    %v101 = vpop.permute.xlu0 %100
    %vm102 = vcmask 7168
    %s103 = scalar_lea.vmem %s1, 12
    %104 = vst.msk [vmem:[%s103] sm:$0x1] %vm102, %v101
    %s105 = scalar_lea.vmem %s1, 43
    %106 = vst.msk [vmem:[%s105] sm:$0x2] %vm102, %v101
    %v107 = vld [vmem:[#allocation0] sm:$0x3]
    %108 = vrot.lane.b32.xlu0 %v107, 115
    %v109 = vpop.permute.xlu0 %108
    %vm110 = vcmask 7168
    %s111 = scalar_lea.vmem %s1, 13
    %112 = vst.msk [vmem:[%s111] sm:$0x1] %vm110, %v109
    %s113 = scalar_lea.vmem %s1, 44
    %114 = vst.msk [vmem:[%s113] sm:$0x2] %vm110, %v109
    %v115 = vld [vmem:[#allocation0] sm:$0x3]
    %116 = vrot.lane.b32.xlu0 %v115, 114
    %v117 = vpop.permute.xlu0 %116
    %vm118 = vcmask 7168
    %s119 = scalar_lea.vmem %s1, 14
    %120 = vst.msk [vmem:[%s119] sm:$0x1] %vm118, %v117
    %s121 = scalar_lea.vmem %s1, 45
    %122 = vst.msk [vmem:[%s121] sm:$0x2] %vm118, %v117
    %v123 = vld [vmem:[#allocation0] sm:$0x3]
    %124 = vrot.lane.b32.xlu0 %v123, 113
    %v125 = vpop.permute.xlu0 %124
    %vm126 = vcmask 7168
    %s127 = scalar_lea.vmem %s1, 15
    %128 = vst.msk [vmem:[%s127] sm:$0x1] %vm126, %v125
    %s129 = scalar_lea.vmem %s1, 46
    %130 = vst.msk [vmem:[%s129] sm:$0x2] %vm126, %v125
    %v131 = vld [vmem:[#allocation0] sm:$0x3]
    %132 = vrot.lane.b32.xlu0 %v131, 112
    %v133 = vpop.permute.xlu0 %132
    %vm134 = vcmask 7168
    %s135 = scalar_lea.vmem %s1, 16
    %136 = vst.msk [vmem:[%s135] sm:$0x1] %vm134, %v133
    %s137 = scalar_lea.vmem %s1, 47
    %138 = vst.msk [vmem:[%s137] sm:$0x2] %vm134, %v133
    %v139 = vld [vmem:[#allocation0] sm:$0x3]
    %140 = vrot.lane.b32.xlu0 %v139, 111
    %v141 = vpop.permute.xlu0 %140
    %vm142 = vcmask 7168
    %s143 = scalar_lea.vmem %s1, 17
    %144 = vst.msk [vmem:[%s143] sm:$0x1] %vm142, %v141
    %s145 = scalar_lea.vmem %s1, 48
    %146 = vst.msk [vmem:[%s145] sm:$0x2] %vm142, %v141
    %v147 = vld [vmem:[#allocation0] sm:$0x3]
    %148 = vrot.lane.b32.xlu0 %v147, 110
    %v149 = vpop.permute.xlu0 %148
    %vm150 = vcmask 7168
    %s151 = scalar_lea.vmem %s1, 18
    %152 = vst.msk [vmem:[%s151] sm:$0x1] %vm150, %v149
    %s153 = scalar_lea.vmem %s1, 49
    %154 = vst.msk [vmem:[%s153] sm:$0x2] %vm150, %v149
    %v155 = vld [vmem:[#allocation0] sm:$0x3]
    %156 = vrot.lane.b32.xlu0 %v155, 109
    %v157 = vpop.permute.xlu0 %156
    %vm158 = vcmask 7168
    %s159 = scalar_lea.vmem %s1, 19
    %160 = vst.msk [vmem:[%s159] sm:$0x1] %vm158, %v157
    %s161 = scalar_lea.vmem %s1, 50
    %162 = vst.msk [vmem:[%s161] sm:$0x2] %vm158, %v157
    %v163 = vld [vmem:[#allocation0] sm:$0x3]
    %164 = vrot.lane.b32.xlu0 %v163, 108
    %v165 = vpop.permute.xlu0 %164
    %vm166 = vcmask 7168
    %s167 = scalar_lea.vmem %s1, 20
    %168 = vst.msk [vmem:[%s167] sm:$0x1] %vm166, %v165
    %s169 = scalar_lea.vmem %s1, 51
    %170 = vst.msk [vmem:[%s169] sm:$0x2] %vm166, %v165
    %v171 = vld [vmem:[#allocation0] sm:$0x3]
    %172 = vrot.lane.b32.xlu0 %v171, 107
    %v173 = vpop.permute.xlu0 %172
    %vm174 = vcmask 7168
    %s175 = scalar_lea.vmem %s1, 21
    %176 = vst.msk [vmem:[%s175] sm:$0x1] %vm174, %v173
    %s177 = scalar_lea.vmem %s1, 52
    %178 = vst.msk [vmem:[%s177] sm:$0x2] %vm174, %v173
    %v179 = vld [vmem:[#allocation0] sm:$0x3]
    %180 = vrot.lane.b32.xlu0 %v179, 106
    %v181 = vpop.permute.xlu0 %180
    %vm182 = vcmask 7168
    %s183 = scalar_lea.vmem %s1, 22
    %184 = vst.msk [vmem:[%s183] sm:$0x1] %vm182, %v181
    %s185 = scalar_lea.vmem %s1, 53
    %186 = vst.msk [vmem:[%s185] sm:$0x2] %vm182, %v181
    %v187 = vld [vmem:[#allocation0] sm:$0x3]
    %188 = vrot.lane.b32.xlu0 %v187, 105
    %v189 = vpop.permute.xlu0 %188
    %vm190 = vcmask 7168
    %s191 = scalar_lea.vmem %s1, 23
    %192 = vst.msk [vmem:[%s191] sm:$0x1] %vm190, %v189
    %s193 = scalar_lea.vmem %s1, 54
    %194 = vst.msk [vmem:[%s193] sm:$0x2] %vm190, %v189
    %v195 = vld [vmem:[#allocation0] sm:$0x3]
    %196 = vrot.lane.b32.xlu0 %v195, 104
    %v197 = vpop.permute.xlu0 %196
    %vm198 = vcmask 7168
    %s199 = scalar_lea.vmem %s1, 24
    %200 = vst.msk [vmem:[%s199] sm:$0x1] %vm198, %v197
    %s201 = scalar_lea.vmem %s1, 55
    %202 = vst.msk [vmem:[%s201] sm:$0x2] %vm198, %v197
    %v203 = vld [vmem:[#allocation0] sm:$0x3]
    %204 = vrot.lane.b32.xlu0 %v203, 103
    %v205 = vpop.permute.xlu0 %204
    %vm206 = vcmask 7168
    %s207 = scalar_lea.vmem %s1, 25
    %208 = vst.msk [vmem:[%s207] sm:$0x1] %vm206, %v205
    %s209 = scalar_lea.vmem %s1, 56
    %210 = vst.msk [vmem:[%s209] sm:$0x2] %vm206, %v205
    %v211 = vld [vmem:[#allocation0] sm:$0x3]
    %212 = vrot.lane.b32.xlu0 %v211, 102
    %v213 = vpop.permute.xlu0 %212
    %vm214 = vcmask 7168
    %s215 = scalar_lea.vmem %s1, 26
    %216 = vst.msk [vmem:[%s215] sm:$0x1] %vm214, %v213
    %s217 = scalar_lea.vmem %s1, 57
    %218 = vst.msk [vmem:[%s217] sm:$0x2] %vm214, %v213
    %v219 = vld [vmem:[#allocation0] sm:$0x3]
    %220 = vrot.lane.b32.xlu0 %v219, 101
    %v221 = vpop.permute.xlu0 %220
    %vm222 = vcmask 7168
    %s223 = scalar_lea.vmem %s1, 27
    %224 = vst.msk [vmem:[%s223] sm:$0x1] %vm222, %v221
    %s225 = scalar_lea.vmem %s1, 58
    %226 = vst.msk [vmem:[%s225] sm:$0x2] %vm222, %v221
    %v227 = vld [vmem:[#allocation0] sm:$0x3]
    %228 = vrot.lane.b32.xlu0 %v227, 100
    %v229 = vpop.permute.xlu0 %228
    %vm230 = vcmask 7168
    %s231 = scalar_lea.vmem %s1, 28
    %232 = vst.msk [vmem:[%s231] sm:$0x1] %vm230, %v229
    %s233 = scalar_lea.vmem %s1, 59
    %234 = vst.msk [vmem:[%s233] sm:$0x2] %vm230, %v229
    %v235 = vld [vmem:[#allocation0] sm:$0x3]
    %236 = vrot.lane.b32.xlu0 %v235, 99
    %v237 = vpop.permute.xlu0 %236
    %vm238 = vcmask 7168
    %s239 = scalar_lea.vmem %s1, 29
    %240 = vst.msk [vmem:[%s239] sm:$0x1] %vm238, %v237
    %s241 = scalar_lea.vmem %s1, 60
    %242 = vst.msk [vmem:[%s241] sm:$0x2] %vm238, %v237
    %v243 = vld [vmem:[#allocation0] sm:$0x3]
    %244 = vrot.lane.b32.xlu0 %v243, 98
    %v245 = vpop.permute.xlu0 %244
    %vm246 = vcmask 7168
    %s247 = scalar_lea.vmem %s1, 30
    %248 = vst.msk [vmem:[%s247] sm:$0x1] %vm246, %v245
    %s249 = scalar_lea.vmem %s1, 61
    %250 = vst.msk [vmem:[%s249] sm:$0x2] %vm246, %v245
    %v251 = vld [vmem:[#allocation0] sm:$0x3]
    %252 = vrot.lane.b32.xlu0 %v251, 97
    %v253 = vpop.permute.xlu0 %252
    %vm254 = vcmask 7168
    %s255 = scalar_lea.vmem %s1, 31
    %256 = vst.msk [vmem:[%s255] sm:$0x1] %vm254, %v253
    %s257 = scalar_lea.vmem %s1, 62
    %258 = vst.msk [vmem:[%s257] sm:$0x2] %vm254, %v253

// kernel: _lambda_.65
$region0: #{_lambda_.65}
  #allocation0 [shape = 'u32[]', space=smem, size = 0x4, offset = 0x4, fixed_abs, tag = 'smem constant byte address 0x4 - core index']
  #allocation1 [shape = 'u32[72,128]{1,0:T(1,128)}', space=vmem, size = 0x9000, scoped, tag = 'internal scratch']
  #allocation2 [shape = 'f32[64,64]{1,0:T(8,128)}', space=vmem, size = 0x8000, scoped, tag = 'scratch operand']
  %s0 = inlined_call_operand.vmem [shape: bf16[64,64], index: 0, kind: input, shape index: {}]
  %s1 = inlined_call_operand.vmem [shape: bf16[64,64], index: 1, kind: input, shape index: {}]
  %s2 = inlined_call_operand.vmem [shape: f32[1,64], index: 2, kind: input, shape index: {}]
  %s3 = inlined_call_operand.vmem [shape: bf16[64,64], index: 3, kind: input, shape index: {}]
  %s4 = inlined_call_operand.vmem [shape: bf16[64,64], index: 4, kind: input, shape index: {}]
  %s5 = inlined_call_operand.vmem [shape: bf16[64,64], index: 5, kind: output, shape index: {}]
  %s6 = sld [smem:[#allocation0]]
  $region38: #{_lambda_.65} parent=0
    _
  %s8 = ssub.s32 1, %s6
  %s9 = scalar_select 0, %s8, %s6
  // Predicated region
  $region2: #{_lambda_.65} parent=0 // pred_check
    _
  $region3: #{_lambda_.65} parent=0 // pred_check_branch
    %11 = sbr.rel (0) target = $region5
  $region4: #{_lambda_.65} parent=0 // pred_region
    _
  $region5: #{_lambda_.65} parent=0 // pred_fallthru
    _
  // Predicated region
  $region6: #{_lambda_.65} parent=0 // pred_check
    _
  $region7: #{_lambda_.65} parent=0 // pred_check_branch
    %13 = sbr.rel (0) target = $region9
  $region8: #{_lambda_.65} parent=0 // pred_region
    _
  $region9: #{_lambda_.65} parent=0 // pred_fallthru
    _
  // Predicated region
  $region10: #{_lambda_.65} parent=0 // pred_check
    _
  $region11: #{_lambda_.65} parent=0 // pred_check_branch
    %15 = sbr.rel (0) target = $region13
  $region12: #{_lambda_.65} parent=0 // pred_region
    _
  $region13: #{_lambda_.65} parent=0 // pred_fallthru
    _
  // Predicated region
  $region14: #{_lambda_.65} parent=0 // pred_check
    _
  $region15: #{_lambda_.65} parent=0 // pred_check_branch
    %17 = sbr.rel (0) target = $region17
  $region16: #{_lambda_.65} parent=0 // pred_region
    _
  $region17: #{_lambda_.65} parent=0 // pred_fallthru
    _
  // Predicated region
  $region18: #{_lambda_.65} parent=0 // pred_check
    _
  $region19: #{_lambda_.65} parent=0 // pred_check_branch
    %19 = sbr.rel (0) target = $region21
  $region20: #{_lambda_.65} parent=0 // pred_region
    _
  $region21: #{_lambda_.65} parent=0 // pred_fallthru
    _
  %p21 = scmp.eq.s32.totalorder 0, 0
  // Predicated region
  $region22: #{_lambda_.65} parent=0 // pred_check
    %p22 = pneg %p21
  $region23: #{_lambda_.65} parent=0 // pred_check_branch
    %24 = sbr.rel (%p22) target = $region25
  $region24: #{_lambda_.65} parent=0 // pred_region
    %vm25 = vcmask 523264
    %26 = vst.msk [vmem:[#allocation2] sm:$0xff] %vm25, 0.0
    %27 = vst.msk [vmem:[#allocation2 + $0x8] sm:$0xff] %vm25, 0.0
    %28 = vst.msk [vmem:[#allocation2 + $0x10] sm:$0xff] %vm25, 0.0
    %29 = vst.msk [vmem:[#allocation2 + $0x18] sm:$0xff] %vm25, 0.0
    %30 = vst.msk [vmem:[#allocation2 + $0x20] sm:$0xff] %vm25, 0.0
    %31 = vst.msk [vmem:[#allocation2 + $0x28] sm:$0xff] %vm25, 0.0
    %32 = vst.msk [vmem:[#allocation2 + $0x30] sm:$0xff] %vm25, 0.0
    %33 = vst.msk [vmem:[#allocation2 + $0x38] sm:$0xff] %vm25, 0.0
  $region25: #{_lambda_.65} parent=0 // pred_fallthru
    _
  %v34 = vld [vmem:[#allocation2] sm:$0xff]
  %v35 = vld [vmem:[#allocation2 + $0x8] sm:$0xff]
  %v36 = vld [vmem:[#allocation2 + $0x10] sm:$0xff]
  %v37 = vld [vmem:[#allocation2 + $0x18] sm:$0xff]
  %v38 = vld [vmem:[#allocation2 + $0x20] sm:$0xff]
  %v39 = vld [vmem:[#allocation2 + $0x28] sm:$0xff]
  %v40 = vld [vmem:[#allocation2 + $0x30] sm:$0xff]
  %v41 = vld [vmem:[#allocation2 + $0x38] sm:$0xff]
  %v42 = vld [vmem:[%s0] sm:$0xf]
  %v43 = vld [vmem:[%s0 + $0x4] sm:$0xf]
  %v44 = vld [vmem:[%s0 + $0x8] sm:$0xf]
  %v45 = vld [vmem:[%s0 + $0xc] sm:$0xf]
  %v46 = vld [vmem:[%s0 + $0x10] sm:$0xf]
  %v47 = vld [vmem:[%s0 + $0x14] sm:$0xf]
  %v48 = vld [vmem:[%s0 + $0x18] sm:$0xf]
  %v49 = vld [vmem:[%s0 + $0x1c] sm:$0xf]
  %v50 = vld [vmem:[%s1] sm:$0xf]
  %v51 = vld [vmem:[%s1 + $0x4] sm:$0xf]
  %v52 = vld [vmem:[%s1 + $0x8] sm:$0xf]
  %v53 = vld [vmem:[%s1 + $0xc] sm:$0xf]
  %v54 = vld [vmem:[%s1 + $0x10] sm:$0xf]
  %v55 = vld [vmem:[%s1 + $0x14] sm:$0xf]
  %v56 = vld [vmem:[%s1 + $0x18] sm:$0xf]
  %v57 = vld [vmem:[%s1 + $0x1c] sm:$0xf]
  %v66 = vunpack.c.l.b16 %v42
  %v67 = vunpack.c.l.b16 %v43
  %v68 = vunpack.c.l.b16 %v44
  %v69 = vunpack.c.l.b16 %v45
  %v70 = vunpack.c.l.b16 %v46
  %v71 = vunpack.c.l.b16 %v47
  %v72 = vunpack.c.l.b16 %v48
  %v73 = vunpack.c.l.b16 %v49
  %v74 = vpack.c.b16 %v67, %v66
  %v75 = vpack.c.b16 %v69, %v68
  %v76 = vpack.c.b16 %v71, %v70
  %v77 = vpack.c.b16 %v73, %v72
  %v86 = vunpack.c.l.b16 %v50
  %v87 = vunpack.c.l.b16 %v51
  %v88 = vunpack.c.l.b16 %v52
  %v89 = vunpack.c.l.b16 %v53
  %v90 = vunpack.c.l.b16 %v54
  %v91 = vunpack.c.l.b16 %v55
  %v92 = vunpack.c.l.b16 %v56
  %v93 = vunpack.c.l.b16 %v57
  %v94 = vpack.c.b16 %v87, %v86
  %v95 = vpack.c.b16 %v89, %v88
  %v96 = vpack.c.b16 %v91, %v90
  %v97 = vpack.c.b16 %v93, %v92
  %vm102 = vcmask 523264
  %v104 = vsel %vm102, %v74, 0
  %v107 = vsel %vm102, %v75, 0
  %v110 = vsel %vm102, %v76, 0
  %v113 = vsel %vm102, %v77, 0
  %115 = vmatpush.bf16.msra.mxu0 0
  %116 = vmatpush.bf16.msra.mxu0 0
  %117 = vmatpush.bf16.msra.mxu0 0
  %118 = vmatpush.bf16.msra.mxu0 0
  %119 = vmatpush.bf16.msra.mxu0 %v97
  %120 = vmatpush.bf16.msra.mxu0 %v96
  %121 = vmatpush.bf16.msra.mxu0 %v95
  %122 = vmatpush.bf16.msra.mxu0 %v94
  %123 = vmatmul.bf16.gmra.mxu0 %v104
  %v124 = vpop.f32.mrf.mxu0
  %v125 = vadd.f32 0.0, %v124
  %v126 = vpop.f32.mrf.mxu0
  %v127 = vadd.f32 0.0, %v126
  %128 = vmatmul.bf16.gmra.mxu0 %v107
  %v129 = vpop.f32.mrf.mxu0
  %v130 = vadd.f32 0.0, %v129
  %v131 = vpop.f32.mrf.mxu0
  %v132 = vadd.f32 0.0, %v131
  %133 = vmatmul.bf16.gmra.mxu0 %v110
  %v134 = vpop.f32.mrf.mxu0
  %v135 = vadd.f32 0.0, %v134
  %v136 = vpop.f32.mrf.mxu0
  %v137 = vadd.f32 0.0, %v136
  %138 = vmatmul.bf16.gmra.mxu0 %v113
  %v139 = vpop.f32.mrf.mxu0
  %v140 = vadd.f32 0.0, %v139
  %v141 = vpop.f32.mrf.mxu0
  %v142 = vadd.f32 0.0, %v141
  %143 = vdwg.mxu0
  %v144 = vadd.f32 %v34, %v125
  %v145 = vadd.f32 %v35, %v127
  %v146 = vadd.f32 %v36, %v130
  %v147 = vadd.f32 %v37, %v132
  %v148 = vadd.f32 %v38, %v135
  %v149 = vadd.f32 %v39, %v137
  %v150 = vadd.f32 %v40, %v140
  %v151 = vadd.f32 %v41, %v142
  %152 = vst.msk [vmem:[#allocation2] sm:$0xff] %vm102, %v144
  %153 = vst.msk [vmem:[#allocation2 + $0x8] sm:$0xff] %vm102, %v145
  %154 = vst.msk [vmem:[#allocation2 + $0x10] sm:$0xff] %vm102, %v146
  %155 = vst.msk [vmem:[#allocation2 + $0x18] sm:$0xff] %vm102, %v147
  %156 = vst.msk [vmem:[#allocation2 + $0x20] sm:$0xff] %vm102, %v148
  %157 = vst.msk [vmem:[#allocation2 + $0x28] sm:$0xff] %vm102, %v149
  %158 = vst.msk [vmem:[#allocation2 + $0x30] sm:$0xff] %vm102, %v150
  %159 = vst.msk [vmem:[#allocation2 + $0x38] sm:$0xff] %vm102, %v151
  // Predicated region
  $region26: #{_lambda_.65} parent=0 // pred_check
    %p160 = pneg %p21
  $region27: #{_lambda_.65} parent=0 // pred_check_branch
    %162 = sbr.rel (%p160) target = $region29
  $region28: #{_lambda_.65} parent=0 // pred_region
    %v163 = vld [vmem:[#allocation2] sm:$0xff]
    %v164 = vld [vmem:[#allocation2 + $0x8] sm:$0xff]
    %v165 = vld [vmem:[#allocation2 + $0x10] sm:$0xff]
    %v166 = vld [vmem:[#allocation2 + $0x18] sm:$0xff]
    %v167 = vld [vmem:[#allocation2 + $0x20] sm:$0xff]
    %v168 = vld [vmem:[#allocation2 + $0x28] sm:$0xff]
    %v169 = vld [vmem:[#allocation2 + $0x30] sm:$0xff]
    %v170 = vld [vmem:[#allocation2 + $0x38] sm:$0xff]
    %v171 = vld [vmem:[%s2] sm:$0x1]
    %v173 = vperm.slane %v171, 0
    %v175 = vadd.f32 %v163, %v173
    %v176 = vadd.f32 %v164, %v173
    %v177 = vadd.f32 %v165, %v173
    %v178 = vadd.f32 %v166, %v173
    %v179 = vadd.f32 %v167, %v173
    %v180 = vadd.f32 %v168, %v173
    %v181 = vadd.f32 %v169, %v173
    %v182 = vadd.f32 %v170, %v173
    %v183 = vld [vmem:[%s3] sm:$0xf]
    %v184 = vld [vmem:[%s3 + $0x4] sm:$0xf]
    %v185 = vld [vmem:[%s3 + $0x8] sm:$0xf]
    %v186 = vld [vmem:[%s3 + $0xc] sm:$0xf]
    %v187 = vld [vmem:[%s3 + $0x10] sm:$0xf]
    %v188 = vld [vmem:[%s3 + $0x14] sm:$0xf]
    %v189 = vld [vmem:[%s3 + $0x18] sm:$0xf]
    %v190 = vld [vmem:[%s3 + $0x1c] sm:$0xf]
    %v191 = vunpack.c.l.bf16 %v183
    %v192 = vunpack.c.l.bf16 %v184
    %v193 = vunpack.c.l.bf16 %v185
    %v194 = vunpack.c.l.bf16 %v186
    %v195 = vunpack.c.l.bf16 %v187
    %v196 = vunpack.c.l.bf16 %v188
    %v197 = vunpack.c.l.bf16 %v189
    %v198 = vunpack.c.l.bf16 %v190
    %v199 = vmul.f32 %v191, %v175
    %v200 = vmul.f32 %v192, %v176
    %v201 = vmul.f32 %v193, %v177
    %v202 = vmul.f32 %v194, %v178
    %v203 = vmul.f32 %v195, %v179
    %v204 = vmul.f32 %v196, %v180
    %v205 = vmul.f32 %v197, %v181
    %v206 = vmul.f32 %v198, %v182
    %v207 = vld [vmem:[%s4] sm:$0xf]
    %v208 = vld [vmem:[%s4 + $0x4] sm:$0xf]
    %v209 = vld [vmem:[%s4 + $0x8] sm:$0xf]
    %v210 = vld [vmem:[%s4 + $0xc] sm:$0xf]
    %v211 = vld [vmem:[%s4 + $0x10] sm:$0xf]
    %v212 = vld [vmem:[%s4 + $0x14] sm:$0xf]
    %v213 = vld [vmem:[%s4 + $0x18] sm:$0xf]
    %v214 = vld [vmem:[%s4 + $0x1c] sm:$0xf]
    %v215 = vunpack.c.l.bf16 %v207
    %v216 = vunpack.c.l.bf16 %v208
    %v217 = vunpack.c.l.bf16 %v209
    %v218 = vunpack.c.l.bf16 %v210
    %v219 = vunpack.c.l.bf16 %v211
    %v220 = vunpack.c.l.bf16 %v212
    %v221 = vunpack.c.l.bf16 %v213
    %v222 = vunpack.c.l.bf16 %v214
    %v223 = vadd.f32 %v215, %v199
    %v224 = vadd.f32 %v216, %v200
    %v225 = vadd.f32 %v217, %v201
    %v226 = vadd.f32 %v218, %v202
    %v227 = vadd.f32 %v219, %v203
    %v228 = vadd.f32 %v220, %v204
    %v229 = vadd.f32 %v221, %v205
    %v230 = vadd.f32 %v222, %v206
    %v231 = vpack.c.bf16 %v223, %v223
    %v232 = vpack.c.bf16 %v224, %v224
    %v233 = vpack.c.bf16 %v225, %v225
    %v234 = vpack.c.bf16 %v226, %v226
    %v235 = vpack.c.bf16 %v227, %v227
    %v236 = vpack.c.bf16 %v228, %v228
    %v237 = vpack.c.bf16 %v229, %v229
    %v238 = vpack.c.bf16 %v230, %v230
    %vm239 = vcmask 519168
    %240 = vst.msk [vmem:[%s5] sm:$0xf] %vm239, %v231
    %241 = vst.msk [vmem:[%s5 + $0x4] sm:$0xf] %vm239, %v232
    %242 = vst.msk [vmem:[%s5 + $0x8] sm:$0xf] %vm239, %v233
    %243 = vst.msk [vmem:[%s5 + $0xc] sm:$0xf] %vm239, %v234
    %244 = vst.msk [vmem:[%s5 + $0x10] sm:$0xf] %vm239, %v235
    %245 = vst.msk [vmem:[%s5 + $0x14] sm:$0xf] %vm239, %v236
    %246 = vst.msk [vmem:[%s5 + $0x18] sm:$0xf] %vm239, %v237
    %247 = vst.msk [vmem:[%s5 + $0x1c] sm:$0xf] %vm239, %v238
  $region29: #{_lambda_.65} parent=0 // pred_fallthru
    _
  // Predicated region
  $region30: #{_lambda_.65} parent=0 // pred_check
    _
  $region31: #{_lambda_.65} parent=0 // pred_check_branch
    %249 = sbr.rel (0) target = $region33
  $region32: #{_lambda_.65} parent=0 // pred_region
    _
  $region33: #{_lambda_.65} parent=0 // pred_fallthru
    _
  // Predicated region
  $region34: #{_lambda_.65} parent=0 // pred_check
    _
  $region35: #{_lambda_.65} parent=0 // pred_check_branch
    %251 = sbr.rel (0) target = $region37
  $region36: #{_lambda_.65} parent=0 // pred_region
    _
  $region37: #{_lambda_.65} parent=0 // pred_fallthru
    _

// kernel: _lambda_.69
$region0: #{_lambda_.69}
  #allocation0 [shape = 'u32[]', space=smem, size = 0x4, offset = 0x4, fixed_abs, tag = 'smem constant byte address 0x4 - core index']
  #allocation1 [shape = 'u32[72,128]{1,0:T(1,128)}', space=vmem, size = 0x9000, scoped, tag = 'internal scratch']
  #allocation2 [shape = 'f32[64,128]{1,0:T(8,128)}', space=vmem, size = 0x8000, scoped, tag = 'scratch operand']
  %s0 = inlined_call_operand.vmem [shape: bf16[64,64], index: 0, kind: input, shape index: {}]
  %s1 = inlined_call_operand.vmem [shape: bf16[64,128], index: 1, kind: input, shape index: {}]
  %s2 = inlined_call_operand.vmem [shape: f32[1,128], index: 2, kind: input, shape index: {}]
  %s3 = inlined_call_operand.vmem [shape: bf16[64,128], index: 3, kind: output, shape index: {}]
  %s4 = sld [smem:[#allocation0]]
  $region30: #{_lambda_.69} parent=0
    _
  %s6 = ssub.s32 1, %s4
  %s7 = scalar_select 0, %s6, %s4
  // Predicated region
  $region2: #{_lambda_.69} parent=0 // pred_check
    _
  $region3: #{_lambda_.69} parent=0 // pred_check_branch
    %9 = sbr.rel (0) target = $region5
  $region4: #{_lambda_.69} parent=0 // pred_region
    _
  $region5: #{_lambda_.69} parent=0 // pred_fallthru
    _
  // Predicated region
  $region6: #{_lambda_.69} parent=0 // pred_check
    _
  $region7: #{_lambda_.69} parent=0 // pred_check_branch
    %11 = sbr.rel (0) target = $region9
  $region8: #{_lambda_.69} parent=0 // pred_region
    _
  $region9: #{_lambda_.69} parent=0 // pred_fallthru
    _
  // Predicated region
  $region10: #{_lambda_.69} parent=0 // pred_check
    _
  $region11: #{_lambda_.69} parent=0 // pred_check_branch
    %13 = sbr.rel (0) target = $region13
  $region12: #{_lambda_.69} parent=0 // pred_region
    _
  $region13: #{_lambda_.69} parent=0 // pred_fallthru
    _
  %p15 = scmp.eq.s32.totalorder 0, 0
  // Predicated region
  $region14: #{_lambda_.69} parent=0 // pred_check
    %p16 = pneg %p15
  $region15: #{_lambda_.69} parent=0 // pred_check_branch
    %18 = sbr.rel (%p16) target = $region17
  $region16: #{_lambda_.69} parent=0 // pred_region
    %19 = vst [vmem:[#allocation2] sm:$0xff] 0.0
    %20 = vst [vmem:[#allocation2 + $0x8] sm:$0xff] 0.0
    %21 = vst [vmem:[#allocation2 + $0x10] sm:$0xff] 0.0
    %22 = vst [vmem:[#allocation2 + $0x18] sm:$0xff] 0.0
    %23 = vst [vmem:[#allocation2 + $0x20] sm:$0xff] 0.0
    %24 = vst [vmem:[#allocation2 + $0x28] sm:$0xff] 0.0
    %25 = vst [vmem:[#allocation2 + $0x30] sm:$0xff] 0.0
    %26 = vst [vmem:[#allocation2 + $0x38] sm:$0xff] 0.0
  $region17: #{_lambda_.69} parent=0 // pred_fallthru
    _
  %v27 = vld [vmem:[#allocation2] sm:$0xff]
  %v28 = vld [vmem:[#allocation2 + $0x8] sm:$0xff]
  %v29 = vld [vmem:[#allocation2 + $0x10] sm:$0xff]
  %v30 = vld [vmem:[#allocation2 + $0x18] sm:$0xff]
  %v31 = vld [vmem:[#allocation2 + $0x20] sm:$0xff]
  %v32 = vld [vmem:[#allocation2 + $0x28] sm:$0xff]
  %v33 = vld [vmem:[#allocation2 + $0x30] sm:$0xff]
  %v34 = vld [vmem:[#allocation2 + $0x38] sm:$0xff]
  %v35 = vld [vmem:[%s0] sm:$0xf]
  %v36 = vld [vmem:[%s0 + $0x4] sm:$0xf]
  %v37 = vld [vmem:[%s0 + $0x8] sm:$0xf]
  %v38 = vld [vmem:[%s0 + $0xc] sm:$0xf]
  %v39 = vld [vmem:[%s0 + $0x10] sm:$0xf]
  %v40 = vld [vmem:[%s0 + $0x14] sm:$0xf]
  %v41 = vld [vmem:[%s0 + $0x18] sm:$0xf]
  %v42 = vld [vmem:[%s0 + $0x1c] sm:$0xf]
  %v43 = vld [vmem:[%s1] sm:$0xf]
  %v44 = vld [vmem:[%s1 + $0x4] sm:$0xf]
  %v45 = vld [vmem:[%s1 + $0x8] sm:$0xf]
  %v46 = vld [vmem:[%s1 + $0xc] sm:$0xf]
  %v47 = vld [vmem:[%s1 + $0x10] sm:$0xf]
  %v48 = vld [vmem:[%s1 + $0x14] sm:$0xf]
  %v49 = vld [vmem:[%s1 + $0x18] sm:$0xf]
  %v50 = vld [vmem:[%s1 + $0x1c] sm:$0xf]
  %v59 = vunpack.c.l.b16 %v35
  %v60 = vunpack.c.l.b16 %v36
  %v61 = vunpack.c.l.b16 %v37
  %v62 = vunpack.c.l.b16 %v38
  %v63 = vunpack.c.l.b16 %v39
  %v64 = vunpack.c.l.b16 %v40
  %v65 = vunpack.c.l.b16 %v41
  %v66 = vunpack.c.l.b16 %v42
  %v67 = vpack.c.b16 %v60, %v59
  %v68 = vpack.c.b16 %v62, %v61
  %v69 = vpack.c.b16 %v64, %v63
  %v70 = vpack.c.b16 %v66, %v65
  %v79 = vunpack.c.l.b16 %v43
  %v80 = vunpack.c.l.b16 %v44
  %v81 = vunpack.c.l.b16 %v45
  %v82 = vunpack.c.l.b16 %v46
  %v83 = vunpack.c.l.b16 %v47
  %v84 = vunpack.c.l.b16 %v48
  %v85 = vunpack.c.l.b16 %v49
  %v86 = vunpack.c.l.b16 %v50
  %v87 = vpack.c.b16 %v80, %v79
  %v88 = vpack.c.b16 %v82, %v81
  %v89 = vpack.c.b16 %v84, %v83
  %v90 = vpack.c.b16 %v86, %v85
  %vm95 = vcmask 523264
  %v97 = vsel %vm95, %v67, 0
  %v100 = vsel %vm95, %v68, 0
  %v103 = vsel %vm95, %v69, 0
  %v106 = vsel %vm95, %v70, 0
  %108 = vmatpush.bf16.msra.mxu0 0
  %109 = vmatpush.bf16.msra.mxu0 0
  %110 = vmatpush.bf16.msra.mxu0 0
  %111 = vmatpush.bf16.msra.mxu0 0
  %112 = vmatpush.bf16.msra.mxu0 %v90
  %113 = vmatpush.bf16.msra.mxu0 %v89
  %114 = vmatpush.bf16.msra.mxu0 %v88
  %115 = vmatpush.bf16.msra.mxu0 %v87
  %116 = vmatmul.bf16.gmra.mxu0 %v97
  %v117 = vpop.f32.mrf.mxu0
  %v118 = vadd.f32 0.0, %v117
  %v119 = vpop.f32.mrf.mxu0
  %v120 = vadd.f32 0.0, %v119
  %121 = vmatmul.bf16.gmra.mxu0 %v100
  %v122 = vpop.f32.mrf.mxu0
  %v123 = vadd.f32 0.0, %v122
  %v124 = vpop.f32.mrf.mxu0
  %v125 = vadd.f32 0.0, %v124
  %126 = vmatmul.bf16.gmra.mxu0 %v103
  %v127 = vpop.f32.mrf.mxu0
  %v128 = vadd.f32 0.0, %v127
  %v129 = vpop.f32.mrf.mxu0
  %v130 = vadd.f32 0.0, %v129
  %131 = vmatmul.bf16.gmra.mxu0 %v106
  %v132 = vpop.f32.mrf.mxu0
  %v133 = vadd.f32 0.0, %v132
  %v134 = vpop.f32.mrf.mxu0
  %v135 = vadd.f32 0.0, %v134
  %136 = vdwg.mxu0
  %v137 = vadd.f32 %v27, %v118
  %v138 = vadd.f32 %v28, %v120
  %v139 = vadd.f32 %v29, %v123
  %v140 = vadd.f32 %v30, %v125
  %v141 = vadd.f32 %v31, %v128
  %v142 = vadd.f32 %v32, %v130
  %v143 = vadd.f32 %v33, %v133
  %v144 = vadd.f32 %v34, %v135
  %145 = vst [vmem:[#allocation2] sm:$0xff] %v137
  %146 = vst [vmem:[#allocation2 + $0x8] sm:$0xff] %v138
  %147 = vst [vmem:[#allocation2 + $0x10] sm:$0xff] %v139
  %148 = vst [vmem:[#allocation2 + $0x18] sm:$0xff] %v140
  %149 = vst [vmem:[#allocation2 + $0x20] sm:$0xff] %v141
  %150 = vst [vmem:[#allocation2 + $0x28] sm:$0xff] %v142
  %151 = vst [vmem:[#allocation2 + $0x30] sm:$0xff] %v143
  %152 = vst [vmem:[#allocation2 + $0x38] sm:$0xff] %v144
  // Predicated region
  $region18: #{_lambda_.69} parent=0 // pred_check
    %p153 = pneg %p15
  $region19: #{_lambda_.69} parent=0 // pred_check_branch
    %155 = sbr.rel (%p153) target = $region21
  $region20: #{_lambda_.69} parent=0 // pred_region
    %v156 = vld [vmem:[#allocation2] sm:$0xff]
    %v157 = vld [vmem:[#allocation2 + $0x8] sm:$0xff]
    %v158 = vld [vmem:[#allocation2 + $0x10] sm:$0xff]
    %v159 = vld [vmem:[#allocation2 + $0x18] sm:$0xff]
    %v160 = vld [vmem:[#allocation2 + $0x20] sm:$0xff]
    %v161 = vld [vmem:[#allocation2 + $0x28] sm:$0xff]
    %v162 = vld [vmem:[#allocation2 + $0x30] sm:$0xff]
    %v163 = vld [vmem:[#allocation2 + $0x38] sm:$0xff]
    %v164 = vld [vmem:[%s2] sm:$0x1]
    %v166 = vperm.slane %v164, 0
    %v168 = vadd.f32 %v156, %v166
    %v169 = vadd.f32 %v157, %v166
    %v170 = vadd.f32 %v158, %v166
    %v171 = vadd.f32 %v159, %v166
    %v172 = vadd.f32 %v160, %v166
    %v173 = vadd.f32 %v161, %v166
    %v174 = vadd.f32 %v162, %v166
    %v175 = vadd.f32 %v163, %v166
    %v176 = vpack.c.bf16 %v168, %v168
    %v177 = vpack.c.bf16 %v169, %v169
    %v178 = vpack.c.bf16 %v170, %v170
    %v179 = vpack.c.bf16 %v171, %v171
    %v180 = vpack.c.bf16 %v172, %v172
    %v181 = vpack.c.bf16 %v173, %v173
    %v182 = vpack.c.bf16 %v174, %v174
    %v183 = vpack.c.bf16 %v175, %v175
    %184 = vst [vmem:[%s3] sm:$0xf] %v176
    %185 = vst [vmem:[%s3 + $0x4] sm:$0xf] %v177
    %186 = vst [vmem:[%s3 + $0x8] sm:$0xf] %v178
    %187 = vst [vmem:[%s3 + $0xc] sm:$0xf] %v179
    %188 = vst [vmem:[%s3 + $0x10] sm:$0xf] %v180
    %189 = vst [vmem:[%s3 + $0x14] sm:$0xf] %v181
    %190 = vst [vmem:[%s3 + $0x18] sm:$0xf] %v182
    %191 = vst [vmem:[%s3 + $0x1c] sm:$0xf] %v183
  $region21: #{_lambda_.69} parent=0 // pred_fallthru
    _
  // Predicated region
  $region22: #{_lambda_.69} parent=0 // pred_check
    _
  $region23: #{_lambda_.69} parent=0 // pred_check_branch
    %193 = sbr.rel (0) target = $region25
  $region24: #{_lambda_.69} parent=0 // pred_region
    _
  $region25: #{_lambda_.69} parent=0 // pred_fallthru
    _
  // Predicated region
  $region26: #{_lambda_.69} parent=0 // pred_check
    _
  $region27: #{_lambda_.69} parent=0 // pred_check_branch
    %195 = sbr.rel (0) target = $region29
  $region28: #{_lambda_.69} parent=0 // pred_region
    _
  $region29: #{_lambda_.69} parent=0 // pred_fallthru
    _

// kernel: _lambda_.70
$region0: #{_lambda_.70}
  #allocation0 [shape = 'u32[]', space=smem, size = 0x4, offset = 0x4, fixed_abs, tag = 'smem constant byte address 0x4 - core index']
  #allocation1 [shape = 'u32[72,128]{1,0:T(1,128)}', space=vmem, size = 0x9000, scoped, tag = 'internal scratch']
  %s0 = inlined_call_operand.vmem [shape: bf16[64,64], index: 0, kind: input, shape index: {}]
  %s1 = inlined_call_operand.vmem [shape: f32[1,64], index: 1, kind: input, shape index: {}]
  %s2 = inlined_call_operand.vmem [shape: f32[1,64], index: 2, kind: input, shape index: {}]
  %s3 = inlined_call_operand.vmem [shape: bf16[64,128], index: 3, kind: input, shape index: {}]
  %s4 = inlined_call_operand.vmem [shape: bf16[64,8], index: 4, kind: input, shape index: {}]
  %s5 = inlined_call_operand.vmem [shape: f32[1,8], index: 5, kind: input, shape index: {}]
  %s6 = inlined_call_operand.vmem [shape: f32[64,8], index: 6, kind: output, shape index: {}]
  %s7 = sld [smem:[#allocation0]]
  $region34: #{_lambda_.70} parent=0
    _
  %s9 = ssub.s32 1, %s7
  %s10 = scalar_select 0, %s9, %s7
  // Predicated region
  $region2: #{_lambda_.70} parent=0 // pred_check
    _
  $region3: #{_lambda_.70} parent=0 // pred_check_branch
    %12 = sbr.rel (0) target = $region5
  $region4: #{_lambda_.70} parent=0 // pred_region
    _
  $region5: #{_lambda_.70} parent=0 // pred_fallthru
    _
  // Predicated region
  $region6: #{_lambda_.70} parent=0 // pred_check
    _
  $region7: #{_lambda_.70} parent=0 // pred_check_branch
    %14 = sbr.rel (0) target = $region9
  $region8: #{_lambda_.70} parent=0 // pred_region
    _
  $region9: #{_lambda_.70} parent=0 // pred_fallthru
    _
  // Predicated region
  $region10: #{_lambda_.70} parent=0 // pred_check
    _
  $region11: #{_lambda_.70} parent=0 // pred_check_branch
    %16 = sbr.rel (0) target = $region13
  $region12: #{_lambda_.70} parent=0 // pred_region
    _
  $region13: #{_lambda_.70} parent=0 // pred_fallthru
    _
  // Predicated region
  $region14: #{_lambda_.70} parent=0 // pred_check
    _
  $region15: #{_lambda_.70} parent=0 // pred_check_branch
    %18 = sbr.rel (0) target = $region17
  $region16: #{_lambda_.70} parent=0 // pred_region
    _
  $region17: #{_lambda_.70} parent=0 // pred_fallthru
    _
  // Predicated region
  $region18: #{_lambda_.70} parent=0 // pred_check
    _
  $region19: #{_lambda_.70} parent=0 // pred_check_branch
    %20 = sbr.rel (0) target = $region21
  $region20: #{_lambda_.70} parent=0 // pred_region
    _
  $region21: #{_lambda_.70} parent=0 // pred_fallthru
    _
  // Predicated region
  $region22: #{_lambda_.70} parent=0 // pred_check
    _
  $region23: #{_lambda_.70} parent=0 // pred_check_branch
    %22 = sbr.rel (0) target = $region25
  $region24: #{_lambda_.70} parent=0 // pred_region
    _
  $region25: #{_lambda_.70} parent=0 // pred_fallthru
    _
  %v24 = vld [vmem:[%s0] sm:$0xf]
  %v25 = vld [vmem:[%s0 + $0x4] sm:$0xf]
  %v26 = vld [vmem:[%s0 + $0x8] sm:$0xf]
  %v27 = vld [vmem:[%s0 + $0xc] sm:$0xf]
  %v28 = vld [vmem:[%s0 + $0x10] sm:$0xf]
  %v29 = vld [vmem:[%s0 + $0x14] sm:$0xf]
  %v30 = vld [vmem:[%s0 + $0x18] sm:$0xf]
  %v31 = vld [vmem:[%s0 + $0x1c] sm:$0xf]
  %v32 = vunpack.c.l.bf16 %v24
  %v33 = vunpack.c.l.bf16 %v25
  %v34 = vunpack.c.l.bf16 %v26
  %v35 = vunpack.c.l.bf16 %v27
  %v36 = vunpack.c.l.bf16 %v28
  %v37 = vunpack.c.l.bf16 %v29
  %v38 = vunpack.c.l.bf16 %v30
  %v39 = vunpack.c.l.bf16 %v31
  %vm40 = vcmask 523264
  %v41 = vsel %vm40, %v32, 0.0
  %42 = vadd.xlane.f32.xlu0 %v41
  %v43 = vpop.xlane.xlu0 %42
  %v44 = vsel %vm40, %v33, 0.0
  %45 = vadd.xlane.f32.xlu0 %v44
  %v46 = vpop.xlane.xlu0 %45
  %v47 = vsel %vm40, %v34, 0.0
  %48 = vadd.xlane.f32.xlu0 %v47
  %v49 = vpop.xlane.xlu0 %48
  %v50 = vsel %vm40, %v35, 0.0
  %51 = vadd.xlane.f32.xlu0 %v50
  %v52 = vpop.xlane.xlu0 %51
  %v53 = vsel %vm40, %v36, 0.0
  %54 = vadd.xlane.f32.xlu0 %v53
  %v55 = vpop.xlane.xlu0 %54
  %v56 = vsel %vm40, %v37, 0.0
  %57 = vadd.xlane.f32.xlu0 %v56
  %v58 = vpop.xlane.xlu0 %57
  %v59 = vsel %vm40, %v38, 0.0
  %60 = vadd.xlane.f32.xlu0 %v59
  %v61 = vpop.xlane.xlu0 %60
  %v62 = vsel %vm40, %v39, 0.0
  %63 = vadd.xlane.f32.xlu0 %v62
  %v64 = vpop.xlane.xlu0 %63
  %v65 = vrcp.pop 64.0
  %v66 = vmul.f32 64.0, %v65
  %v67 = vsub.f32 1.0, %v66
  %v68 = vmul.f32 %v65, %v67
  %v69 = vadd.f32 %v65, %v68
  %vm70 = vweird.f32 %v65
  %v71 = vsel %vm70, %v65, %v69
  %v72 = vmul.f32 %v43, %v71
  %v73 = vmul.f32 %v46, %v71
  %v74 = vmul.f32 %v49, %v71
  %v75 = vmul.f32 %v52, %v71
  %v76 = vmul.f32 %v55, %v71
  %v77 = vmul.f32 %v58, %v71
  %v78 = vmul.f32 %v61, %v71
  %v79 = vmul.f32 %v64, %v71
  %v80 = vsub.f32 %v32, %v72
  %v81 = vsub.f32 %v33, %v73
  %v82 = vsub.f32 %v34, %v74
  %v83 = vsub.f32 %v35, %v75
  %v84 = vsub.f32 %v36, %v76
  %v85 = vsub.f32 %v37, %v77
  %v86 = vsub.f32 %v38, %v78
  %v87 = vsub.f32 %v39, %v79
  %v88 = vmul.f32 %v80, %v80
  %v89 = vmul.f32 %v81, %v81
  %v90 = vmul.f32 %v82, %v82
  %v91 = vmul.f32 %v83, %v83
  %v92 = vmul.f32 %v84, %v84
  %v93 = vmul.f32 %v85, %v85
  %v94 = vmul.f32 %v86, %v86
  %v95 = vmul.f32 %v87, %v87
  %v96 = vsel %vm40, %v88, 0.0
  %97 = vadd.xlane.f32.xlu0 %v96
  %v98 = vpop.xlane.xlu0 %97
  %v99 = vsel %vm40, %v89, 0.0
  %100 = vadd.xlane.f32.xlu0 %v99
  %v101 = vpop.xlane.xlu0 %100
  %v102 = vsel %vm40, %v90, 0.0
  %103 = vadd.xlane.f32.xlu0 %v102
  %v104 = vpop.xlane.xlu0 %103
  %v105 = vsel %vm40, %v91, 0.0
  %106 = vadd.xlane.f32.xlu0 %v105
  %v107 = vpop.xlane.xlu0 %106
  %v108 = vsel %vm40, %v92, 0.0
  %109 = vadd.xlane.f32.xlu0 %v108
  %v110 = vpop.xlane.xlu0 %109
  %v111 = vsel %vm40, %v93, 0.0
  %112 = vadd.xlane.f32.xlu0 %v111
  %v113 = vpop.xlane.xlu0 %112
  %v114 = vsel %vm40, %v94, 0.0
  %115 = vadd.xlane.f32.xlu0 %v114
  %v116 = vpop.xlane.xlu0 %115
  %v117 = vsel %vm40, %v95, 0.0
  %118 = vadd.xlane.f32.xlu0 %v117
  %v119 = vpop.xlane.xlu0 %118
  %v120 = vmul.f32 %v98, %v71
  %v121 = vmul.f32 %v101, %v71
  %v122 = vmul.f32 %v104, %v71
  %v123 = vmul.f32 %v107, %v71
  %v124 = vmul.f32 %v110, %v71
  %v125 = vmul.f32 %v113, %v71
  %v126 = vmul.f32 %v116, %v71
  %v127 = vmul.f32 %v119, %v71
  %v128 = vadd.f32 %v120, 1e-06
  %v129 = vadd.f32 %v121, 1e-06
  %v130 = vadd.f32 %v122, 1e-06
  %v131 = vadd.f32 %v123, 1e-06
  %v132 = vadd.f32 %v124, 1e-06
  %v133 = vadd.f32 %v125, 1e-06
  %v134 = vadd.f32 %v126, 1e-06
  %v135 = vadd.f32 %v127, 1e-06
  %v136 = vrsqrt.pop %v128
  %v137 = vmul.f32 %v136, %v128
  %v138 = vmul.f32 %v137, %v136
  %v139 = vmul.f32 0.5, %v138
  %v140 = vsub.f32 1.5, %v139
  %v141 = vmul.f32 %v136, %v140
  %vm142 = vweird.f32 %v128
  %vm143 = vweird.f32 %v136
  %vm144 = vmor %vm142, %vm143
  %v145 = vsel %vm144, %v136, %v141
  %v146 = vrsqrt.pop %v129
  %v147 = vmul.f32 %v146, %v129
  %v148 = vmul.f32 %v147, %v146
  %v149 = vmul.f32 0.5, %v148
  %v150 = vsub.f32 1.5, %v149
  %v151 = vmul.f32 %v146, %v150
  %vm152 = vweird.f32 %v129
  %vm153 = vweird.f32 %v146
  %vm154 = vmor %vm152, %vm153
  %v155 = vsel %vm154, %v146, %v151
  %v156 = vrsqrt.pop %v130
  %v157 = vmul.f32 %v156, %v130
  %v158 = vmul.f32 %v157, %v156
  %v159 = vmul.f32 0.5, %v158
  %v160 = vsub.f32 1.5, %v159
  %v161 = vmul.f32 %v156, %v160
  %vm162 = vweird.f32 %v130
  %vm163 = vweird.f32 %v156
  %vm164 = vmor %vm162, %vm163
  %v165 = vsel %vm164, %v156, %v161
  %v166 = vrsqrt.pop %v131
  %v167 = vmul.f32 %v166, %v131
  %v168 = vmul.f32 %v167, %v166
  %v169 = vmul.f32 0.5, %v168
  %v170 = vsub.f32 1.5, %v169
  %v171 = vmul.f32 %v166, %v170
  %vm172 = vweird.f32 %v131
  %vm173 = vweird.f32 %v166
  %vm174 = vmor %vm172, %vm173
  %v175 = vsel %vm174, %v166, %v171
  %v176 = vrsqrt.pop %v132
  %v177 = vmul.f32 %v176, %v132
  %v178 = vmul.f32 %v177, %v176
  %v179 = vmul.f32 0.5, %v178
  %v180 = vsub.f32 1.5, %v179
  %v181 = vmul.f32 %v176, %v180
  %vm182 = vweird.f32 %v132
  %vm183 = vweird.f32 %v176
  %vm184 = vmor %vm182, %vm183
  %v185 = vsel %vm184, %v176, %v181
  %v186 = vrsqrt.pop %v133
  %v187 = vmul.f32 %v186, %v133
  %v188 = vmul.f32 %v187, %v186
  %v189 = vmul.f32 0.5, %v188
  %v190 = vsub.f32 1.5, %v189
  %v191 = vmul.f32 %v186, %v190
  %vm192 = vweird.f32 %v133
  %vm193 = vweird.f32 %v186
  %vm194 = vmor %vm192, %vm193
  %v195 = vsel %vm194, %v186, %v191
  %v196 = vrsqrt.pop %v134
  %v197 = vmul.f32 %v196, %v134
  %v198 = vmul.f32 %v197, %v196
  %v199 = vmul.f32 0.5, %v198
  %v200 = vsub.f32 1.5, %v199
  %v201 = vmul.f32 %v196, %v200
  %vm202 = vweird.f32 %v134
  %vm203 = vweird.f32 %v196
  %vm204 = vmor %vm202, %vm203
  %v205 = vsel %vm204, %v196, %v201
  %v206 = vrsqrt.pop %v135
  %v207 = vmul.f32 %v206, %v135
  %v208 = vmul.f32 %v207, %v206
  %v209 = vmul.f32 0.5, %v208
  %v210 = vsub.f32 1.5, %v209
  %v211 = vmul.f32 %v206, %v210
  %vm212 = vweird.f32 %v135
  %vm213 = vweird.f32 %v206
  %vm214 = vmor %vm212, %vm213
  %v215 = vsel %vm214, %v206, %v211
  %v216 = vmul.f32 %v80, %v145
  %v217 = vmul.f32 %v81, %v155
  %v218 = vmul.f32 %v82, %v165
  %v219 = vmul.f32 %v83, %v175
  %v220 = vmul.f32 %v84, %v185
  %v221 = vmul.f32 %v85, %v195
  %v222 = vmul.f32 %v86, %v205
  %v223 = vmul.f32 %v87, %v215
  %v224 = vld [vmem:[%s1] sm:$0x1]
  %v226 = vperm.slane %v224, 0
  %v228 = vmul.f32 %v216, %v226
  %v229 = vmul.f32 %v217, %v226
  %v230 = vmul.f32 %v218, %v226
  %v231 = vmul.f32 %v219, %v226
  %v232 = vmul.f32 %v220, %v226
  %v233 = vmul.f32 %v221, %v226
  %v234 = vmul.f32 %v222, %v226
  %v235 = vmul.f32 %v223, %v226
  %v236 = vld [vmem:[%s2] sm:$0x1]
  %v238 = vperm.slane %v236, 0
  %v240 = vadd.f32 %v228, %v238
  %v241 = vadd.f32 %v229, %v238
  %v242 = vadd.f32 %v230, %v238
  %v243 = vadd.f32 %v231, %v238
  %v244 = vadd.f32 %v232, %v238
  %v245 = vadd.f32 %v233, %v238
  %v246 = vadd.f32 %v234, %v238
  %v247 = vadd.f32 %v235, %v238
  %v248 = vld [vmem:[%s3] sm:$0xf]
  %v249 = vld [vmem:[%s3 + $0x4] sm:$0xf]
  %v250 = vld [vmem:[%s3 + $0x8] sm:$0xf]
  %v251 = vld [vmem:[%s3 + $0xc] sm:$0xf]
  %v252 = vld [vmem:[%s3 + $0x10] sm:$0xf]
  %v253 = vld [vmem:[%s3 + $0x14] sm:$0xf]
  %v254 = vld [vmem:[%s3 + $0x18] sm:$0xf]
  %v255 = vld [vmem:[%s3 + $0x1c] sm:$0xf]
  %v256 = vunpack.c.l.bf16 %v248
  %v257 = vunpack.c.l.bf16 %v249
  %v258 = vunpack.c.l.bf16 %v250
  %v259 = vunpack.c.l.bf16 %v251
  %v260 = vunpack.c.l.bf16 %v252
  %v261 = vunpack.c.l.bf16 %v253
  %v262 = vunpack.c.l.bf16 %v254
  %v263 = vunpack.c.l.bf16 %v255
  %v264 = vadd.f32 %v256, 1.0
  %v265 = vadd.f32 %v257, 1.0
  %v266 = vadd.f32 %v258, 1.0
  %v267 = vadd.f32 %v259, 1.0
  %v268 = vadd.f32 %v260, 1.0
  %v269 = vadd.f32 %v261, 1.0
  %v270 = vadd.f32 %v262, 1.0
  %v271 = vadd.f32 %v263, 1.0
  %280 = vrot.lane.b32.xlu0 %v264, 64
  %v281 = vpop.permute.xlu0 %280
  %282 = vrot.lane.b32.xlu0 %v265, 64
  %v283 = vpop.permute.xlu0 %282
  %284 = vrot.lane.b32.xlu0 %v266, 64
  %v285 = vpop.permute.xlu0 %284
  %286 = vrot.lane.b32.xlu0 %v267, 64
  %v287 = vpop.permute.xlu0 %286
  %288 = vrot.lane.b32.xlu0 %v268, 64
  %v289 = vpop.permute.xlu0 %288
  %290 = vrot.lane.b32.xlu0 %v269, 64
  %v291 = vpop.permute.xlu0 %290
  %292 = vrot.lane.b32.xlu0 %v270, 64
  %v293 = vpop.permute.xlu0 %292
  %294 = vrot.lane.b32.xlu0 %v271, 64
  %v295 = vpop.permute.xlu0 %294
  %v304 = vmul.f32 %v240, %v281
  %v305 = vmul.f32 %v241, %v283
  %v306 = vmul.f32 %v242, %v285
  %v307 = vmul.f32 %v243, %v287
  %v308 = vmul.f32 %v244, %v289
  %v309 = vmul.f32 %v245, %v291
  %v310 = vmul.f32 %v246, %v293
  %v311 = vmul.f32 %v247, %v295
  %v312 = vadd.f32 %v304, %v256
  %v313 = vadd.f32 %v305, %v257
  %v314 = vadd.f32 %v306, %v258
  %v315 = vadd.f32 %v307, %v259
  %v316 = vadd.f32 %v308, %v260
  %v317 = vadd.f32 %v309, %v261
  %v318 = vadd.f32 %v310, %v262
  %v319 = vadd.f32 %v311, %v263
  %v320 = vpack.c.bf16 %v313, %v312
  %v321 = vpack.c.bf16 %v315, %v314
  %v322 = vpack.c.bf16 %v317, %v316
  %v323 = vpack.c.bf16 %v319, %v318
  %v324 = vld [vmem:[%s4] sm:$0xf]
  %v325 = vld [vmem:[%s4 + $0x4] sm:$0xf]
  %v326 = vld [vmem:[%s4 + $0x8] sm:$0xf]
  %v327 = vld [vmem:[%s4 + $0xc] sm:$0xf]
  %v328 = vld [vmem:[%s4 + $0x10] sm:$0xf]
  %v329 = vld [vmem:[%s4 + $0x14] sm:$0xf]
  %v330 = vld [vmem:[%s4 + $0x18] sm:$0xf]
  %v331 = vld [vmem:[%s4 + $0x1c] sm:$0xf]
  %v332 = vld [vmem:[%s5] sm:$0x1]
  %v334 = vperm.slane %v332, 0
  %v344 = vunpack.c.l.b16 %v324
  %v345 = vunpack.c.l.b16 %v325
  %v346 = vunpack.c.l.b16 %v326
  %v347 = vunpack.c.l.b16 %v327
  %v348 = vunpack.c.l.b16 %v328
  %v349 = vunpack.c.l.b16 %v329
  %v350 = vunpack.c.l.b16 %v330
  %v351 = vunpack.c.l.b16 %v331
  %v352 = vpack.c.b16 %v345, %v344
  %v353 = vpack.c.b16 %v347, %v346
  %v354 = vpack.c.b16 %v349, %v348
  %v355 = vpack.c.b16 %v351, %v350
  %v361 = vsel %vm40, %v320, 0
  %v364 = vsel %vm40, %v321, 0
  %v367 = vsel %vm40, %v322, 0
  %v370 = vsel %vm40, %v323, 0
  %372 = vmatpush.bf16.msra.mxu0 0
  %373 = vmatpush.bf16.msra.mxu0 0
  %374 = vmatpush.bf16.msra.mxu0 0
  %375 = vmatpush.bf16.msra.mxu0 0
  %376 = vmatpush.bf16.msra.mxu0 %v355
  %377 = vmatpush.bf16.msra.mxu0 %v354
  %378 = vmatpush.bf16.msra.mxu0 %v353
  %379 = vmatpush.bf16.msra.mxu0 %v352
  %380 = vmatmul.bf16.gmra.mxu0 %v361
  %v381 = vpop.f32.mrf.mxu0
  %v382 = vadd.f32 %v334, %v381
  %v383 = vpop.f32.mrf.mxu0
  %v384 = vadd.f32 %v334, %v383
  %385 = vmatmul.bf16.gmra.mxu0 %v364
  %v386 = vpop.f32.mrf.mxu0
  %v387 = vadd.f32 %v334, %v386
  %v388 = vpop.f32.mrf.mxu0
  %v389 = vadd.f32 %v334, %v388
  %390 = vmatmul.bf16.gmra.mxu0 %v367
  %v391 = vpop.f32.mrf.mxu0
  %v392 = vadd.f32 %v334, %v391
  %v393 = vpop.f32.mrf.mxu0
  %v394 = vadd.f32 %v334, %v393
  %395 = vmatmul.bf16.gmra.mxu0 %v370
  %v396 = vpop.f32.mrf.mxu0
  %v397 = vadd.f32 %v334, %v396
  %v398 = vpop.f32.mrf.mxu0
  %v399 = vadd.f32 %v334, %v398
  %400 = vdwg.mxu0
  %vm401 = vcmask 64512
  %402 = vst.msk [vmem:[%s6] sm:$0xff] %vm401, %v382
  %403 = vst.msk [vmem:[%s6 + $0x8] sm:$0xff] %vm401, %v384
  %404 = vst.msk [vmem:[%s6 + $0x10] sm:$0xff] %vm401, %v387
  %405 = vst.msk [vmem:[%s6 + $0x18] sm:$0xff] %vm401, %v389
  %406 = vst.msk [vmem:[%s6 + $0x20] sm:$0xff] %vm401, %v392
  %407 = vst.msk [vmem:[%s6 + $0x28] sm:$0xff] %vm401, %v394
  %408 = vst.msk [vmem:[%s6 + $0x30] sm:$0xff] %vm401, %v397
  %409 = vst.msk [vmem:[%s6 + $0x38] sm:$0xff] %vm401, %v399
  // Predicated region
  $region26: #{_lambda_.70} parent=0 // pred_check
    _
  $region27: #{_lambda_.70} parent=0 // pred_check_branch
    %411 = sbr.rel (0) target = $region29
  $region28: #{_lambda_.70} parent=0 // pred_region
    _
  $region29: #{_lambda_.70} parent=0 // pred_fallthru
    _
  // Predicated region
  $region30: #{_lambda_.70} parent=0 // pred_check
    _
  $region31: #{_lambda_.70} parent=0 // pred_check_branch
    %413 = sbr.rel (0) target = $region33
  $region32: #{_lambda_.70} parent=0 // pred_region
    _
  $region33: #{_lambda_.70} parent=0 // pred_fallthru
    _

// kernel: _lambda_.71
$region0: #{_lambda_.71}
  #allocation0 [shape = 'u32[]', space=smem, size = 0x4, offset = 0x4, fixed_abs, tag = 'smem constant byte address 0x4 - core index']
  #allocation1 [shape = 'u32[72,128]{1,0:T(1,128)}', space=vmem, size = 0x9000, scoped, tag = 'internal scratch']
  #allocation2 [shape = 'f32[1,1]{1,0:T(1,128)}', space=vmem, size = 0x200, scoped, tag = 'scratch operand']
  #allocation3 [shape = 'f32[1,1]{1,0:T(1,128)}', space=vmem, size = 0x200, scoped, tag = 'scratch operand']
  %s0 = inlined_call_operand.vmem [shape: f32[64,4], index: 0, kind: input, shape index: {}]
  %s1 = inlined_call_operand.vmem [shape: f32[64,4], index: 1, kind: input, shape index: {}]
  %s2 = inlined_call_operand.vmem [shape: f32[64,1], index: 2, kind: input, shape index: {}]
  %s3 = inlined_call_operand.vmem [shape: f32[16,128], index: 3, kind: output, shape index: {0}]
  %s4 = inlined_call_operand.vmem [shape: f32[16,128], index: 4, kind: output, shape index: {1}]
  %5 = xla_tuple %s3, %s4
  %s6 = sld [smem:[#allocation0]]
  $region61: #{_lambda_.71} parent=0
    _
  %s8 = ssub.s32 1, %s6
  %s9 = scalar_select 0, %s8, %s6
  loop: start=0, step=1, limit=4
  $region2: #{_lambda_.71} parent=0 // loop_pre_header
    _
  $region3: #{_lambda_.71} parent=0 // loop_header
    %s11 = sphi 0, %s15
    %p12 = scmp.ge.s32.totalorder %s11, 4
    %s18 = sphi 0, %s30
    %s19 = sphi 0, %s26
    %s20 = sphi 0, %s18
    %s21 = sphi 0, %s19
    %s22 = sphi 0, %s20
    %s23 = sphi 0, %s21
    %s35 = sphi 0, %s37
    %s38 = sphi 0, %s35
    %s39 = sphi 0, %s38
    %s55 = sphi 0, %s39
    %s63 = sphi 0, %s65
    %s66 = sphi 0, %s63
    %s67 = sphi 0, %s66
    %s83 = sphi 0, %s67
    %s91 = sphi 0, %s93
    %s94 = sphi 0, %s91
    %s95 = sphi 0, %s94
    %s111 = sphi 0, %s95
    %s117 = sphi 0, %s119
    %s120 = sphi 0, %s117
    %s121 = sphi 0, %s120
    %s137 = sphi 0, %s121
    %s143 = sphi 0, %s145
    %s146 = sphi 0, %s143
    %s147 = sphi 0, %s146
    %s163 = sphi 0, %s147
  $region4: #{_lambda_.71} parent=0 // loop_header_branch
    %14 = sbr.rel (%p12) target = $region8
  $region5: #{_lambda_.71} parent=0 // loop_body
    %s16 = ssub.s32 %s11, 1
    %s17 = ssub.s32 %s11, 2
    %s24 = sadd.s32 1, %s19
    %p25 = scmp.ge.s32.totalorder %s24, 1
    %s26 = scalar_select %p25, 0, %s24
    %s27 = sadd.s32 1, %s18
    %s28 = scalar_select %p25, %s27, %s18
    %p29 = scmp.ge.s32.totalorder %s28, 2
    %s30 = scalar_select %p29, 0, %s28
    %s31 = sadd.s32 %s18, %s19
    %s32 = sadd.s32 %s30, %s26
    %s33 = ssub.s32 %s31, %s32
    %p34 = scmp.eq.s32.totalorder %s33, 0
    %s36 = sadd.s32 %s35, 1
    %s37 = scalar_select %p34, %s35, %s36
    %p40 = pneg %p34
    %p41 = scmp.eq.s32.totalorder %s11, 1
    %p42 = por %p40, %p41
    %p43 = scmp.ne.s32.totalorder %s35, %s38
    %p44 = scmp.eq.s32.totalorder %s11, 0
    %p45 = por %p43, %p44
    %p46 = scmp.ne.s32.totalorder %s35, %s38
    %p47 = scmp.eq.s32.totalorder %s16, 1
    %p48 = por %p46, %p47
    %p49 = scmp.ne.s32.totalorder %s38, %s39
    %p50 = scmp.eq.s32.totalorder %s16, 0
    %p51 = por %p49, %p50
    %p52 = scmp.ne.s32.totalorder %s38, %s39
    %p53 = scmp.eq.s32.totalorder %s17, 1
    %p54 = por %p52, %p53
    %p56 = scmp.ne.s32.totalorder %s39, %s55
    %p57 = scmp.eq.s32.totalorder %s17, 0
    %p58 = por %p56, %p57
    %s59 = sadd.s32 %s18, %s19
    %s60 = sadd.s32 %s30, %s26
    %s61 = ssub.s32 %s59, %s60
    %p62 = scmp.eq.s32.totalorder %s61, 0
    %s64 = sadd.s32 %s63, 1
    %s65 = scalar_select %p62, %s63, %s64
    %p68 = pneg %p62
    %p69 = scmp.eq.s32.totalorder %s11, 1
    %p70 = por %p68, %p69
    %p71 = scmp.ne.s32.totalorder %s63, %s66
    %p72 = scmp.eq.s32.totalorder %s11, 0
    %p73 = por %p71, %p72
    %p74 = scmp.ne.s32.totalorder %s63, %s66
    %p75 = scmp.eq.s32.totalorder %s16, 1
    %p76 = por %p74, %p75
    %p77 = scmp.ne.s32.totalorder %s66, %s67
    %p78 = scmp.eq.s32.totalorder %s16, 0
    %p79 = por %p77, %p78
    %p80 = scmp.ne.s32.totalorder %s66, %s67
    %p81 = scmp.eq.s32.totalorder %s17, 1
    %p82 = por %p80, %p81
    %p84 = scmp.ne.s32.totalorder %s67, %s83
    %p85 = scmp.eq.s32.totalorder %s17, 0
    %p86 = por %p84, %p85
    %s87 = sadd.s32 %s18, %s19
    %s88 = sadd.s32 %s30, %s26
    %s89 = ssub.s32 %s87, %s88
    %p90 = scmp.eq.s32.totalorder %s89, 0
    %s92 = sadd.s32 %s91, 1
    %s93 = scalar_select %p90, %s91, %s92
    %p96 = pneg %p90
    %p97 = scmp.eq.s32.totalorder %s11, 1
    %p98 = por %p96, %p97
    %p99 = scmp.ne.s32.totalorder %s91, %s94
    %p100 = scmp.eq.s32.totalorder %s11, 0
    %p101 = por %p99, %p100
    %p102 = scmp.ne.s32.totalorder %s91, %s94
    %p103 = scmp.eq.s32.totalorder %s16, 1
    %p104 = por %p102, %p103
    %p105 = scmp.ne.s32.totalorder %s94, %s95
    %p106 = scmp.eq.s32.totalorder %s16, 0
    %p107 = por %p105, %p106
    %p108 = scmp.ne.s32.totalorder %s94, %s95
    %p109 = scmp.eq.s32.totalorder %s17, 1
    %p110 = por %p108, %p109
    %p112 = scmp.ne.s32.totalorder %s95, %s111
    %p113 = scmp.eq.s32.totalorder %s17, 0
    %p114 = por %p112, %p113
    %s115 = ssub.s32 %s18, %s30
    %p116 = scmp.eq.s32.totalorder %s115, 0
    %s118 = sadd.s32 %s117, 1
    %s119 = scalar_select %p116, %s117, %s118
    %p122 = pneg %p116
    %p123 = scmp.eq.s32.totalorder %s11, 1
    %p124 = por %p122, %p123
    %p125 = scmp.ne.s32.totalorder %s117, %s120
    %p126 = scmp.eq.s32.totalorder %s11, 0
    %p127 = por %p125, %p126
    %p128 = scmp.ne.s32.totalorder %s117, %s120
    %p129 = scmp.eq.s32.totalorder %s16, 1
    %p130 = por %p128, %p129
    %p131 = scmp.ne.s32.totalorder %s120, %s121
    %p132 = scmp.eq.s32.totalorder %s16, 0
    %p133 = por %p131, %p132
    %p134 = scmp.ne.s32.totalorder %s120, %s121
    %p135 = scmp.eq.s32.totalorder %s17, 1
    %p136 = por %p134, %p135
    %p138 = scmp.ne.s32.totalorder %s121, %s137
    %p139 = scmp.eq.s32.totalorder %s17, 0
    %p140 = por %p138, %p139
    %s141 = ssub.s32 %s18, %s30
    %p142 = scmp.eq.s32.totalorder %s141, 0
    %s144 = sadd.s32 %s143, 1
    %s145 = scalar_select %p142, %s143, %s144
    %p148 = pneg %p142
    %p149 = scmp.eq.s32.totalorder %s11, 1
    %p150 = por %p148, %p149
    %p151 = scmp.ne.s32.totalorder %s143, %s146
    %p152 = scmp.eq.s32.totalorder %s11, 0
    %p153 = por %p151, %p152
    %p154 = scmp.ne.s32.totalorder %s143, %s146
    %p155 = scmp.eq.s32.totalorder %s16, 1
    %p156 = por %p154, %p155
    %p157 = scmp.ne.s32.totalorder %s146, %s147
    %p158 = scmp.eq.s32.totalorder %s16, 0
    %p159 = por %p157, %p158
    %p160 = scmp.ne.s32.totalorder %s146, %s147
    %p161 = scmp.eq.s32.totalorder %s17, 1
    %p162 = por %p160, %p161
    %p164 = scmp.ne.s32.totalorder %s147, %s163
    %p165 = scmp.eq.s32.totalorder %s17, 0
    %p166 = por %p164, %p165
    %p167 = scmp.le.s32.totalorder 1, %s11
    %p168 = scmp.lt.s32.totalorder %s11, 3
    %p169 = pnand %p167, %p168
    %p170 = pneg %p169
    // Predicated region
    $region9: #{_lambda_.71} parent=5 // pred_check
      _
    $region10: #{_lambda_.71} parent=5 // pred_check_branch
      %172 = sbr.rel (%p169) target = $region12
    $region11: #{_lambda_.71} parent=5 // pred_region
      %s173 = ssub.s32 %s11, 1
    $region12: #{_lambda_.71} parent=5 // pred_fallthru
      _
    %p174 = scmp.lt.s32.totalorder %s11, 2
    // Predicated region
    $region13: #{_lambda_.71} parent=5 // pred_check
      %p175 = pneg %p174
    $region14: #{_lambda_.71} parent=5 // pred_check_branch
      %177 = sbr.rel (%p175) target = $region16
    $region15: #{_lambda_.71} parent=5 // pred_region
      // Predicated region
      $region17: #{_lambda_.71} parent=15 // pred_check
        %p178 = pneg %p45
      $region18: #{_lambda_.71} parent=15 // pred_check_branch
        %180 = sbr.rel (%p178) target = $region20
      $region19: #{_lambda_.71} parent=15 // pred_region
        %s181 = sadd.s32 %s18, %s19
        %s182 = smul.u32 4, %s181
        %p183 = scmp.lt.s32.totalorder %s182, 7
        %s184 = scalar_select %p183, %s182, 7
        %s185 = smul.addr %s184, 8
        %s186 = scalar_lea.vmem %s0, %s185
        %s187 = sadd.s32 %s18, %s19
        %s188 = smul.u32 4, %s187
      $region20: #{_lambda_.71} parent=15 // pred_fallthru
        _
      // Predicated region
      $region21: #{_lambda_.71} parent=15 // pred_check
        %p189 = pneg %p73
      $region22: #{_lambda_.71} parent=15 // pred_check_branch
        %191 = sbr.rel (%p189) target = $region24
      $region23: #{_lambda_.71} parent=15 // pred_region
        %s192 = sadd.s32 %s18, %s19
        %s193 = smul.u32 4, %s192
        %p194 = scmp.lt.s32.totalorder %s193, 7
        %s195 = scalar_select %p194, %s193, 7
        %s196 = smul.addr %s195, 8
        %s197 = scalar_lea.vmem %s1, %s196
        %s198 = sadd.s32 %s18, %s19
        %s199 = smul.u32 4, %s198
      $region24: #{_lambda_.71} parent=15 // pred_fallthru
        _
      // Predicated region
      $region25: #{_lambda_.71} parent=15 // pred_check
        %p200 = pneg %p101
      $region26: #{_lambda_.71} parent=15 // pred_check_branch
        %202 = sbr.rel (%p200) target = $region28
      $region27: #{_lambda_.71} parent=15 // pred_region
        %s203 = sadd.s32 %s18, %s19
        %s204 = smul.u32 4, %s203
        %p205 = scmp.lt.s32.totalorder %s204, 7
        %s206 = scalar_select %p205, %s204, 7
        %s207 = smul.addr %s206, 8
        %s208 = scalar_lea.vmem %s2, %s207
        %s209 = sadd.s32 %s18, %s19
        %s210 = smul.u32 4, %s209
      $region28: #{_lambda_.71} parent=15 // pred_fallthru
        _
    $region16: #{_lambda_.71} parent=5 // pred_fallthru
      _
    %p211 = scmp.le.s32.totalorder 1, %s11
    %p212 = scmp.lt.s32.totalorder %s11, 3
    %p213 = pnand %p211, %p212
    %p214 = pneg %p213
    // Predicated region
    $region29: #{_lambda_.71} parent=5 // pred_check
      _
    $region30: #{_lambda_.71} parent=5 // pred_check_branch
      %216 = sbr.rel (%p213) target = $region32
    $region31: #{_lambda_.71} parent=5 // pred_region
      %s217 = ssub.s32 %s11, 1
      %s218 = sadd.s32 %s20, %s21
      %s219 = smul.u32 4, %s218
      %p220 = scmp.lt.s32.totalorder %s219, 7
      %s221 = scalar_select %p220, %s219, 7
      %s222 = smul.addr %s221, 8
      %s223 = scalar_lea.vmem %s0, %s222
      %p224 = pneg %p51
      %p225 = pneg %p48
      %s226 = sadd.s32 %s20, %s21
      %s227 = smul.u32 4, %s226
      %p228 = scmp.lt.s32.totalorder %s227, 7
      %s229 = scalar_select %p228, %s227, 7
      %s230 = smul.addr %s229, 8
      %s231 = scalar_lea.vmem %s1, %s230
      %p232 = pneg %p79
      %p233 = pneg %p76
      %s234 = sadd.s32 %s20, %s21
      %s235 = smul.u32 4, %s234
      %p236 = scmp.lt.s32.totalorder %s235, 7
      %s237 = scalar_select %p236, %s235, 7
      %s238 = smul.addr %s237, 8
      %s239 = scalar_lea.vmem %s2, %s238
      %p240 = pneg %p107
      %p241 = pneg %p104
      %p242 = pneg %p133
      %p243 = pneg %p130
      %p244 = scmp.lt.s32.totalorder %s20, 1
      %s245 = scalar_select %p244, %s20, 1
      %s246 = smul.addr %s245, 8
      %s247 = scalar_lea.vmem %s3, %s246
      %p248 = pneg %p159
      %p249 = pneg %p156
      %p250 = scmp.lt.s32.totalorder %s20, 1
      %s251 = scalar_select %p250, %s20, 1
      %s252 = smul.addr %s251, 8
      %s253 = scalar_lea.vmem %s4, %s252
      %s254 = sadd.s32 %s20, %s21
      %s255 = smul.u32 4, %s254
      %p256 = scmp.lt.s32.totalorder %s255, 7
      %s257 = scalar_select %p256, %s255, 7
      %s258 = smul.addr %s257, 8
      %s259 = scalar_lea.vmem %s0, %s258
      %s260 = sadd.s32 %s20, %s21
      %s261 = smul.u32 4, %s260
      %s262 = sadd.s32 %s20, %s21
      %s263 = smul.u32 4, %s262
      %p264 = scmp.lt.s32.totalorder %s263, 7
      %s265 = scalar_select %p264, %s263, 7
      %s266 = smul.addr %s265, 8
      %s267 = scalar_lea.vmem %s1, %s266
      %s268 = sadd.s32 %s20, %s21
      %s269 = smul.u32 4, %s268
      %s270 = sadd.s32 %s20, %s21
      %s271 = smul.u32 4, %s270
      %p272 = scmp.lt.s32.totalorder %s271, 7
      %s273 = scalar_select %p272, %s271, 7
      %s274 = smul.addr %s273, 8
      %s275 = scalar_lea.vmem %s2, %s274
      %s276 = sadd.s32 %s20, %s21
      %s277 = smul.u32 4, %s276
      %p278 = scmp.lt.s32.totalorder %s20, 1
      %s279 = scalar_select %p278, %s20, 1
      %s280 = smul.addr %s279, 8
      %s281 = scalar_lea.vmem %s3, %s280
      %p282 = scmp.lt.s32.totalorder %s20, 1
      %s283 = scalar_select %p282, %s20, 1
      %s284 = smul.addr %s283, 8
      %s285 = scalar_lea.vmem %s4, %s284
      %p286 = scmp.eq.s32.totalorder %s21, 0
      // Predicated region
      $region33: #{_lambda_.71} parent=31 // pred_check
        %p287 = pneg %p286
      $region34: #{_lambda_.71} parent=31 // pred_check_branch
        %289 = sbr.rel (%p287) target = $region36
      $region35: #{_lambda_.71} parent=31 // pred_region
        %vm290 = vcmask 0
        %291 = vst.msk [vmem:[#allocation2] sm:$0x1] %vm290, 0.0
        %292 = vst.msk [vmem:[#allocation3] sm:$0x1] %vm290, 0.0
      $region36: #{_lambda_.71} parent=31 // pred_fallthru
        _
      %v293 = vld [vmem:[%s259] sm:$0xff]
      %v294 = vld [vmem:[%s259 + $0x8] sm:$0xff]
      %v295 = vld [vmem:[%s259 + $0x10] sm:$0xff]
      %v296 = vld [vmem:[%s259 + $0x18] sm:$0xff]
      %v297 = vld [vmem:[%s267] sm:$0xff]
      %v298 = vld [vmem:[%s267 + $0x8] sm:$0xff]
      %v299 = vld [vmem:[%s267 + $0x10] sm:$0xff]
      %v300 = vld [vmem:[%s267 + $0x18] sm:$0xff]
      %v301 = vsub.f32 %v293, %v297
      %v302 = vsub.f32 %v294, %v298
      %v303 = vsub.f32 %v295, %v299
      %v304 = vsub.f32 %v296, %v300
      %v305 = vmul.f32 %v301, %v301
      %v306 = vmul.f32 %v302, %v302
      %v307 = vmul.f32 %v303, %v303
      %v308 = vmul.f32 %v304, %v304
      %vm309 = vcmask 31744
      %v310 = vsel %vm309, %v305, 0.0
      %311 = vadd.xlane.f32.xlu0 %v310
      %v312 = vpop.xlane.xlu0 %311
      %v313 = vsel %vm309, %v306, 0.0
      %314 = vadd.xlane.f32.xlu0 %v313
      %v315 = vpop.xlane.xlu0 %314
      %v316 = vsel %vm309, %v307, 0.0
      %317 = vadd.xlane.f32.xlu0 %v316
      %v318 = vpop.xlane.xlu0 %317
      %v319 = vsel %vm309, %v308, 0.0
      %320 = vadd.xlane.f32.xlu0 %v319
      %v321 = vpop.xlane.xlu0 %320
      %v322 = vrcp.pop 4.0
      %v323 = vmul.f32 4.0, %v322
      %v324 = vsub.f32 1.0, %v323
      %v325 = vmul.f32 %v322, %v324
      %v326 = vadd.f32 %v322, %v325
      %vm327 = vweird.f32 %v322
      %v328 = vsel %vm327, %v322, %v326
      %v329 = vmul.f32 %v312, %v328
      %v330 = vmul.f32 %v315, %v328
      %v331 = vmul.f32 %v318, %v328
      %v332 = vmul.f32 %v321, %v328
      %v333 = vld [vmem:[%s275] sm:$0xff]
      %v334 = vld [vmem:[%s275 + $0x8] sm:$0xff]
      %v335 = vld [vmem:[%s275 + $0x10] sm:$0xff]
      %v336 = vld [vmem:[%s275 + $0x18] sm:$0xff]
      %v337 = vld [vmem:[#allocation2] sm:$0x1]
      %v338 = vmul.f32 %v329, %v333
      %v339 = vmul.f32 %v330, %v334
      %v340 = vmul.f32 %v331, %v335
      %v341 = vmul.f32 %v332, %v336
      %vm342 = vcmask 7168
      %v343 = vsel %vm342, %v338, 0.0
      %v344 = vsel %vm342, %v339, 0.0
      %v345 = vadd.f32 %v343, %v344
      %v346 = vsel %vm342, %v340, 0.0
      %v347 = vadd.f32 %v345, %v346
      %v348 = vsel %vm342, %v341, 0.0
      %v349 = vadd.f32 %v347, %v348
      %v350 = vrot.slane %v349, 4
      %v351 = vadd.f32 %v349, %v350
      %v352 = vrot.slane %v351, 2
      %v353 = vadd.f32 %v351, %v352
      %v354 = vrot.slane %v353, 1
      %v355 = vadd.f32 %v353, %v354
      %v356 = vadd.f32 %v337, %v355
      %vm357 = vcmask 0
      %358 = vst.msk [vmem:[#allocation2] sm:$0x1] %vm357, %v356
      %v359 = vld [vmem:[#allocation3] sm:$0x1]
      %v360 = vsel %vm342, %v333, 0.0
      %v361 = vsel %vm342, %v334, 0.0
      %v362 = vadd.f32 %v360, %v361
      %v363 = vsel %vm342, %v335, 0.0
      %v364 = vadd.f32 %v362, %v363
      %v365 = vsel %vm342, %v336, 0.0
      %v366 = vadd.f32 %v364, %v365
      %v367 = vrot.slane %v366, 4
      %v368 = vadd.f32 %v366, %v367
      %v369 = vrot.slane %v368, 2
      %v370 = vadd.f32 %v368, %v369
      %v371 = vrot.slane %v370, 1
      %v372 = vadd.f32 %v370, %v371
      %v373 = vadd.f32 %v359, %v372
      %374 = vst.msk [vmem:[#allocation3] sm:$0x1] %vm357, %v373
      // Predicated region
      $region37: #{_lambda_.71} parent=31 // pred_check
        %p375 = pneg %p286
      $region38: #{_lambda_.71} parent=31 // pred_check_branch
        %377 = sbr.rel (%p375) target = $region40
      $region39: #{_lambda_.71} parent=31 // pred_region
        %v378 = vld [vmem:[#allocation2] sm:$0x1]
        %v380 = vperm.slane %v378, 0
        %381 = vset.pattern.permute.xlu0 0
        %382 = vperm.xlu0 %381, %v380
        %v383 = vpop.permute.xlu0 %382
        %385 = vst [vmem:[%s281] sm:$0xff] %v383
        %v386 = vld [vmem:[#allocation3] sm:$0x1]
        %v388 = vperm.slane %v386, 0
        %389 = vset.pattern.permute.xlu0 0
        %390 = vperm.xlu0 %389, %v388
        %v391 = vpop.permute.xlu0 %390
        %393 = vst [vmem:[%s285] sm:$0xff] %v391
      $region40: #{_lambda_.71} parent=31 // pred_fallthru
        _
      %p394 = scmp.lt.s32.totalorder %s20, 1
      %s395 = scalar_select %p394, %s20, 1
      %s396 = smul.addr %s395, 8
      %s397 = scalar_lea.vmem %s3, %s396
      %p398 = scmp.lt.s32.totalorder %s20, 1
      %s399 = scalar_select %p398, %s20, 1
      %s400 = smul.addr %s399, 8
      %s401 = scalar_lea.vmem %s4, %s400
      // Predicated region
      $region41: #{_lambda_.71} parent=31 // pred_check
        %p402 = pneg %p130
      $region42: #{_lambda_.71} parent=31 // pred_check_branch
        %404 = sbr.rel (%p402) target = $region44
      $region43: #{_lambda_.71} parent=31 // pred_region
        _
      $region44: #{_lambda_.71} parent=31 // pred_fallthru
        _
      // Predicated region
      $region45: #{_lambda_.71} parent=31 // pred_check
        %p405 = pneg %p156
      $region46: #{_lambda_.71} parent=31 // pred_check_branch
        %407 = sbr.rel (%p405) target = $region48
      $region47: #{_lambda_.71} parent=31 // pred_region
        _
      $region48: #{_lambda_.71} parent=31 // pred_fallthru
        _
    $region32: #{_lambda_.71} parent=5 // pred_fallthru
      _
    %p408 = scmp.le.s32.totalorder 2, %s11
    // Predicated region
    $region49: #{_lambda_.71} parent=5 // pred_check
      %p409 = pneg %p408
    $region50: #{_lambda_.71} parent=5 // pred_check_branch
      %411 = sbr.rel (%p409) target = $region52
    $region51: #{_lambda_.71} parent=5 // pred_region
      %s412 = ssub.s32 %s11, 2
      // Predicated region
      $region53: #{_lambda_.71} parent=51 // pred_check
        %p413 = pneg %p136
      $region54: #{_lambda_.71} parent=51 // pred_check_branch
        %415 = sbr.rel (%p413) target = $region56
      $region55: #{_lambda_.71} parent=51 // pred_region
        %p416 = scmp.lt.s32.totalorder %s22, 1
        %s417 = scalar_select %p416, %s22, 1
        %s418 = smul.addr %s417, 8
        %s419 = scalar_lea.vmem %s3, %s418
      $region56: #{_lambda_.71} parent=51 // pred_fallthru
        _
      // Predicated region
      $region57: #{_lambda_.71} parent=51 // pred_check
        %p420 = pneg %p162
      $region58: #{_lambda_.71} parent=51 // pred_check_branch
        %422 = sbr.rel (%p420) target = $region60
      $region59: #{_lambda_.71} parent=51 // pred_region
        %p423 = scmp.lt.s32.totalorder %s22, 1
        %s424 = scalar_select %p423, %s22, 1
        %s425 = smul.addr %s424, 8
        %s426 = scalar_lea.vmem %s4, %s425
      $region60: #{_lambda_.71} parent=51 // pred_fallthru
        _
    $region52: #{_lambda_.71} parent=5 // pred_fallthru
      _
  $region6: #{_lambda_.71} parent=0 // loop_footer
    %s15 = sadd.s32 1, %s11
  $region7: #{_lambda_.71} parent=0 // loop_footer_branch
    %10 = sbr.rel target = $region3
  $region8: #{_lambda_.71} parent=0 // loop_exit
    _

</llo_original>
